<compile_context>
chip_gen: v5e
topology: v5e:2x2
jax: 0.10.0
libtpu: 0.0.40
codegen_flags: <defaults>
</compile_context>

<pallas_src>
import functools

import jax
import jax.numpy as jnp
from jax import lax
from jax.experimental import pallas as pl
from jax.experimental.pallas import tpu as pltpu

BN_EPS = 1e-5


def _round_up(x, m):
    return ((x + m - 1) // m) * m


# --------------------------------------------------------------------------
# Pallas kernel: Bottleneck (1x1 -> 3x3 -> 1x1, residual, ReLU) + conv111
# --------------------------------------------------------------------------
def _fused_kernel(H, W, PADV,
                  x_ref, ml_ref, mr_ref,
                  w1_ref, b1_ref, w2_ref, b2_ref, w3_ref, b3_ref,
                  w4_ref, b4_ref,
                  o_ref,
                  hbuf_ref, acc3_ref):
    HW = H * W
    j = pl.program_id(1)                      # Cm2 tile index (inner, sequential)

    def mm(a, w):                             # bf16 MXU matmul, f32 accumulation
        return jnp.dot(a, w, preferred_element_type=jnp.float32)

    # ---- per-image prep (j == 0): conv1 (1x1) + stage three horizontally
    #      pre-shifted / pre-masked bf16 copies of y1 with zero vertical halos.
    @pl.when(j == 0)
    def _prep():
        # Zero only the halo rows (interiors are fully overwritten below).
        zhalo = jnp.zeros((PADV, hbuf_ref.shape[2]), hbuf_ref.dtype)
        for s in range(3):
            hbuf_ref[s, pl.ds(0, PADV), :] = zhalo
            hbuf_ref[s, pl.ds(PADV + HW, PADV), :] = zhalo

        x = x_ref[0]                                             # (HW, Cin) bf16
        y1 = jnp.maximum(mm(x, w1_ref[...]) + b1_ref[...], 0.0)  # f32
        y1 = y1.astype(hbuf_ref.dtype)                           # bf16
        hbuf_ref[1, pl.ds(PADV, HW), :] = y1                     # dx =  0
        # dx = -1 / +1 copies; wrapped columns zeroed once here instead of
        # six mask multiplies inside the 9-tap loop.
        ml = ml_ref[...]
        mr = mr_ref[...]
        hbuf_ref[0, pl.ds(PADV, HW), :] = hbuf_ref[1, pl.ds(PADV - 1, HW), :] * ml
        hbuf_ref[2, pl.ds(PADV, HW), :] = hbuf_ref[1, pl.ds(PADV + 1, HW), :] * mr

    # ---- 3x3 conv for this Cm2 tile: 9 vertical-shift matmuls --------------
    acc2 = None
    for ky in range(3):
        for kx in range(3):
            # sublane-aligned vertical shift when W % 8 == 0
            tap = hbuf_ref[kx, pl.ds(PADV + (ky - 1) * W, HW), :]   # (HW, Cm1) bf16
            p = mm(tap, w2_ref[ky * 3 + kx])                        # (HW, tc2) f32
            acc2 = p if acc2 is None else acc2 + p
    y2 = jnp.maximum(acc2 + b2_ref[...], 0.0).astype(jnp.bfloat16)  # (HW, tc2)

    # ---- conv3 partial product, accumulated over Cm2 tiles in f32 VMEM -----
    part = mm(y2, w3_ref[...])                                      # (HW, Cout) f32

    @pl.when(j == 0)
    def _init_acc():
        acc3_ref[...] = part

    @pl.when(j > 0)
    def _accumulate():
        acc3_ref[...] += part

    # ---- finalize on the last Cm2 tile: residual + ReLU + conv111 ----------
    @pl.when(j == pl.num_programs(1) - 1)
    def _finalize():
        x = x_ref[0].astype(jnp.float32)                 # re-read; short live range
        out = jnp.maximum(acc3_ref[...] + b3_ref[...] + x, 0.0)
        z = jnp.maximum(mm(out.astype(jnp.bfloat16), w4_ref[...]) + b4_ref[...], 0.0)
        o_ref[0] = z.astype(o_ref.dtype)


def _bottle_conv111_flat(x_flat, H, W, params, masks, *, tc2=128):
    """x_flat: (N, H*W, Cin) f32/bf16.  Returns (N, H*W, Cfin) f32."""
    N, HW, Cin = x_flat.shape
    w1, b1, w2hwio, b2, w3, b3, w4, b4 = params
    ml, mr = masks
    Cm1, Cm2 = w2hwio.shape[2], w2hwio.shape[3]
    Cout = w3.shape[1]
    Cfin = w4.shape[1]
    assert Cin == Cout, "identity shortcut requires Cin == Cout"

    tc2 = min(tc2, Cm2)
    assert Cm2 % tc2 == 0
    n_j = Cm2 // tc2
    PADV = _round_up(W, 8)                     # vertical-halo depth (>= W rows)

    bf = jnp.bfloat16
    x_bf = x_flat.astype(bf)
    w1b = w1.astype(bf)
    w2b = w2hwio.reshape(9, Cm1, Cm2).astype(bf)    # tap index t = ky*3 + kx
    w3b = w3.astype(bf)
    w4b = w4.astype(bf)
    mlb = ml.astype(bf)
    mrb = mr.astype(bf)

    kernel = functools.partial(_fused_kernel, H, W, PADV)

    def const_spec(a):
        nd = a.ndim
        return pl.BlockSpec(a.shape, lambda n, j, _nd=nd: (0,) * _nd)

    grid_spec = pltpu.PrefetchScalarGridSpec(
        num_scalar_prefetch=0,
        grid=(N, n_j),
        in_specs=[
            pl.BlockSpec((1, HW, Cin), lambda n, j: (n, 0, 0)),    # x: resident over j
            const_spec(mlb), const_spec(mrb),
            const_spec(w1b), const_spec(b1),
            pl.BlockSpec((9, Cm1, tc2), lambda n, j: (0, 0, j)),   # w2: streamed by Cm2 tile
            pl.BlockSpec((1, tc2), lambda n, j: (0, j)),           # b2 tile
            pl.BlockSpec((tc2, Cout), lambda n, j: (j, 0)),        # w3: streamed by Cm2 tile
            const_spec(b3),
            const_spec(w4b), const_spec(b4),
        ],
        out_specs=pl.BlockSpec((1, HW, Cfin), lambda n, j: (n, 0, 0)),
        scratch_shapes=[
            pltpu.VMEM((3, HW + 2 * PADV, Cm1), bf),   # pre-shifted y1 copies (bf16)
            pltpu.VMEM((HW, Cout), jnp.float32),       # conv3 accumulator
        ],
    )

    return pl.pallas_call(
        kernel,
        out_shape=jax.ShapeDtypeStruct((N, HW, Cfin), jnp.float32),
        grid_spec=grid_spec,
        compiler_params=pltpu.CompilerParams(
            dimension_semantics=("parallel", "arbitrary"),
            vmem_limit_bytes=64 * 1024 * 1024,
        ),
    )(x_bf, mlb, mrb, w1b, b1, w2b, b2, w3b, b3, w4b, b4)


# --------------------------------------------------------------------------
# Module-level wrapper (mirrors NonLocalPartBlockND.forward)
# --------------------------------------------------------------------------
def _make_col_masks(H, W):
    col = jnp.arange(H * W, dtype=jnp.int32) % W
    ml = (col >= 1).astype(jnp.float32).reshape(H * W, 1)       # valid for kx == 0
    mr = (col <= W - 2).astype(jnp.float32).reshape(H * W, 1)   # valid for kx == 2
    return ml, mr


def nonlocal_part_block_forward(conv2_2, conv3_3, conv4_3, conv_out8_cat,
                                conv5_3_out8, params, *, tc2=128):
    """All tensors NCHW (PyTorch convention). Only conv_out8_cat is transformed."""
    N, C, H, W = conv_out8_cat.shape
    x_flat = jnp.transpose(conv_out8_cat, (0, 2, 3, 1)).reshape(N, H * W, C)
    masks = _make_col_masks(H, W)
    z_flat = _bottle_conv111_flat(x_flat, H, W, params, masks, tc2=tc2)
    Cfin = z_flat.shape[-1]
    z = jnp.transpose(z_flat.reshape(N, H, W, Cfin), (0, 3, 1, 2))   # back to NCHW
    return (conv2_2, conv3_3, conv4_3, z, conv5_3_out8)


# --------------------------------------------------------------------------
# Deterministic parameter init (BaseConv: weight ~ N(0, 0.01), bias = 0,
# BN gamma=1/beta=0 with running stats 0/1 folded at inference).
# --------------------------------------------------------------------------
def init_params(key, cin, cm1, cm2, cout, cfin):
    ks = jax.random.split(key, 4)
    std = jnp.float32(0.01)
    w1 = std * jax.random.normal(ks[0], (cin, cm1), jnp.float32)        # 1x1, IO
    w2 = std * jax.random.normal(ks[1], (3, 3, cm1, cm2), jnp.float32)  # 3x3, HWIO
    w3 = std * jax.random.normal(ks[2], (cm2, cout), jnp.float32)       # 1x1, IO
    w4 = std * jax.random.normal(ks[3], (cout, cfin), jnp.float32)      # conv111, IO
    b1 = jnp.zeros((1, cm1), jnp.float32)
    b2 = jnp.zeros((1, cm2), jnp.float32)
    b3 = jnp.zeros((1, cout), jnp.float32)
    b4 = jnp.zeros((1, cfin), jnp.float32)
    # Fold inference-mode BatchNorm2d:  y = (conv) / sqrt(1 + eps)
    s = jnp.float32(1.0) / jnp.sqrt(jnp.float32(1.0) + BN_EPS)
    return (w1 * s, b1 * s, w2 * s, b2 * s, w3 * s, b3 * s, w4 * s, b4 * s)


# --------------------------------------------------------------------------
# Pure-JAX reference (same bf16-input / f32-accumulation numerics)
# --------------------------------------------------------------------------
def reference_forward(x_nchw, params):
    w1, b1, w2, b2, w3, b3, w4, b4 = params
    bf = jnp.bfloat16
    x = jnp.transpose(x_nchw, (0, 2, 3, 1)).astype(bf)                  # NHWC bf16

    def c1(t, w, b):
        return jnp.einsum('nhwc,cd->nhwd', t.astype(bf), w.astype(bf),
                          preferred_element_type=jnp.float32) + b[0]

    y1 = jax.nn.relu(c1(x, w1, b1)).astype(bf)
    y2 = lax.conv_general_dilated(y1, w2.astype(bf), (1, 1), 'SAME',
                                  dimension_numbers=('NHWC', 'HWIO', 'NHWC'),
                                  preferred_element_type=jnp.float32) + b2[0]
    y2 = jax.nn.relu(y2).astype(bf)
    y3 = c1(y2, w3, b3)
    out = jax.nn.relu(y3 + x.astype(jnp.float32))
    z = jax.nn.relu(c1(out, w4, b4))
    return jnp.transpose(z, (0, 3, 1, 2))                               # NCHW


if __name__ == "__main__":
    key = jax.random.PRNGKey(0)
    N, H, W = 2, 16, 16
    # Channel counts scaled down from the original (4096, 2048, 2048, 4096, 512)
    # but kept TPU-shaped (multiples of 128) so the streamed Cm2-tile path
    # (tc2=128 -> 2 tiles) and lane-dense output stores are exercised.
    Cin, Cm1, Cm2, Cout, Cfin = 256, 128, 256, 256, 128
    assert Cin == Cout  # identity shortcut in the bottleneck

    k_x, k_p, k0, k1, k2, k3 = jax.random.split(key, 6)
    conv2_2 = jax.random.normal(k0, (N, 8, 32, 32), jnp.float32)
    conv3_3 = jax.random.normal(k1, (N, 16, 16, 16), jnp.float32)
    conv4_3 = jax.random.normal(k2, (N, 16, 8, 8), jnp.float32)
    conv5_3_out8 = jax.random.normal(k3, (N, 16, 8, 8), jnp.float32)
    x = jax.random.normal(k_x, (N, Cin, H, W), jnp.float32)   # NCHW like PyTorch

    params = init_params(k_p, Cin, Cm1, Cm2, Cout, Cfin)

    outs = nonlocal_part_block_forward(conv2_2, conv3_3, conv4_3, x,
                                       conv5_3_out8, params, tc2=128)
    z = jax.block_until_ready(outs[3])

    z_ref = reference_forward(x, params)
    assert z.shape == (N, Cfin, H, W), z.shape
    max_err = float(jnp.max(jnp.abs(z - z_ref)))
    assert jnp.allclose(z, z_ref, atol=2e-2, rtol=2e-2), max_err
    # Pass-through branches must be returned untouched.
    assert outs[0] is conv2_2 and outs[1] is conv3_3
    assert outs[2] is conv4_3 and outs[4] is conv5_3_out8
    print("KERNEL_OK")
</pallas_src>

<mosaic_0001>
module attributes {stable_mosaic.version = 11 : i64} {
  func.func @_fused_kernel(%arg0: i32, %arg1: i32, %arg2: memref<1x256x256xbf16, #tpu.memory_space<vmem>>, %arg3: memref<256x1xbf16, #tpu.memory_space<vmem>>, %arg4: memref<256x1xbf16, #tpu.memory_space<vmem>>, %arg5: memref<256x128xbf16, #tpu.memory_space<vmem>>, %arg6: memref<1x128xf32, #tpu.memory_space<vmem>>, %arg7: memref<9x128x128xbf16, #tpu.memory_space<vmem>>, %arg8: memref<1x128xf32, #tpu.memory_space<vmem>>, %arg9: memref<128x256xbf16, #tpu.memory_space<vmem>>, %arg10: memref<1x256xf32, #tpu.memory_space<vmem>>, %arg11: memref<256x128xbf16, #tpu.memory_space<vmem>>, %arg12: memref<1x128xf32, #tpu.memory_space<vmem>>, %arg13: memref<1x256x128xf32, #tpu.memory_space<vmem>>, %arg14: memref<3x288x128xbf16, #tpu.memory_space<vmem>>, %arg15: memref<256x256xf32, #tpu.memory_space<vmem>>) attributes {dimension_semantics = [#tpu.dimension_semantics<parallel>, #tpu.dimension_semantics<arbitrary>], iteration_bounds = array<i64: 2, 2>, scalar_prefetch = 0 : i64, scratch_operands = 2 : i64, tpu.core_type = #tpu.core_type<tc>, window_params = [{transform_indices = @transform_0, window_bounds = array<i64: 1, 256, 256>}, {pipeline_mode = #tpu.pipeline_mode<synchronous>, transform_indices = @transform_1, window_bounds = array<i64: 256, 1>}, {pipeline_mode = #tpu.pipeline_mode<synchronous>, transform_indices = @transform_2, window_bounds = array<i64: 256, 1>}, {pipeline_mode = #tpu.pipeline_mode<synchronous>, transform_indices = @transform_3, window_bounds = array<i64: 256, 128>}, {pipeline_mode = #tpu.pipeline_mode<synchronous>, transform_indices = @transform_4, window_bounds = array<i64: 1, 128>}, {transform_indices = @transform_5, window_bounds = array<i64: 9, 128, 128>}, {transform_indices = @transform_6, window_bounds = array<i64: 1, 128>}, {transform_indices = @transform_7, window_bounds = array<i64: 128, 256>}, {pipeline_mode = #tpu.pipeline_mode<synchronous>, transform_indices = @transform_8, window_bounds = array<i64: 1, 256>}, {pipeline_mode = #tpu.pipeline_mode<synchronous>, transform_indices = @transform_9, window_bounds = array<i64: 256, 128>}, {pipeline_mode = #tpu.pipeline_mode<synchronous>, transform_indices = @transform_10, window_bounds = array<i64: 1, 128>}, {transform_indices = @transform_11, window_bounds = array<i64: 1, 256, 128>}]} {
    %c0_i32 = arith.constant 0 : i32
    %0 = arith.cmpi eq, %arg1, %c0_i32 : i32
    %1 = arith.extui %0 : i1 to i32
    %c0_i32_0 = arith.constant 0 : i32
    %2 = arith.cmpi ne, %1, %c0_i32_0 : i32
    scf.if %2 {
      %cst_63 = arith.constant 0.000000e+00 : bf16
      %73 = vector.broadcast %cst_63 : bf16 to vector<16x128xbf16>
      %c0_64 = arith.constant 0 : index
      %c0_65 = arith.constant 0 : index
      %c0_66 = arith.constant 0 : index
      %74 = vector.load %arg14[%c0_64, %c0_65, %c0_66] : memref<3x288x128xbf16, #tpu.memory_space<vmem>>, vector<1x16x128xbf16>
      %75 = vector.shape_cast %74 : vector<1x16x128xbf16> to vector<16x128xbf16>
      %76 = vector.shape_cast %73 : vector<16x128xbf16> to vector<1x16x128xbf16>
      tpu.vector_store %arg14[%c0_64, %c0_65, %c0_66], %76 {strides = array<i32>} : memref<3x288x128xbf16, #tpu.memory_space<vmem>>, vector<1x16x128xbf16>,
      %c0_67 = arith.constant 0 : index
      %c272 = arith.constant 272 : index
      %c0_68 = arith.constant 0 : index
      %77 = vector.load %arg14[%c0_67, %c272, %c0_68] : memref<3x288x128xbf16, #tpu.memory_space<vmem>>, vector<1x16x128xbf16>
      %78 = vector.shape_cast %77 : vector<1x16x128xbf16> to vector<16x128xbf16>
      %79 = vector.shape_cast %73 : vector<16x128xbf16> to vector<1x16x128xbf16>
      tpu.vector_store %arg14[%c0_67, %c272, %c0_68], %79 {strides = array<i32>} : memref<3x288x128xbf16, #tpu.memory_space<vmem>>, vector<1x16x128xbf16>,
      %c1_69 = arith.constant 1 : index
      %c0_70 = arith.constant 0 : index
      %c0_71 = arith.constant 0 : index
      %80 = vector.load %arg14[%c1_69, %c0_70, %c0_71] : memref<3x288x128xbf16, #tpu.memory_space<vmem>>, vector<1x16x128xbf16>
      %81 = vector.shape_cast %80 : vector<1x16x128xbf16> to vector<16x128xbf16>
      %82 = vector.shape_cast %73 : vector<16x128xbf16> to vector<1x16x128xbf16>
      tpu.vector_store %arg14[%c1_69, %c0_70, %c0_71], %82 {strides = array<i32>} : memref<3x288x128xbf16, #tpu.memory_space<vmem>>, vector<1x16x128xbf16>,
      %c1_72 = arith.constant 1 : index
      %c272_73 = arith.constant 272 : index
      %c0_74 = arith.constant 0 : index
      %83 = vector.load %arg14[%c1_72, %c272_73, %c0_74] : memref<3x288x128xbf16, #tpu.memory_space<vmem>>, vector<1x16x128xbf16>
      %84 = vector.shape_cast %83 : vector<1x16x128xbf16> to vector<16x128xbf16>
      %85 = vector.shape_cast %73 : vector<16x128xbf16> to vector<1x16x128xbf16>
      tpu.vector_store %arg14[%c1_72, %c272_73, %c0_74], %85 {strides = array<i32>} : memref<3x288x128xbf16, #tpu.memory_space<vmem>>, vector<1x16x128xbf16>,
      %c2_75 = arith.constant 2 : index
      %c0_76 = arith.constant 0 : index
      %c0_77 = arith.constant 0 : index
      %86 = vector.load %arg14[%c2_75, %c0_76, %c0_77] : memref<3x288x128xbf16, #tpu.memory_space<vmem>>, vector<1x16x128xbf16>
      %87 = vector.shape_cast %86 : vector<1x16x128xbf16> to vector<16x128xbf16>
      %88 = vector.shape_cast %73 : vector<16x128xbf16> to vector<1x16x128xbf16>
      tpu.vector_store %arg14[%c2_75, %c0_76, %c0_77], %88 {strides = array<i32>} : memref<3x288x128xbf16, #tpu.memory_space<vmem>>, vector<1x16x128xbf16>,
      %c2_78 = arith.constant 2 : index
      %c272_79 = arith.constant 272 : index
      %c0_80 = arith.constant 0 : index
      %89 = vector.load %arg14[%c2_78, %c272_79, %c0_80] : memref<3x288x128xbf16, #tpu.memory_space<vmem>>, vector<1x16x128xbf16>
      %90 = vector.shape_cast %89 : vector<1x16x128xbf16> to vector<16x128xbf16>
      %91 = vector.shape_cast %73 : vector<16x128xbf16> to vector<1x16x128xbf16>
      tpu.vector_store %arg14[%c2_78, %c272_79, %c0_80], %91 {strides = array<i32>} : memref<3x288x128xbf16, #tpu.memory_space<vmem>>, vector<1x16x128xbf16>,
      %c0_81 = arith.constant 0 : index
      %c0_82 = arith.constant 0 : index
      %c0_83 = arith.constant 0 : index
      %92 = vector.load %arg2[%c0_81, %c0_82, %c0_83] : memref<1x256x256xbf16, #tpu.memory_space<vmem>>, vector<1x256x256xbf16>
      %93 = vector.shape_cast %92 : vector<1x256x256xbf16> to vector<256x256xbf16>
      %c0_84 = arith.constant 0 : index
      %c0_85 = arith.constant 0 : index
      %94 = vector.load %arg5[%c0_84, %c0_85] : memref<256x128xbf16, #tpu.memory_space<vmem>>, vector<256x128xbf16>
      %cst_86 = arith.constant dense<0.000000e+00> : vector<256x128xf32>
      %95 = tpu.matmul %93, %94, %cst_86 {dimension_numbers = #tpu.dot_dimension_numbers<[1], [0], [0], [1], [0, 0, 1, 1], [], []>} : vector<256x256xbf16>, vector<256x128xbf16>, vector<256x128xf32> -> vector<256x128xf32>
      %c0_87 = arith.constant 0 : index
      %c0_88 = arith.constant 0 : index
      %96 = vector.load %arg6[%c0_87, %c0_88] : memref<1x128xf32, #tpu.memory_space<vmem>>, vector<1x128xf32>
      %97 = vector.broadcast %96 : vector<1x128xf32> to vector<256x128xf32>
      %98 = arith.addf %95, %97 : vector<256x128xf32>
      %cst_89 = arith.constant 0.000000e+00 : f32
      %99 = vector.broadcast %cst_89 : f32 to vector<256x128xf32>
      %100 = arith.maximumf %98, %99 : vector<256x128xf32>
      %101 = arith.truncf %100 : vector<256x128xf32> to vector<256x128xbf16>
      %c1_90 = arith.constant 1 : index
      %c16_91 = arith.constant 16 : index
      %c0_92 = arith.constant 0 : index
      %102 = vector.load %arg14[%c1_90, %c16_91, %c0_92] : memref<3x288x128xbf16, #tpu.memory_space<vmem>>, vector<1x256x128xbf16>
      %103 = vector.shape_cast %102 : vector<1x256x128xbf16> to vector<256x128xbf16>
      %104 = vector.shape_cast %101 : vector<256x128xbf16> to vector<1x256x128xbf16>
      tpu.vector_store %arg14[%c1_90, %c16_91, %c0_92], %104 {strides = array<i32>} : memref<3x288x128xbf16, #tpu.memory_space<vmem>>, vector<1x256x128xbf16>,
      %c0_93 = arith.constant 0 : index
      %c0_94 = arith.constant 0 : index
      %105 = vector.load %arg3[%c0_93, %c0_94] : memref<256x1xbf16, #tpu.memory_space<vmem>>, vector<256x1xbf16>
      %c0_95 = arith.constant 0 : index
      %c0_96 = arith.constant 0 : index
      %106 = vector.load %arg4[%c0_95, %c0_96] : memref<256x1xbf16, #tpu.memory_space<vmem>>, vector<256x1xbf16>
      %c1_97 = arith.constant 1 : index
      %c15 = arith.constant 15 : index
      %c0_98 = arith.constant 0 : index
      %107 = vector.load %arg14[%c1_97, %c15, %c0_98] : memref<3x288x128xbf16, #tpu.memory_space<vmem>>, vector<1x256x128xbf16>
      %108 = vector.shape_cast %107 : vector<1x256x128xbf16> to vector<256x128xbf16>
      %109 = vector.broadcast %105 : vector<256x1xbf16> to vector<256x128xbf16>
      %110 = arith.mulf %108, %109 : vector<256x128xbf16>
      %c0_99 = arith.constant 0 : index
      %c16_100 = arith.constant 16 : index
      %c0_101 = arith.constant 0 : index
      %111 = vector.load %arg14[%c0_99, %c16_100, %c0_101] : memref<3x288x128xbf16, #tpu.memory_space<vmem>>, vector<1x256x128xbf16>
      %112 = vector.shape_cast %111 : vector<1x256x128xbf16> to vector<256x128xbf16>
      %113 = vector.shape_cast %110 : vector<256x128xbf16> to vector<1x256x128xbf16>
      tpu.vector_store %arg14[%c0_99, %c16_100, %c0_101], %113 {strides = array<i32>} : memref<3x288x128xbf16, #tpu.memory_space<vmem>>, vector<1x256x128xbf16>,
      %c1_102 = arith.constant 1 : index
      %c17 = arith.constant 17 : index
      %c0_103 = arith.constant 0 : index
      %114 = vector.load %arg14[%c1_102, %c17, %c0_103] : memref<3x288x128xbf16, #tpu.memory_space<vmem>>, vector<1x256x128xbf16>
      %115 = vector.shape_cast %114 : vector<1x256x128xbf16> to vector<256x128xbf16>
      %116 = vector.broadcast %106 : vector<256x1xbf16> to vector<256x128xbf16>
      %117 = arith.mulf %115, %116 : vector<256x128xbf16>
      %c2_104 = arith.constant 2 : index
      %c16_105 = arith.constant 16 : index
      %c0_106 = arith.constant 0 : index
      %118 = vector.load %arg14[%c2_104, %c16_105, %c0_106] : memref<3x288x128xbf16, #tpu.memory_space<vmem>>, vector<1x256x128xbf16>
      %119 = vector.shape_cast %118 : vector<1x256x128xbf16> to vector<256x128xbf16>
      %120 = vector.shape_cast %117 : vector<256x128xbf16> to vector<1x256x128xbf16>
      tpu.vector_store %arg14[%c2_104, %c16_105, %c0_106], %120 {strides = array<i32>} : memref<3x288x128xbf16, #tpu.memory_space<vmem>>, vector<1x256x128xbf16>,
    } else {
    }
    %c0 = arith.constant 0 : index
    %c0_1 = arith.constant 0 : index
    %c0_2 = arith.constant 0 : index
    %3 = vector.load %arg14[%c0, %c0_1, %c0_2] : memref<3x288x128xbf16, #tpu.memory_space<vmem>>, vector<1x256x128xbf16>
    %4 = vector.shape_cast %3 : vector<1x256x128xbf16> to vector<256x128xbf16>
    %c0_3 = arith.constant 0 : index
    %c0_4 = arith.constant 0 : index
    %c0_5 = arith.constant 0 : index
    %5 = vector.load %arg7[%c0_3, %c0_4, %c0_5] : memref<9x128x128xbf16, #tpu.memory_space<vmem>>, vector<1x128x128xbf16>
    %6 = vector.shape_cast %5 : vector<1x128x128xbf16> to vector<128x128xbf16>
    %cst = arith.constant dense<0.000000e+00> : vector<256x128xf32>
    %7 = tpu.matmul %4, %6, %cst {dimension_numbers = #tpu.dot_dimension_numbers<[1], [0], [0], [1], [0, 0, 1, 1], [], []>} : vector<256x128xbf16>, vector<128x128xbf16>, vector<256x128xf32> -> vector<256x128xf32>
    %c1 = arith.constant 1 : index
    %c0_6 = arith.constant 0 : index
    %c0_7 = arith.constant 0 : index
    %8 = vector.load %arg14[%c1, %c0_6, %c0_7] : memref<3x288x128xbf16, #tpu.memory_space<vmem>>, vector<1x256x128xbf16>
    %9 = vector.shape_cast %8 : vector<1x256x128xbf16> to vector<256x128xbf16>
    %c1_8 = arith.constant 1 : index
    %c0_9 = arith.constant 0 : index
    %c0_10 = arith.constant 0 : index
    %10 = vector.load %arg7[%c1_8, %c0_9, %c0_10] : memref<9x128x128xbf16, #tpu.memory_space<vmem>>, vector<1x128x128xbf16>
    %11 = vector.shape_cast %10 : vector<1x128x128xbf16> to vector<128x128xbf16>
    %cst_11 = arith.constant dense<0.000000e+00> : vector<256x128xf32>
    %12 = tpu.matmul %9, %11, %cst_11 {dimension_numbers = #tpu.dot_dimension_numbers<[1], [0], [0], [1], [0, 0, 1, 1], [], []>} : vector<256x128xbf16>, vector<128x128xbf16>, vector<256x128xf32> -> vector<256x128xf32>
    %13 = arith.addf %7, %12 : vector<256x128xf32>
    %c2 = arith.constant 2 : index
    %c0_12 = arith.constant 0 : index
    %c0_13 = arith.constant 0 : index
    %14 = vector.load %arg14[%c2, %c0_12, %c0_13] : memref<3x288x128xbf16, #tpu.memory_space<vmem>>, vector<1x256x128xbf16>
    %15 = vector.shape_cast %14 : vector<1x256x128xbf16> to vector<256x128xbf16>
    %c2_14 = arith.constant 2 : index
    %c0_15 = arith.constant 0 : index
    %c0_16 = arith.constant 0 : index
    %16 = vector.load %arg7[%c2_14, %c0_15, %c0_16] : memref<9x128x128xbf16, #tpu.memory_space<vmem>>, vector<1x128x128xbf16>
    %17 = vector.shape_cast %16 : vector<1x128x128xbf16> to vector<128x128xbf16>
    %cst_17 = arith.constant dense<0.000000e+00> : vector<256x128xf32>
    %18 = tpu.matmul %15, %17, %cst_17 {dimension_numbers = #tpu.dot_dimension_numbers<[1], [0], [0], [1], [0, 0, 1, 1], [], []>} : vector<256x128xbf16>, vector<128x128xbf16>, vector<256x128xf32> -> vector<256x128xf32>
    %19 = arith.addf %13, %18 : vector<256x128xf32>
    %c0_18 = arith.constant 0 : index
    %c16 = arith.constant 16 : index
    %c0_19 = arith.constant 0 : index
    %20 = vector.load %arg14[%c0_18, %c16, %c0_19] : memref<3x288x128xbf16, #tpu.memory_space<vmem>>, vector<1x256x128xbf16>
    %21 = vector.shape_cast %20 : vector<1x256x128xbf16> to vector<256x128xbf16>
    %c3 = arith.constant 3 : index
    %c0_20 = arith.constant 0 : index
    %c0_21 = arith.constant 0 : index
    %22 = vector.load %arg7[%c3, %c0_20, %c0_21] : memref<9x128x128xbf16, #tpu.memory_space<vmem>>, vector<1x128x128xbf16>
    %23 = vector.shape_cast %22 : vector<1x128x128xbf16> to vector<128x128xbf16>
    %cst_22 = arith.constant dense<0.000000e+00> : vector<256x128xf32>
    %24 = tpu.matmul %21, %23, %cst_22 {dimension_numbers = #tpu.dot_dimension_numbers<[1], [0], [0], [1], [0, 0, 1, 1], [], []>} : vector<256x128xbf16>, vector<128x128xbf16>, vector<256x128xf32> -> vector<256x128xf32>
    %25 = arith.addf %19, %24 : vector<256x128xf32>
    %c1_23 = arith.constant 1 : index
    %c16_24 = arith.constant 16 : index
    %c0_25 = arith.constant 0 : index
    %26 = vector.load %arg14[%c1_23, %c16_24, %c0_25] : memref<3x288x128xbf16, #tpu.memory_space<vmem>>, vector<1x256x128xbf16>
    %27 = vector.shape_cast %26 : vector<1x256x128xbf16> to vector<256x128xbf16>
    %c4 = arith.constant 4 : index
    %c0_26 = arith.constant 0 : index
    %c0_27 = arith.constant 0 : index
    %28 = vector.load %arg7[%c4, %c0_26, %c0_27] : memref<9x128x128xbf16, #tpu.memory_space<vmem>>, vector<1x128x128xbf16>
    %29 = vector.shape_cast %28 : vector<1x128x128xbf16> to vector<128x128xbf16>
    %cst_28 = arith.constant dense<0.000000e+00> : vector<256x128xf32>
    %30 = tpu.matmul %27, %29, %cst_28 {dimension_numbers = #tpu.dot_dimension_numbers<[1], [0], [0], [1], [0, 0, 1, 1], [], []>} : vector<256x128xbf16>, vector<128x128xbf16>, vector<256x128xf32> -> vector<256x128xf32>
    %31 = arith.addf %25, %30 : vector<256x128xf32>
    %c2_29 = arith.constant 2 : index
    %c16_30 = arith.constant 16 : index
    %c0_31 = arith.constant 0 : index
    %32 = vector.load %arg14[%c2_29, %c16_30, %c0_31] : memref<3x288x128xbf16, #tpu.memory_space<vmem>>, vector<1x256x128xbf16>
    %33 = vector.shape_cast %32 : vector<1x256x128xbf16> to vector<256x128xbf16>
    %c5 = arith.constant 5 : index
    %c0_32 = arith.constant 0 : index
    %c0_33 = arith.constant 0 : index
    %34 = vector.load %arg7[%c5, %c0_32, %c0_33] : memref<9x128x128xbf16, #tpu.memory_space<vmem>>, vector<1x128x128xbf16>
    %35 = vector.shape_cast %34 : vector<1x128x128xbf16> to vector<128x128xbf16>
    %cst_34 = arith.constant dense<0.000000e+00> : vector<256x128xf32>
    %36 = tpu.matmul %33, %35, %cst_34 {dimension_numbers = #tpu.dot_dimension_numbers<[1], [0], [0], [1], [0, 0, 1, 1], [], []>} : vector<256x128xbf16>, vector<128x128xbf16>, vector<256x128xf32> -> vector<256x128xf32>
    %37 = arith.addf %31, %36 : vector<256x128xf32>
    %c0_35 = arith.constant 0 : index
    %c32 = arith.constant 32 : index
    %c0_36 = arith.constant 0 : index
    %38 = vector.load %arg14[%c0_35, %c32, %c0_36] : memref<3x288x128xbf16, #tpu.memory_space<vmem>>, vector<1x256x128xbf16>
    %39 = vector.shape_cast %38 : vector<1x256x128xbf16> to vector<256x128xbf16>
    %c6 = arith.constant 6 : index
    %c0_37 = arith.constant 0 : index
    %c0_38 = arith.constant 0 : index
    %40 = vector.load %arg7[%c6, %c0_37, %c0_38] : memref<9x128x128xbf16, #tpu.memory_space<vmem>>, vector<1x128x128xbf16>
    %41 = vector.shape_cast %40 : vector<1x128x128xbf16> to vector<128x128xbf16>
    %cst_39 = arith.constant dense<0.000000e+00> : vector<256x128xf32>
    %42 = tpu.matmul %39, %41, %cst_39 {dimension_numbers = #tpu.dot_dimension_numbers<[1], [0], [0], [1], [0, 0, 1, 1], [], []>} : vector<256x128xbf16>, vector<128x128xbf16>, vector<256x128xf32> -> vector<256x128xf32>
    %43 = arith.addf %37, %42 : vector<256x128xf32>
    %c1_40 = arith.constant 1 : index
    %c32_41 = arith.constant 32 : index
    %c0_42 = arith.constant 0 : index
    %44 = vector.load %arg14[%c1_40, %c32_41, %c0_42] : memref<3x288x128xbf16, #tpu.memory_space<vmem>>, vector<1x256x128xbf16>
    %45 = vector.shape_cast %44 : vector<1x256x128xbf16> to vector<256x128xbf16>
    %c7 = arith.constant 7 : index
    %c0_43 = arith.constant 0 : index
    %c0_44 = arith.constant 0 : index
    %46 = vector.load %arg7[%c7, %c0_43, %c0_44] : memref<9x128x128xbf16, #tpu.memory_space<vmem>>, vector<1x128x128xbf16>
    %47 = vector.shape_cast %46 : vector<1x128x128xbf16> to vector<128x128xbf16>
    %cst_45 = arith.constant dense<0.000000e+00> : vector<256x128xf32>
    %48 = tpu.matmul %45, %47, %cst_45 {dimension_numbers = #tpu.dot_dimension_numbers<[1], [0], [0], [1], [0, 0, 1, 1], [], []>} : vector<256x128xbf16>, vector<128x128xbf16>, vector<256x128xf32> -> vector<256x128xf32>
    %49 = arith.addf %43, %48 : vector<256x128xf32>
    %c2_46 = arith.constant 2 : index
    %c32_47 = arith.constant 32 : index
    %c0_48 = arith.constant 0 : index
    %50 = vector.load %arg14[%c2_46, %c32_47, %c0_48] : memref<3x288x128xbf16, #tpu.memory_space<vmem>>, vector<1x256x128xbf16>
    %51 = vector.shape_cast %50 : vector<1x256x128xbf16> to vector<256x128xbf16>
    %c8 = arith.constant 8 : index
    %c0_49 = arith.constant 0 : index
    %c0_50 = arith.constant 0 : index
    %52 = vector.load %arg7[%c8, %c0_49, %c0_50] : memref<9x128x128xbf16, #tpu.memory_space<vmem>>, vector<1x128x128xbf16>
    %53 = vector.shape_cast %52 : vector<1x128x128xbf16> to vector<128x128xbf16>
    %cst_51 = arith.constant dense<0.000000e+00> : vector<256x128xf32>
    %54 = tpu.matmul %51, %53, %cst_51 {dimension_numbers = #tpu.dot_dimension_numbers<[1], [0], [0], [1], [0, 0, 1, 1], [], []>} : vector<256x128xbf16>, vector<128x128xbf16>, vector<256x128xf32> -> vector<256x128xf32>
    %55 = arith.addf %49, %54 : vector<256x128xf32>
    %c0_52 = arith.constant 0 : index
    %c0_53 = arith.constant 0 : index
    %56 = vector.load %arg8[%c0_52, %c0_53] : memref<1x128xf32, #tpu.memory_space<vmem>>, vector<1x128xf32>
    %57 = vector.broadcast %56 : vector<1x128xf32> to vector<256x128xf32>
    %58 = arith.addf %55, %57 : vector<256x128xf32>
    %cst_54 = arith.constant 0.000000e+00 : f32
    %59 = vector.broadcast %cst_54 : f32 to vector<256x128xf32>
    %60 = arith.maximumf %58, %59 : vector<256x128xf32>
    %61 = arith.truncf %60 : vector<256x128xf32> to vector<256x128xbf16>
    %c0_55 = arith.constant 0 : index
    %c0_56 = arith.constant 0 : index
    %62 = vector.load %arg9[%c0_55, %c0_56] : memref<128x256xbf16, #tpu.memory_space<vmem>>, vector<128x256xbf16>
    %cst_57 = arith.constant dense<0.000000e+00> : vector<256x256xf32>
    %63 = tpu.matmul %61, %62, %cst_57 {dimension_numbers = #tpu.dot_dimension_numbers<[1], [0], [0], [1], [0, 0, 1, 1], [], []>} : vector<256x128xbf16>, vector<128x256xbf16>, vector<256x256xf32> -> vector<256x256xf32>
    %c0_i32_58 = arith.constant 0 : i32
    %64 = arith.cmpi eq, %arg1, %c0_i32_58 : i32
    %65 = arith.extui %64 : i1 to i32
    %c0_i32_59 = arith.constant 0 : i32
    %66 = arith.cmpi ne, %65, %c0_i32_59 : i32
    scf.if %66 {
      %c0_63 = arith.constant 0 : index
      %c0_64 = arith.constant 0 : index
      %73 = vector.load %arg15[%c0_63, %c0_64] : memref<256x256xf32, #tpu.memory_space<vmem>>, vector<256x256xf32>
      tpu.vector_store %arg15[%c0_63, %c0_64], %63 {strides = array<i32>} : memref<256x256xf32, #tpu.memory_space<vmem>>, vector<256x256xf32>,
    } else {
    }
    %c0_i32_60 = arith.constant 0 : i32
    %67 = arith.cmpi sgt, %arg1, %c0_i32_60 : i32
    %68 = arith.extui %67 : i1 to i32
    %c0_i32_61 = arith.constant 0 : i32
    %69 = arith.cmpi ne, %68, %c0_i32_61 : i32
    scf.if %69 {
      %c0_63 = arith.constant 0 : index
      %c0_64 = arith.constant 0 : index
      %73 = vector.load %arg15[%c0_63, %c0_64] : memref<256x256xf32, #tpu.memory_space<vmem>>, vector<256x256xf32>
      %74 = arith.addf %73, %63 : vector<256x256xf32>
      %c0_65 = arith.constant 0 : index
      %c0_66 = arith.constant 0 : index
      %75 = vector.load %arg15[%c0_65, %c0_66] : memref<256x256xf32, #tpu.memory_space<vmem>>, vector<256x256xf32>
      tpu.vector_store %arg15[%c0_65, %c0_66], %74 {strides = array<i32>} : memref<256x256xf32, #tpu.memory_space<vmem>>, vector<256x256xf32>,
    } else {
    }
    %c1_i32 = arith.constant 1 : i32
    %70 = arith.cmpi eq, %arg1, %c1_i32 : i32
    %71 = arith.extui %70 : i1 to i32
    %c0_i32_62 = arith.constant 0 : i32
    %72 = arith.cmpi ne, %71, %c0_i32_62 : i32
    scf.if %72 {
      %c0_63 = arith.constant 0 : index
      %c0_64 = arith.constant 0 : index
      %c0_65 = arith.constant 0 : index
      %73 = vector.load %arg2[%c0_63, %c0_64, %c0_65] : memref<1x256x256xbf16, #tpu.memory_space<vmem>>, vector<1x256x256xbf16>
      %74 = vector.shape_cast %73 : vector<1x256x256xbf16> to vector<256x256xbf16>
      %75 = arith.extf %74 : vector<256x256xbf16> to vector<256x256xf32>
      %c0_66 = arith.constant 0 : index
      %c0_67 = arith.constant 0 : index
      %76 = vector.load %arg15[%c0_66, %c0_67] : memref<256x256xf32, #tpu.memory_space<vmem>>, vector<256x256xf32>
      %c0_68 = arith.constant 0 : index
      %c0_69 = arith.constant 0 : index
      %77 = vector.load %arg10[%c0_68, %c0_69] : memref<1x256xf32, #tpu.memory_space<vmem>>, vector<1x256xf32>
      %78 = vector.broadcast %77 : vector<1x256xf32> to vector<256x256xf32>
      %79 = arith.addf %76, %78 : vector<256x256xf32>
      %80 = arith.addf %79, %75 : vector<256x256xf32>
      %cst_70 = arith.constant 0.000000e+00 : f32
      %81 = vector.broadcast %cst_70 : f32 to vector<256x256xf32>
      %82 = arith.maximumf %80, %81 : vector<256x256xf32>
      %83 = arith.truncf %82 : vector<256x256xf32> to vector<256x256xbf16>
      %c0_71 = arith.constant 0 : index
      %c0_72 = arith.constant 0 : index
      %84 = vector.load %arg11[%c0_71, %c0_72] : memref<256x128xbf16, #tpu.memory_space<vmem>>, vector<256x128xbf16>
      %cst_73 = arith.constant dense<0.000000e+00> : vector<256x128xf32>
      %85 = tpu.matmul %83, %84, %cst_73 {dimension_numbers = #tpu.dot_dimension_numbers<[1], [0], [0], [1], [0, 0, 1, 1], [], []>} : vector<256x256xbf16>, vector<256x128xbf16>, vector<256x128xf32> -> vector<256x128xf32>
      %c0_74 = arith.constant 0 : index
      %c0_75 = arith.constant 0 : index
      %86 = vector.load %arg12[%c0_74, %c0_75] : memref<1x128xf32, #tpu.memory_space<vmem>>, vector<1x128xf32>
      %87 = vector.broadcast %86 : vector<1x128xf32> to vector<256x128xf32>
      %88 = arith.addf %85, %87 : vector<256x128xf32>
      %cst_76 = arith.constant 0.000000e+00 : f32
      %89 = vector.broadcast %cst_76 : f32 to vector<256x128xf32>
      %90 = arith.maximumf %88, %89 : vector<256x128xf32>
      %c0_77 = arith.constant 0 : index
      %c0_78 = arith.constant 0 : index
      %c0_79 = arith.constant 0 : index
      %91 = vector.load %arg13[%c0_77, %c0_78, %c0_79] : memref<1x256x128xf32, #tpu.memory_space<vmem>>, vector<1x256x128xf32>
      %92 = vector.shape_cast %91 : vector<1x256x128xf32> to vector<256x128xf32>
      %93 = vector.shape_cast %90 : vector<256x128xf32> to vector<1x256x128xf32>
      tpu.vector_store %arg13[%c0_77, %c0_78, %c0_79], %93 {strides = array<i32>} : memref<1x256x128xf32, #tpu.memory_space<vmem>>, vector<1x256x128xf32>,
    } else {
    }
    return
  }
  func.func @transform_0(%arg0: i32, %arg1: i32) -> (i32, i32, i32) {
    %c0_i32 = arith.constant 0 : i32
    %c0_i32_0 = arith.constant 0 : i32
    %c0_i32_1 = arith.constant 0 : i32
    return %arg0, %c0_i32, %c0_i32_0 : i32, i32, i32
  }
  func.func @transform_1(%arg0: i32, %arg1: i32) -> (i32, i32) {
    %c0_i32 = arith.constant 0 : i32
    %c0_i32_0 = arith.constant 0 : i32
    %c0_i32_1 = arith.constant 0 : i32
    return %c0_i32, %c0_i32_0 : i32, i32
  }
  func.func @transform_2(%arg0: i32, %arg1: i32) -> (i32, i32) {
    %c0_i32 = arith.constant 0 : i32
    %c0_i32_0 = arith.constant 0 : i32
    %c0_i32_1 = arith.constant 0 : i32
    return %c0_i32, %c0_i32_0 : i32, i32
  }
  func.func @transform_3(%arg0: i32, %arg1: i32) -> (i32, i32) {
    %c0_i32 = arith.constant 0 : i32
    %c0_i32_0 = arith.constant 0 : i32
    %c0_i32_1 = arith.constant 0 : i32
    return %c0_i32, %c0_i32_0 : i32, i32
  }
  func.func @transform_4(%arg0: i32, %arg1: i32) -> (i32, i32) {
    %c0_i32 = arith.constant 0 : i32
    %c0_i32_0 = arith.constant 0 : i32
    %c0_i32_1 = arith.constant 0 : i32
    return %c0_i32, %c0_i32_0 : i32, i32
  }
  func.func @transform_5(%arg0: i32, %arg1: i32) -> (i32, i32, i32) {
    %c0_i32 = arith.constant 0 : i32
    %c0_i32_0 = arith.constant 0 : i32
    %c0_i32_1 = arith.constant 0 : i32
    return %c0_i32, %c0_i32_0, %arg1 : i32, i32, i32
  }
  func.func @transform_6(%arg0: i32, %arg1: i32) -> (i32, i32) {
    %c0_i32 = arith.constant 0 : i32
    %c0_i32_0 = arith.constant 0 : i32
    return %c0_i32, %arg1 : i32, i32
  }
  func.func @transform_7(%arg0: i32, %arg1: i32) -> (i32, i32) {
    %c0_i32 = arith.constant 0 : i32
    %c0_i32_0 = arith.constant 0 : i32
    return %arg1, %c0_i32 : i32, i32
  }
  func.func @transform_8(%arg0: i32, %arg1: i32) -> (i32, i32) {
    %c0_i32 = arith.constant 0 : i32
    %c0_i32_0 = arith.constant 0 : i32
    %c0_i32_1 = arith.constant 0 : i32
    return %c0_i32, %c0_i32_0 : i32, i32
  }
  func.func @transform_9(%arg0: i32, %arg1: i32) -> (i32, i32) {
    %c0_i32 = arith.constant 0 : i32
    %c0_i32_0 = arith.constant 0 : i32
    %c0_i32_1 = arith.constant 0 : i32
    return %c0_i32, %c0_i32_0 : i32, i32
  }
  func.func @transform_10(%arg0: i32, %arg1: i32) -> (i32, i32) {
    %c0_i32 = arith.constant 0 : i32
    %c0_i32_0 = arith.constant 0 : i32
    %c0_i32_1 = arith.constant 0 : i32
    return %c0_i32, %c0_i32_0 : i32, i32
  }
  func.func @transform_11(%arg0: i32, %arg1: i32) -> (i32, i32, i32) {
    %c0_i32 = arith.constant 0 : i32
    %c0_i32_0 = arith.constant 0 : i32
    %c0_i32_1 = arith.constant 0 : i32
    return %arg0, %c0_i32, %c0_i32_0 : i32, i32, i32
  }
}

</mosaic_0001>

<llo_original>
// kernel: tpu_custom_call.1
$region0: #{tpu_custom_call.1}
  #allocation0 [shape = 'u32[]', space=smem, size = 0x4, offset = 0x4, fixed_abs, tag = 'smem constant byte address 0x4 - core index']
  #allocation1 [shape = 'u32[72,128]{1,0:T(1,128)}', space=vmem, size = 0x9000, scoped, tag = 'internal scratch']
  #allocation2 [shape = 'bf16[3,288,128]{2,1,0:T(8,128)(2,1)}', space=vmem, size = 0x36000, scoped, tag = 'scratch operand']
  #allocation3 [shape = 'f32[256,256]{1,0:T(8,128)}', space=vmem, size = 0x40000, scoped, tag = 'scratch operand']
  %s0 = inlined_call_operand.hbm [shape: bf16[2,256,256], index: 0, kind: input, shape index: {}]
  %s1 = inlined_call_operand.vmem [shape: bf16[256,1], index: 1, kind: input, shape index: {}]
  %s2 = inlined_call_operand.vmem [shape: bf16[256,1], index: 2, kind: input, shape index: {}]
  %s3 = inlined_call_operand.hbm [shape: bf16[256,128], index: 3, kind: input, shape index: {}]
  %s4 = inlined_call_operand.hbm [shape: f32[1,128], index: 4, kind: input, shape index: {}]
  %s5 = inlined_call_operand.hbm [shape: bf16[9,128,256], index: 5, kind: input, shape index: {}]
  %s6 = inlined_call_operand.vmem [shape: f32[1,256], index: 6, kind: input, shape index: {}]
  %s7 = inlined_call_operand.vmem [shape: bf16[256,256], index: 7, kind: input, shape index: {}]
  %s8 = inlined_call_operand.vmem [shape: f32[1,256], index: 8, kind: input, shape index: {}]
  %s9 = inlined_call_operand.hbm [shape: bf16[256,128], index: 9, kind: input, shape index: {}]
  %s10 = inlined_call_operand.vmem [shape: f32[1,128], index: 10, kind: input, shape index: {}]
  %s11 = inlined_call_operand.hbm [shape: f32[2,256,128], index: 11, kind: output, shape index: {}]
  %s12 = sld [smem:[#allocation0]]
  $region113: #{tpu_custom_call.1} parent=0
    _
  %s14 = ssub.s32 1, %s12
  %s15 = scalar_select 0, %s14, %s12
  $region1: #{tpu_custom_call.1} parent=0
    #allocation4 [shape = 'u8[262144]{0}', space=vmem, size = 0x40000, scoped, tag = 'input window, operand 0']
    #allocation5 [shape = 's32[2]{0}', space=sflag, size = 0x8, scoped, tag = 'scoped memory for tpu_custom_call.1']
    #allocation6 [shape = 's32[2]{0}', space=sflag, size = 0x8, scoped, tag = 'scoped memory for tpu_custom_call.1']
    #allocation7 [shape = 'u8[65536]{0}', space=vmem, size = 0x10000, scoped, tag = 'input window, operand 3, single buffered']
    #allocation8 [shape = 's32[1]{0}', space=sflag, size = 0x4, scoped, tag = 'scoped memory for tpu_custom_call.1']
    #allocation9 [shape = 'u8[512]{0}', space=vmem, size = 0x400, scoped, tag = 'input window, operand 4, single buffered']
    #allocation10 [shape = 'u8[589824]{0}', space=vmem, size = 0x90000, scoped, tag = 'input window, operand 5']
    #allocation11 [shape = 's32[2]{0}', space=sflag, size = 0x8, scoped, tag = 'scoped memory for tpu_custom_call.1']
    #allocation12 [shape = 'u8[65536]{0}', space=vmem, size = 0x10000, scoped, tag = 'input window, operand 9, single buffered']
    #allocation13 [shape = 'u8[262144]{0}', space=vmem, size = 0x40000, scoped, tag = 'output window, operand 0']
    %16 = vsyncpa [#allocation5], 0
    %s17 = scalar_lea.sflag [#allocation5], 1
    %18 = vsyncpa %s17, 0
    %19 = vsyncpa [#allocation8], 0
    %20 = vsyncpa [#allocation11], 0
    %s21 = scalar_lea.sflag [#allocation11], 1
    %22 = vsyncpa %s21, 0
    %23 = vsyncpa [#allocation6], 0
    %s24 = scalar_lea.sflag [#allocation6], 1
    %25 = vsyncpa %s24, 0
    loop: start=0, step=1, limit=6
    $region2: #{tpu_custom_call.1} parent=1 // loop_pre_header
      _
    $region3: #{tpu_custom_call.1} parent=1 // loop_header
      %s27 = sphi 0, %s31
      %p28 = scmp.ge.s32.totalorder %s27, 6
      %s34 = sphi 0, %s46
      %s35 = sphi 0, %s42
      %s36 = sphi 0, %s34
      %s37 = sphi 0, %s35
      %s38 = sphi 0, %s36
      %s39 = sphi 0, %s37
      %s49 = sphi 0, %s51
      %s52 = sphi 0, %s49
      %s53 = sphi 0, %s52
      %s69 = sphi 0, %s53
      %s73 = sphi 0, %s73
      %s75 = sphi 0, %s73
      %s76 = sphi 0, %s75
      %s90 = sphi 0, %s76
      %s94 = sphi 0, %s94
      %s96 = sphi 0, %s94
      %s97 = sphi 0, %s96
      %s111 = sphi 0, %s97
      %s115 = sphi 0, %s115
      %s117 = sphi 0, %s115
      %s118 = sphi 0, %s117
      %s132 = sphi 0, %s118
      %s136 = sphi 0, %s136
      %s138 = sphi 0, %s136
      %s139 = sphi 0, %s138
      %s153 = sphi 0, %s139
      %s159 = sphi 0, %s161
      %s162 = sphi 0, %s159
      %s163 = sphi 0, %s162
      %s179 = sphi 0, %s163
      %s185 = sphi 0, %s187
      %s188 = sphi 0, %s185
      %s189 = sphi 0, %s188
      %s205 = sphi 0, %s189
      %s211 = sphi 0, %s213
      %s214 = sphi 0, %s211
      %s215 = sphi 0, %s214
      %s231 = sphi 0, %s215
      %s235 = sphi 0, %s235
      %s237 = sphi 0, %s235
      %s238 = sphi 0, %s237
      %s252 = sphi 0, %s238
      %s256 = sphi 0, %s256
      %s258 = sphi 0, %s256
      %s259 = sphi 0, %s258
      %s273 = sphi 0, %s259
      %s277 = sphi 0, %s277
      %s279 = sphi 0, %s277
      %s280 = sphi 0, %s279
      %s294 = sphi 0, %s280
      %s300 = sphi 0, %s302
      %s303 = sphi 0, %s300
      %s304 = sphi 0, %s303
      %s320 = sphi 0, %s304
    $region4: #{tpu_custom_call.1} parent=1 // loop_header_branch
      %30 = sbr.rel (%p28) target = $region8
    $region5: #{tpu_custom_call.1} parent=1 // loop_body
      %s32 = ssub.s32 %s27, 1
      %s33 = ssub.s32 %s27, 2
      %s40 = sadd.s32 1, %s35
      %p41 = scmp.ge.s32.totalorder %s40, 2
      %s42 = scalar_select %p41, 0, %s40
      %s43 = sadd.s32 1, %s34
      %s44 = scalar_select %p41, %s43, %s34
      %p45 = scmp.ge.s32.totalorder %s44, 2
      %s46 = scalar_select %p45, 0, %s44
      %s47 = ssub.s32 %s34, %s46
      %p48 = scmp.eq.s32.totalorder %s47, 0
      %s50 = sadd.s32 %s49, 1
      %s51 = scalar_select %p48, %s49, %s50
      %p54 = pneg %p48
      %p55 = scmp.eq.s32.totalorder %s27, 3
      %p56 = por %p54, %p55
      %p57 = scmp.ne.s32.totalorder %s49, %s52
      %p58 = scmp.eq.s32.totalorder %s27, 0
      %p59 = por %p57, %p58
      %p60 = scmp.ne.s32.totalorder %s49, %s52
      %p61 = scmp.eq.s32.totalorder %s32, 3
      %p62 = por %p60, %p61
      %p63 = scmp.ne.s32.totalorder %s52, %s53
      %p64 = scmp.eq.s32.totalorder %s32, 0
      %p65 = por %p63, %p64
      %p66 = scmp.ne.s32.totalorder %s52, %s53
      %p67 = scmp.eq.s32.totalorder %s33, 3
      %p68 = por %p66, %p67
      %p70 = scmp.ne.s32.totalorder %s53, %s69
      %p71 = scmp.eq.s32.totalorder %s33, 0
      %p72 = por %p70, %p71
      %s74 = sadd.s32 %s73, 1
      %p77 = scmp.eq.s32.totalorder %s27, 3
      %p78 = scmp.ne.s32.totalorder %s73, %s75
      %p79 = scmp.eq.s32.totalorder %s27, 0
      %p80 = por %p78, %p79
      %p81 = scmp.ne.s32.totalorder %s73, %s75
      %p82 = scmp.eq.s32.totalorder %s32, 3
      %p83 = por %p81, %p82
      %p84 = scmp.ne.s32.totalorder %s75, %s76
      %p85 = scmp.eq.s32.totalorder %s32, 0
      %p86 = por %p84, %p85
      %p87 = scmp.ne.s32.totalorder %s75, %s76
      %p88 = scmp.eq.s32.totalorder %s33, 3
      %p89 = por %p87, %p88
      %p91 = scmp.ne.s32.totalorder %s76, %s90
      %p92 = scmp.eq.s32.totalorder %s33, 0
      %p93 = por %p91, %p92
      %s95 = sadd.s32 %s94, 1
      %p98 = scmp.eq.s32.totalorder %s27, 3
      %p99 = scmp.ne.s32.totalorder %s94, %s96
      %p100 = scmp.eq.s32.totalorder %s27, 0
      %p101 = por %p99, %p100
      %p102 = scmp.ne.s32.totalorder %s94, %s96
      %p103 = scmp.eq.s32.totalorder %s32, 3
      %p104 = por %p102, %p103
      %p105 = scmp.ne.s32.totalorder %s96, %s97
      %p106 = scmp.eq.s32.totalorder %s32, 0
      %p107 = por %p105, %p106
      %p108 = scmp.ne.s32.totalorder %s96, %s97
      %p109 = scmp.eq.s32.totalorder %s33, 3
      %p110 = por %p108, %p109
      %p112 = scmp.ne.s32.totalorder %s97, %s111
      %p113 = scmp.eq.s32.totalorder %s33, 0
      %p114 = por %p112, %p113
      %s116 = sadd.s32 %s115, 1
      %p119 = scmp.eq.s32.totalorder %s27, 3
      %p120 = scmp.ne.s32.totalorder %s115, %s117
      %p121 = scmp.eq.s32.totalorder %s27, 0
      %p122 = por %p120, %p121
      %p123 = scmp.ne.s32.totalorder %s115, %s117
      %p124 = scmp.eq.s32.totalorder %s32, 3
      %p125 = por %p123, %p124
      %p126 = scmp.ne.s32.totalorder %s117, %s118
      %p127 = scmp.eq.s32.totalorder %s32, 0
      %p128 = por %p126, %p127
      %p129 = scmp.ne.s32.totalorder %s117, %s118
      %p130 = scmp.eq.s32.totalorder %s33, 3
      %p131 = por %p129, %p130
      %p133 = scmp.ne.s32.totalorder %s118, %s132
      %p134 = scmp.eq.s32.totalorder %s33, 0
      %p135 = por %p133, %p134
      %s137 = sadd.s32 %s136, 1
      %p140 = scmp.eq.s32.totalorder %s27, 3
      %p141 = scmp.ne.s32.totalorder %s136, %s138
      %p142 = scmp.eq.s32.totalorder %s27, 0
      %p143 = por %p141, %p142
      %p144 = scmp.ne.s32.totalorder %s136, %s138
      %p145 = scmp.eq.s32.totalorder %s32, 3
      %p146 = por %p144, %p145
      %p147 = scmp.ne.s32.totalorder %s138, %s139
      %p148 = scmp.eq.s32.totalorder %s32, 0
      %p149 = por %p147, %p148
      %p150 = scmp.ne.s32.totalorder %s138, %s139
      %p151 = scmp.eq.s32.totalorder %s33, 3
      %p152 = por %p150, %p151
      %p154 = scmp.ne.s32.totalorder %s139, %s153
      %p155 = scmp.eq.s32.totalorder %s33, 0
      %p156 = por %p154, %p155
      %s157 = ssub.s32 %s35, %s42
      %p158 = scmp.eq.s32.totalorder %s157, 0
      %s160 = sadd.s32 %s159, 1
      %s161 = scalar_select %p158, %s159, %s160
      %p164 = pneg %p158
      %p165 = scmp.eq.s32.totalorder %s27, 3
      %p166 = por %p164, %p165
      %p167 = scmp.ne.s32.totalorder %s159, %s162
      %p168 = scmp.eq.s32.totalorder %s27, 0
      %p169 = por %p167, %p168
      %p170 = scmp.ne.s32.totalorder %s159, %s162
      %p171 = scmp.eq.s32.totalorder %s32, 3
      %p172 = por %p170, %p171
      %p173 = scmp.ne.s32.totalorder %s162, %s163
      %p174 = scmp.eq.s32.totalorder %s32, 0
      %p175 = por %p173, %p174
      %p176 = scmp.ne.s32.totalorder %s162, %s163
      %p177 = scmp.eq.s32.totalorder %s33, 3
      %p178 = por %p176, %p177
      %p180 = scmp.ne.s32.totalorder %s163, %s179
      %p181 = scmp.eq.s32.totalorder %s33, 0
      %p182 = por %p180, %p181
      %s183 = ssub.s32 %s35, %s42
      %p184 = scmp.eq.s32.totalorder %s183, 0
      %s186 = sadd.s32 %s185, 1
      %s187 = scalar_select %p184, %s185, %s186
      %p190 = pneg %p184
      %p191 = scmp.eq.s32.totalorder %s27, 3
      %p192 = por %p190, %p191
      %p193 = scmp.ne.s32.totalorder %s185, %s188
      %p194 = scmp.eq.s32.totalorder %s27, 0
      %p195 = por %p193, %p194
      %p196 = scmp.ne.s32.totalorder %s185, %s188
      %p197 = scmp.eq.s32.totalorder %s32, 3
      %p198 = por %p196, %p197
      %p199 = scmp.ne.s32.totalorder %s188, %s189
      %p200 = scmp.eq.s32.totalorder %s32, 0
      %p201 = por %p199, %p200
      %p202 = scmp.ne.s32.totalorder %s188, %s189
      %p203 = scmp.eq.s32.totalorder %s33, 3
      %p204 = por %p202, %p203
      %p206 = scmp.ne.s32.totalorder %s189, %s205
      %p207 = scmp.eq.s32.totalorder %s33, 0
      %p208 = por %p206, %p207
      %s209 = ssub.s32 %s35, %s42
      %p210 = scmp.eq.s32.totalorder %s209, 0
      %s212 = sadd.s32 %s211, 1
      %s213 = scalar_select %p210, %s211, %s212
      %p216 = pneg %p210
      %p217 = scmp.eq.s32.totalorder %s27, 3
      %p218 = por %p216, %p217
      %p219 = scmp.ne.s32.totalorder %s211, %s214
      %p220 = scmp.eq.s32.totalorder %s27, 0
      %p221 = por %p219, %p220
      %p222 = scmp.ne.s32.totalorder %s211, %s214
      %p223 = scmp.eq.s32.totalorder %s32, 3
      %p224 = por %p222, %p223
      %p225 = scmp.ne.s32.totalorder %s214, %s215
      %p226 = scmp.eq.s32.totalorder %s32, 0
      %p227 = por %p225, %p226
      %p228 = scmp.ne.s32.totalorder %s214, %s215
      %p229 = scmp.eq.s32.totalorder %s33, 3
      %p230 = por %p228, %p229
      %p232 = scmp.ne.s32.totalorder %s215, %s231
      %p233 = scmp.eq.s32.totalorder %s33, 0
      %p234 = por %p232, %p233
      %s236 = sadd.s32 %s235, 1
      %p239 = scmp.eq.s32.totalorder %s27, 3
      %p240 = scmp.ne.s32.totalorder %s235, %s237
      %p241 = scmp.eq.s32.totalorder %s27, 0
      %p242 = por %p240, %p241
      %p243 = scmp.ne.s32.totalorder %s235, %s237
      %p244 = scmp.eq.s32.totalorder %s32, 3
      %p245 = por %p243, %p244
      %p246 = scmp.ne.s32.totalorder %s237, %s238
      %p247 = scmp.eq.s32.totalorder %s32, 0
      %p248 = por %p246, %p247
      %p249 = scmp.ne.s32.totalorder %s237, %s238
      %p250 = scmp.eq.s32.totalorder %s33, 3
      %p251 = por %p249, %p250
      %p253 = scmp.ne.s32.totalorder %s238, %s252
      %p254 = scmp.eq.s32.totalorder %s33, 0
      %p255 = por %p253, %p254
      %s257 = sadd.s32 %s256, 1
      %p260 = scmp.eq.s32.totalorder %s27, 3
      %p261 = scmp.ne.s32.totalorder %s256, %s258
      %p262 = scmp.eq.s32.totalorder %s27, 0
      %p263 = por %p261, %p262
      %p264 = scmp.ne.s32.totalorder %s256, %s258
      %p265 = scmp.eq.s32.totalorder %s32, 3
      %p266 = por %p264, %p265
      %p267 = scmp.ne.s32.totalorder %s258, %s259
      %p268 = scmp.eq.s32.totalorder %s32, 0
      %p269 = por %p267, %p268
      %p270 = scmp.ne.s32.totalorder %s258, %s259
      %p271 = scmp.eq.s32.totalorder %s33, 3
      %p272 = por %p270, %p271
      %p274 = scmp.ne.s32.totalorder %s259, %s273
      %p275 = scmp.eq.s32.totalorder %s33, 0
      %p276 = por %p274, %p275
      %s278 = sadd.s32 %s277, 1
      %p281 = scmp.eq.s32.totalorder %s27, 3
      %p282 = scmp.ne.s32.totalorder %s277, %s279
      %p283 = scmp.eq.s32.totalorder %s27, 0
      %p284 = por %p282, %p283
      %p285 = scmp.ne.s32.totalorder %s277, %s279
      %p286 = scmp.eq.s32.totalorder %s32, 3
      %p287 = por %p285, %p286
      %p288 = scmp.ne.s32.totalorder %s279, %s280
      %p289 = scmp.eq.s32.totalorder %s32, 0
      %p290 = por %p288, %p289
      %p291 = scmp.ne.s32.totalorder %s279, %s280
      %p292 = scmp.eq.s32.totalorder %s33, 3
      %p293 = por %p291, %p292
      %p295 = scmp.ne.s32.totalorder %s280, %s294
      %p296 = scmp.eq.s32.totalorder %s33, 0
      %p297 = por %p295, %p296
      %s298 = ssub.s32 %s34, %s46
      %p299 = scmp.eq.s32.totalorder %s298, 0
      %s301 = sadd.s32 %s300, 1
      %s302 = scalar_select %p299, %s300, %s301
      %p305 = pneg %p299
      %p306 = scmp.eq.s32.totalorder %s27, 3
      %p307 = por %p305, %p306
      %p308 = scmp.ne.s32.totalorder %s300, %s303
      %p309 = scmp.eq.s32.totalorder %s27, 0
      %p310 = por %p308, %p309
      %p311 = scmp.ne.s32.totalorder %s300, %s303
      %p312 = scmp.eq.s32.totalorder %s32, 3
      %p313 = por %p311, %p312
      %p314 = scmp.ne.s32.totalorder %s303, %s304
      %p315 = scmp.eq.s32.totalorder %s32, 0
      %p316 = por %p314, %p315
      %p317 = scmp.ne.s32.totalorder %s303, %s304
      %p318 = scmp.eq.s32.totalorder %s33, 3
      %p319 = por %p317, %p318
      %p321 = scmp.ne.s32.totalorder %s304, %s320
      %p322 = scmp.eq.s32.totalorder %s33, 0
      %p323 = por %p321, %p322
      %p324 = scmp.le.s32.totalorder 1, %s27
      %p325 = scmp.lt.s32.totalorder %s27, 5
      %p326 = pnand %p324, %p325
      %p327 = pneg %p326
      // Predicated region
      $region9: #{tpu_custom_call.1} parent=5 // pred_check
        _
      $region10: #{tpu_custom_call.1} parent=5 // pred_check_branch
        %329 = sbr.rel (%p326) target = $region12
      $region11: #{tpu_custom_call.1} parent=5 // pred_region
        %s330 = ssub.s32 %s27, 1
        // Predicated region
        $region13: #{tpu_custom_call.1} parent=11 // pred_check
          %p331 = pneg %p86
        $region14: #{tpu_custom_call.1} parent=11 // pred_check_branch
          %333 = sbr.rel (%p331) target = $region16
        $region15: #{tpu_custom_call.1} parent=11 // pred_region
          _
        $region16: #{tpu_custom_call.1} parent=11 // pred_fallthru
          _
        // Predicated region
        $region17: #{tpu_custom_call.1} parent=11 // pred_check
          %p334 = pneg %p107
        $region18: #{tpu_custom_call.1} parent=11 // pred_check_branch
          %336 = sbr.rel (%p334) target = $region20
        $region19: #{tpu_custom_call.1} parent=11 // pred_region
          _
        $region20: #{tpu_custom_call.1} parent=11 // pred_fallthru
          _
        // Predicated region
        $region21: #{tpu_custom_call.1} parent=11 // pred_check
          %p337 = pneg %p128
        $region22: #{tpu_custom_call.1} parent=11 // pred_check_branch
          %339 = sbr.rel (%p337) target = $region24
        $region23: #{tpu_custom_call.1} parent=11 // pred_region
          %341 = vsyncadd [#allocation8], 0
          %s342 = sshll.u32 %s3, 4
          %s343 = int_to_ptr.hbm [resolvable:$true] %s342
          %s344 = sshll.u32 [#allocation7], 4
          %s345 = int_to_ptr.vmem [resolvable:$true] %s344
          %350 = dma.hbm_to_vmem [thread:$0]  %s343, 2048, %s345, [#allocation8], 64, 64, 4
        $region24: #{tpu_custom_call.1} parent=11 // pred_fallthru
          _
        // Predicated region
        $region25: #{tpu_custom_call.1} parent=11 // pred_check
          %p351 = pneg %p149
        $region26: #{tpu_custom_call.1} parent=11 // pred_check_branch
          %353 = sbr.rel (%p351) target = $region28
        $region27: #{tpu_custom_call.1} parent=11 // pred_region
          %355 = vsyncadd [#allocation8], 0
          %s357 = sshll.u32 %s4, 4
          %s358 = int_to_ptr.hbm [resolvable:$true] %s357
          %s359 = sshll.u32 [#allocation9], 4
          %s360 = int_to_ptr.vmem [resolvable:$true] %s359
          %362 = dma.hbm_to_vmem [thread:$0]  %s358, 16, %s360, [#allocation8]
        $region28: #{tpu_custom_call.1} parent=11 // pred_fallthru
          _
        // Predicated region
        $region29: #{tpu_custom_call.1} parent=11 // pred_check
          %p363 = pneg %p248
        $region30: #{tpu_custom_call.1} parent=11 // pred_check_branch
          %365 = sbr.rel (%p363) target = $region32
        $region31: #{tpu_custom_call.1} parent=11 // pred_region
          _
        $region32: #{tpu_custom_call.1} parent=11 // pred_fallthru
          _
        // Predicated region
        $region33: #{tpu_custom_call.1} parent=11 // pred_check
          %p366 = pneg %p269
        $region34: #{tpu_custom_call.1} parent=11 // pred_check_branch
          %368 = sbr.rel (%p366) target = $region36
        $region35: #{tpu_custom_call.1} parent=11 // pred_region
          %370 = vsyncadd [#allocation11], 0
          %s371 = sshll.u32 %s9, 4
          %s372 = int_to_ptr.hbm [resolvable:$true] %s371
          %s373 = sshll.u32 [#allocation12], 4
          %s374 = int_to_ptr.vmem [resolvable:$true] %s373
          %379 = dma.hbm_to_vmem [thread:$0]  %s372, 2048, %s374, [#allocation11], 64, 64, 4
        $region36: #{tpu_custom_call.1} parent=11 // pred_fallthru
          _
        // Predicated region
        $region37: #{tpu_custom_call.1} parent=11 // pred_check
          %p380 = pneg %p290
        $region38: #{tpu_custom_call.1} parent=11 // pred_check_branch
          %382 = sbr.rel (%p380) target = $region40
        $region39: #{tpu_custom_call.1} parent=11 // pred_region
          _
        $region40: #{tpu_custom_call.1} parent=11 // pred_fallthru
          _
      $region12: #{tpu_custom_call.1} parent=5 // pred_fallthru
        _
      %p383 = scmp.lt.s32.totalorder %s27, 4
      // Predicated region
      $region41: #{tpu_custom_call.1} parent=5 // pred_check
        %p384 = pneg %p383
      $region42: #{tpu_custom_call.1} parent=5 // pred_check_branch
        %386 = sbr.rel (%p384) target = $region44
      $region43: #{tpu_custom_call.1} parent=5 // pred_region
        // Predicated region
        $region45: #{tpu_custom_call.1} parent=43 // pred_check
          %p387 = pneg %p59
        $region46: #{tpu_custom_call.1} parent=43 // pred_check_branch
          %389 = sbr.rel (%p387) target = $region48
        $region47: #{tpu_custom_call.1} parent=43 // pred_region
          %s390 = sand.u32 %s49, 1
          %s391 = scalar_lea.sflag [#allocation5], %s390
          %s392 = sand.u32 %s49, 1
          %s393 = smul.addr %s392, 256
          %s394 = scalar_lea.vmem [#allocation4], %s393
          %396 = vsyncadd %s391, 0
          %s397 = smul.addr %s34, 64
          %s398 = smul.addr %s397, 4
          %s399 = scalar_lea.hbm %s0, %s398
          %s400 = sshll.u32 %s399, 4
          %s401 = int_to_ptr.hbm [resolvable:$true] %s400
          %s402 = sshll.u32 %s394, 4
          %s403 = int_to_ptr.vmem [resolvable:$true] %s402
          %408 = dma.hbm_to_vmem [thread:$0]  %s401, 4096, %s403, %s391, 128, 128, 8
        $region48: #{tpu_custom_call.1} parent=43 // pred_fallthru
          _
        // Predicated region
        $region49: #{tpu_custom_call.1} parent=43 // pred_check
          %p409 = pneg %p169
        $region50: #{tpu_custom_call.1} parent=43 // pred_check_branch
          %411 = sbr.rel (%p409) target = $region52
        $region51: #{tpu_custom_call.1} parent=43 // pred_region
          %s412 = sand.u32 %s27, 1
          %s413 = scalar_lea.sflag [#allocation11], %s412
          %s414 = sand.u32 %s159, 1
          %s415 = smul.addr %s414, 576
          %s416 = scalar_lea.vmem [#allocation10], %s415
          %418 = vsyncadd %s413, 0
          %s419 = smul.addr %s35, 4
          %s420 = scalar_lea.hbm %s5, %s419
          %s421 = sshll.u32 %s420, 4
          %s422 = int_to_ptr.hbm [resolvable:$true] %s421
          %s423 = sshll.u32 %s416, 4
          %s424 = int_to_ptr.vmem [resolvable:$true] %s423
          %429 = dma.hbm_to_vmem [thread:$0]  %s422, 9216, %s424, %s413, 128, 64, 4
        $region52: #{tpu_custom_call.1} parent=43 // pred_fallthru
          _
        // Predicated region
        $region53: #{tpu_custom_call.1} parent=43 // pred_check
          %p430 = pneg %p195
        $region54: #{tpu_custom_call.1} parent=43 // pred_check_branch
          %432 = sbr.rel (%p430) target = $region56
        $region55: #{tpu_custom_call.1} parent=43 // pred_region
          %p433 = scmp.lt.s32.totalorder %s35, 1
          %s434 = scalar_select %p433, %s35, 1
          %s435 = scalar_lea.vmem %s6, %s434
        $region56: #{tpu_custom_call.1} parent=43 // pred_fallthru
          _
        // Predicated region
        $region57: #{tpu_custom_call.1} parent=43 // pred_check
          %p436 = pneg %p221
        $region58: #{tpu_custom_call.1} parent=43 // pred_check_branch
          %438 = sbr.rel (%p436) target = $region60
        $region59: #{tpu_custom_call.1} parent=43 // pred_region
          %s439 = smul.u32 16, %s35
          %p440 = scmp.lt.s32.totalorder %s439, 31
          %s441 = scalar_select %p440, %s439, 31
          %s442 = smul.addr %s441, 2
          %s443 = smul.addr %s442, 4
          %s444 = scalar_lea.vmem %s7, %s443
          %s445 = smul.u32 16, %s35
        $region60: #{tpu_custom_call.1} parent=43 // pred_fallthru
          _
      $region44: #{tpu_custom_call.1} parent=5 // pred_fallthru
        _
      %p446 = scmp.le.s32.totalorder 1, %s27
      %p447 = scmp.lt.s32.totalorder %s27, 5
      %p448 = pnand %p446, %p447
      %p449 = pneg %p448
      // Predicated region
      $region61: #{tpu_custom_call.1} parent=5 // pred_check
        _
      $region62: #{tpu_custom_call.1} parent=5 // pred_check_branch
        %451 = sbr.rel (%p448) target = $region64
      $region63: #{tpu_custom_call.1} parent=5 // pred_region
        %s452 = ssub.s32 %s27, 1
        %s453 = sand.u32 %s52, 1
        %s454 = scalar_lea.sflag [#allocation5], %s453
        %s455 = sand.u32 %s52, 1
        %s456 = smul.addr %s455, 256
        %s457 = scalar_lea.vmem [#allocation4], %s456
        // Predicated region
        $region65: #{tpu_custom_call.1} parent=63 // pred_check
          %p458 = pneg %p65
        $region66: #{tpu_custom_call.1} parent=63 // pred_check_branch
          %460 = sbr.rel (%p458) target = $region68
        $region67: #{tpu_custom_call.1} parent=63 // pred_region
          %462 = dma.done %s454, 4096
        $region68: #{tpu_custom_call.1} parent=63 // pred_fallthru
          _
        // Predicated region
        $region69: #{tpu_custom_call.1} parent=63 // pred_check
          %p463 = pneg %p128
        $region70: #{tpu_custom_call.1} parent=63 // pred_check_branch
          %465 = sbr.rel (%p463) target = $region72
        $region71: #{tpu_custom_call.1} parent=63 // pred_region
          %467 = dma.done [#allocation8], 2048
        $region72: #{tpu_custom_call.1} parent=63 // pred_fallthru
          _
        // Predicated region
        $region73: #{tpu_custom_call.1} parent=63 // pred_check
          %p468 = pneg %p149
        $region74: #{tpu_custom_call.1} parent=63 // pred_check_branch
          %470 = sbr.rel (%p468) target = $region76
        $region75: #{tpu_custom_call.1} parent=63 // pred_region
          %472 = dma.done [#allocation8], 16
        $region76: #{tpu_custom_call.1} parent=63 // pred_fallthru
          _
        %s473 = sand.u32 %s32, 1
        %s474 = scalar_lea.sflag [#allocation11], %s473
        %s475 = sand.u32 %s162, 1
        %s476 = smul.addr %s475, 576
        %s477 = scalar_lea.vmem [#allocation10], %s476
        // Predicated region
        $region77: #{tpu_custom_call.1} parent=63 // pred_check
          %p478 = pneg %p175
        $region78: #{tpu_custom_call.1} parent=63 // pred_check_branch
          %480 = sbr.rel (%p478) target = $region80
        $region79: #{tpu_custom_call.1} parent=63 // pred_region
          %482 = dma.done %s474, 9216
        $region80: #{tpu_custom_call.1} parent=63 // pred_fallthru
          _
        // Predicated region
        $region81: #{tpu_custom_call.1} parent=63 // pred_check
          %p483 = pneg %p269
        $region82: #{tpu_custom_call.1} parent=63 // pred_check_branch
          %485 = sbr.rel (%p483) target = $region84
        $region83: #{tpu_custom_call.1} parent=63 // pred_region
          %487 = dma.done [#allocation11], 2048
        $region84: #{tpu_custom_call.1} parent=63 // pred_fallthru
          _
        %s488 = sand.u32 %s52, 1
        %s489 = scalar_lea.sflag [#allocation5], %s488
        %s490 = sand.u32 %s52, 1
        %s491 = smul.addr %s490, 256
        %s492 = scalar_lea.vmem [#allocation4], %s491
        %p493 = pneg %p65
        %p494 = pneg %p62
        %p495 = pneg %p86
        %p496 = pneg %p83
        %p497 = pneg %p107
        %p498 = pneg %p104
        %p499 = pneg %p128
        %p500 = pneg %p125
        %p501 = pneg %p149
        %p502 = pneg %p146
        %s503 = sand.u32 %s32, 1
        %s504 = scalar_lea.sflag [#allocation11], %s503
        %s505 = sand.u32 %s162, 1
        %s506 = smul.addr %s505, 576
        %s507 = scalar_lea.vmem [#allocation10], %s506
        %p508 = pneg %p175
        %p509 = pneg %p172
        %p510 = scmp.lt.s32.totalorder %s37, 1
        %s511 = scalar_select %p510, %s37, 1
        %s512 = scalar_lea.vmem %s6, %s511
        %p513 = pneg %p201
        %p514 = pneg %p198
        %s515 = smul.u32 16, %s37
        %p516 = scmp.lt.s32.totalorder %s515, 31
        %s517 = scalar_select %p516, %s515, 31
        %s518 = smul.addr %s517, 2
        %s519 = smul.addr %s518, 4
        %s520 = scalar_lea.vmem %s7, %s519
        %p521 = pneg %p227
        %p522 = pneg %p224
        %p523 = pneg %p248
        %p524 = pneg %p245
        %p525 = pneg %p269
        %p526 = pneg %p266
        %p527 = pneg %p290
        %p528 = pneg %p287
        %p529 = pneg %p316
        %p530 = pneg %p313
        %s531 = sand.u32 %s303, 1
        %s532 = scalar_lea.sflag [#allocation6], %s531
        %s533 = sand.u32 %s303, 1
        %s534 = smul.addr %s533, 256
        %s535 = scalar_lea.vmem [#allocation13], %s534
        %p536 = scmp.lt.s32.totalorder %s37, 1
        %s537 = scalar_select %p536, %s37, 1
        %s538 = scalar_lea.vmem %s6, %s537
        %s539 = smul.u32 16, %s37
        %p540 = scmp.lt.s32.totalorder %s539, 31
        %s541 = scalar_select %p540, %s539, 31
        %s542 = smul.addr %s541, 2
        %s543 = smul.addr %s542, 4
        %s544 = scalar_lea.vmem %s7, %s543
        %s545 = smul.u32 16, %s37
        %p547 = scmp.eq.s32.totalorder %s37, 0
        // Predicated region
        $region85: #{tpu_custom_call.1} parent=63 // pred_check
          %p548 = pneg %p547
        $region86: #{tpu_custom_call.1} parent=63 // pred_check_branch
          %550 = sbr.rel (%p548) target = $region88
        $region87: #{tpu_custom_call.1} parent=63 // pred_region
          %551 = vst [vmem:[#allocation2] sm:$0xf] 0
          %552 = vst [vmem:[#allocation2 + $0x4] sm:$0xf] 0
          %553 = vst [vmem:[#allocation2 + $0x88] sm:$0xf] 0
          %554 = vst [vmem:[#allocation2 + $0x8c] sm:$0xf] 0
          %s555 = scalar_lea.vmem [#allocation2], 144
          %556 = vst [vmem:[%s555] sm:$0xf] 0
          %557 = vst [vmem:[%s555 + $0x4] sm:$0xf] 0
          %558 = vst [vmem:[%s555 + $0x88] sm:$0xf] 0
          %559 = vst [vmem:[%s555 + $0x8c] sm:$0xf] 0
          %s560 = scalar_lea.vmem [#allocation2], 288
          %561 = vst [vmem:[%s560] sm:$0xf] 0
          %562 = vst [vmem:[%s560 + $0x4] sm:$0xf] 0
          %563 = vst [vmem:[%s560 + $0x88] sm:$0xf] 0
          %564 = vst [vmem:[%s560 + $0x8c] sm:$0xf] 0
          %v565 = vld [vmem:[%s457] sm:$0xff]
          %v566 = vld [vmem:[%s457 + $0x8] sm:$0xff]
          %v567 = vld [vmem:[%s457 + $0x10] sm:$0xff]
          %v568 = vld [vmem:[%s457 + $0x18] sm:$0xff]
          %v569 = vld [vmem:[%s457 + $0x20] sm:$0xff]
          %v570 = vld [vmem:[%s457 + $0x28] sm:$0xff]
          %v571 = vld [vmem:[%s457 + $0x30] sm:$0xff]
          %v572 = vld [vmem:[%s457 + $0x38] sm:$0xff]
          %v573 = vld [vmem:[%s457 + $0x40] sm:$0xff]
          %v574 = vld [vmem:[%s457 + $0x48] sm:$0xff]
          %v575 = vld [vmem:[%s457 + $0x50] sm:$0xff]
          %v576 = vld [vmem:[%s457 + $0x58] sm:$0xff]
          %v577 = vld [vmem:[%s457 + $0x60] sm:$0xff]
          %v578 = vld [vmem:[%s457 + $0x68] sm:$0xff]
          %v579 = vld [vmem:[%s457 + $0x70] sm:$0xff]
          %v580 = vld [vmem:[%s457 + $0x78] sm:$0xff]
          %v581 = vld [vmem:[%s457 + $0x80] sm:$0xff]
          %v582 = vld [vmem:[%s457 + $0x88] sm:$0xff]
          %v583 = vld [vmem:[%s457 + $0x90] sm:$0xff]
          %v584 = vld [vmem:[%s457 + $0x98] sm:$0xff]
          %v585 = vld [vmem:[%s457 + $0xa0] sm:$0xff]
          %v586 = vld [vmem:[%s457 + $0xa8] sm:$0xff]
          %v587 = vld [vmem:[%s457 + $0xb0] sm:$0xff]
          %v588 = vld [vmem:[%s457 + $0xb8] sm:$0xff]
          %v589 = vld [vmem:[%s457 + $0xc0] sm:$0xff]
          %v590 = vld [vmem:[%s457 + $0xc8] sm:$0xff]
          %v591 = vld [vmem:[%s457 + $0xd0] sm:$0xff]
          %v592 = vld [vmem:[%s457 + $0xd8] sm:$0xff]
          %v593 = vld [vmem:[%s457 + $0xe0] sm:$0xff]
          %v594 = vld [vmem:[%s457 + $0xe8] sm:$0xff]
          %v595 = vld [vmem:[%s457 + $0xf0] sm:$0xff]
          %v596 = vld [vmem:[%s457 + $0xf8] sm:$0xff]
          %v597 = vld [vmem:[#allocation7] sm:$0xf]
          %v598 = vld [vmem:[#allocation7 + $0x4] sm:$0xf]
          %v599 = vld [vmem:[#allocation7 + $0x8] sm:$0xf]
          %v600 = vld [vmem:[#allocation7 + $0xc] sm:$0xf]
          %v601 = vld [vmem:[#allocation7 + $0x10] sm:$0xf]
          %v602 = vld [vmem:[#allocation7 + $0x14] sm:$0xf]
          %v603 = vld [vmem:[#allocation7 + $0x18] sm:$0xf]
          %v604 = vld [vmem:[#allocation7 + $0x1c] sm:$0xf]
          %v605 = vld [vmem:[#allocation7 + $0x20] sm:$0xf]
          %v606 = vld [vmem:[#allocation7 + $0x24] sm:$0xf]
          %v607 = vld [vmem:[#allocation7 + $0x28] sm:$0xf]
          %v608 = vld [vmem:[#allocation7 + $0x2c] sm:$0xf]
          %v609 = vld [vmem:[#allocation7 + $0x30] sm:$0xf]
          %v610 = vld [vmem:[#allocation7 + $0x34] sm:$0xf]
          %v611 = vld [vmem:[#allocation7 + $0x38] sm:$0xf]
          %v612 = vld [vmem:[#allocation7 + $0x3c] sm:$0xf]
          %v613 = vld [vmem:[#allocation7 + $0x40] sm:$0xf]
          %v614 = vld [vmem:[#allocation7 + $0x44] sm:$0xf]
          %v615 = vld [vmem:[#allocation7 + $0x48] sm:$0xf]
          %v616 = vld [vmem:[#allocation7 + $0x4c] sm:$0xf]
          %v617 = vld [vmem:[#allocation7 + $0x50] sm:$0xf]
          %v618 = vld [vmem:[#allocation7 + $0x54] sm:$0xf]
          %v619 = vld [vmem:[#allocation7 + $0x58] sm:$0xf]
          %v620 = vld [vmem:[#allocation7 + $0x5c] sm:$0xf]
          %v621 = vld [vmem:[#allocation7 + $0x60] sm:$0xf]
          %v622 = vld [vmem:[#allocation7 + $0x64] sm:$0xf]
          %v623 = vld [vmem:[#allocation7 + $0x68] sm:$0xf]
          %v624 = vld [vmem:[#allocation7 + $0x6c] sm:$0xf]
          %v625 = vld [vmem:[#allocation7 + $0x70] sm:$0xf]
          %v626 = vld [vmem:[#allocation7 + $0x74] sm:$0xf]
          %v627 = vld [vmem:[#allocation7 + $0x78] sm:$0xf]
          %v628 = vld [vmem:[#allocation7 + $0x7c] sm:$0xf]
          %v629 = vld [vmem:[#allocation9] sm:$0x1]
          %v631 = vperm.slane %v629, 0
          %v665 = vunpack.c.l.b16 %v565
          %v666 = vunpack.c.h.b16 %v565
          %v667 = vunpack.c.l.b16 %v566
          %v668 = vunpack.c.h.b16 %v566
          %v669 = vunpack.c.l.b16 %v567
          %v670 = vunpack.c.h.b16 %v567
          %v671 = vunpack.c.l.b16 %v568
          %v672 = vunpack.c.h.b16 %v568
          %v673 = vunpack.c.l.b16 %v569
          %v674 = vunpack.c.h.b16 %v569
          %v675 = vunpack.c.l.b16 %v570
          %v676 = vunpack.c.h.b16 %v570
          %v677 = vunpack.c.l.b16 %v571
          %v678 = vunpack.c.h.b16 %v571
          %v679 = vunpack.c.l.b16 %v572
          %v680 = vunpack.c.h.b16 %v572
          %v681 = vunpack.c.l.b16 %v573
          %v682 = vunpack.c.h.b16 %v573
          %v683 = vunpack.c.l.b16 %v574
          %v684 = vunpack.c.h.b16 %v574
          %v685 = vunpack.c.l.b16 %v575
          %v686 = vunpack.c.h.b16 %v575
          %v687 = vunpack.c.l.b16 %v576
          %v688 = vunpack.c.h.b16 %v576
          %v689 = vunpack.c.l.b16 %v577
          %v690 = vunpack.c.h.b16 %v577
          %v691 = vunpack.c.l.b16 %v578
          %v692 = vunpack.c.h.b16 %v578
          %v693 = vunpack.c.l.b16 %v579
          %v694 = vunpack.c.h.b16 %v579
          %v695 = vunpack.c.l.b16 %v580
          %v696 = vunpack.c.h.b16 %v580
          %v697 = vunpack.c.l.b16 %v581
          %v698 = vunpack.c.h.b16 %v581
          %v699 = vunpack.c.l.b16 %v582
          %v700 = vunpack.c.h.b16 %v582
          %v701 = vunpack.c.l.b16 %v583
          %v702 = vunpack.c.h.b16 %v583
          %v703 = vunpack.c.l.b16 %v584
          %v704 = vunpack.c.h.b16 %v584
          %v705 = vunpack.c.l.b16 %v585
          %v706 = vunpack.c.h.b16 %v585
          %v707 = vunpack.c.l.b16 %v586
          %v708 = vunpack.c.h.b16 %v586
          %v709 = vunpack.c.l.b16 %v587
          %v710 = vunpack.c.h.b16 %v587
          %v711 = vunpack.c.l.b16 %v588
          %v712 = vunpack.c.h.b16 %v588
          %v713 = vunpack.c.l.b16 %v589
          %v714 = vunpack.c.h.b16 %v589
          %v715 = vunpack.c.l.b16 %v590
          %v716 = vunpack.c.h.b16 %v590
          %v717 = vunpack.c.l.b16 %v591
          %v718 = vunpack.c.h.b16 %v591
          %v719 = vunpack.c.l.b16 %v592
          %v720 = vunpack.c.h.b16 %v592
          %v721 = vunpack.c.l.b16 %v593
          %v722 = vunpack.c.h.b16 %v593
          %v723 = vunpack.c.l.b16 %v594
          %v724 = vunpack.c.h.b16 %v594
          %v725 = vunpack.c.l.b16 %v595
          %v726 = vunpack.c.h.b16 %v595
          %v727 = vunpack.c.l.b16 %v596
          %v728 = vunpack.c.h.b16 %v596
          %v729 = vpack.c.b16 %v667, %v665
          %v730 = vpack.c.b16 %v668, %v666
          %v731 = vpack.c.b16 %v671, %v669
          %v732 = vpack.c.b16 %v672, %v670
          %v733 = vpack.c.b16 %v675, %v673
          %v734 = vpack.c.b16 %v676, %v674
          %v735 = vpack.c.b16 %v679, %v677
          %v736 = vpack.c.b16 %v680, %v678
          %v737 = vpack.c.b16 %v683, %v681
          %v738 = vpack.c.b16 %v684, %v682
          %v739 = vpack.c.b16 %v687, %v685
          %v740 = vpack.c.b16 %v688, %v686
          %v741 = vpack.c.b16 %v691, %v689
          %v742 = vpack.c.b16 %v692, %v690
          %v743 = vpack.c.b16 %v695, %v693
          %v744 = vpack.c.b16 %v696, %v694
          %v745 = vpack.c.b16 %v699, %v697
          %v746 = vpack.c.b16 %v700, %v698
          %v747 = vpack.c.b16 %v703, %v701
          %v748 = vpack.c.b16 %v704, %v702
          %v749 = vpack.c.b16 %v707, %v705
          %v750 = vpack.c.b16 %v708, %v706
          %v751 = vpack.c.b16 %v711, %v709
          %v752 = vpack.c.b16 %v712, %v710
          %v753 = vpack.c.b16 %v715, %v713
          %v754 = vpack.c.b16 %v716, %v714
          %v755 = vpack.c.b16 %v719, %v717
          %v756 = vpack.c.b16 %v720, %v718
          %v757 = vpack.c.b16 %v723, %v721
          %v758 = vpack.c.b16 %v724, %v722
          %v759 = vpack.c.b16 %v727, %v725
          %v760 = vpack.c.b16 %v728, %v726
          %v825 = vunpack.c.l.b16 %v597
          %v826 = vunpack.c.l.b16 %v598
          %v827 = vunpack.c.l.b16 %v599
          %v828 = vunpack.c.l.b16 %v600
          %v829 = vunpack.c.l.b16 %v601
          %v830 = vunpack.c.l.b16 %v602
          %v831 = vunpack.c.l.b16 %v603
          %v832 = vunpack.c.l.b16 %v604
          %v833 = vunpack.c.l.b16 %v605
          %v834 = vunpack.c.l.b16 %v606
          %v835 = vunpack.c.l.b16 %v607
          %v836 = vunpack.c.l.b16 %v608
          %v837 = vunpack.c.l.b16 %v609
          %v838 = vunpack.c.l.b16 %v610
          %v839 = vunpack.c.l.b16 %v611
          %v840 = vunpack.c.l.b16 %v612
          %v841 = vunpack.c.l.b16 %v613
          %v842 = vunpack.c.l.b16 %v614
          %v843 = vunpack.c.l.b16 %v615
          %v844 = vunpack.c.l.b16 %v616
          %v845 = vunpack.c.l.b16 %v617
          %v846 = vunpack.c.l.b16 %v618
          %v847 = vunpack.c.l.b16 %v619
          %v848 = vunpack.c.l.b16 %v620
          %v849 = vunpack.c.l.b16 %v621
          %v850 = vunpack.c.l.b16 %v622
          %v851 = vunpack.c.l.b16 %v623
          %v852 = vunpack.c.l.b16 %v624
          %v853 = vunpack.c.l.b16 %v625
          %v854 = vunpack.c.l.b16 %v626
          %v855 = vunpack.c.l.b16 %v627
          %v856 = vunpack.c.l.b16 %v628
          %v857 = vpack.c.b16 %v826, %v825
          %v858 = vpack.c.b16 %v828, %v827
          %v859 = vpack.c.b16 %v830, %v829
          %v860 = vpack.c.b16 %v832, %v831
          %v861 = vpack.c.b16 %v834, %v833
          %v862 = vpack.c.b16 %v836, %v835
          %v863 = vpack.c.b16 %v838, %v837
          %v864 = vpack.c.b16 %v840, %v839
          %v865 = vpack.c.b16 %v842, %v841
          %v866 = vpack.c.b16 %v844, %v843
          %v867 = vpack.c.b16 %v846, %v845
          %v868 = vpack.c.b16 %v848, %v847
          %v869 = vpack.c.b16 %v850, %v849
          %v870 = vpack.c.b16 %v852, %v851
          %v871 = vpack.c.b16 %v854, %v853
          %v872 = vpack.c.b16 %v856, %v855
          %889 = vmatpush.bf16.msra.mxu0 %v864
          %890 = vmatpush.bf16.msra.mxu0 %v863
          %891 = vmatpush.bf16.msra.mxu0 %v862
          %892 = vmatpush.bf16.msra.mxu0 %v861
          %893 = vmatpush.bf16.msra.mxu0 %v860
          %894 = vmatpush.bf16.msra.mxu0 %v859
          %895 = vmatpush.bf16.msra.mxu0 %v858
          %896 = vmatpush.bf16.msra.mxu0 %v857
          %897 = vmatmul.bf16.gmra.mxu0 %v729
          %v898 = vpop.f32.mrf.mxu0
          %v899 = vadd.f32 %v631, %v898
          %v900 = vpop.f32.mrf.mxu0
          %v901 = vadd.f32 %v631, %v900
          %902 = vmatmul.bf16.gmra.mxu0 %v731
          %v903 = vpop.f32.mrf.mxu0
          %v904 = vadd.f32 %v631, %v903
          %v905 = vpop.f32.mrf.mxu0
          %v906 = vadd.f32 %v631, %v905
          %907 = vmatmul.bf16.gmra.mxu0 %v733
          %v908 = vpop.f32.mrf.mxu0
          %v909 = vadd.f32 %v631, %v908
          %v910 = vpop.f32.mrf.mxu0
          %v911 = vadd.f32 %v631, %v910
          %912 = vmatmul.bf16.gmra.mxu0 %v735
          %v913 = vpop.f32.mrf.mxu0
          %v914 = vadd.f32 %v631, %v913
          %v915 = vpop.f32.mrf.mxu0
          %v916 = vadd.f32 %v631, %v915
          %917 = vmatmul.bf16.gmra.mxu0 %v737
          %v918 = vpop.f32.mrf.mxu0
          %v919 = vadd.f32 %v631, %v918
          %v920 = vpop.f32.mrf.mxu0
          %v921 = vadd.f32 %v631, %v920
          %922 = vmatmul.bf16.gmra.mxu0 %v739
          %v923 = vpop.f32.mrf.mxu0
          %v924 = vadd.f32 %v631, %v923
          %v925 = vpop.f32.mrf.mxu0
          %v926 = vadd.f32 %v631, %v925
          %927 = vmatmul.bf16.gmra.mxu0 %v741
          %v928 = vpop.f32.mrf.mxu0
          %v929 = vadd.f32 %v631, %v928
          %v930 = vpop.f32.mrf.mxu0
          %v931 = vadd.f32 %v631, %v930
          %932 = vmatmul.bf16.gmra.mxu0 %v743
          %v933 = vpop.f32.mrf.mxu0
          %v934 = vadd.f32 %v631, %v933
          %v935 = vpop.f32.mrf.mxu0
          %v936 = vadd.f32 %v631, %v935
          %937 = vmatmul.bf16.gmra.mxu0 %v745
          %v938 = vpop.f32.mrf.mxu0
          %v939 = vadd.f32 %v631, %v938
          %v940 = vpop.f32.mrf.mxu0
          %v941 = vadd.f32 %v631, %v940
          %942 = vmatmul.bf16.gmra.mxu0 %v747
          %v943 = vpop.f32.mrf.mxu0
          %v944 = vadd.f32 %v631, %v943
          %v945 = vpop.f32.mrf.mxu0
          %v946 = vadd.f32 %v631, %v945
          %947 = vmatmul.bf16.gmra.mxu0 %v749
          %v948 = vpop.f32.mrf.mxu0
          %v949 = vadd.f32 %v631, %v948
          %v950 = vpop.f32.mrf.mxu0
          %v951 = vadd.f32 %v631, %v950
          %952 = vmatmul.bf16.gmra.mxu0 %v751
          %v953 = vpop.f32.mrf.mxu0
          %v954 = vadd.f32 %v631, %v953
          %v955 = vpop.f32.mrf.mxu0
          %v956 = vadd.f32 %v631, %v955
          %957 = vmatmul.bf16.gmra.mxu0 %v753
          %v958 = vpop.f32.mrf.mxu0
          %v959 = vadd.f32 %v631, %v958
          %v960 = vpop.f32.mrf.mxu0
          %v961 = vadd.f32 %v631, %v960
          %962 = vmatmul.bf16.gmra.mxu0 %v755
          %v963 = vpop.f32.mrf.mxu0
          %v964 = vadd.f32 %v631, %v963
          %v965 = vpop.f32.mrf.mxu0
          %v966 = vadd.f32 %v631, %v965
          %967 = vmatmul.bf16.gmra.mxu0 %v757
          %v968 = vpop.f32.mrf.mxu0
          %v969 = vadd.f32 %v631, %v968
          %v970 = vpop.f32.mrf.mxu0
          %v971 = vadd.f32 %v631, %v970
          %972 = vmatmul.bf16.gmra.mxu0 %v759
          %v973 = vpop.f32.mrf.mxu0
          %v974 = vadd.f32 %v631, %v973
          %v975 = vpop.f32.mrf.mxu0
          %v976 = vadd.f32 %v631, %v975
          %977 = vdwg.mxu0
          %978 = vmatpush.bf16.msra.mxu0 %v872
          %979 = vmatpush.bf16.msra.mxu0 %v871
          %980 = vmatpush.bf16.msra.mxu0 %v870
          %981 = vmatpush.bf16.msra.mxu0 %v869
          %982 = vmatpush.bf16.msra.mxu0 %v868
          %983 = vmatpush.bf16.msra.mxu0 %v867
          %984 = vmatpush.bf16.msra.mxu0 %v866
          %985 = vmatpush.bf16.msra.mxu0 %v865
          %986 = vmatmul.bf16.gmra.mxu0 %v730
          %v987 = vpop.f32.mrf.mxu0
          %v988 = vadd.f32 %v899, %v987
          %v989 = vpop.f32.mrf.mxu0
          %v990 = vadd.f32 %v901, %v989
          %991 = vmatmul.bf16.gmra.mxu0 %v732
          %v992 = vpop.f32.mrf.mxu0
          %v993 = vadd.f32 %v904, %v992
          %v994 = vpop.f32.mrf.mxu0
          %v995 = vadd.f32 %v906, %v994
          %996 = vmatmul.bf16.gmra.mxu0 %v734
          %v997 = vpop.f32.mrf.mxu0
          %v998 = vadd.f32 %v909, %v997
          %v999 = vpop.f32.mrf.mxu0
          %v1000 = vadd.f32 %v911, %v999
          %1001 = vmatmul.bf16.gmra.mxu0 %v736
          %v1002 = vpop.f32.mrf.mxu0
          %v1003 = vadd.f32 %v914, %v1002
          %v1004 = vpop.f32.mrf.mxu0
          %v1005 = vadd.f32 %v916, %v1004
          %1006 = vmatmul.bf16.gmra.mxu0 %v738
          %v1007 = vpop.f32.mrf.mxu0
          %v1008 = vadd.f32 %v919, %v1007
          %v1009 = vpop.f32.mrf.mxu0
          %v1010 = vadd.f32 %v921, %v1009
          %1011 = vmatmul.bf16.gmra.mxu0 %v740
          %v1012 = vpop.f32.mrf.mxu0
          %v1013 = vadd.f32 %v924, %v1012
          %v1014 = vpop.f32.mrf.mxu0
          %v1015 = vadd.f32 %v926, %v1014
          %1016 = vmatmul.bf16.gmra.mxu0 %v742
          %v1017 = vpop.f32.mrf.mxu0
          %v1018 = vadd.f32 %v929, %v1017
          %v1019 = vpop.f32.mrf.mxu0
          %v1020 = vadd.f32 %v931, %v1019
          %1021 = vmatmul.bf16.gmra.mxu0 %v744
          %v1022 = vpop.f32.mrf.mxu0
          %v1023 = vadd.f32 %v934, %v1022
          %v1024 = vpop.f32.mrf.mxu0
          %v1025 = vadd.f32 %v936, %v1024
          %1026 = vmatmul.bf16.gmra.mxu0 %v746
          %v1027 = vpop.f32.mrf.mxu0
          %v1028 = vadd.f32 %v939, %v1027
          %v1029 = vpop.f32.mrf.mxu0
          %v1030 = vadd.f32 %v941, %v1029
          %1031 = vmatmul.bf16.gmra.mxu0 %v748
          %v1032 = vpop.f32.mrf.mxu0
          %v1033 = vadd.f32 %v944, %v1032
          %v1034 = vpop.f32.mrf.mxu0
          %v1035 = vadd.f32 %v946, %v1034
          %1036 = vmatmul.bf16.gmra.mxu0 %v750
          %v1037 = vpop.f32.mrf.mxu0
          %v1038 = vadd.f32 %v949, %v1037
          %v1039 = vpop.f32.mrf.mxu0
          %v1040 = vadd.f32 %v951, %v1039
          %1041 = vmatmul.bf16.gmra.mxu0 %v752
          %v1042 = vpop.f32.mrf.mxu0
          %v1043 = vadd.f32 %v954, %v1042
          %v1044 = vpop.f32.mrf.mxu0
          %v1045 = vadd.f32 %v956, %v1044
          %1046 = vmatmul.bf16.gmra.mxu0 %v754
          %v1047 = vpop.f32.mrf.mxu0
          %v1048 = vadd.f32 %v959, %v1047
          %v1049 = vpop.f32.mrf.mxu0
          %v1050 = vadd.f32 %v961, %v1049
          %1051 = vmatmul.bf16.gmra.mxu0 %v756
          %v1052 = vpop.f32.mrf.mxu0
          %v1053 = vadd.f32 %v964, %v1052
          %v1054 = vpop.f32.mrf.mxu0
          %v1055 = vadd.f32 %v966, %v1054
          %1056 = vmatmul.bf16.gmra.mxu0 %v758
          %v1057 = vpop.f32.mrf.mxu0
          %v1058 = vadd.f32 %v969, %v1057
          %v1059 = vpop.f32.mrf.mxu0
          %v1060 = vadd.f32 %v971, %v1059
          %1061 = vmatmul.bf16.gmra.mxu0 %v760
          %v1062 = vpop.f32.mrf.mxu0
          %v1063 = vadd.f32 %v974, %v1062
          %v1064 = vpop.f32.mrf.mxu0
          %v1065 = vadd.f32 %v976, %v1064
          %1066 = vdwg.mxu0
          %v1067 = vmax.f32 %v988, 0.0
          %v1068 = vmax.f32 %v990, 0.0
          %v1069 = vmax.f32 %v993, 0.0
          %v1070 = vmax.f32 %v995, 0.0
          %v1071 = vmax.f32 %v998, 0.0
          %v1072 = vmax.f32 %v1000, 0.0
          %v1073 = vmax.f32 %v1003, 0.0
          %v1074 = vmax.f32 %v1005, 0.0
          %v1075 = vmax.f32 %v1008, 0.0
          %v1076 = vmax.f32 %v1010, 0.0
          %v1077 = vmax.f32 %v1013, 0.0
          %v1078 = vmax.f32 %v1015, 0.0
          %v1079 = vmax.f32 %v1018, 0.0
          %v1080 = vmax.f32 %v1020, 0.0
          %v1081 = vmax.f32 %v1023, 0.0
          %v1082 = vmax.f32 %v1025, 0.0
          %v1083 = vmax.f32 %v1028, 0.0
          %v1084 = vmax.f32 %v1030, 0.0
          %v1085 = vmax.f32 %v1033, 0.0
          %v1086 = vmax.f32 %v1035, 0.0
          %v1087 = vmax.f32 %v1038, 0.0
          %v1088 = vmax.f32 %v1040, 0.0
          %v1089 = vmax.f32 %v1043, 0.0
          %v1090 = vmax.f32 %v1045, 0.0
          %v1091 = vmax.f32 %v1048, 0.0
          %v1092 = vmax.f32 %v1050, 0.0
          %v1093 = vmax.f32 %v1053, 0.0
          %v1094 = vmax.f32 %v1055, 0.0
          %v1095 = vmax.f32 %v1058, 0.0
          %v1096 = vmax.f32 %v1060, 0.0
          %v1097 = vmax.f32 %v1063, 0.0
          %v1098 = vmax.f32 %v1065, 0.0
          %v1099 = vpack.c.bf16 %v1067, %v1067
          %v1100 = vpack.c.bf16 %v1068, %v1068
          %v1101 = vpack.c.bf16 %v1069, %v1069
          %v1102 = vpack.c.bf16 %v1070, %v1070
          %v1103 = vpack.c.bf16 %v1071, %v1071
          %v1104 = vpack.c.bf16 %v1072, %v1072
          %v1105 = vpack.c.bf16 %v1073, %v1073
          %v1106 = vpack.c.bf16 %v1074, %v1074
          %v1107 = vpack.c.bf16 %v1075, %v1075
          %v1108 = vpack.c.bf16 %v1076, %v1076
          %v1109 = vpack.c.bf16 %v1077, %v1077
          %v1110 = vpack.c.bf16 %v1078, %v1078
          %v1111 = vpack.c.bf16 %v1079, %v1079
          %v1112 = vpack.c.bf16 %v1080, %v1080
          %v1113 = vpack.c.bf16 %v1081, %v1081
          %v1114 = vpack.c.bf16 %v1082, %v1082
          %v1115 = vpack.c.bf16 %v1083, %v1083
          %v1116 = vpack.c.bf16 %v1084, %v1084
          %v1117 = vpack.c.bf16 %v1085, %v1085
          %v1118 = vpack.c.bf16 %v1086, %v1086
          %v1119 = vpack.c.bf16 %v1087, %v1087
          %v1120 = vpack.c.bf16 %v1088, %v1088
          %v1121 = vpack.c.bf16 %v1089, %v1089
          %v1122 = vpack.c.bf16 %v1090, %v1090
          %v1123 = vpack.c.bf16 %v1091, %v1091
          %v1124 = vpack.c.bf16 %v1092, %v1092
          %v1125 = vpack.c.bf16 %v1093, %v1093
          %v1126 = vpack.c.bf16 %v1094, %v1094
          %v1127 = vpack.c.bf16 %v1095, %v1095
          %v1128 = vpack.c.bf16 %v1096, %v1096
          %v1129 = vpack.c.bf16 %v1097, %v1097
          %v1130 = vpack.c.bf16 %v1098, %v1098
          %1131 = vst [vmem:[%s555 + $0x8] sm:$0xf] %v1099
          %1132 = vst [vmem:[%s555 + $0xc] sm:$0xf] %v1100
          %1133 = vst [vmem:[%s555 + $0x10] sm:$0xf] %v1101
          %1134 = vst [vmem:[%s555 + $0x14] sm:$0xf] %v1102
          %1135 = vst [vmem:[%s555 + $0x18] sm:$0xf] %v1103
          %1136 = vst [vmem:[%s555 + $0x1c] sm:$0xf] %v1104
          %1137 = vst [vmem:[%s555 + $0x20] sm:$0xf] %v1105
          %1138 = vst [vmem:[%s555 + $0x24] sm:$0xf] %v1106
          %1139 = vst [vmem:[%s555 + $0x28] sm:$0xf] %v1107
          %1140 = vst [vmem:[%s555 + $0x2c] sm:$0xf] %v1108
          %1141 = vst [vmem:[%s555 + $0x30] sm:$0xf] %v1109
          %1142 = vst [vmem:[%s555 + $0x34] sm:$0xf] %v1110
          %1143 = vst [vmem:[%s555 + $0x38] sm:$0xf] %v1111
          %1144 = vst [vmem:[%s555 + $0x3c] sm:$0xf] %v1112
          %1145 = vst [vmem:[%s555 + $0x40] sm:$0xf] %v1113
          %1146 = vst [vmem:[%s555 + $0x44] sm:$0xf] %v1114
          %1147 = vst [vmem:[%s555 + $0x48] sm:$0xf] %v1115
          %1148 = vst [vmem:[%s555 + $0x4c] sm:$0xf] %v1116
          %1149 = vst [vmem:[%s555 + $0x50] sm:$0xf] %v1117
          %1150 = vst [vmem:[%s555 + $0x54] sm:$0xf] %v1118
          %1151 = vst [vmem:[%s555 + $0x58] sm:$0xf] %v1119
          %1152 = vst [vmem:[%s555 + $0x5c] sm:$0xf] %v1120
          %1153 = vst [vmem:[%s555 + $0x60] sm:$0xf] %v1121
          %1154 = vst [vmem:[%s555 + $0x64] sm:$0xf] %v1122
          %1155 = vst [vmem:[%s555 + $0x68] sm:$0xf] %v1123
          %1156 = vst [vmem:[%s555 + $0x6c] sm:$0xf] %v1124
          %1157 = vst [vmem:[%s555 + $0x70] sm:$0xf] %v1125
          %1158 = vst [vmem:[%s555 + $0x74] sm:$0xf] %v1126
          %1159 = vst [vmem:[%s555 + $0x78] sm:$0xf] %v1127
          %1160 = vst [vmem:[%s555 + $0x7c] sm:$0xf] %v1128
          %1161 = vst [vmem:[%s555 + $0x80] sm:$0xf] %v1129
          %1162 = vst [vmem:[%s555 + $0x84] sm:$0xf] %v1130
          %v1163 = vld [vmem:[%s1] sm:$0xf]
          %v1164 = vld [vmem:[%s1 + $0x4] sm:$0xf]
          %v1165 = vld [vmem:[%s1 + $0x8] sm:$0xf]
          %v1166 = vld [vmem:[%s1 + $0xc] sm:$0xf]
          %v1167 = vld [vmem:[%s1 + $0x10] sm:$0xf]
          %v1168 = vld [vmem:[%s1 + $0x14] sm:$0xf]
          %v1169 = vld [vmem:[%s1 + $0x18] sm:$0xf]
          %v1170 = vld [vmem:[%s1 + $0x1c] sm:$0xf]
          %v1171 = vld [vmem:[%s1 + $0x20] sm:$0xf]
          %v1172 = vld [vmem:[%s1 + $0x24] sm:$0xf]
          %v1173 = vld [vmem:[%s1 + $0x28] sm:$0xf]
          %v1174 = vld [vmem:[%s1 + $0x2c] sm:$0xf]
          %v1175 = vld [vmem:[%s1 + $0x30] sm:$0xf]
          %v1176 = vld [vmem:[%s1 + $0x34] sm:$0xf]
          %v1177 = vld [vmem:[%s1 + $0x38] sm:$0xf]
          %v1178 = vld [vmem:[%s1 + $0x3c] sm:$0xf]
          %v1179 = vld [vmem:[%s1 + $0x40] sm:$0xf]
          %v1180 = vld [vmem:[%s1 + $0x44] sm:$0xf]
          %v1181 = vld [vmem:[%s1 + $0x48] sm:$0xf]
          %v1182 = vld [vmem:[%s1 + $0x4c] sm:$0xf]
          %v1183 = vld [vmem:[%s1 + $0x50] sm:$0xf]
          %v1184 = vld [vmem:[%s1 + $0x54] sm:$0xf]
          %v1185 = vld [vmem:[%s1 + $0x58] sm:$0xf]
          %v1186 = vld [vmem:[%s1 + $0x5c] sm:$0xf]
          %v1187 = vld [vmem:[%s1 + $0x60] sm:$0xf]
          %v1188 = vld [vmem:[%s1 + $0x64] sm:$0xf]
          %v1189 = vld [vmem:[%s1 + $0x68] sm:$0xf]
          %v1190 = vld [vmem:[%s1 + $0x6c] sm:$0xf]
          %v1191 = vld [vmem:[%s1 + $0x70] sm:$0xf]
          %v1192 = vld [vmem:[%s1 + $0x74] sm:$0xf]
          %v1193 = vld [vmem:[%s1 + $0x78] sm:$0xf]
          %v1194 = vld [vmem:[%s1 + $0x7c] sm:$0xf]
          %v1195 = vld [vmem:[%s2] sm:$0xf]
          %v1196 = vld [vmem:[%s2 + $0x4] sm:$0xf]
          %v1197 = vld [vmem:[%s2 + $0x8] sm:$0xf]
          %v1198 = vld [vmem:[%s2 + $0xc] sm:$0xf]
          %v1199 = vld [vmem:[%s2 + $0x10] sm:$0xf]
          %v1200 = vld [vmem:[%s2 + $0x14] sm:$0xf]
          %v1201 = vld [vmem:[%s2 + $0x18] sm:$0xf]
          %v1202 = vld [vmem:[%s2 + $0x1c] sm:$0xf]
          %v1203 = vld [vmem:[%s2 + $0x20] sm:$0xf]
          %v1204 = vld [vmem:[%s2 + $0x24] sm:$0xf]
          %v1205 = vld [vmem:[%s2 + $0x28] sm:$0xf]
          %v1206 = vld [vmem:[%s2 + $0x2c] sm:$0xf]
          %v1207 = vld [vmem:[%s2 + $0x30] sm:$0xf]
          %v1208 = vld [vmem:[%s2 + $0x34] sm:$0xf]
          %v1209 = vld [vmem:[%s2 + $0x38] sm:$0xf]
          %v1210 = vld [vmem:[%s2 + $0x3c] sm:$0xf]
          %v1211 = vld [vmem:[%s2 + $0x40] sm:$0xf]
          %v1212 = vld [vmem:[%s2 + $0x44] sm:$0xf]
          %v1213 = vld [vmem:[%s2 + $0x48] sm:$0xf]
          %v1214 = vld [vmem:[%s2 + $0x4c] sm:$0xf]
          %v1215 = vld [vmem:[%s2 + $0x50] sm:$0xf]
          %v1216 = vld [vmem:[%s2 + $0x54] sm:$0xf]
          %v1217 = vld [vmem:[%s2 + $0x58] sm:$0xf]
          %v1218 = vld [vmem:[%s2 + $0x5c] sm:$0xf]
          %v1219 = vld [vmem:[%s2 + $0x60] sm:$0xf]
          %v1220 = vld [vmem:[%s2 + $0x64] sm:$0xf]
          %v1221 = vld [vmem:[%s2 + $0x68] sm:$0xf]
          %v1222 = vld [vmem:[%s2 + $0x6c] sm:$0xf]
          %v1223 = vld [vmem:[%s2 + $0x70] sm:$0xf]
          %v1224 = vld [vmem:[%s2 + $0x74] sm:$0xf]
          %v1225 = vld [vmem:[%s2 + $0x78] sm:$0xf]
          %v1226 = vld [vmem:[%s2 + $0x7c] sm:$0xf]
          %v1227 = vld [vmem:[%s555 + $0x4] sm:$0x8]
          %v1228 = vld [vmem:[%s555 + $0x8] sm:$0xf]
          %v1229 = vld [vmem:[%s555 + $0xc] sm:$0xf]
          %v1230 = vld [vmem:[%s555 + $0x10] sm:$0xf]
          %v1231 = vld [vmem:[%s555 + $0x14] sm:$0xf]
          %v1232 = vld [vmem:[%s555 + $0x18] sm:$0xf]
          %v1233 = vld [vmem:[%s555 + $0x1c] sm:$0xf]
          %v1234 = vld [vmem:[%s555 + $0x20] sm:$0xf]
          %v1235 = vld [vmem:[%s555 + $0x24] sm:$0xf]
          %v1236 = vld [vmem:[%s555 + $0x28] sm:$0xf]
          %v1237 = vld [vmem:[%s555 + $0x2c] sm:$0xf]
          %v1238 = vld [vmem:[%s555 + $0x30] sm:$0xf]
          %v1239 = vld [vmem:[%s555 + $0x34] sm:$0xf]
          %v1240 = vld [vmem:[%s555 + $0x38] sm:$0xf]
          %v1241 = vld [vmem:[%s555 + $0x3c] sm:$0xf]
          %v1242 = vld [vmem:[%s555 + $0x40] sm:$0xf]
          %v1243 = vld [vmem:[%s555 + $0x44] sm:$0xf]
          %v1244 = vld [vmem:[%s555 + $0x48] sm:$0xf]
          %v1245 = vld [vmem:[%s555 + $0x4c] sm:$0xf]
          %v1246 = vld [vmem:[%s555 + $0x50] sm:$0xf]
          %v1247 = vld [vmem:[%s555 + $0x54] sm:$0xf]
          %v1248 = vld [vmem:[%s555 + $0x58] sm:$0xf]
          %v1249 = vld [vmem:[%s555 + $0x5c] sm:$0xf]
          %v1250 = vld [vmem:[%s555 + $0x60] sm:$0xf]
          %v1251 = vld [vmem:[%s555 + $0x64] sm:$0xf]
          %v1252 = vld [vmem:[%s555 + $0x68] sm:$0xf]
          %v1253 = vld [vmem:[%s555 + $0x6c] sm:$0xf]
          %v1254 = vld [vmem:[%s555 + $0x70] sm:$0xf]
          %v1255 = vld [vmem:[%s555 + $0x74] sm:$0xf]
          %v1256 = vld [vmem:[%s555 + $0x78] sm:$0xf]
          %v1257 = vld [vmem:[%s555 + $0x7c] sm:$0xf]
          %v1258 = vld [vmem:[%s555 + $0x80] sm:$0xf]
          %v1259 = vld [vmem:[%s555 + $0x84] sm:$0xf]
          %1261 = vset.pattern.permute.xlu0 0
          %1262 = vperm.xlu0 %1261, %v1163
          %v1263 = vpop.permute.xlu0 %1262
          %v1266 = vunpack.c.l.s4 839922192
          %v1267 = vunpack.c.0.s8 %v1266
          %v1268 = vperm.slane %v1263, %v1267
          %1270 = vset.pattern.permute.xlu0 0
          %1271 = vperm.xlu0 %1270, %v1164
          %v1272 = vpop.permute.xlu0 %1271
          %v1275 = vunpack.c.l.s4 839922192
          %v1276 = vunpack.c.0.s8 %v1275
          %v1277 = vperm.slane %v1272, %v1276
          %1279 = vset.pattern.permute.xlu0 0
          %1280 = vperm.xlu0 %1279, %v1165
          %v1281 = vpop.permute.xlu0 %1280
          %v1284 = vunpack.c.l.s4 839922192
          %v1285 = vunpack.c.0.s8 %v1284
          %v1286 = vperm.slane %v1281, %v1285
          %1288 = vset.pattern.permute.xlu0 0
          %1289 = vperm.xlu0 %1288, %v1166
          %v1290 = vpop.permute.xlu0 %1289
          %v1293 = vunpack.c.l.s4 839922192
          %v1294 = vunpack.c.0.s8 %v1293
          %v1295 = vperm.slane %v1290, %v1294
          %1297 = vset.pattern.permute.xlu0 0
          %1298 = vperm.xlu0 %1297, %v1167
          %v1299 = vpop.permute.xlu0 %1298
          %v1302 = vunpack.c.l.s4 839922192
          %v1303 = vunpack.c.0.s8 %v1302
          %v1304 = vperm.slane %v1299, %v1303
          %1306 = vset.pattern.permute.xlu0 0
          %1307 = vperm.xlu0 %1306, %v1168
          %v1308 = vpop.permute.xlu0 %1307
          %v1311 = vunpack.c.l.s4 839922192
          %v1312 = vunpack.c.0.s8 %v1311
          %v1313 = vperm.slane %v1308, %v1312
          %1315 = vset.pattern.permute.xlu0 0
          %1316 = vperm.xlu0 %1315, %v1169
          %v1317 = vpop.permute.xlu0 %1316
          %v1320 = vunpack.c.l.s4 839922192
          %v1321 = vunpack.c.0.s8 %v1320
          %v1322 = vperm.slane %v1317, %v1321
          %1324 = vset.pattern.permute.xlu0 0
          %1325 = vperm.xlu0 %1324, %v1170
          %v1326 = vpop.permute.xlu0 %1325
          %v1329 = vunpack.c.l.s4 839922192
          %v1330 = vunpack.c.0.s8 %v1329
          %v1331 = vperm.slane %v1326, %v1330
          %1333 = vset.pattern.permute.xlu0 0
          %1334 = vperm.xlu0 %1333, %v1171
          %v1335 = vpop.permute.xlu0 %1334
          %v1338 = vunpack.c.l.s4 839922192
          %v1339 = vunpack.c.0.s8 %v1338
          %v1340 = vperm.slane %v1335, %v1339
          %1342 = vset.pattern.permute.xlu0 0
          %1343 = vperm.xlu0 %1342, %v1172
          %v1344 = vpop.permute.xlu0 %1343
          %v1347 = vunpack.c.l.s4 839922192
          %v1348 = vunpack.c.0.s8 %v1347
          %v1349 = vperm.slane %v1344, %v1348
          %1351 = vset.pattern.permute.xlu0 0
          %1352 = vperm.xlu0 %1351, %v1173
          %v1353 = vpop.permute.xlu0 %1352
          %v1356 = vunpack.c.l.s4 839922192
          %v1357 = vunpack.c.0.s8 %v1356
          %v1358 = vperm.slane %v1353, %v1357
          %1360 = vset.pattern.permute.xlu0 0
          %1361 = vperm.xlu0 %1360, %v1174
          %v1362 = vpop.permute.xlu0 %1361
          %v1365 = vunpack.c.l.s4 839922192
          %v1366 = vunpack.c.0.s8 %v1365
          %v1367 = vperm.slane %v1362, %v1366
          %1369 = vset.pattern.permute.xlu0 0
          %1370 = vperm.xlu0 %1369, %v1175
          %v1371 = vpop.permute.xlu0 %1370
          %v1374 = vunpack.c.l.s4 839922192
          %v1375 = vunpack.c.0.s8 %v1374
          %v1376 = vperm.slane %v1371, %v1375
          %1378 = vset.pattern.permute.xlu0 0
          %1379 = vperm.xlu0 %1378, %v1176
          %v1380 = vpop.permute.xlu0 %1379
          %v1383 = vunpack.c.l.s4 839922192
          %v1384 = vunpack.c.0.s8 %v1383
          %v1385 = vperm.slane %v1380, %v1384
          %1387 = vset.pattern.permute.xlu0 0
          %1388 = vperm.xlu0 %1387, %v1177
          %v1389 = vpop.permute.xlu0 %1388
          %v1392 = vunpack.c.l.s4 839922192
          %v1393 = vunpack.c.0.s8 %v1392
          %v1394 = vperm.slane %v1389, %v1393
          %1396 = vset.pattern.permute.xlu0 0
          %1397 = vperm.xlu0 %1396, %v1178
          %v1398 = vpop.permute.xlu0 %1397
          %v1401 = vunpack.c.l.s4 839922192
          %v1402 = vunpack.c.0.s8 %v1401
          %v1403 = vperm.slane %v1398, %v1402
          %1405 = vset.pattern.permute.xlu0 0
          %1406 = vperm.xlu0 %1405, %v1179
          %v1407 = vpop.permute.xlu0 %1406
          %v1410 = vunpack.c.l.s4 839922192
          %v1411 = vunpack.c.0.s8 %v1410
          %v1412 = vperm.slane %v1407, %v1411
          %1414 = vset.pattern.permute.xlu0 0
          %1415 = vperm.xlu0 %1414, %v1180
          %v1416 = vpop.permute.xlu0 %1415
          %v1419 = vunpack.c.l.s4 839922192
          %v1420 = vunpack.c.0.s8 %v1419
          %v1421 = vperm.slane %v1416, %v1420
          %1423 = vset.pattern.permute.xlu0 0
          %1424 = vperm.xlu0 %1423, %v1181
          %v1425 = vpop.permute.xlu0 %1424
          %v1428 = vunpack.c.l.s4 839922192
          %v1429 = vunpack.c.0.s8 %v1428
          %v1430 = vperm.slane %v1425, %v1429
          %1432 = vset.pattern.permute.xlu0 0
          %1433 = vperm.xlu0 %1432, %v1182
          %v1434 = vpop.permute.xlu0 %1433
          %v1437 = vunpack.c.l.s4 839922192
          %v1438 = vunpack.c.0.s8 %v1437
          %v1439 = vperm.slane %v1434, %v1438
          %1441 = vset.pattern.permute.xlu0 0
          %1442 = vperm.xlu0 %1441, %v1183
          %v1443 = vpop.permute.xlu0 %1442
          %v1446 = vunpack.c.l.s4 839922192
          %v1447 = vunpack.c.0.s8 %v1446
          %v1448 = vperm.slane %v1443, %v1447
          %1450 = vset.pattern.permute.xlu0 0
          %1451 = vperm.xlu0 %1450, %v1184
          %v1452 = vpop.permute.xlu0 %1451
          %v1455 = vunpack.c.l.s4 839922192
          %v1456 = vunpack.c.0.s8 %v1455
          %v1457 = vperm.slane %v1452, %v1456
          %1459 = vset.pattern.permute.xlu0 0
          %1460 = vperm.xlu0 %1459, %v1185
          %v1461 = vpop.permute.xlu0 %1460
          %v1464 = vunpack.c.l.s4 839922192
          %v1465 = vunpack.c.0.s8 %v1464
          %v1466 = vperm.slane %v1461, %v1465
          %1468 = vset.pattern.permute.xlu0 0
          %1469 = vperm.xlu0 %1468, %v1186
          %v1470 = vpop.permute.xlu0 %1469
          %v1473 = vunpack.c.l.s4 839922192
          %v1474 = vunpack.c.0.s8 %v1473
          %v1475 = vperm.slane %v1470, %v1474
          %1477 = vset.pattern.permute.xlu0 0
          %1478 = vperm.xlu0 %1477, %v1187
          %v1479 = vpop.permute.xlu0 %1478
          %v1482 = vunpack.c.l.s4 839922192
          %v1483 = vunpack.c.0.s8 %v1482
          %v1484 = vperm.slane %v1479, %v1483
          %1486 = vset.pattern.permute.xlu0 0
          %1487 = vperm.xlu0 %1486, %v1188
          %v1488 = vpop.permute.xlu0 %1487
          %v1491 = vunpack.c.l.s4 839922192
          %v1492 = vunpack.c.0.s8 %v1491
          %v1493 = vperm.slane %v1488, %v1492
          %1495 = vset.pattern.permute.xlu0 0
          %1496 = vperm.xlu0 %1495, %v1189
          %v1497 = vpop.permute.xlu0 %1496
          %v1500 = vunpack.c.l.s4 839922192
          %v1501 = vunpack.c.0.s8 %v1500
          %v1502 = vperm.slane %v1497, %v1501
          %1504 = vset.pattern.permute.xlu0 0
          %1505 = vperm.xlu0 %1504, %v1190
          %v1506 = vpop.permute.xlu0 %1505
          %v1509 = vunpack.c.l.s4 839922192
          %v1510 = vunpack.c.0.s8 %v1509
          %v1511 = vperm.slane %v1506, %v1510
          %1513 = vset.pattern.permute.xlu0 0
          %1514 = vperm.xlu0 %1513, %v1191
          %v1515 = vpop.permute.xlu0 %1514
          %v1518 = vunpack.c.l.s4 839922192
          %v1519 = vunpack.c.0.s8 %v1518
          %v1520 = vperm.slane %v1515, %v1519
          %1522 = vset.pattern.permute.xlu0 0
          %1523 = vperm.xlu0 %1522, %v1192
          %v1524 = vpop.permute.xlu0 %1523
          %v1527 = vunpack.c.l.s4 839922192
          %v1528 = vunpack.c.0.s8 %v1527
          %v1529 = vperm.slane %v1524, %v1528
          %1531 = vset.pattern.permute.xlu0 0
          %1532 = vperm.xlu0 %1531, %v1193
          %v1533 = vpop.permute.xlu0 %1532
          %v1536 = vunpack.c.l.s4 839922192
          %v1537 = vunpack.c.0.s8 %v1536
          %v1538 = vperm.slane %v1533, %v1537
          %1540 = vset.pattern.permute.xlu0 0
          %1541 = vperm.xlu0 %1540, %v1194
          %v1542 = vpop.permute.xlu0 %1541
          %v1545 = vunpack.c.l.s4 839922192
          %v1546 = vunpack.c.0.s8 %v1545
          %v1547 = vperm.slane %v1542, %v1546
          %v1548 = vunpack.c.l.bf16 %v1227
          %v1549 = vunpack.c.l.bf16 %v1228
          %v1550 = vunpack.c.l.bf16 %v1229
          %v1551 = vunpack.c.l.bf16 %v1230
          %v1552 = vunpack.c.l.bf16 %v1231
          %v1553 = vunpack.c.l.bf16 %v1232
          %v1554 = vunpack.c.l.bf16 %v1233
          %v1555 = vunpack.c.l.bf16 %v1234
          %v1556 = vunpack.c.l.bf16 %v1235
          %v1557 = vunpack.c.l.bf16 %v1236
          %v1558 = vunpack.c.l.bf16 %v1237
          %v1559 = vunpack.c.l.bf16 %v1238
          %v1560 = vunpack.c.l.bf16 %v1239
          %v1561 = vunpack.c.l.bf16 %v1240
          %v1562 = vunpack.c.l.bf16 %v1241
          %v1563 = vunpack.c.l.bf16 %v1242
          %v1564 = vunpack.c.l.bf16 %v1243
          %v1565 = vunpack.c.l.bf16 %v1244
          %v1566 = vunpack.c.l.bf16 %v1245
          %v1567 = vunpack.c.l.bf16 %v1246
          %v1568 = vunpack.c.l.bf16 %v1247
          %v1569 = vunpack.c.l.bf16 %v1248
          %v1570 = vunpack.c.l.bf16 %v1249
          %v1571 = vunpack.c.l.bf16 %v1250
          %v1572 = vunpack.c.l.bf16 %v1251
          %v1573 = vunpack.c.l.bf16 %v1252
          %v1574 = vunpack.c.l.bf16 %v1253
          %v1575 = vunpack.c.l.bf16 %v1254
          %v1576 = vunpack.c.l.bf16 %v1255
          %v1577 = vunpack.c.l.bf16 %v1256
          %v1578 = vunpack.c.l.bf16 %v1257
          %v1579 = vunpack.c.l.bf16 %v1258
          %v1580 = vunpack.c.l.bf16 %v1259
          %v1581 = vunpack.c.l.bf16 %v1268
          %v1582 = vunpack.c.l.bf16 %v1277
          %v1583 = vunpack.c.l.bf16 %v1286
          %v1584 = vunpack.c.l.bf16 %v1295
          %v1585 = vunpack.c.l.bf16 %v1304
          %v1586 = vunpack.c.l.bf16 %v1313
          %v1587 = vunpack.c.l.bf16 %v1322
          %v1588 = vunpack.c.l.bf16 %v1331
          %v1589 = vunpack.c.l.bf16 %v1340
          %v1590 = vunpack.c.l.bf16 %v1349
          %v1591 = vunpack.c.l.bf16 %v1358
          %v1592 = vunpack.c.l.bf16 %v1367
          %v1593 = vunpack.c.l.bf16 %v1376
          %v1594 = vunpack.c.l.bf16 %v1385
          %v1595 = vunpack.c.l.bf16 %v1394
          %v1596 = vunpack.c.l.bf16 %v1403
          %v1597 = vunpack.c.l.bf16 %v1412
          %v1598 = vunpack.c.l.bf16 %v1421
          %v1599 = vunpack.c.l.bf16 %v1430
          %v1600 = vunpack.c.l.bf16 %v1439
          %v1601 = vunpack.c.l.bf16 %v1448
          %v1602 = vunpack.c.l.bf16 %v1457
          %v1603 = vunpack.c.l.bf16 %v1466
          %v1604 = vunpack.c.l.bf16 %v1475
          %v1605 = vunpack.c.l.bf16 %v1484
          %v1606 = vunpack.c.l.bf16 %v1493
          %v1607 = vunpack.c.l.bf16 %v1502
          %v1608 = vunpack.c.l.bf16 %v1511
          %v1609 = vunpack.c.l.bf16 %v1520
          %v1610 = vunpack.c.l.bf16 %v1529
          %v1611 = vunpack.c.l.bf16 %v1538
          %v1612 = vunpack.c.l.bf16 %v1547
          %vm1645 = vcmask 1046528
          %v1646 = vrot.slane %v1581, 1
          %v1647 = vrot.slane %v1582, 1
          %v1648 = vsel %vm1645, %v1646, %v1647
          %v1649 = vrot.slane %v1583, 1
          %v1650 = vsel %vm1645, %v1647, %v1649
          %v1651 = vrot.slane %v1584, 1
          %v1652 = vsel %vm1645, %v1649, %v1651
          %v1653 = vrot.slane %v1585, 1
          %v1654 = vsel %vm1645, %v1651, %v1653
          %v1655 = vrot.slane %v1586, 1
          %v1656 = vsel %vm1645, %v1653, %v1655
          %v1657 = vrot.slane %v1587, 1
          %v1658 = vsel %vm1645, %v1655, %v1657
          %v1659 = vrot.slane %v1588, 1
          %v1660 = vsel %vm1645, %v1657, %v1659
          %v1661 = vrot.slane %v1589, 1
          %v1662 = vsel %vm1645, %v1659, %v1661
          %v1663 = vrot.slane %v1590, 1
          %v1664 = vsel %vm1645, %v1661, %v1663
          %v1665 = vrot.slane %v1591, 1
          %v1666 = vsel %vm1645, %v1663, %v1665
          %v1667 = vrot.slane %v1592, 1
          %v1668 = vsel %vm1645, %v1665, %v1667
          %v1669 = vrot.slane %v1593, 1
          %v1670 = vsel %vm1645, %v1667, %v1669
          %v1671 = vrot.slane %v1594, 1
          %v1672 = vsel %vm1645, %v1669, %v1671
          %v1673 = vrot.slane %v1595, 1
          %v1674 = vsel %vm1645, %v1671, %v1673
          %v1675 = vrot.slane %v1596, 1
          %v1676 = vsel %vm1645, %v1673, %v1675
          %v1677 = vrot.slane %v1597, 1
          %v1678 = vsel %vm1645, %v1675, %v1677
          %v1679 = vrot.slane %v1598, 1
          %v1680 = vsel %vm1645, %v1677, %v1679
          %v1681 = vrot.slane %v1599, 1
          %v1682 = vsel %vm1645, %v1679, %v1681
          %v1683 = vrot.slane %v1600, 1
          %v1684 = vsel %vm1645, %v1681, %v1683
          %v1685 = vrot.slane %v1601, 1
          %v1686 = vsel %vm1645, %v1683, %v1685
          %v1687 = vrot.slane %v1602, 1
          %v1688 = vsel %vm1645, %v1685, %v1687
          %v1689 = vrot.slane %v1603, 1
          %v1690 = vsel %vm1645, %v1687, %v1689
          %v1691 = vrot.slane %v1604, 1
          %v1692 = vsel %vm1645, %v1689, %v1691
          %v1693 = vrot.slane %v1605, 1
          %v1694 = vsel %vm1645, %v1691, %v1693
          %v1695 = vrot.slane %v1606, 1
          %v1696 = vsel %vm1645, %v1693, %v1695
          %v1697 = vrot.slane %v1607, 1
          %v1698 = vsel %vm1645, %v1695, %v1697
          %v1699 = vrot.slane %v1608, 1
          %v1700 = vsel %vm1645, %v1697, %v1699
          %v1701 = vrot.slane %v1609, 1
          %v1702 = vsel %vm1645, %v1699, %v1701
          %v1703 = vrot.slane %v1610, 1
          %v1704 = vsel %vm1645, %v1701, %v1703
          %v1705 = vrot.slane %v1611, 1
          %v1706 = vsel %vm1645, %v1703, %v1705
          %v1707 = vrot.slane %v1612, 1
          %v1708 = vsel %vm1645, %v1705, %v1707
          %v1742 = vmul.f32 %v1548, %v1646
          %v1743 = vmul.f32 %v1549, %v1648
          %v1744 = vmul.f32 %v1550, %v1650
          %v1745 = vmul.f32 %v1551, %v1652
          %v1746 = vmul.f32 %v1552, %v1654
          %v1747 = vmul.f32 %v1553, %v1656
          %v1748 = vmul.f32 %v1554, %v1658
          %v1749 = vmul.f32 %v1555, %v1660
          %v1750 = vmul.f32 %v1556, %v1662
          %v1751 = vmul.f32 %v1557, %v1664
          %v1752 = vmul.f32 %v1558, %v1666
          %v1753 = vmul.f32 %v1559, %v1668
          %v1754 = vmul.f32 %v1560, %v1670
          %v1755 = vmul.f32 %v1561, %v1672
          %v1756 = vmul.f32 %v1562, %v1674
          %v1757 = vmul.f32 %v1563, %v1676
          %v1758 = vmul.f32 %v1564, %v1678
          %v1759 = vmul.f32 %v1565, %v1680
          %v1760 = vmul.f32 %v1566, %v1682
          %v1761 = vmul.f32 %v1567, %v1684
          %v1762 = vmul.f32 %v1568, %v1686
          %v1763 = vmul.f32 %v1569, %v1688
          %v1764 = vmul.f32 %v1570, %v1690
          %v1765 = vmul.f32 %v1571, %v1692
          %v1766 = vmul.f32 %v1572, %v1694
          %v1767 = vmul.f32 %v1573, %v1696
          %v1768 = vmul.f32 %v1574, %v1698
          %v1769 = vmul.f32 %v1575, %v1700
          %v1770 = vmul.f32 %v1576, %v1702
          %v1771 = vmul.f32 %v1577, %v1704
          %v1772 = vmul.f32 %v1578, %v1706
          %v1773 = vmul.f32 %v1579, %v1708
          %v1774 = vmul.f32 %v1580, %v1707
          %v1775 = vpack.c.bf16 %v1742, %v1742
          %v1776 = vpack.c.bf16 %v1743, %v1743
          %v1777 = vpack.c.bf16 %v1744, %v1744
          %v1778 = vpack.c.bf16 %v1745, %v1745
          %v1779 = vpack.c.bf16 %v1746, %v1746
          %v1780 = vpack.c.bf16 %v1747, %v1747
          %v1781 = vpack.c.bf16 %v1748, %v1748
          %v1782 = vpack.c.bf16 %v1749, %v1749
          %v1783 = vpack.c.bf16 %v1750, %v1750
          %v1784 = vpack.c.bf16 %v1751, %v1751
          %v1785 = vpack.c.bf16 %v1752, %v1752
          %v1786 = vpack.c.bf16 %v1753, %v1753
          %v1787 = vpack.c.bf16 %v1754, %v1754
          %v1788 = vpack.c.bf16 %v1755, %v1755
          %v1789 = vpack.c.bf16 %v1756, %v1756
          %v1790 = vpack.c.bf16 %v1757, %v1757
          %v1791 = vpack.c.bf16 %v1758, %v1758
          %v1792 = vpack.c.bf16 %v1759, %v1759
          %v1793 = vpack.c.bf16 %v1760, %v1760
          %v1794 = vpack.c.bf16 %v1761, %v1761
          %v1795 = vpack.c.bf16 %v1762, %v1762
          %v1796 = vpack.c.bf16 %v1763, %v1763
          %v1797 = vpack.c.bf16 %v1764, %v1764
          %v1798 = vpack.c.bf16 %v1765, %v1765
          %v1799 = vpack.c.bf16 %v1766, %v1766
          %v1800 = vpack.c.bf16 %v1767, %v1767
          %v1801 = vpack.c.bf16 %v1768, %v1768
          %v1802 = vpack.c.bf16 %v1769, %v1769
          %v1803 = vpack.c.bf16 %v1770, %v1770
          %v1804 = vpack.c.bf16 %v1771, %v1771
          %v1805 = vpack.c.bf16 %v1772, %v1772
          %v1806 = vpack.c.bf16 %v1773, %v1773
          %v1807 = vpack.c.bf16 %v1774, %v1774
          %vm1808 = vsmask.f32 256
          %vm1809 = vsmask.f32 4368
          %vm1810 = vmor %vm1808, %vm1809
          %v1812 = vshrl.u32 %v1775, 16
          %v1814 = vrot.slane %v1812, 7
          %v1815 = vrot.slane %v1814, 4
          %v1817 = vshrl.u32 %v1776, 16
          %v1819 = vrot.slane %v1817, 7
          %v1820 = vshll.u32 %v1776, 16
          %v1822 = vor.u32 %v1819, %v1820
          %v1823 = vsel %vm1810, %v1815, %v1822
          %v1824 = vrot.slane %v1819, 4
          %v1826 = vshrl.u32 %v1777, 16
          %v1828 = vrot.slane %v1826, 7
          %v1829 = vshll.u32 %v1777, 16
          %v1831 = vor.u32 %v1828, %v1829
          %v1832 = vsel %vm1810, %v1824, %v1831
          %v1833 = vrot.slane %v1828, 4
          %v1835 = vshrl.u32 %v1778, 16
          %v1837 = vrot.slane %v1835, 7
          %v1838 = vshll.u32 %v1778, 16
          %v1840 = vor.u32 %v1837, %v1838
          %v1841 = vsel %vm1810, %v1833, %v1840
          %v1842 = vrot.slane %v1837, 4
          %v1844 = vshrl.u32 %v1779, 16
          %v1846 = vrot.slane %v1844, 7
          %v1847 = vshll.u32 %v1779, 16
          %v1849 = vor.u32 %v1846, %v1847
          %v1850 = vsel %vm1810, %v1842, %v1849
          %v1851 = vrot.slane %v1846, 4
          %v1853 = vshrl.u32 %v1780, 16
          %v1855 = vrot.slane %v1853, 7
          %v1856 = vshll.u32 %v1780, 16
          %v1858 = vor.u32 %v1855, %v1856
          %v1859 = vsel %vm1810, %v1851, %v1858
          %v1860 = vrot.slane %v1855, 4
          %v1862 = vshrl.u32 %v1781, 16
          %v1864 = vrot.slane %v1862, 7
          %v1865 = vshll.u32 %v1781, 16
          %v1867 = vor.u32 %v1864, %v1865
          %v1868 = vsel %vm1810, %v1860, %v1867
          %v1869 = vrot.slane %v1864, 4
          %v1871 = vshrl.u32 %v1782, 16
          %v1873 = vrot.slane %v1871, 7
          %v1874 = vshll.u32 %v1782, 16
          %v1876 = vor.u32 %v1873, %v1874
          %v1877 = vsel %vm1810, %v1869, %v1876
          %v1878 = vrot.slane %v1873, 4
          %v1880 = vshrl.u32 %v1783, 16
          %v1882 = vrot.slane %v1880, 7
          %v1883 = vshll.u32 %v1783, 16
          %v1885 = vor.u32 %v1882, %v1883
          %v1886 = vsel %vm1810, %v1878, %v1885
          %v1887 = vrot.slane %v1882, 4
          %v1889 = vshrl.u32 %v1784, 16
          %v1891 = vrot.slane %v1889, 7
          %v1892 = vshll.u32 %v1784, 16
          %v1894 = vor.u32 %v1891, %v1892
          %v1895 = vsel %vm1810, %v1887, %v1894
          %v1896 = vrot.slane %v1891, 4
          %v1898 = vshrl.u32 %v1785, 16
          %v1900 = vrot.slane %v1898, 7
          %v1901 = vshll.u32 %v1785, 16
          %v1903 = vor.u32 %v1900, %v1901
          %v1904 = vsel %vm1810, %v1896, %v1903
          %v1905 = vrot.slane %v1900, 4
          %v1907 = vshrl.u32 %v1786, 16
          %v1909 = vrot.slane %v1907, 7
          %v1910 = vshll.u32 %v1786, 16
          %v1912 = vor.u32 %v1909, %v1910
          %v1913 = vsel %vm1810, %v1905, %v1912
          %v1914 = vrot.slane %v1909, 4
          %v1916 = vshrl.u32 %v1787, 16
          %v1918 = vrot.slane %v1916, 7
          %v1919 = vshll.u32 %v1787, 16
          %v1921 = vor.u32 %v1918, %v1919
          %v1922 = vsel %vm1810, %v1914, %v1921
          %v1923 = vrot.slane %v1918, 4
          %v1925 = vshrl.u32 %v1788, 16
          %v1927 = vrot.slane %v1925, 7
          %v1928 = vshll.u32 %v1788, 16
          %v1930 = vor.u32 %v1927, %v1928
          %v1931 = vsel %vm1810, %v1923, %v1930
          %v1932 = vrot.slane %v1927, 4
          %v1934 = vshrl.u32 %v1789, 16
          %v1936 = vrot.slane %v1934, 7
          %v1937 = vshll.u32 %v1789, 16
          %v1939 = vor.u32 %v1936, %v1937
          %v1940 = vsel %vm1810, %v1932, %v1939
          %v1941 = vrot.slane %v1936, 4
          %v1943 = vshrl.u32 %v1790, 16
          %v1945 = vrot.slane %v1943, 7
          %v1946 = vshll.u32 %v1790, 16
          %v1948 = vor.u32 %v1945, %v1946
          %v1949 = vsel %vm1810, %v1941, %v1948
          %v1950 = vrot.slane %v1945, 4
          %v1952 = vshrl.u32 %v1791, 16
          %v1954 = vrot.slane %v1952, 7
          %v1955 = vshll.u32 %v1791, 16
          %v1957 = vor.u32 %v1954, %v1955
          %v1958 = vsel %vm1810, %v1950, %v1957
          %v1959 = vrot.slane %v1954, 4
          %v1961 = vshrl.u32 %v1792, 16
          %v1963 = vrot.slane %v1961, 7
          %v1964 = vshll.u32 %v1792, 16
          %v1966 = vor.u32 %v1963, %v1964
          %v1967 = vsel %vm1810, %v1959, %v1966
          %v1968 = vrot.slane %v1963, 4
          %v1970 = vshrl.u32 %v1793, 16
          %v1972 = vrot.slane %v1970, 7
          %v1973 = vshll.u32 %v1793, 16
          %v1975 = vor.u32 %v1972, %v1973
          %v1976 = vsel %vm1810, %v1968, %v1975
          %v1977 = vrot.slane %v1972, 4
          %v1979 = vshrl.u32 %v1794, 16
          %v1981 = vrot.slane %v1979, 7
          %v1982 = vshll.u32 %v1794, 16
          %v1984 = vor.u32 %v1981, %v1982
          %v1985 = vsel %vm1810, %v1977, %v1984
          %v1986 = vrot.slane %v1981, 4
          %v1988 = vshrl.u32 %v1795, 16
          %v1990 = vrot.slane %v1988, 7
          %v1991 = vshll.u32 %v1795, 16
          %v1993 = vor.u32 %v1990, %v1991
          %v1994 = vsel %vm1810, %v1986, %v1993
          %v1995 = vrot.slane %v1990, 4
          %v1997 = vshrl.u32 %v1796, 16
          %v1999 = vrot.slane %v1997, 7
          %v2000 = vshll.u32 %v1796, 16
          %v2002 = vor.u32 %v1999, %v2000
          %v2003 = vsel %vm1810, %v1995, %v2002
          %v2004 = vrot.slane %v1999, 4
          %v2006 = vshrl.u32 %v1797, 16
          %v2008 = vrot.slane %v2006, 7
          %v2009 = vshll.u32 %v1797, 16
          %v2011 = vor.u32 %v2008, %v2009
          %v2012 = vsel %vm1810, %v2004, %v2011
          %v2013 = vrot.slane %v2008, 4
          %v2015 = vshrl.u32 %v1798, 16
          %v2017 = vrot.slane %v2015, 7
          %v2018 = vshll.u32 %v1798, 16
          %v2020 = vor.u32 %v2017, %v2018
          %v2021 = vsel %vm1810, %v2013, %v2020
          %v2022 = vrot.slane %v2017, 4
          %v2024 = vshrl.u32 %v1799, 16
          %v2026 = vrot.slane %v2024, 7
          %v2027 = vshll.u32 %v1799, 16
          %v2029 = vor.u32 %v2026, %v2027
          %v2030 = vsel %vm1810, %v2022, %v2029
          %v2031 = vrot.slane %v2026, 4
          %v2033 = vshrl.u32 %v1800, 16
          %v2035 = vrot.slane %v2033, 7
          %v2036 = vshll.u32 %v1800, 16
          %v2038 = vor.u32 %v2035, %v2036
          %v2039 = vsel %vm1810, %v2031, %v2038
          %v2040 = vrot.slane %v2035, 4
          %v2042 = vshrl.u32 %v1801, 16
          %v2044 = vrot.slane %v2042, 7
          %v2045 = vshll.u32 %v1801, 16
          %v2047 = vor.u32 %v2044, %v2045
          %v2048 = vsel %vm1810, %v2040, %v2047
          %v2049 = vrot.slane %v2044, 4
          %v2051 = vshrl.u32 %v1802, 16
          %v2053 = vrot.slane %v2051, 7
          %v2054 = vshll.u32 %v1802, 16
          %v2056 = vor.u32 %v2053, %v2054
          %v2057 = vsel %vm1810, %v2049, %v2056
          %v2058 = vrot.slane %v2053, 4
          %v2060 = vshrl.u32 %v1803, 16
          %v2062 = vrot.slane %v2060, 7
          %v2063 = vshll.u32 %v1803, 16
          %v2065 = vor.u32 %v2062, %v2063
          %v2066 = vsel %vm1810, %v2058, %v2065
          %v2067 = vrot.slane %v2062, 4
          %v2069 = vshrl.u32 %v1804, 16
          %v2071 = vrot.slane %v2069, 7
          %v2072 = vshll.u32 %v1804, 16
          %v2074 = vor.u32 %v2071, %v2072
          %v2075 = vsel %vm1810, %v2067, %v2074
          %v2076 = vrot.slane %v2071, 4
          %v2078 = vshrl.u32 %v1805, 16
          %v2080 = vrot.slane %v2078, 7
          %v2081 = vshll.u32 %v1805, 16
          %v2083 = vor.u32 %v2080, %v2081
          %v2084 = vsel %vm1810, %v2076, %v2083
          %v2085 = vrot.slane %v2080, 4
          %v2087 = vshrl.u32 %v1806, 16
          %v2089 = vrot.slane %v2087, 7
          %v2090 = vshll.u32 %v1806, 16
          %v2092 = vor.u32 %v2089, %v2090
          %v2093 = vsel %vm1810, %v2085, %v2092
          %v2094 = vrot.slane %v2089, 4
          %v2096 = vshrl.u32 %v1807, 16
          %v2098 = vrot.slane %v2096, 7
          %v2099 = vshll.u32 %v1807, 16
          %v2101 = vor.u32 %v2098, %v2099
          %v2102 = vsel %vm1810, %v2094, %v2101
          %2135 = vst [vmem:[#allocation2 + $0x8] sm:$0xf] %v1823
          %2136 = vst [vmem:[#allocation2 + $0xc] sm:$0xf] %v1832
          %2137 = vst [vmem:[#allocation2 + $0x10] sm:$0xf] %v1841
          %2138 = vst [vmem:[#allocation2 + $0x14] sm:$0xf] %v1850
          %2139 = vst [vmem:[#allocation2 + $0x18] sm:$0xf] %v1859
          %2140 = vst [vmem:[#allocation2 + $0x1c] sm:$0xf] %v1868
          %2141 = vst [vmem:[#allocation2 + $0x20] sm:$0xf] %v1877
          %2142 = vst [vmem:[#allocation2 + $0x24] sm:$0xf] %v1886
          %2143 = vst [vmem:[#allocation2 + $0x28] sm:$0xf] %v1895
          %2144 = vst [vmem:[#allocation2 + $0x2c] sm:$0xf] %v1904
          %2145 = vst [vmem:[#allocation2 + $0x30] sm:$0xf] %v1913
          %2146 = vst [vmem:[#allocation2 + $0x34] sm:$0xf] %v1922
          %2147 = vst [vmem:[#allocation2 + $0x38] sm:$0xf] %v1931
          %2148 = vst [vmem:[#allocation2 + $0x3c] sm:$0xf] %v1940
          %2149 = vst [vmem:[#allocation2 + $0x40] sm:$0xf] %v1949
          %2150 = vst [vmem:[#allocation2 + $0x44] sm:$0xf] %v1958
          %2151 = vst [vmem:[#allocation2 + $0x48] sm:$0xf] %v1967
          %2152 = vst [vmem:[#allocation2 + $0x4c] sm:$0xf] %v1976
          %2153 = vst [vmem:[#allocation2 + $0x50] sm:$0xf] %v1985
          %2154 = vst [vmem:[#allocation2 + $0x54] sm:$0xf] %v1994
          %2155 = vst [vmem:[#allocation2 + $0x58] sm:$0xf] %v2003
          %2156 = vst [vmem:[#allocation2 + $0x5c] sm:$0xf] %v2012
          %2157 = vst [vmem:[#allocation2 + $0x60] sm:$0xf] %v2021
          %2158 = vst [vmem:[#allocation2 + $0x64] sm:$0xf] %v2030
          %2159 = vst [vmem:[#allocation2 + $0x68] sm:$0xf] %v2039
          %2160 = vst [vmem:[#allocation2 + $0x6c] sm:$0xf] %v2048
          %2161 = vst [vmem:[#allocation2 + $0x70] sm:$0xf] %v2057
          %2162 = vst [vmem:[#allocation2 + $0x74] sm:$0xf] %v2066
          %2163 = vst [vmem:[#allocation2 + $0x78] sm:$0xf] %v2075
          %2164 = vst [vmem:[#allocation2 + $0x7c] sm:$0xf] %v2084
          %2165 = vst [vmem:[#allocation2 + $0x80] sm:$0xf] %v2093
          %2166 = vst [vmem:[#allocation2 + $0x84] sm:$0xf] %v2102
          %v2167 = vld [vmem:[%s555 + $0x8] sm:$0xf]
          %v2168 = vld [vmem:[%s555 + $0xc] sm:$0xf]
          %v2169 = vld [vmem:[%s555 + $0x10] sm:$0xf]
          %v2170 = vld [vmem:[%s555 + $0x14] sm:$0xf]
          %v2171 = vld [vmem:[%s555 + $0x18] sm:$0xf]
          %v2172 = vld [vmem:[%s555 + $0x1c] sm:$0xf]
          %v2173 = vld [vmem:[%s555 + $0x20] sm:$0xf]
          %v2174 = vld [vmem:[%s555 + $0x24] sm:$0xf]
          %v2175 = vld [vmem:[%s555 + $0x28] sm:$0xf]
          %v2176 = vld [vmem:[%s555 + $0x2c] sm:$0xf]
          %v2177 = vld [vmem:[%s555 + $0x30] sm:$0xf]
          %v2178 = vld [vmem:[%s555 + $0x34] sm:$0xf]
          %v2179 = vld [vmem:[%s555 + $0x38] sm:$0xf]
          %v2180 = vld [vmem:[%s555 + $0x3c] sm:$0xf]
          %v2181 = vld [vmem:[%s555 + $0x40] sm:$0xf]
          %v2182 = vld [vmem:[%s555 + $0x44] sm:$0xf]
          %v2183 = vld [vmem:[%s555 + $0x48] sm:$0xf]
          %v2184 = vld [vmem:[%s555 + $0x4c] sm:$0xf]
          %v2185 = vld [vmem:[%s555 + $0x50] sm:$0xf]
          %v2186 = vld [vmem:[%s555 + $0x54] sm:$0xf]
          %v2187 = vld [vmem:[%s555 + $0x58] sm:$0xf]
          %v2188 = vld [vmem:[%s555 + $0x5c] sm:$0xf]
          %v2189 = vld [vmem:[%s555 + $0x60] sm:$0xf]
          %v2190 = vld [vmem:[%s555 + $0x64] sm:$0xf]
          %v2191 = vld [vmem:[%s555 + $0x68] sm:$0xf]
          %v2192 = vld [vmem:[%s555 + $0x6c] sm:$0xf]
          %v2193 = vld [vmem:[%s555 + $0x70] sm:$0xf]
          %v2194 = vld [vmem:[%s555 + $0x74] sm:$0xf]
          %v2195 = vld [vmem:[%s555 + $0x78] sm:$0xf]
          %v2196 = vld [vmem:[%s555 + $0x7c] sm:$0xf]
          %v2197 = vld [vmem:[%s555 + $0x80] sm:$0xf]
          %v2198 = vld [vmem:[%s555 + $0x84] sm:$0xf]
          %v2199 = vld [vmem:[%s555 + $0x88] sm:$0x1]
          %2201 = vset.pattern.permute.xlu0 0
          %2202 = vperm.xlu0 %2201, %v1195
          %v2203 = vpop.permute.xlu0 %2202
          %v2206 = vunpack.c.l.s4 839922192
          %v2207 = vunpack.c.0.s8 %v2206
          %v2208 = vperm.slane %v2203, %v2207
          %2210 = vset.pattern.permute.xlu0 0
          %2211 = vperm.xlu0 %2210, %v1196
          %v2212 = vpop.permute.xlu0 %2211
          %v2215 = vunpack.c.l.s4 839922192
          %v2216 = vunpack.c.0.s8 %v2215
          %v2217 = vperm.slane %v2212, %v2216
          %2219 = vset.pattern.permute.xlu0 0
          %2220 = vperm.xlu0 %2219, %v1197
          %v2221 = vpop.permute.xlu0 %2220
          %v2224 = vunpack.c.l.s4 839922192
          %v2225 = vunpack.c.0.s8 %v2224
          %v2226 = vperm.slane %v2221, %v2225
          %2228 = vset.pattern.permute.xlu0 0
          %2229 = vperm.xlu0 %2228, %v1198
          %v2230 = vpop.permute.xlu0 %2229
          %v2233 = vunpack.c.l.s4 839922192
          %v2234 = vunpack.c.0.s8 %v2233
          %v2235 = vperm.slane %v2230, %v2234
          %2237 = vset.pattern.permute.xlu0 0
          %2238 = vperm.xlu0 %2237, %v1199
          %v2239 = vpop.permute.xlu0 %2238
          %v2242 = vunpack.c.l.s4 839922192
          %v2243 = vunpack.c.0.s8 %v2242
          %v2244 = vperm.slane %v2239, %v2243
          %2246 = vset.pattern.permute.xlu0 0
          %2247 = vperm.xlu0 %2246, %v1200
          %v2248 = vpop.permute.xlu0 %2247
          %v2251 = vunpack.c.l.s4 839922192
          %v2252 = vunpack.c.0.s8 %v2251
          %v2253 = vperm.slane %v2248, %v2252
          %2255 = vset.pattern.permute.xlu0 0
          %2256 = vperm.xlu0 %2255, %v1201
          %v2257 = vpop.permute.xlu0 %2256
          %v2260 = vunpack.c.l.s4 839922192
          %v2261 = vunpack.c.0.s8 %v2260
          %v2262 = vperm.slane %v2257, %v2261
          %2264 = vset.pattern.permute.xlu0 0
          %2265 = vperm.xlu0 %2264, %v1202
          %v2266 = vpop.permute.xlu0 %2265
          %v2269 = vunpack.c.l.s4 839922192
          %v2270 = vunpack.c.0.s8 %v2269
          %v2271 = vperm.slane %v2266, %v2270
          %2273 = vset.pattern.permute.xlu0 0
          %2274 = vperm.xlu0 %2273, %v1203
          %v2275 = vpop.permute.xlu0 %2274
          %v2278 = vunpack.c.l.s4 839922192
          %v2279 = vunpack.c.0.s8 %v2278
          %v2280 = vperm.slane %v2275, %v2279
          %2282 = vset.pattern.permute.xlu0 0
          %2283 = vperm.xlu0 %2282, %v1204
          %v2284 = vpop.permute.xlu0 %2283
          %v2287 = vunpack.c.l.s4 839922192
          %v2288 = vunpack.c.0.s8 %v2287
          %v2289 = vperm.slane %v2284, %v2288
          %2291 = vset.pattern.permute.xlu0 0
          %2292 = vperm.xlu0 %2291, %v1205
          %v2293 = vpop.permute.xlu0 %2292
          %v2296 = vunpack.c.l.s4 839922192
          %v2297 = vunpack.c.0.s8 %v2296
          %v2298 = vperm.slane %v2293, %v2297
          %2300 = vset.pattern.permute.xlu0 0
          %2301 = vperm.xlu0 %2300, %v1206
          %v2302 = vpop.permute.xlu0 %2301
          %v2305 = vunpack.c.l.s4 839922192
          %v2306 = vunpack.c.0.s8 %v2305
          %v2307 = vperm.slane %v2302, %v2306
          %2309 = vset.pattern.permute.xlu0 0
          %2310 = vperm.xlu0 %2309, %v1207
          %v2311 = vpop.permute.xlu0 %2310
          %v2314 = vunpack.c.l.s4 839922192
          %v2315 = vunpack.c.0.s8 %v2314
          %v2316 = vperm.slane %v2311, %v2315
          %2318 = vset.pattern.permute.xlu0 0
          %2319 = vperm.xlu0 %2318, %v1208
          %v2320 = vpop.permute.xlu0 %2319
          %v2323 = vunpack.c.l.s4 839922192
          %v2324 = vunpack.c.0.s8 %v2323
          %v2325 = vperm.slane %v2320, %v2324
          %2327 = vset.pattern.permute.xlu0 0
          %2328 = vperm.xlu0 %2327, %v1209
          %v2329 = vpop.permute.xlu0 %2328
          %v2332 = vunpack.c.l.s4 839922192
          %v2333 = vunpack.c.0.s8 %v2332
          %v2334 = vperm.slane %v2329, %v2333
          %2336 = vset.pattern.permute.xlu0 0
          %2337 = vperm.xlu0 %2336, %v1210
          %v2338 = vpop.permute.xlu0 %2337
          %v2341 = vunpack.c.l.s4 839922192
          %v2342 = vunpack.c.0.s8 %v2341
          %v2343 = vperm.slane %v2338, %v2342
          %2345 = vset.pattern.permute.xlu0 0
          %2346 = vperm.xlu0 %2345, %v1211
          %v2347 = vpop.permute.xlu0 %2346
          %v2350 = vunpack.c.l.s4 839922192
          %v2351 = vunpack.c.0.s8 %v2350
          %v2352 = vperm.slane %v2347, %v2351
          %2354 = vset.pattern.permute.xlu0 0
          %2355 = vperm.xlu0 %2354, %v1212
          %v2356 = vpop.permute.xlu0 %2355
          %v2359 = vunpack.c.l.s4 839922192
          %v2360 = vunpack.c.0.s8 %v2359
          %v2361 = vperm.slane %v2356, %v2360
          %2363 = vset.pattern.permute.xlu0 0
          %2364 = vperm.xlu0 %2363, %v1213
          %v2365 = vpop.permute.xlu0 %2364
          %v2368 = vunpack.c.l.s4 839922192
          %v2369 = vunpack.c.0.s8 %v2368
          %v2370 = vperm.slane %v2365, %v2369
          %2372 = vset.pattern.permute.xlu0 0
          %2373 = vperm.xlu0 %2372, %v1214
          %v2374 = vpop.permute.xlu0 %2373
          %v2377 = vunpack.c.l.s4 839922192
          %v2378 = vunpack.c.0.s8 %v2377
          %v2379 = vperm.slane %v2374, %v2378
          %2381 = vset.pattern.permute.xlu0 0
          %2382 = vperm.xlu0 %2381, %v1215
          %v2383 = vpop.permute.xlu0 %2382
          %v2386 = vunpack.c.l.s4 839922192
          %v2387 = vunpack.c.0.s8 %v2386
          %v2388 = vperm.slane %v2383, %v2387
          %2390 = vset.pattern.permute.xlu0 0
          %2391 = vperm.xlu0 %2390, %v1216
          %v2392 = vpop.permute.xlu0 %2391
          %v2395 = vunpack.c.l.s4 839922192
          %v2396 = vunpack.c.0.s8 %v2395
          %v2397 = vperm.slane %v2392, %v2396
          %2399 = vset.pattern.permute.xlu0 0
          %2400 = vperm.xlu0 %2399, %v1217
          %v2401 = vpop.permute.xlu0 %2400
          %v2404 = vunpack.c.l.s4 839922192
          %v2405 = vunpack.c.0.s8 %v2404
          %v2406 = vperm.slane %v2401, %v2405
          %2408 = vset.pattern.permute.xlu0 0
          %2409 = vperm.xlu0 %2408, %v1218
          %v2410 = vpop.permute.xlu0 %2409
          %v2413 = vunpack.c.l.s4 839922192
          %v2414 = vunpack.c.0.s8 %v2413
          %v2415 = vperm.slane %v2410, %v2414
          %2417 = vset.pattern.permute.xlu0 0
          %2418 = vperm.xlu0 %2417, %v1219
          %v2419 = vpop.permute.xlu0 %2418
          %v2422 = vunpack.c.l.s4 839922192
          %v2423 = vunpack.c.0.s8 %v2422
          %v2424 = vperm.slane %v2419, %v2423
          %2426 = vset.pattern.permute.xlu0 0
          %2427 = vperm.xlu0 %2426, %v1220
          %v2428 = vpop.permute.xlu0 %2427
          %v2431 = vunpack.c.l.s4 839922192
          %v2432 = vunpack.c.0.s8 %v2431
          %v2433 = vperm.slane %v2428, %v2432
          %2435 = vset.pattern.permute.xlu0 0
          %2436 = vperm.xlu0 %2435, %v1221
          %v2437 = vpop.permute.xlu0 %2436
          %v2440 = vunpack.c.l.s4 839922192
          %v2441 = vunpack.c.0.s8 %v2440
          %v2442 = vperm.slane %v2437, %v2441
          %2444 = vset.pattern.permute.xlu0 0
          %2445 = vperm.xlu0 %2444, %v1222
          %v2446 = vpop.permute.xlu0 %2445
          %v2449 = vunpack.c.l.s4 839922192
          %v2450 = vunpack.c.0.s8 %v2449
          %v2451 = vperm.slane %v2446, %v2450
          %2453 = vset.pattern.permute.xlu0 0
          %2454 = vperm.xlu0 %2453, %v1223
          %v2455 = vpop.permute.xlu0 %2454
          %v2458 = vunpack.c.l.s4 839922192
          %v2459 = vunpack.c.0.s8 %v2458
          %v2460 = vperm.slane %v2455, %v2459
          %2462 = vset.pattern.permute.xlu0 0
          %2463 = vperm.xlu0 %2462, %v1224
          %v2464 = vpop.permute.xlu0 %2463
          %v2467 = vunpack.c.l.s4 839922192
          %v2468 = vunpack.c.0.s8 %v2467
          %v2469 = vperm.slane %v2464, %v2468
          %2471 = vset.pattern.permute.xlu0 0
          %2472 = vperm.xlu0 %2471, %v1225
          %v2473 = vpop.permute.xlu0 %2472
          %v2476 = vunpack.c.l.s4 839922192
          %v2477 = vunpack.c.0.s8 %v2476
          %v2478 = vperm.slane %v2473, %v2477
          %2480 = vset.pattern.permute.xlu0 0
          %2481 = vperm.xlu0 %2480, %v1226
          %v2482 = vpop.permute.xlu0 %2481
          %v2485 = vunpack.c.l.s4 839922192
          %v2486 = vunpack.c.0.s8 %v2485
          %v2487 = vperm.slane %v2482, %v2486
          %v2488 = vunpack.c.l.bf16 %v2167
          %v2489 = vunpack.c.l.bf16 %v2168
          %v2490 = vunpack.c.l.bf16 %v2169
          %v2491 = vunpack.c.l.bf16 %v2170
          %v2492 = vunpack.c.l.bf16 %v2171
          %v2493 = vunpack.c.l.bf16 %v2172
          %v2494 = vunpack.c.l.bf16 %v2173
          %v2495 = vunpack.c.l.bf16 %v2174
          %v2496 = vunpack.c.l.bf16 %v2175
          %v2497 = vunpack.c.l.bf16 %v2176
          %v2498 = vunpack.c.l.bf16 %v2177
          %v2499 = vunpack.c.l.bf16 %v2178
          %v2500 = vunpack.c.l.bf16 %v2179
          %v2501 = vunpack.c.l.bf16 %v2180
          %v2502 = vunpack.c.l.bf16 %v2181
          %v2503 = vunpack.c.l.bf16 %v2182
          %v2504 = vunpack.c.l.bf16 %v2183
          %v2505 = vunpack.c.l.bf16 %v2184
          %v2506 = vunpack.c.l.bf16 %v2185
          %v2507 = vunpack.c.l.bf16 %v2186
          %v2508 = vunpack.c.l.bf16 %v2187
          %v2509 = vunpack.c.l.bf16 %v2188
          %v2510 = vunpack.c.l.bf16 %v2189
          %v2511 = vunpack.c.l.bf16 %v2190
          %v2512 = vunpack.c.l.bf16 %v2191
          %v2513 = vunpack.c.l.bf16 %v2192
          %v2514 = vunpack.c.l.bf16 %v2193
          %v2515 = vunpack.c.l.bf16 %v2194
          %v2516 = vunpack.c.l.bf16 %v2195
          %v2517 = vunpack.c.l.bf16 %v2196
          %v2518 = vunpack.c.l.bf16 %v2197
          %v2519 = vunpack.c.l.bf16 %v2198
          %v2520 = vunpack.c.l.bf16 %v2199
          %v2521 = vunpack.c.l.bf16 %v2208
          %v2522 = vunpack.c.l.bf16 %v2217
          %v2523 = vunpack.c.l.bf16 %v2226
          %v2524 = vunpack.c.l.bf16 %v2235
          %v2525 = vunpack.c.l.bf16 %v2244
          %v2526 = vunpack.c.l.bf16 %v2253
          %v2527 = vunpack.c.l.bf16 %v2262
          %v2528 = vunpack.c.l.bf16 %v2271
          %v2529 = vunpack.c.l.bf16 %v2280
          %v2530 = vunpack.c.l.bf16 %v2289
          %v2531 = vunpack.c.l.bf16 %v2298
          %v2532 = vunpack.c.l.bf16 %v2307
          %v2533 = vunpack.c.l.bf16 %v2316
          %v2534 = vunpack.c.l.bf16 %v2325
          %v2535 = vunpack.c.l.bf16 %v2334
          %v2536 = vunpack.c.l.bf16 %v2343
          %v2537 = vunpack.c.l.bf16 %v2352
          %v2538 = vunpack.c.l.bf16 %v2361
          %v2539 = vunpack.c.l.bf16 %v2370
          %v2540 = vunpack.c.l.bf16 %v2379
          %v2541 = vunpack.c.l.bf16 %v2388
          %v2542 = vunpack.c.l.bf16 %v2397
          %v2543 = vunpack.c.l.bf16 %v2406
          %v2544 = vunpack.c.l.bf16 %v2415
          %v2545 = vunpack.c.l.bf16 %v2424
          %v2546 = vunpack.c.l.bf16 %v2433
          %v2547 = vunpack.c.l.bf16 %v2442
          %v2548 = vunpack.c.l.bf16 %v2451
          %v2549 = vunpack.c.l.bf16 %v2460
          %v2550 = vunpack.c.l.bf16 %v2469
          %v2551 = vunpack.c.l.bf16 %v2478
          %v2552 = vunpack.c.l.bf16 %v2487
          %vm2585 = vcmask 1040384
          %v2586 = vrot.slane %v2521, 7
          %v2587 = vrot.slane %v2522, 7
          %v2588 = vsel %vm2585, %v2586, %v2587
          %v2589 = vrot.slane %v2523, 7
          %v2590 = vsel %vm2585, %v2587, %v2589
          %v2591 = vrot.slane %v2524, 7
          %v2592 = vsel %vm2585, %v2589, %v2591
          %v2593 = vrot.slane %v2525, 7
          %v2594 = vsel %vm2585, %v2591, %v2593
          %v2595 = vrot.slane %v2526, 7
          %v2596 = vsel %vm2585, %v2593, %v2595
          %v2597 = vrot.slane %v2527, 7
          %v2598 = vsel %vm2585, %v2595, %v2597
          %v2599 = vrot.slane %v2528, 7
          %v2600 = vsel %vm2585, %v2597, %v2599
          %v2601 = vrot.slane %v2529, 7
          %v2602 = vsel %vm2585, %v2599, %v2601
          %v2603 = vrot.slane %v2530, 7
          %v2604 = vsel %vm2585, %v2601, %v2603
          %v2605 = vrot.slane %v2531, 7
          %v2606 = vsel %vm2585, %v2603, %v2605
          %v2607 = vrot.slane %v2532, 7
          %v2608 = vsel %vm2585, %v2605, %v2607
          %v2609 = vrot.slane %v2533, 7
          %v2610 = vsel %vm2585, %v2607, %v2609
          %v2611 = vrot.slane %v2534, 7
          %v2612 = vsel %vm2585, %v2609, %v2611
          %v2613 = vrot.slane %v2535, 7
          %v2614 = vsel %vm2585, %v2611, %v2613
          %v2615 = vrot.slane %v2536, 7
          %v2616 = vsel %vm2585, %v2613, %v2615
          %v2617 = vrot.slane %v2537, 7
          %v2618 = vsel %vm2585, %v2615, %v2617
          %v2619 = vrot.slane %v2538, 7
          %v2620 = vsel %vm2585, %v2617, %v2619
          %v2621 = vrot.slane %v2539, 7
          %v2622 = vsel %vm2585, %v2619, %v2621
          %v2623 = vrot.slane %v2540, 7
          %v2624 = vsel %vm2585, %v2621, %v2623
          %v2625 = vrot.slane %v2541, 7
          %v2626 = vsel %vm2585, %v2623, %v2625
          %v2627 = vrot.slane %v2542, 7
          %v2628 = vsel %vm2585, %v2625, %v2627
          %v2629 = vrot.slane %v2543, 7
          %v2630 = vsel %vm2585, %v2627, %v2629
          %v2631 = vrot.slane %v2544, 7
          %v2632 = vsel %vm2585, %v2629, %v2631
          %v2633 = vrot.slane %v2545, 7
          %v2634 = vsel %vm2585, %v2631, %v2633
          %v2635 = vrot.slane %v2546, 7
          %v2636 = vsel %vm2585, %v2633, %v2635
          %v2637 = vrot.slane %v2547, 7
          %v2638 = vsel %vm2585, %v2635, %v2637
          %v2639 = vrot.slane %v2548, 7
          %v2640 = vsel %vm2585, %v2637, %v2639
          %v2641 = vrot.slane %v2549, 7
          %v2642 = vsel %vm2585, %v2639, %v2641
          %v2643 = vrot.slane %v2550, 7
          %v2644 = vsel %vm2585, %v2641, %v2643
          %v2645 = vrot.slane %v2551, 7
          %v2646 = vsel %vm2585, %v2643, %v2645
          %v2647 = vrot.slane %v2552, 7
          %v2648 = vsel %vm2585, %v2645, %v2647
          %v2682 = vmul.f32 %v2488, %v2586
          %v2683 = vmul.f32 %v2489, %v2588
          %v2684 = vmul.f32 %v2490, %v2590
          %v2685 = vmul.f32 %v2491, %v2592
          %v2686 = vmul.f32 %v2492, %v2594
          %v2687 = vmul.f32 %v2493, %v2596
          %v2688 = vmul.f32 %v2494, %v2598
          %v2689 = vmul.f32 %v2495, %v2600
          %v2690 = vmul.f32 %v2496, %v2602
          %v2691 = vmul.f32 %v2497, %v2604
          %v2692 = vmul.f32 %v2498, %v2606
          %v2693 = vmul.f32 %v2499, %v2608
          %v2694 = vmul.f32 %v2500, %v2610
          %v2695 = vmul.f32 %v2501, %v2612
          %v2696 = vmul.f32 %v2502, %v2614
          %v2697 = vmul.f32 %v2503, %v2616
          %v2698 = vmul.f32 %v2504, %v2618
          %v2699 = vmul.f32 %v2505, %v2620
          %v2700 = vmul.f32 %v2506, %v2622
          %v2701 = vmul.f32 %v2507, %v2624
          %v2702 = vmul.f32 %v2508, %v2626
          %v2703 = vmul.f32 %v2509, %v2628
          %v2704 = vmul.f32 %v2510, %v2630
          %v2705 = vmul.f32 %v2511, %v2632
          %v2706 = vmul.f32 %v2512, %v2634
          %v2707 = vmul.f32 %v2513, %v2636
          %v2708 = vmul.f32 %v2514, %v2638
          %v2709 = vmul.f32 %v2515, %v2640
          %v2710 = vmul.f32 %v2516, %v2642
          %v2711 = vmul.f32 %v2517, %v2644
          %v2712 = vmul.f32 %v2518, %v2646
          %v2713 = vmul.f32 %v2519, %v2648
          %v2714 = vmul.f32 %v2520, %v2647
          %v2715 = vpack.c.bf16 %v2682, %v2682
          %v2716 = vpack.c.bf16 %v2683, %v2683
          %v2717 = vpack.c.bf16 %v2684, %v2684
          %v2718 = vpack.c.bf16 %v2685, %v2685
          %v2719 = vpack.c.bf16 %v2686, %v2686
          %v2720 = vpack.c.bf16 %v2687, %v2687
          %v2721 = vpack.c.bf16 %v2688, %v2688
          %v2722 = vpack.c.bf16 %v2689, %v2689
          %v2723 = vpack.c.bf16 %v2690, %v2690
          %v2724 = vpack.c.bf16 %v2691, %v2691
          %v2725 = vpack.c.bf16 %v2692, %v2692
          %v2726 = vpack.c.bf16 %v2693, %v2693
          %v2727 = vpack.c.bf16 %v2694, %v2694
          %v2728 = vpack.c.bf16 %v2695, %v2695
          %v2729 = vpack.c.bf16 %v2696, %v2696
          %v2730 = vpack.c.bf16 %v2697, %v2697
          %v2731 = vpack.c.bf16 %v2698, %v2698
          %v2732 = vpack.c.bf16 %v2699, %v2699
          %v2733 = vpack.c.bf16 %v2700, %v2700
          %v2734 = vpack.c.bf16 %v2701, %v2701
          %v2735 = vpack.c.bf16 %v2702, %v2702
          %v2736 = vpack.c.bf16 %v2703, %v2703
          %v2737 = vpack.c.bf16 %v2704, %v2704
          %v2738 = vpack.c.bf16 %v2705, %v2705
          %v2739 = vpack.c.bf16 %v2706, %v2706
          %v2740 = vpack.c.bf16 %v2707, %v2707
          %v2741 = vpack.c.bf16 %v2708, %v2708
          %v2742 = vpack.c.bf16 %v2709, %v2709
          %v2743 = vpack.c.bf16 %v2710, %v2710
          %v2744 = vpack.c.bf16 %v2711, %v2711
          %v2745 = vpack.c.bf16 %v2712, %v2712
          %v2746 = vpack.c.bf16 %v2713, %v2713
          %v2747 = vpack.c.bf16 %v2714, %v2714
          %vm2748 = vsmask.f32 3328
          %vm2749 = vsmask.f32 7440
          %vm2750 = vmor %vm2748, %vm2749
          %v2752 = vshrl.u32 %v2715, 16
          %v2754 = vrot.slane %v2752, 4
          %v2755 = vshll.u32 %v2715, 16
          %v2757 = vrot.slane %v2755, 5
          %v2758 = vor.u32 %v2754, %v2757
          %v2759 = vrot.slane %v2758, 4
          %v2761 = vshll.u32 %v2716, 16
          %v2763 = vrot.slane %v2761, 5
          %v2764 = vsel %vm2750, %v2759, %v2763
          %v2765 = vshrl.u32 %v2716, 16
          %v2767 = vrot.slane %v2765, 4
          %v2768 = vor.u32 %v2767, %v2763
          %v2769 = vrot.slane %v2768, 4
          %v2771 = vshll.u32 %v2717, 16
          %v2773 = vrot.slane %v2771, 5
          %v2774 = vsel %vm2750, %v2769, %v2773
          %v2775 = vshrl.u32 %v2717, 16
          %v2777 = vrot.slane %v2775, 4
          %v2778 = vor.u32 %v2777, %v2773
          %v2779 = vrot.slane %v2778, 4
          %v2781 = vshll.u32 %v2718, 16
          %v2783 = vrot.slane %v2781, 5
          %v2784 = vsel %vm2750, %v2779, %v2783
          %v2785 = vshrl.u32 %v2718, 16
          %v2787 = vrot.slane %v2785, 4
          %v2788 = vor.u32 %v2787, %v2783
          %v2789 = vrot.slane %v2788, 4
          %v2791 = vshll.u32 %v2719, 16
          %v2793 = vrot.slane %v2791, 5
          %v2794 = vsel %vm2750, %v2789, %v2793
          %v2795 = vshrl.u32 %v2719, 16
          %v2797 = vrot.slane %v2795, 4
          %v2798 = vor.u32 %v2797, %v2793
          %v2799 = vrot.slane %v2798, 4
          %v2801 = vshll.u32 %v2720, 16
          %v2803 = vrot.slane %v2801, 5
          %v2804 = vsel %vm2750, %v2799, %v2803
          %v2805 = vshrl.u32 %v2720, 16
          %v2807 = vrot.slane %v2805, 4
          %v2808 = vor.u32 %v2807, %v2803
          %v2809 = vrot.slane %v2808, 4
          %v2811 = vshll.u32 %v2721, 16
          %v2813 = vrot.slane %v2811, 5
          %v2814 = vsel %vm2750, %v2809, %v2813
          %v2815 = vshrl.u32 %v2721, 16
          %v2817 = vrot.slane %v2815, 4
          %v2818 = vor.u32 %v2817, %v2813
          %v2819 = vrot.slane %v2818, 4
          %v2821 = vshll.u32 %v2722, 16
          %v2823 = vrot.slane %v2821, 5
          %v2824 = vsel %vm2750, %v2819, %v2823
          %v2825 = vshrl.u32 %v2722, 16
          %v2827 = vrot.slane %v2825, 4
          %v2828 = vor.u32 %v2827, %v2823
          %v2829 = vrot.slane %v2828, 4
          %v2831 = vshll.u32 %v2723, 16
          %v2833 = vrot.slane %v2831, 5
          %v2834 = vsel %vm2750, %v2829, %v2833
          %v2835 = vshrl.u32 %v2723, 16
          %v2837 = vrot.slane %v2835, 4
          %v2838 = vor.u32 %v2837, %v2833
          %v2839 = vrot.slane %v2838, 4
          %v2841 = vshll.u32 %v2724, 16
          %v2843 = vrot.slane %v2841, 5
          %v2844 = vsel %vm2750, %v2839, %v2843
          %v2845 = vshrl.u32 %v2724, 16
          %v2847 = vrot.slane %v2845, 4
          %v2848 = vor.u32 %v2847, %v2843
          %v2849 = vrot.slane %v2848, 4
          %v2851 = vshll.u32 %v2725, 16
          %v2853 = vrot.slane %v2851, 5
          %v2854 = vsel %vm2750, %v2849, %v2853
          %v2855 = vshrl.u32 %v2725, 16
          %v2857 = vrot.slane %v2855, 4
          %v2858 = vor.u32 %v2857, %v2853
          %v2859 = vrot.slane %v2858, 4
          %v2861 = vshll.u32 %v2726, 16
          %v2863 = vrot.slane %v2861, 5
          %v2864 = vsel %vm2750, %v2859, %v2863
          %v2865 = vshrl.u32 %v2726, 16
          %v2867 = vrot.slane %v2865, 4
          %v2868 = vor.u32 %v2867, %v2863
          %v2869 = vrot.slane %v2868, 4
          %v2871 = vshll.u32 %v2727, 16
          %v2873 = vrot.slane %v2871, 5
          %v2874 = vsel %vm2750, %v2869, %v2873
          %v2875 = vshrl.u32 %v2727, 16
          %v2877 = vrot.slane %v2875, 4
          %v2878 = vor.u32 %v2877, %v2873
          %v2879 = vrot.slane %v2878, 4
          %v2881 = vshll.u32 %v2728, 16
          %v2883 = vrot.slane %v2881, 5
          %v2884 = vsel %vm2750, %v2879, %v2883
          %v2885 = vshrl.u32 %v2728, 16
          %v2887 = vrot.slane %v2885, 4
          %v2888 = vor.u32 %v2887, %v2883
          %v2889 = vrot.slane %v2888, 4
          %v2891 = vshll.u32 %v2729, 16
          %v2893 = vrot.slane %v2891, 5
          %v2894 = vsel %vm2750, %v2889, %v2893
          %v2895 = vshrl.u32 %v2729, 16
          %v2897 = vrot.slane %v2895, 4
          %v2898 = vor.u32 %v2897, %v2893
          %v2899 = vrot.slane %v2898, 4
          %v2901 = vshll.u32 %v2730, 16
          %v2903 = vrot.slane %v2901, 5
          %v2904 = vsel %vm2750, %v2899, %v2903
          %v2905 = vshrl.u32 %v2730, 16
          %v2907 = vrot.slane %v2905, 4
          %v2908 = vor.u32 %v2907, %v2903
          %v2909 = vrot.slane %v2908, 4
          %v2911 = vshll.u32 %v2731, 16
          %v2913 = vrot.slane %v2911, 5
          %v2914 = vsel %vm2750, %v2909, %v2913
          %v2915 = vshrl.u32 %v2731, 16
          %v2917 = vrot.slane %v2915, 4
          %v2918 = vor.u32 %v2917, %v2913
          %v2919 = vrot.slane %v2918, 4
          %v2921 = vshll.u32 %v2732, 16
          %v2923 = vrot.slane %v2921, 5
          %v2924 = vsel %vm2750, %v2919, %v2923
          %v2925 = vshrl.u32 %v2732, 16
          %v2927 = vrot.slane %v2925, 4
          %v2928 = vor.u32 %v2927, %v2923
          %v2929 = vrot.slane %v2928, 4
          %v2931 = vshll.u32 %v2733, 16
          %v2933 = vrot.slane %v2931, 5
          %v2934 = vsel %vm2750, %v2929, %v2933
          %v2935 = vshrl.u32 %v2733, 16
          %v2937 = vrot.slane %v2935, 4
          %v2938 = vor.u32 %v2937, %v2933
          %v2939 = vrot.slane %v2938, 4
          %v2941 = vshll.u32 %v2734, 16
          %v2943 = vrot.slane %v2941, 5
          %v2944 = vsel %vm2750, %v2939, %v2943
          %v2945 = vshrl.u32 %v2734, 16
          %v2947 = vrot.slane %v2945, 4
          %v2948 = vor.u32 %v2947, %v2943
          %v2949 = vrot.slane %v2948, 4
          %v2951 = vshll.u32 %v2735, 16
          %v2953 = vrot.slane %v2951, 5
          %v2954 = vsel %vm2750, %v2949, %v2953
          %v2955 = vshrl.u32 %v2735, 16
          %v2957 = vrot.slane %v2955, 4
          %v2958 = vor.u32 %v2957, %v2953
          %v2959 = vrot.slane %v2958, 4
          %v2961 = vshll.u32 %v2736, 16
          %v2963 = vrot.slane %v2961, 5
          %v2964 = vsel %vm2750, %v2959, %v2963
          %v2965 = vshrl.u32 %v2736, 16
          %v2967 = vrot.slane %v2965, 4
          %v2968 = vor.u32 %v2967, %v2963
          %v2969 = vrot.slane %v2968, 4
          %v2971 = vshll.u32 %v2737, 16
          %v2973 = vrot.slane %v2971, 5
          %v2974 = vsel %vm2750, %v2969, %v2973
          %v2975 = vshrl.u32 %v2737, 16
          %v2977 = vrot.slane %v2975, 4
          %v2978 = vor.u32 %v2977, %v2973
          %v2979 = vrot.slane %v2978, 4
          %v2981 = vshll.u32 %v2738, 16
          %v2983 = vrot.slane %v2981, 5
          %v2984 = vsel %vm2750, %v2979, %v2983
          %v2985 = vshrl.u32 %v2738, 16
          %v2987 = vrot.slane %v2985, 4
          %v2988 = vor.u32 %v2987, %v2983
          %v2989 = vrot.slane %v2988, 4
          %v2991 = vshll.u32 %v2739, 16
          %v2993 = vrot.slane %v2991, 5
          %v2994 = vsel %vm2750, %v2989, %v2993
          %v2995 = vshrl.u32 %v2739, 16
          %v2997 = vrot.slane %v2995, 4
          %v2998 = vor.u32 %v2997, %v2993
          %v2999 = vrot.slane %v2998, 4
          %v3001 = vshll.u32 %v2740, 16
          %v3003 = vrot.slane %v3001, 5
          %v3004 = vsel %vm2750, %v2999, %v3003
          %v3005 = vshrl.u32 %v2740, 16
          %v3007 = vrot.slane %v3005, 4
          %v3008 = vor.u32 %v3007, %v3003
          %v3009 = vrot.slane %v3008, 4
          %v3011 = vshll.u32 %v2741, 16
          %v3013 = vrot.slane %v3011, 5
          %v3014 = vsel %vm2750, %v3009, %v3013
          %v3015 = vshrl.u32 %v2741, 16
          %v3017 = vrot.slane %v3015, 4
          %v3018 = vor.u32 %v3017, %v3013
          %v3019 = vrot.slane %v3018, 4
          %v3021 = vshll.u32 %v2742, 16
          %v3023 = vrot.slane %v3021, 5
          %v3024 = vsel %vm2750, %v3019, %v3023
          %v3025 = vshrl.u32 %v2742, 16
          %v3027 = vrot.slane %v3025, 4
          %v3028 = vor.u32 %v3027, %v3023
          %v3029 = vrot.slane %v3028, 4
          %v3031 = vshll.u32 %v2743, 16
          %v3033 = vrot.slane %v3031, 5
          %v3034 = vsel %vm2750, %v3029, %v3033
          %v3035 = vshrl.u32 %v2743, 16
          %v3037 = vrot.slane %v3035, 4
          %v3038 = vor.u32 %v3037, %v3033
          %v3039 = vrot.slane %v3038, 4
          %v3041 = vshll.u32 %v2744, 16
          %v3043 = vrot.slane %v3041, 5
          %v3044 = vsel %vm2750, %v3039, %v3043
          %v3045 = vshrl.u32 %v2744, 16
          %v3047 = vrot.slane %v3045, 4
          %v3048 = vor.u32 %v3047, %v3043
          %v3049 = vrot.slane %v3048, 4
          %v3051 = vshll.u32 %v2745, 16
          %v3053 = vrot.slane %v3051, 5
          %v3054 = vsel %vm2750, %v3049, %v3053
          %v3055 = vshrl.u32 %v2745, 16
          %v3057 = vrot.slane %v3055, 4
          %v3058 = vor.u32 %v3057, %v3053
          %v3059 = vrot.slane %v3058, 4
          %v3061 = vshll.u32 %v2746, 16
          %v3063 = vrot.slane %v3061, 5
          %v3064 = vsel %vm2750, %v3059, %v3063
          %v3065 = vshrl.u32 %v2746, 16
          %v3067 = vrot.slane %v3065, 4
          %v3068 = vor.u32 %v3067, %v3063
          %v3069 = vrot.slane %v3068, 4
          %v3071 = vshll.u32 %v2747, 16
          %v3073 = vrot.slane %v3071, 5
          %v3074 = vsel %vm2750, %v3069, %v3073
          %3107 = vst [vmem:[%s560 + $0x8] sm:$0xf] %v2764
          %3108 = vst [vmem:[%s560 + $0xc] sm:$0xf] %v2774
          %3109 = vst [vmem:[%s560 + $0x10] sm:$0xf] %v2784
          %3110 = vst [vmem:[%s560 + $0x14] sm:$0xf] %v2794
          %3111 = vst [vmem:[%s560 + $0x18] sm:$0xf] %v2804
          %3112 = vst [vmem:[%s560 + $0x1c] sm:$0xf] %v2814
          %3113 = vst [vmem:[%s560 + $0x20] sm:$0xf] %v2824
          %3114 = vst [vmem:[%s560 + $0x24] sm:$0xf] %v2834
          %3115 = vst [vmem:[%s560 + $0x28] sm:$0xf] %v2844
          %3116 = vst [vmem:[%s560 + $0x2c] sm:$0xf] %v2854
          %3117 = vst [vmem:[%s560 + $0x30] sm:$0xf] %v2864
          %3118 = vst [vmem:[%s560 + $0x34] sm:$0xf] %v2874
          %3119 = vst [vmem:[%s560 + $0x38] sm:$0xf] %v2884
          %3120 = vst [vmem:[%s560 + $0x3c] sm:$0xf] %v2894
          %3121 = vst [vmem:[%s560 + $0x40] sm:$0xf] %v2904
          %3122 = vst [vmem:[%s560 + $0x44] sm:$0xf] %v2914
          %3123 = vst [vmem:[%s560 + $0x48] sm:$0xf] %v2924
          %3124 = vst [vmem:[%s560 + $0x4c] sm:$0xf] %v2934
          %3125 = vst [vmem:[%s560 + $0x50] sm:$0xf] %v2944
          %3126 = vst [vmem:[%s560 + $0x54] sm:$0xf] %v2954
          %3127 = vst [vmem:[%s560 + $0x58] sm:$0xf] %v2964
          %3128 = vst [vmem:[%s560 + $0x5c] sm:$0xf] %v2974
          %3129 = vst [vmem:[%s560 + $0x60] sm:$0xf] %v2984
          %3130 = vst [vmem:[%s560 + $0x64] sm:$0xf] %v2994
          %3131 = vst [vmem:[%s560 + $0x68] sm:$0xf] %v3004
          %3132 = vst [vmem:[%s560 + $0x6c] sm:$0xf] %v3014
          %3133 = vst [vmem:[%s560 + $0x70] sm:$0xf] %v3024
          %3134 = vst [vmem:[%s560 + $0x74] sm:$0xf] %v3034
          %3135 = vst [vmem:[%s560 + $0x78] sm:$0xf] %v3044
          %3136 = vst [vmem:[%s560 + $0x7c] sm:$0xf] %v3054
          %3137 = vst [vmem:[%s560 + $0x80] sm:$0xf] %v3064
          %3138 = vst [vmem:[%s560 + $0x84] sm:$0xf] %v3074
        $region88: #{tpu_custom_call.1} parent=63 // pred_fallthru
          _
        %v3139 = vld [vmem:[#allocation2] sm:$0xf]
        %v3140 = vld [vmem:[#allocation2 + $0x4] sm:$0xf]
        %v3141 = vld [vmem:[#allocation2 + $0x8] sm:$0xf]
        %v3142 = vld [vmem:[#allocation2 + $0xc] sm:$0xf]
        %v3143 = vld [vmem:[#allocation2 + $0x10] sm:$0xf]
        %v3144 = vld [vmem:[#allocation2 + $0x14] sm:$0xf]
        %v3145 = vld [vmem:[#allocation2 + $0x18] sm:$0xf]
        %v3146 = vld [vmem:[#allocation2 + $0x1c] sm:$0xf]
        %v3147 = vld [vmem:[#allocation2 + $0x20] sm:$0xf]
        %v3148 = vld [vmem:[#allocation2 + $0x24] sm:$0xf]
        %v3149 = vld [vmem:[#allocation2 + $0x28] sm:$0xf]
        %v3150 = vld [vmem:[#allocation2 + $0x2c] sm:$0xf]
        %v3151 = vld [vmem:[#allocation2 + $0x30] sm:$0xf]
        %v3152 = vld [vmem:[#allocation2 + $0x34] sm:$0xf]
        %v3153 = vld [vmem:[#allocation2 + $0x38] sm:$0xf]
        %v3154 = vld [vmem:[#allocation2 + $0x3c] sm:$0xf]
        %v3155 = vld [vmem:[#allocation2 + $0x40] sm:$0xf]
        %v3156 = vld [vmem:[#allocation2 + $0x44] sm:$0xf]
        %v3157 = vld [vmem:[#allocation2 + $0x48] sm:$0xf]
        %v3158 = vld [vmem:[#allocation2 + $0x4c] sm:$0xf]
        %v3159 = vld [vmem:[#allocation2 + $0x50] sm:$0xf]
        %v3160 = vld [vmem:[#allocation2 + $0x54] sm:$0xf]
        %v3161 = vld [vmem:[#allocation2 + $0x58] sm:$0xf]
        %v3162 = vld [vmem:[#allocation2 + $0x5c] sm:$0xf]
        %v3163 = vld [vmem:[#allocation2 + $0x60] sm:$0xf]
        %v3164 = vld [vmem:[#allocation2 + $0x64] sm:$0xf]
        %v3165 = vld [vmem:[#allocation2 + $0x68] sm:$0xf]
        %v3166 = vld [vmem:[#allocation2 + $0x6c] sm:$0xf]
        %v3167 = vld [vmem:[#allocation2 + $0x70] sm:$0xf]
        %v3168 = vld [vmem:[#allocation2 + $0x74] sm:$0xf]
        %v3169 = vld [vmem:[#allocation2 + $0x78] sm:$0xf]
        %v3170 = vld [vmem:[#allocation2 + $0x7c] sm:$0xf]
        %v3171 = vld [vmem:[%s477] sm:$0xf]
        %v3172 = vld [vmem:[%s477 + $0x4] sm:$0xf]
        %v3173 = vld [vmem:[%s477 + $0x8] sm:$0xf]
        %v3174 = vld [vmem:[%s477 + $0xc] sm:$0xf]
        %v3175 = vld [vmem:[%s477 + $0x10] sm:$0xf]
        %v3176 = vld [vmem:[%s477 + $0x14] sm:$0xf]
        %v3177 = vld [vmem:[%s477 + $0x18] sm:$0xf]
        %v3178 = vld [vmem:[%s477 + $0x1c] sm:$0xf]
        %v3179 = vld [vmem:[%s477 + $0x20] sm:$0xf]
        %v3180 = vld [vmem:[%s477 + $0x24] sm:$0xf]
        %v3181 = vld [vmem:[%s477 + $0x28] sm:$0xf]
        %v3182 = vld [vmem:[%s477 + $0x2c] sm:$0xf]
        %v3183 = vld [vmem:[%s477 + $0x30] sm:$0xf]
        %v3184 = vld [vmem:[%s477 + $0x34] sm:$0xf]
        %v3185 = vld [vmem:[%s477 + $0x38] sm:$0xf]
        %v3186 = vld [vmem:[%s477 + $0x3c] sm:$0xf]
        %s3187 = scalar_lea.vmem [#allocation2], 144
        %v3188 = vld [vmem:[%s3187] sm:$0xf]
        %v3189 = vld [vmem:[%s3187 + $0x4] sm:$0xf]
        %v3190 = vld [vmem:[%s3187 + $0x8] sm:$0xf]
        %v3191 = vld [vmem:[%s3187 + $0xc] sm:$0xf]
        %v3192 = vld [vmem:[%s3187 + $0x10] sm:$0xf]
        %v3193 = vld [vmem:[%s3187 + $0x14] sm:$0xf]
        %v3194 = vld [vmem:[%s3187 + $0x18] sm:$0xf]
        %v3195 = vld [vmem:[%s3187 + $0x1c] sm:$0xf]
        %v3196 = vld [vmem:[%s3187 + $0x20] sm:$0xf]
        %v3197 = vld [vmem:[%s3187 + $0x24] sm:$0xf]
        %v3198 = vld [vmem:[%s3187 + $0x28] sm:$0xf]
        %v3199 = vld [vmem:[%s3187 + $0x2c] sm:$0xf]
        %v3200 = vld [vmem:[%s3187 + $0x30] sm:$0xf]
        %v3201 = vld [vmem:[%s3187 + $0x34] sm:$0xf]
        %v3202 = vld [vmem:[%s3187 + $0x38] sm:$0xf]
        %v3203 = vld [vmem:[%s3187 + $0x3c] sm:$0xf]
        %v3204 = vld [vmem:[%s3187 + $0x40] sm:$0xf]
        %v3205 = vld [vmem:[%s3187 + $0x44] sm:$0xf]
        %v3206 = vld [vmem:[%s3187 + $0x48] sm:$0xf]
        %v3207 = vld [vmem:[%s3187 + $0x4c] sm:$0xf]
        %v3208 = vld [vmem:[%s3187 + $0x50] sm:$0xf]
        %v3209 = vld [vmem:[%s3187 + $0x54] sm:$0xf]
        %v3210 = vld [vmem:[%s3187 + $0x58] sm:$0xf]
        %v3211 = vld [vmem:[%s3187 + $0x5c] sm:$0xf]
        %v3212 = vld [vmem:[%s3187 + $0x60] sm:$0xf]
        %v3213 = vld [vmem:[%s3187 + $0x64] sm:$0xf]
        %v3214 = vld [vmem:[%s3187 + $0x68] sm:$0xf]
        %v3215 = vld [vmem:[%s3187 + $0x6c] sm:$0xf]
        %v3216 = vld [vmem:[%s3187 + $0x70] sm:$0xf]
        %v3217 = vld [vmem:[%s3187 + $0x74] sm:$0xf]
        %v3218 = vld [vmem:[%s3187 + $0x78] sm:$0xf]
        %v3219 = vld [vmem:[%s3187 + $0x7c] sm:$0xf]
        %s3220 = scalar_lea.vmem %s477, 64 [#allocation10]
        %v3221 = vld [vmem:[%s3220] sm:$0xf]
        %v3222 = vld [vmem:[%s3220 + $0x4] sm:$0xf]
        %v3223 = vld [vmem:[%s3220 + $0x8] sm:$0xf]
        %v3224 = vld [vmem:[%s3220 + $0xc] sm:$0xf]
        %v3225 = vld [vmem:[%s3220 + $0x10] sm:$0xf]
        %v3226 = vld [vmem:[%s3220 + $0x14] sm:$0xf]
        %v3227 = vld [vmem:[%s3220 + $0x18] sm:$0xf]
        %v3228 = vld [vmem:[%s3220 + $0x1c] sm:$0xf]
        %v3229 = vld [vmem:[%s3220 + $0x20] sm:$0xf]
        %v3230 = vld [vmem:[%s3220 + $0x24] sm:$0xf]
        %v3231 = vld [vmem:[%s3220 + $0x28] sm:$0xf]
        %v3232 = vld [vmem:[%s3220 + $0x2c] sm:$0xf]
        %v3233 = vld [vmem:[%s3220 + $0x30] sm:$0xf]
        %v3234 = vld [vmem:[%s3220 + $0x34] sm:$0xf]
        %v3235 = vld [vmem:[%s3220 + $0x38] sm:$0xf]
        %v3236 = vld [vmem:[%s3220 + $0x3c] sm:$0xf]
        %v3269 = vunpack.c.l.b16 %v3188
        %v3270 = vunpack.c.l.b16 %v3189
        %v3271 = vunpack.c.l.b16 %v3190
        %v3272 = vunpack.c.l.b16 %v3191
        %v3273 = vunpack.c.l.b16 %v3192
        %v3274 = vunpack.c.l.b16 %v3193
        %v3275 = vunpack.c.l.b16 %v3194
        %v3276 = vunpack.c.l.b16 %v3195
        %v3277 = vunpack.c.l.b16 %v3196
        %v3278 = vunpack.c.l.b16 %v3197
        %v3279 = vunpack.c.l.b16 %v3198
        %v3280 = vunpack.c.l.b16 %v3199
        %v3281 = vunpack.c.l.b16 %v3200
        %v3282 = vunpack.c.l.b16 %v3201
        %v3283 = vunpack.c.l.b16 %v3202
        %v3284 = vunpack.c.l.b16 %v3203
        %v3285 = vunpack.c.l.b16 %v3204
        %v3286 = vunpack.c.l.b16 %v3205
        %v3287 = vunpack.c.l.b16 %v3206
        %v3288 = vunpack.c.l.b16 %v3207
        %v3289 = vunpack.c.l.b16 %v3208
        %v3290 = vunpack.c.l.b16 %v3209
        %v3291 = vunpack.c.l.b16 %v3210
        %v3292 = vunpack.c.l.b16 %v3211
        %v3293 = vunpack.c.l.b16 %v3212
        %v3294 = vunpack.c.l.b16 %v3213
        %v3295 = vunpack.c.l.b16 %v3214
        %v3296 = vunpack.c.l.b16 %v3215
        %v3297 = vunpack.c.l.b16 %v3216
        %v3298 = vunpack.c.l.b16 %v3217
        %v3299 = vunpack.c.l.b16 %v3218
        %v3300 = vunpack.c.l.b16 %v3219
        %v3301 = vpack.c.b16 %v3270, %v3269
        %v3302 = vpack.c.b16 %v3272, %v3271
        %v3303 = vpack.c.b16 %v3274, %v3273
        %v3304 = vpack.c.b16 %v3276, %v3275
        %v3305 = vpack.c.b16 %v3278, %v3277
        %v3306 = vpack.c.b16 %v3280, %v3279
        %v3307 = vpack.c.b16 %v3282, %v3281
        %v3308 = vpack.c.b16 %v3284, %v3283
        %v3309 = vpack.c.b16 %v3286, %v3285
        %v3310 = vpack.c.b16 %v3288, %v3287
        %v3311 = vpack.c.b16 %v3290, %v3289
        %v3312 = vpack.c.b16 %v3292, %v3291
        %v3313 = vpack.c.b16 %v3294, %v3293
        %v3314 = vpack.c.b16 %v3296, %v3295
        %v3315 = vpack.c.b16 %v3298, %v3297
        %v3316 = vpack.c.b16 %v3300, %v3299
        %v3349 = vunpack.c.l.b16 %v3221
        %v3350 = vunpack.c.l.b16 %v3222
        %v3351 = vunpack.c.l.b16 %v3223
        %v3352 = vunpack.c.l.b16 %v3224
        %v3353 = vunpack.c.l.b16 %v3225
        %v3354 = vunpack.c.l.b16 %v3226
        %v3355 = vunpack.c.l.b16 %v3227
        %v3356 = vunpack.c.l.b16 %v3228
        %v3357 = vunpack.c.l.b16 %v3229
        %v3358 = vunpack.c.l.b16 %v3230
        %v3359 = vunpack.c.l.b16 %v3231
        %v3360 = vunpack.c.l.b16 %v3232
        %v3361 = vunpack.c.l.b16 %v3233
        %v3362 = vunpack.c.l.b16 %v3234
        %v3363 = vunpack.c.l.b16 %v3235
        %v3364 = vunpack.c.l.b16 %v3236
        %v3365 = vpack.c.b16 %v3350, %v3349
        %v3366 = vpack.c.b16 %v3352, %v3351
        %v3367 = vpack.c.b16 %v3354, %v3353
        %v3368 = vpack.c.b16 %v3356, %v3355
        %v3369 = vpack.c.b16 %v3358, %v3357
        %v3370 = vpack.c.b16 %v3360, %v3359
        %v3371 = vpack.c.b16 %v3362, %v3361
        %v3372 = vpack.c.b16 %v3364, %v3363
        %3381 = vmatpush.bf16.msra.mxu0 %v3372
        %3382 = vmatpush.bf16.msra.mxu0 %v3371
        %3383 = vmatpush.bf16.msra.mxu0 %v3370
        %3384 = vmatpush.bf16.msra.mxu0 %v3369
        %3385 = vmatpush.bf16.msra.mxu0 %v3368
        %3386 = vmatpush.bf16.msra.mxu0 %v3367
        %3387 = vmatpush.bf16.msra.mxu0 %v3366
        %3388 = vmatpush.bf16.msra.mxu0 %v3365
        %3389 = vmatmul.bf16.gmra.mxu0 %v3301
        %v3390 = vpop.f32.mrf.mxu0
        %v3391 = vadd.f32 0.0, %v3390
        %v3392 = vpop.f32.mrf.mxu0
        %v3393 = vadd.f32 0.0, %v3392
        %3394 = vmatmul.bf16.gmra.mxu0 %v3302
        %v3395 = vpop.f32.mrf.mxu0
        %v3396 = vadd.f32 0.0, %v3395
        %v3397 = vpop.f32.mrf.mxu0
        %v3398 = vadd.f32 0.0, %v3397
        %3399 = vmatmul.bf16.gmra.mxu0 %v3303
        %v3400 = vpop.f32.mrf.mxu0
        %v3401 = vadd.f32 0.0, %v3400
        %v3402 = vpop.f32.mrf.mxu0
        %v3403 = vadd.f32 0.0, %v3402
        %3404 = vmatmul.bf16.gmra.mxu0 %v3304
        %v3405 = vpop.f32.mrf.mxu0
        %v3406 = vadd.f32 0.0, %v3405
        %v3407 = vpop.f32.mrf.mxu0
        %v3408 = vadd.f32 0.0, %v3407
        %3409 = vmatmul.bf16.gmra.mxu0 %v3305
        %v3410 = vpop.f32.mrf.mxu0
        %v3411 = vadd.f32 0.0, %v3410
        %v3412 = vpop.f32.mrf.mxu0
        %v3413 = vadd.f32 0.0, %v3412
        %3414 = vmatmul.bf16.gmra.mxu0 %v3306
        %v3415 = vpop.f32.mrf.mxu0
        %v3416 = vadd.f32 0.0, %v3415
        %v3417 = vpop.f32.mrf.mxu0
        %v3418 = vadd.f32 0.0, %v3417
        %3419 = vmatmul.bf16.gmra.mxu0 %v3307
        %v3420 = vpop.f32.mrf.mxu0
        %v3421 = vadd.f32 0.0, %v3420
        %v3422 = vpop.f32.mrf.mxu0
        %v3423 = vadd.f32 0.0, %v3422
        %3424 = vmatmul.bf16.gmra.mxu0 %v3308
        %v3425 = vpop.f32.mrf.mxu0
        %v3426 = vadd.f32 0.0, %v3425
        %v3427 = vpop.f32.mrf.mxu0
        %v3428 = vadd.f32 0.0, %v3427
        %3429 = vmatmul.bf16.gmra.mxu0 %v3309
        %v3430 = vpop.f32.mrf.mxu0
        %v3431 = vadd.f32 0.0, %v3430
        %v3432 = vpop.f32.mrf.mxu0
        %v3433 = vadd.f32 0.0, %v3432
        %3434 = vmatmul.bf16.gmra.mxu0 %v3310
        %v3435 = vpop.f32.mrf.mxu0
        %v3436 = vadd.f32 0.0, %v3435
        %v3437 = vpop.f32.mrf.mxu0
        %v3438 = vadd.f32 0.0, %v3437
        %3439 = vmatmul.bf16.gmra.mxu0 %v3311
        %v3440 = vpop.f32.mrf.mxu0
        %v3441 = vadd.f32 0.0, %v3440
        %v3442 = vpop.f32.mrf.mxu0
        %v3443 = vadd.f32 0.0, %v3442
        %3444 = vmatmul.bf16.gmra.mxu0 %v3312
        %v3445 = vpop.f32.mrf.mxu0
        %v3446 = vadd.f32 0.0, %v3445
        %v3447 = vpop.f32.mrf.mxu0
        %v3448 = vadd.f32 0.0, %v3447
        %3449 = vmatmul.bf16.gmra.mxu0 %v3313
        %v3450 = vpop.f32.mrf.mxu0
        %v3451 = vadd.f32 0.0, %v3450
        %v3452 = vpop.f32.mrf.mxu0
        %v3453 = vadd.f32 0.0, %v3452
        %3454 = vmatmul.bf16.gmra.mxu0 %v3314
        %v3455 = vpop.f32.mrf.mxu0
        %v3456 = vadd.f32 0.0, %v3455
        %v3457 = vpop.f32.mrf.mxu0
        %v3458 = vadd.f32 0.0, %v3457
        %3459 = vmatmul.bf16.gmra.mxu0 %v3315
        %v3460 = vpop.f32.mrf.mxu0
        %v3461 = vadd.f32 0.0, %v3460
        %v3462 = vpop.f32.mrf.mxu0
        %v3463 = vadd.f32 0.0, %v3462
        %3464 = vmatmul.bf16.gmra.mxu0 %v3316
        %v3465 = vpop.f32.mrf.mxu0
        %v3466 = vadd.f32 0.0, %v3465
        %v3467 = vpop.f32.mrf.mxu0
        %v3468 = vadd.f32 0.0, %v3467
        %3469 = vdwg.mxu0
        %v3502 = vunpack.c.l.b16 %v3139
        %v3503 = vunpack.c.l.b16 %v3140
        %v3504 = vunpack.c.l.b16 %v3141
        %v3505 = vunpack.c.l.b16 %v3142
        %v3506 = vunpack.c.l.b16 %v3143
        %v3507 = vunpack.c.l.b16 %v3144
        %v3508 = vunpack.c.l.b16 %v3145
        %v3509 = vunpack.c.l.b16 %v3146
        %v3510 = vunpack.c.l.b16 %v3147
        %v3511 = vunpack.c.l.b16 %v3148
        %v3512 = vunpack.c.l.b16 %v3149
        %v3513 = vunpack.c.l.b16 %v3150
        %v3514 = vunpack.c.l.b16 %v3151
        %v3515 = vunpack.c.l.b16 %v3152
        %v3516 = vunpack.c.l.b16 %v3153
        %v3517 = vunpack.c.l.b16 %v3154
        %v3518 = vunpack.c.l.b16 %v3155
        %v3519 = vunpack.c.l.b16 %v3156
        %v3520 = vunpack.c.l.b16 %v3157
        %v3521 = vunpack.c.l.b16 %v3158
        %v3522 = vunpack.c.l.b16 %v3159
        %v3523 = vunpack.c.l.b16 %v3160
        %v3524 = vunpack.c.l.b16 %v3161
        %v3525 = vunpack.c.l.b16 %v3162
        %v3526 = vunpack.c.l.b16 %v3163
        %v3527 = vunpack.c.l.b16 %v3164
        %v3528 = vunpack.c.l.b16 %v3165
        %v3529 = vunpack.c.l.b16 %v3166
        %v3530 = vunpack.c.l.b16 %v3167
        %v3531 = vunpack.c.l.b16 %v3168
        %v3532 = vunpack.c.l.b16 %v3169
        %v3533 = vunpack.c.l.b16 %v3170
        %v3534 = vpack.c.b16 %v3503, %v3502
        %v3535 = vpack.c.b16 %v3505, %v3504
        %v3536 = vpack.c.b16 %v3507, %v3506
        %v3537 = vpack.c.b16 %v3509, %v3508
        %v3538 = vpack.c.b16 %v3511, %v3510
        %v3539 = vpack.c.b16 %v3513, %v3512
        %v3540 = vpack.c.b16 %v3515, %v3514
        %v3541 = vpack.c.b16 %v3517, %v3516
        %v3542 = vpack.c.b16 %v3519, %v3518
        %v3543 = vpack.c.b16 %v3521, %v3520
        %v3544 = vpack.c.b16 %v3523, %v3522
        %v3545 = vpack.c.b16 %v3525, %v3524
        %v3546 = vpack.c.b16 %v3527, %v3526
        %v3547 = vpack.c.b16 %v3529, %v3528
        %v3548 = vpack.c.b16 %v3531, %v3530
        %v3549 = vpack.c.b16 %v3533, %v3532
        %v3582 = vunpack.c.l.b16 %v3171
        %v3583 = vunpack.c.l.b16 %v3172
        %v3584 = vunpack.c.l.b16 %v3173
        %v3585 = vunpack.c.l.b16 %v3174
        %v3586 = vunpack.c.l.b16 %v3175
        %v3587 = vunpack.c.l.b16 %v3176
        %v3588 = vunpack.c.l.b16 %v3177
        %v3589 = vunpack.c.l.b16 %v3178
        %v3590 = vunpack.c.l.b16 %v3179
        %v3591 = vunpack.c.l.b16 %v3180
        %v3592 = vunpack.c.l.b16 %v3181
        %v3593 = vunpack.c.l.b16 %v3182
        %v3594 = vunpack.c.l.b16 %v3183
        %v3595 = vunpack.c.l.b16 %v3184
        %v3596 = vunpack.c.l.b16 %v3185
        %v3597 = vunpack.c.l.b16 %v3186
        %v3598 = vpack.c.b16 %v3583, %v3582
        %v3599 = vpack.c.b16 %v3585, %v3584
        %v3600 = vpack.c.b16 %v3587, %v3586
        %v3601 = vpack.c.b16 %v3589, %v3588
        %v3602 = vpack.c.b16 %v3591, %v3590
        %v3603 = vpack.c.b16 %v3593, %v3592
        %v3604 = vpack.c.b16 %v3595, %v3594
        %v3605 = vpack.c.b16 %v3597, %v3596
        %3614 = vmatpush.bf16.msra.mxu0 %v3605
        %3615 = vmatpush.bf16.msra.mxu0 %v3604
        %3616 = vmatpush.bf16.msra.mxu0 %v3603
        %3617 = vmatpush.bf16.msra.mxu0 %v3602
        %3618 = vmatpush.bf16.msra.mxu0 %v3601
        %3619 = vmatpush.bf16.msra.mxu0 %v3600
        %3620 = vmatpush.bf16.msra.mxu0 %v3599
        %3621 = vmatpush.bf16.msra.mxu0 %v3598
        %3622 = vmatmul.bf16.gmra.mxu0 %v3534
        %v3623 = vpop.f32.mrf.mxu0
        %v3624 = vadd.f32 %v3391, %v3623
        %v3625 = vpop.f32.mrf.mxu0
        %v3626 = vadd.f32 %v3393, %v3625
        %3627 = vmatmul.bf16.gmra.mxu0 %v3535
        %v3628 = vpop.f32.mrf.mxu0
        %v3629 = vadd.f32 %v3396, %v3628
        %v3630 = vpop.f32.mrf.mxu0
        %v3631 = vadd.f32 %v3398, %v3630
        %3632 = vmatmul.bf16.gmra.mxu0 %v3536
        %v3633 = vpop.f32.mrf.mxu0
        %v3634 = vadd.f32 %v3401, %v3633
        %v3635 = vpop.f32.mrf.mxu0
        %v3636 = vadd.f32 %v3403, %v3635
        %3637 = vmatmul.bf16.gmra.mxu0 %v3537
        %v3638 = vpop.f32.mrf.mxu0
        %v3639 = vadd.f32 %v3406, %v3638
        %v3640 = vpop.f32.mrf.mxu0
        %v3641 = vadd.f32 %v3408, %v3640
        %3642 = vmatmul.bf16.gmra.mxu0 %v3538
        %v3643 = vpop.f32.mrf.mxu0
        %v3644 = vadd.f32 %v3411, %v3643
        %v3645 = vpop.f32.mrf.mxu0
        %v3646 = vadd.f32 %v3413, %v3645
        %3647 = vmatmul.bf16.gmra.mxu0 %v3539
        %v3648 = vpop.f32.mrf.mxu0
        %v3649 = vadd.f32 %v3416, %v3648
        %v3650 = vpop.f32.mrf.mxu0
        %v3651 = vadd.f32 %v3418, %v3650
        %3652 = vmatmul.bf16.gmra.mxu0 %v3540
        %v3653 = vpop.f32.mrf.mxu0
        %v3654 = vadd.f32 %v3421, %v3653
        %v3655 = vpop.f32.mrf.mxu0
        %v3656 = vadd.f32 %v3423, %v3655
        %3657 = vmatmul.bf16.gmra.mxu0 %v3541
        %v3658 = vpop.f32.mrf.mxu0
        %v3659 = vadd.f32 %v3426, %v3658
        %v3660 = vpop.f32.mrf.mxu0
        %v3661 = vadd.f32 %v3428, %v3660
        %3662 = vmatmul.bf16.gmra.mxu0 %v3542
        %v3663 = vpop.f32.mrf.mxu0
        %v3664 = vadd.f32 %v3431, %v3663
        %v3665 = vpop.f32.mrf.mxu0
        %v3666 = vadd.f32 %v3433, %v3665
        %3667 = vmatmul.bf16.gmra.mxu0 %v3543
        %v3668 = vpop.f32.mrf.mxu0
        %v3669 = vadd.f32 %v3436, %v3668
        %v3670 = vpop.f32.mrf.mxu0
        %v3671 = vadd.f32 %v3438, %v3670
        %3672 = vmatmul.bf16.gmra.mxu0 %v3544
        %v3673 = vpop.f32.mrf.mxu0
        %v3674 = vadd.f32 %v3441, %v3673
        %v3675 = vpop.f32.mrf.mxu0
        %v3676 = vadd.f32 %v3443, %v3675
        %3677 = vmatmul.bf16.gmra.mxu0 %v3545
        %v3678 = vpop.f32.mrf.mxu0
        %v3679 = vadd.f32 %v3446, %v3678
        %v3680 = vpop.f32.mrf.mxu0
        %v3681 = vadd.f32 %v3448, %v3680
        %3682 = vmatmul.bf16.gmra.mxu0 %v3546
        %v3683 = vpop.f32.mrf.mxu0
        %v3684 = vadd.f32 %v3451, %v3683
        %v3685 = vpop.f32.mrf.mxu0
        %v3686 = vadd.f32 %v3453, %v3685
        %3687 = vmatmul.bf16.gmra.mxu0 %v3547
        %v3688 = vpop.f32.mrf.mxu0
        %v3689 = vadd.f32 %v3456, %v3688
        %v3690 = vpop.f32.mrf.mxu0
        %v3691 = vadd.f32 %v3458, %v3690
        %3692 = vmatmul.bf16.gmra.mxu0 %v3548
        %v3693 = vpop.f32.mrf.mxu0
        %v3694 = vadd.f32 %v3461, %v3693
        %v3695 = vpop.f32.mrf.mxu0
        %v3696 = vadd.f32 %v3463, %v3695
        %3697 = vmatmul.bf16.gmra.mxu0 %v3549
        %v3698 = vpop.f32.mrf.mxu0
        %v3699 = vadd.f32 %v3466, %v3698
        %v3700 = vpop.f32.mrf.mxu0
        %v3701 = vadd.f32 %v3468, %v3700
        %3702 = vdwg.mxu0
        %s3703 = scalar_lea.vmem [#allocation2], 288
        %v3704 = vld [vmem:[%s3703] sm:$0xf]
        %v3705 = vld [vmem:[%s3703 + $0x4] sm:$0xf]
        %v3706 = vld [vmem:[%s3703 + $0x8] sm:$0xf]
        %v3707 = vld [vmem:[%s3703 + $0xc] sm:$0xf]
        %v3708 = vld [vmem:[%s3703 + $0x10] sm:$0xf]
        %v3709 = vld [vmem:[%s3703 + $0x14] sm:$0xf]
        %v3710 = vld [vmem:[%s3703 + $0x18] sm:$0xf]
        %v3711 = vld [vmem:[%s3703 + $0x1c] sm:$0xf]
        %v3712 = vld [vmem:[%s3703 + $0x20] sm:$0xf]
        %v3713 = vld [vmem:[%s3703 + $0x24] sm:$0xf]
        %v3714 = vld [vmem:[%s3703 + $0x28] sm:$0xf]
        %v3715 = vld [vmem:[%s3703 + $0x2c] sm:$0xf]
        %v3716 = vld [vmem:[%s3703 + $0x30] sm:$0xf]
        %v3717 = vld [vmem:[%s3703 + $0x34] sm:$0xf]
        %v3718 = vld [vmem:[%s3703 + $0x38] sm:$0xf]
        %v3719 = vld [vmem:[%s3703 + $0x3c] sm:$0xf]
        %v3720 = vld [vmem:[%s3703 + $0x40] sm:$0xf]
        %v3721 = vld [vmem:[%s3703 + $0x44] sm:$0xf]
        %v3722 = vld [vmem:[%s3703 + $0x48] sm:$0xf]
        %v3723 = vld [vmem:[%s3703 + $0x4c] sm:$0xf]
        %v3724 = vld [vmem:[%s3703 + $0x50] sm:$0xf]
        %v3725 = vld [vmem:[%s3703 + $0x54] sm:$0xf]
        %v3726 = vld [vmem:[%s3703 + $0x58] sm:$0xf]
        %v3727 = vld [vmem:[%s3703 + $0x5c] sm:$0xf]
        %v3728 = vld [vmem:[%s3703 + $0x60] sm:$0xf]
        %v3729 = vld [vmem:[%s3703 + $0x64] sm:$0xf]
        %v3730 = vld [vmem:[%s3703 + $0x68] sm:$0xf]
        %v3731 = vld [vmem:[%s3703 + $0x6c] sm:$0xf]
        %v3732 = vld [vmem:[%s3703 + $0x70] sm:$0xf]
        %v3733 = vld [vmem:[%s3703 + $0x74] sm:$0xf]
        %v3734 = vld [vmem:[%s3703 + $0x78] sm:$0xf]
        %v3735 = vld [vmem:[%s3703 + $0x7c] sm:$0xf]
        %s3736 = scalar_lea.vmem %s477, 128 [#allocation10]
        %v3737 = vld [vmem:[%s3736] sm:$0xf]
        %v3738 = vld [vmem:[%s3736 + $0x4] sm:$0xf]
        %v3739 = vld [vmem:[%s3736 + $0x8] sm:$0xf]
        %v3740 = vld [vmem:[%s3736 + $0xc] sm:$0xf]
        %v3741 = vld [vmem:[%s3736 + $0x10] sm:$0xf]
        %v3742 = vld [vmem:[%s3736 + $0x14] sm:$0xf]
        %v3743 = vld [vmem:[%s3736 + $0x18] sm:$0xf]
        %v3744 = vld [vmem:[%s3736 + $0x1c] sm:$0xf]
        %v3745 = vld [vmem:[%s3736 + $0x20] sm:$0xf]
        %v3746 = vld [vmem:[%s3736 + $0x24] sm:$0xf]
        %v3747 = vld [vmem:[%s3736 + $0x28] sm:$0xf]
        %v3748 = vld [vmem:[%s3736 + $0x2c] sm:$0xf]
        %v3749 = vld [vmem:[%s3736 + $0x30] sm:$0xf]
        %v3750 = vld [vmem:[%s3736 + $0x34] sm:$0xf]
        %v3751 = vld [vmem:[%s3736 + $0x38] sm:$0xf]
        %v3752 = vld [vmem:[%s3736 + $0x3c] sm:$0xf]
        %v3785 = vunpack.c.l.b16 %v3704
        %v3786 = vunpack.c.l.b16 %v3705
        %v3787 = vunpack.c.l.b16 %v3706
        %v3788 = vunpack.c.l.b16 %v3707
        %v3789 = vunpack.c.l.b16 %v3708
        %v3790 = vunpack.c.l.b16 %v3709
        %v3791 = vunpack.c.l.b16 %v3710
        %v3792 = vunpack.c.l.b16 %v3711
        %v3793 = vunpack.c.l.b16 %v3712
        %v3794 = vunpack.c.l.b16 %v3713
        %v3795 = vunpack.c.l.b16 %v3714
        %v3796 = vunpack.c.l.b16 %v3715
        %v3797 = vunpack.c.l.b16 %v3716
        %v3798 = vunpack.c.l.b16 %v3717
        %v3799 = vunpack.c.l.b16 %v3718
        %v3800 = vunpack.c.l.b16 %v3719
        %v3801 = vunpack.c.l.b16 %v3720
        %v3802 = vunpack.c.l.b16 %v3721
        %v3803 = vunpack.c.l.b16 %v3722
        %v3804 = vunpack.c.l.b16 %v3723
        %v3805 = vunpack.c.l.b16 %v3724
        %v3806 = vunpack.c.l.b16 %v3725
        %v3807 = vunpack.c.l.b16 %v3726
        %v3808 = vunpack.c.l.b16 %v3727
        %v3809 = vunpack.c.l.b16 %v3728
        %v3810 = vunpack.c.l.b16 %v3729
        %v3811 = vunpack.c.l.b16 %v3730
        %v3812 = vunpack.c.l.b16 %v3731
        %v3813 = vunpack.c.l.b16 %v3732
        %v3814 = vunpack.c.l.b16 %v3733
        %v3815 = vunpack.c.l.b16 %v3734
        %v3816 = vunpack.c.l.b16 %v3735
        %v3817 = vpack.c.b16 %v3786, %v3785
        %v3818 = vpack.c.b16 %v3788, %v3787
        %v3819 = vpack.c.b16 %v3790, %v3789
        %v3820 = vpack.c.b16 %v3792, %v3791
        %v3821 = vpack.c.b16 %v3794, %v3793
        %v3822 = vpack.c.b16 %v3796, %v3795
        %v3823 = vpack.c.b16 %v3798, %v3797
        %v3824 = vpack.c.b16 %v3800, %v3799
        %v3825 = vpack.c.b16 %v3802, %v3801
        %v3826 = vpack.c.b16 %v3804, %v3803
        %v3827 = vpack.c.b16 %v3806, %v3805
        %v3828 = vpack.c.b16 %v3808, %v3807
        %v3829 = vpack.c.b16 %v3810, %v3809
        %v3830 = vpack.c.b16 %v3812, %v3811
        %v3831 = vpack.c.b16 %v3814, %v3813
        %v3832 = vpack.c.b16 %v3816, %v3815
        %v3865 = vunpack.c.l.b16 %v3737
        %v3866 = vunpack.c.l.b16 %v3738
        %v3867 = vunpack.c.l.b16 %v3739
        %v3868 = vunpack.c.l.b16 %v3740
        %v3869 = vunpack.c.l.b16 %v3741
        %v3870 = vunpack.c.l.b16 %v3742
        %v3871 = vunpack.c.l.b16 %v3743
        %v3872 = vunpack.c.l.b16 %v3744
        %v3873 = vunpack.c.l.b16 %v3745
        %v3874 = vunpack.c.l.b16 %v3746
        %v3875 = vunpack.c.l.b16 %v3747
        %v3876 = vunpack.c.l.b16 %v3748
        %v3877 = vunpack.c.l.b16 %v3749
        %v3878 = vunpack.c.l.b16 %v3750
        %v3879 = vunpack.c.l.b16 %v3751
        %v3880 = vunpack.c.l.b16 %v3752
        %v3881 = vpack.c.b16 %v3866, %v3865
        %v3882 = vpack.c.b16 %v3868, %v3867
        %v3883 = vpack.c.b16 %v3870, %v3869
        %v3884 = vpack.c.b16 %v3872, %v3871
        %v3885 = vpack.c.b16 %v3874, %v3873
        %v3886 = vpack.c.b16 %v3876, %v3875
        %v3887 = vpack.c.b16 %v3878, %v3877
        %v3888 = vpack.c.b16 %v3880, %v3879
        %3897 = vmatpush.bf16.msra.mxu0 %v3888
        %3898 = vmatpush.bf16.msra.mxu0 %v3887
        %3899 = vmatpush.bf16.msra.mxu0 %v3886
        %3900 = vmatpush.bf16.msra.mxu0 %v3885
        %3901 = vmatpush.bf16.msra.mxu0 %v3884
        %3902 = vmatpush.bf16.msra.mxu0 %v3883
        %3903 = vmatpush.bf16.msra.mxu0 %v3882
        %3904 = vmatpush.bf16.msra.mxu0 %v3881
        %3905 = vmatmul.bf16.gmra.mxu0 %v3817
        %v3906 = vpop.f32.mrf.mxu0
        %v3907 = vadd.f32 0.0, %v3906
        %v3908 = vpop.f32.mrf.mxu0
        %v3909 = vadd.f32 0.0, %v3908
        %3910 = vmatmul.bf16.gmra.mxu0 %v3818
        %v3911 = vpop.f32.mrf.mxu0
        %v3912 = vadd.f32 0.0, %v3911
        %v3913 = vpop.f32.mrf.mxu0
        %v3914 = vadd.f32 0.0, %v3913
        %3915 = vmatmul.bf16.gmra.mxu0 %v3819
        %v3916 = vpop.f32.mrf.mxu0
        %v3917 = vadd.f32 0.0, %v3916
        %v3918 = vpop.f32.mrf.mxu0
        %v3919 = vadd.f32 0.0, %v3918
        %3920 = vmatmul.bf16.gmra.mxu0 %v3820
        %v3921 = vpop.f32.mrf.mxu0
        %v3922 = vadd.f32 0.0, %v3921
        %v3923 = vpop.f32.mrf.mxu0
        %v3924 = vadd.f32 0.0, %v3923
        %3925 = vmatmul.bf16.gmra.mxu0 %v3821
        %v3926 = vpop.f32.mrf.mxu0
        %v3927 = vadd.f32 0.0, %v3926
        %v3928 = vpop.f32.mrf.mxu0
        %v3929 = vadd.f32 0.0, %v3928
        %3930 = vmatmul.bf16.gmra.mxu0 %v3822
        %v3931 = vpop.f32.mrf.mxu0
        %v3932 = vadd.f32 0.0, %v3931
        %v3933 = vpop.f32.mrf.mxu0
        %v3934 = vadd.f32 0.0, %v3933
        %3935 = vmatmul.bf16.gmra.mxu0 %v3823
        %v3936 = vpop.f32.mrf.mxu0
        %v3937 = vadd.f32 0.0, %v3936
        %v3938 = vpop.f32.mrf.mxu0
        %v3939 = vadd.f32 0.0, %v3938
        %3940 = vmatmul.bf16.gmra.mxu0 %v3824
        %v3941 = vpop.f32.mrf.mxu0
        %v3942 = vadd.f32 0.0, %v3941
        %v3943 = vpop.f32.mrf.mxu0
        %v3944 = vadd.f32 0.0, %v3943
        %3945 = vmatmul.bf16.gmra.mxu0 %v3825
        %v3946 = vpop.f32.mrf.mxu0
        %v3947 = vadd.f32 0.0, %v3946
        %v3948 = vpop.f32.mrf.mxu0
        %v3949 = vadd.f32 0.0, %v3948
        %3950 = vmatmul.bf16.gmra.mxu0 %v3826
        %v3951 = vpop.f32.mrf.mxu0
        %v3952 = vadd.f32 0.0, %v3951
        %v3953 = vpop.f32.mrf.mxu0
        %v3954 = vadd.f32 0.0, %v3953
        %3955 = vmatmul.bf16.gmra.mxu0 %v3827
        %v3956 = vpop.f32.mrf.mxu0
        %v3957 = vadd.f32 0.0, %v3956
        %v3958 = vpop.f32.mrf.mxu0
        %v3959 = vadd.f32 0.0, %v3958
        %3960 = vmatmul.bf16.gmra.mxu0 %v3828
        %v3961 = vpop.f32.mrf.mxu0
        %v3962 = vadd.f32 0.0, %v3961
        %v3963 = vpop.f32.mrf.mxu0
        %v3964 = vadd.f32 0.0, %v3963
        %3965 = vmatmul.bf16.gmra.mxu0 %v3829
        %v3966 = vpop.f32.mrf.mxu0
        %v3967 = vadd.f32 0.0, %v3966
        %v3968 = vpop.f32.mrf.mxu0
        %v3969 = vadd.f32 0.0, %v3968
        %3970 = vmatmul.bf16.gmra.mxu0 %v3830
        %v3971 = vpop.f32.mrf.mxu0
        %v3972 = vadd.f32 0.0, %v3971
        %v3973 = vpop.f32.mrf.mxu0
        %v3974 = vadd.f32 0.0, %v3973
        %3975 = vmatmul.bf16.gmra.mxu0 %v3831
        %v3976 = vpop.f32.mrf.mxu0
        %v3977 = vadd.f32 0.0, %v3976
        %v3978 = vpop.f32.mrf.mxu0
        %v3979 = vadd.f32 0.0, %v3978
        %3980 = vmatmul.bf16.gmra.mxu0 %v3832
        %v3981 = vpop.f32.mrf.mxu0
        %v3982 = vadd.f32 0.0, %v3981
        %v3983 = vpop.f32.mrf.mxu0
        %v3984 = vadd.f32 0.0, %v3983
        %3985 = vdwg.mxu0
        %v3986 = vadd.f32 %v3624, %v3907
        %v3987 = vadd.f32 %v3626, %v3909
        %v3988 = vadd.f32 %v3629, %v3912
        %v3989 = vadd.f32 %v3631, %v3914
        %v3990 = vadd.f32 %v3634, %v3917
        %v3991 = vadd.f32 %v3636, %v3919
        %v3992 = vadd.f32 %v3639, %v3922
        %v3993 = vadd.f32 %v3641, %v3924
        %v3994 = vadd.f32 %v3644, %v3927
        %v3995 = vadd.f32 %v3646, %v3929
        %v3996 = vadd.f32 %v3649, %v3932
        %v3997 = vadd.f32 %v3651, %v3934
        %v3998 = vadd.f32 %v3654, %v3937
        %v3999 = vadd.f32 %v3656, %v3939
        %v4000 = vadd.f32 %v3659, %v3942
        %v4001 = vadd.f32 %v3661, %v3944
        %v4002 = vadd.f32 %v3664, %v3947
        %v4003 = vadd.f32 %v3666, %v3949
        %v4004 = vadd.f32 %v3669, %v3952
        %v4005 = vadd.f32 %v3671, %v3954
        %v4006 = vadd.f32 %v3674, %v3957
        %v4007 = vadd.f32 %v3676, %v3959
        %v4008 = vadd.f32 %v3679, %v3962
        %v4009 = vadd.f32 %v3681, %v3964
        %v4010 = vadd.f32 %v3684, %v3967
        %v4011 = vadd.f32 %v3686, %v3969
        %v4012 = vadd.f32 %v3689, %v3972
        %v4013 = vadd.f32 %v3691, %v3974
        %v4014 = vadd.f32 %v3694, %v3977
        %v4015 = vadd.f32 %v3696, %v3979
        %v4016 = vadd.f32 %v3699, %v3982
        %v4017 = vadd.f32 %v3701, %v3984
        %v4018 = vld [vmem:[#allocation2 + $0x8] sm:$0xf]
        %v4019 = vld [vmem:[#allocation2 + $0xc] sm:$0xf]
        %v4020 = vld [vmem:[#allocation2 + $0x10] sm:$0xf]
        %v4021 = vld [vmem:[#allocation2 + $0x14] sm:$0xf]
        %v4022 = vld [vmem:[#allocation2 + $0x18] sm:$0xf]
        %v4023 = vld [vmem:[#allocation2 + $0x1c] sm:$0xf]
        %v4024 = vld [vmem:[#allocation2 + $0x20] sm:$0xf]
        %v4025 = vld [vmem:[#allocation2 + $0x24] sm:$0xf]
        %v4026 = vld [vmem:[#allocation2 + $0x28] sm:$0xf]
        %v4027 = vld [vmem:[#allocation2 + $0x2c] sm:$0xf]
        %v4028 = vld [vmem:[#allocation2 + $0x30] sm:$0xf]
        %v4029 = vld [vmem:[#allocation2 + $0x34] sm:$0xf]
        %v4030 = vld [vmem:[#allocation2 + $0x38] sm:$0xf]
        %v4031 = vld [vmem:[#allocation2 + $0x3c] sm:$0xf]
        %v4032 = vld [vmem:[#allocation2 + $0x40] sm:$0xf]
        %v4033 = vld [vmem:[#allocation2 + $0x44] sm:$0xf]
        %v4034 = vld [vmem:[#allocation2 + $0x48] sm:$0xf]
        %v4035 = vld [vmem:[#allocation2 + $0x4c] sm:$0xf]
        %v4036 = vld [vmem:[#allocation2 + $0x50] sm:$0xf]
        %v4037 = vld [vmem:[#allocation2 + $0x54] sm:$0xf]
        %v4038 = vld [vmem:[#allocation2 + $0x58] sm:$0xf]
        %v4039 = vld [vmem:[#allocation2 + $0x5c] sm:$0xf]
        %v4040 = vld [vmem:[#allocation2 + $0x60] sm:$0xf]
        %v4041 = vld [vmem:[#allocation2 + $0x64] sm:$0xf]
        %v4042 = vld [vmem:[#allocation2 + $0x68] sm:$0xf]
        %v4043 = vld [vmem:[#allocation2 + $0x6c] sm:$0xf]
        %v4044 = vld [vmem:[#allocation2 + $0x70] sm:$0xf]
        %v4045 = vld [vmem:[#allocation2 + $0x74] sm:$0xf]
        %v4046 = vld [vmem:[#allocation2 + $0x78] sm:$0xf]
        %v4047 = vld [vmem:[#allocation2 + $0x7c] sm:$0xf]
        %v4048 = vld [vmem:[#allocation2 + $0x80] sm:$0xf]
        %v4049 = vld [vmem:[#allocation2 + $0x84] sm:$0xf]
        %s4050 = scalar_lea.vmem %s477, 192 [#allocation10]
        %v4051 = vld [vmem:[%s4050] sm:$0xf]
        %v4052 = vld [vmem:[%s4050 + $0x4] sm:$0xf]
        %v4053 = vld [vmem:[%s4050 + $0x8] sm:$0xf]
        %v4054 = vld [vmem:[%s4050 + $0xc] sm:$0xf]
        %v4055 = vld [vmem:[%s4050 + $0x10] sm:$0xf]
        %v4056 = vld [vmem:[%s4050 + $0x14] sm:$0xf]
        %v4057 = vld [vmem:[%s4050 + $0x18] sm:$0xf]
        %v4058 = vld [vmem:[%s4050 + $0x1c] sm:$0xf]
        %v4059 = vld [vmem:[%s4050 + $0x20] sm:$0xf]
        %v4060 = vld [vmem:[%s4050 + $0x24] sm:$0xf]
        %v4061 = vld [vmem:[%s4050 + $0x28] sm:$0xf]
        %v4062 = vld [vmem:[%s4050 + $0x2c] sm:$0xf]
        %v4063 = vld [vmem:[%s4050 + $0x30] sm:$0xf]
        %v4064 = vld [vmem:[%s4050 + $0x34] sm:$0xf]
        %v4065 = vld [vmem:[%s4050 + $0x38] sm:$0xf]
        %v4066 = vld [vmem:[%s4050 + $0x3c] sm:$0xf]
        %v4099 = vunpack.c.l.b16 %v4018
        %v4100 = vunpack.c.l.b16 %v4019
        %v4101 = vunpack.c.l.b16 %v4020
        %v4102 = vunpack.c.l.b16 %v4021
        %v4103 = vunpack.c.l.b16 %v4022
        %v4104 = vunpack.c.l.b16 %v4023
        %v4105 = vunpack.c.l.b16 %v4024
        %v4106 = vunpack.c.l.b16 %v4025
        %v4107 = vunpack.c.l.b16 %v4026
        %v4108 = vunpack.c.l.b16 %v4027
        %v4109 = vunpack.c.l.b16 %v4028
        %v4110 = vunpack.c.l.b16 %v4029
        %v4111 = vunpack.c.l.b16 %v4030
        %v4112 = vunpack.c.l.b16 %v4031
        %v4113 = vunpack.c.l.b16 %v4032
        %v4114 = vunpack.c.l.b16 %v4033
        %v4115 = vunpack.c.l.b16 %v4034
        %v4116 = vunpack.c.l.b16 %v4035
        %v4117 = vunpack.c.l.b16 %v4036
        %v4118 = vunpack.c.l.b16 %v4037
        %v4119 = vunpack.c.l.b16 %v4038
        %v4120 = vunpack.c.l.b16 %v4039
        %v4121 = vunpack.c.l.b16 %v4040
        %v4122 = vunpack.c.l.b16 %v4041
        %v4123 = vunpack.c.l.b16 %v4042
        %v4124 = vunpack.c.l.b16 %v4043
        %v4125 = vunpack.c.l.b16 %v4044
        %v4126 = vunpack.c.l.b16 %v4045
        %v4127 = vunpack.c.l.b16 %v4046
        %v4128 = vunpack.c.l.b16 %v4047
        %v4129 = vunpack.c.l.b16 %v4048
        %v4130 = vunpack.c.l.b16 %v4049
        %v4131 = vpack.c.b16 %v4100, %v4099
        %v4132 = vpack.c.b16 %v4102, %v4101
        %v4133 = vpack.c.b16 %v4104, %v4103
        %v4134 = vpack.c.b16 %v4106, %v4105
        %v4135 = vpack.c.b16 %v4108, %v4107
        %v4136 = vpack.c.b16 %v4110, %v4109
        %v4137 = vpack.c.b16 %v4112, %v4111
        %v4138 = vpack.c.b16 %v4114, %v4113
        %v4139 = vpack.c.b16 %v4116, %v4115
        %v4140 = vpack.c.b16 %v4118, %v4117
        %v4141 = vpack.c.b16 %v4120, %v4119
        %v4142 = vpack.c.b16 %v4122, %v4121
        %v4143 = vpack.c.b16 %v4124, %v4123
        %v4144 = vpack.c.b16 %v4126, %v4125
        %v4145 = vpack.c.b16 %v4128, %v4127
        %v4146 = vpack.c.b16 %v4130, %v4129
        %v4179 = vunpack.c.l.b16 %v4051
        %v4180 = vunpack.c.l.b16 %v4052
        %v4181 = vunpack.c.l.b16 %v4053
        %v4182 = vunpack.c.l.b16 %v4054
        %v4183 = vunpack.c.l.b16 %v4055
        %v4184 = vunpack.c.l.b16 %v4056
        %v4185 = vunpack.c.l.b16 %v4057
        %v4186 = vunpack.c.l.b16 %v4058
        %v4187 = vunpack.c.l.b16 %v4059
        %v4188 = vunpack.c.l.b16 %v4060
        %v4189 = vunpack.c.l.b16 %v4061
        %v4190 = vunpack.c.l.b16 %v4062
        %v4191 = vunpack.c.l.b16 %v4063
        %v4192 = vunpack.c.l.b16 %v4064
        %v4193 = vunpack.c.l.b16 %v4065
        %v4194 = vunpack.c.l.b16 %v4066
        %v4195 = vpack.c.b16 %v4180, %v4179
        %v4196 = vpack.c.b16 %v4182, %v4181
        %v4197 = vpack.c.b16 %v4184, %v4183
        %v4198 = vpack.c.b16 %v4186, %v4185
        %v4199 = vpack.c.b16 %v4188, %v4187
        %v4200 = vpack.c.b16 %v4190, %v4189
        %v4201 = vpack.c.b16 %v4192, %v4191
        %v4202 = vpack.c.b16 %v4194, %v4193
        %4211 = vmatpush.bf16.msra.mxu0 %v4202
        %4212 = vmatpush.bf16.msra.mxu0 %v4201
        %4213 = vmatpush.bf16.msra.mxu0 %v4200
        %4214 = vmatpush.bf16.msra.mxu0 %v4199
        %4215 = vmatpush.bf16.msra.mxu0 %v4198
        %4216 = vmatpush.bf16.msra.mxu0 %v4197
        %4217 = vmatpush.bf16.msra.mxu0 %v4196
        %4218 = vmatpush.bf16.msra.mxu0 %v4195
        %4219 = vmatmul.bf16.gmra.mxu0 %v4131
        %v4220 = vpop.f32.mrf.mxu0
        %v4221 = vadd.f32 0.0, %v4220
        %v4222 = vpop.f32.mrf.mxu0
        %v4223 = vadd.f32 0.0, %v4222
        %4224 = vmatmul.bf16.gmra.mxu0 %v4132
        %v4225 = vpop.f32.mrf.mxu0
        %v4226 = vadd.f32 0.0, %v4225
        %v4227 = vpop.f32.mrf.mxu0
        %v4228 = vadd.f32 0.0, %v4227
        %4229 = vmatmul.bf16.gmra.mxu0 %v4133
        %v4230 = vpop.f32.mrf.mxu0
        %v4231 = vadd.f32 0.0, %v4230
        %v4232 = vpop.f32.mrf.mxu0
        %v4233 = vadd.f32 0.0, %v4232
        %4234 = vmatmul.bf16.gmra.mxu0 %v4134
        %v4235 = vpop.f32.mrf.mxu0
        %v4236 = vadd.f32 0.0, %v4235
        %v4237 = vpop.f32.mrf.mxu0
        %v4238 = vadd.f32 0.0, %v4237
        %4239 = vmatmul.bf16.gmra.mxu0 %v4135
        %v4240 = vpop.f32.mrf.mxu0
        %v4241 = vadd.f32 0.0, %v4240
        %v4242 = vpop.f32.mrf.mxu0
        %v4243 = vadd.f32 0.0, %v4242
        %4244 = vmatmul.bf16.gmra.mxu0 %v4136
        %v4245 = vpop.f32.mrf.mxu0
        %v4246 = vadd.f32 0.0, %v4245
        %v4247 = vpop.f32.mrf.mxu0
        %v4248 = vadd.f32 0.0, %v4247
        %4249 = vmatmul.bf16.gmra.mxu0 %v4137
        %v4250 = vpop.f32.mrf.mxu0
        %v4251 = vadd.f32 0.0, %v4250
        %v4252 = vpop.f32.mrf.mxu0
        %v4253 = vadd.f32 0.0, %v4252
        %4254 = vmatmul.bf16.gmra.mxu0 %v4138
        %v4255 = vpop.f32.mrf.mxu0
        %v4256 = vadd.f32 0.0, %v4255
        %v4257 = vpop.f32.mrf.mxu0
        %v4258 = vadd.f32 0.0, %v4257
        %4259 = vmatmul.bf16.gmra.mxu0 %v4139
        %v4260 = vpop.f32.mrf.mxu0
        %v4261 = vadd.f32 0.0, %v4260
        %v4262 = vpop.f32.mrf.mxu0
        %v4263 = vadd.f32 0.0, %v4262
        %4264 = vmatmul.bf16.gmra.mxu0 %v4140
        %v4265 = vpop.f32.mrf.mxu0
        %v4266 = vadd.f32 0.0, %v4265
        %v4267 = vpop.f32.mrf.mxu0
        %v4268 = vadd.f32 0.0, %v4267
        %4269 = vmatmul.bf16.gmra.mxu0 %v4141
        %v4270 = vpop.f32.mrf.mxu0
        %v4271 = vadd.f32 0.0, %v4270
        %v4272 = vpop.f32.mrf.mxu0
        %v4273 = vadd.f32 0.0, %v4272
        %4274 = vmatmul.bf16.gmra.mxu0 %v4142
        %v4275 = vpop.f32.mrf.mxu0
        %v4276 = vadd.f32 0.0, %v4275
        %v4277 = vpop.f32.mrf.mxu0
        %v4278 = vadd.f32 0.0, %v4277
        %4279 = vmatmul.bf16.gmra.mxu0 %v4143
        %v4280 = vpop.f32.mrf.mxu0
        %v4281 = vadd.f32 0.0, %v4280
        %v4282 = vpop.f32.mrf.mxu0
        %v4283 = vadd.f32 0.0, %v4282
        %4284 = vmatmul.bf16.gmra.mxu0 %v4144
        %v4285 = vpop.f32.mrf.mxu0
        %v4286 = vadd.f32 0.0, %v4285
        %v4287 = vpop.f32.mrf.mxu0
        %v4288 = vadd.f32 0.0, %v4287
        %4289 = vmatmul.bf16.gmra.mxu0 %v4145
        %v4290 = vpop.f32.mrf.mxu0
        %v4291 = vadd.f32 0.0, %v4290
        %v4292 = vpop.f32.mrf.mxu0
        %v4293 = vadd.f32 0.0, %v4292
        %4294 = vmatmul.bf16.gmra.mxu0 %v4146
        %v4295 = vpop.f32.mrf.mxu0
        %v4296 = vadd.f32 0.0, %v4295
        %v4297 = vpop.f32.mrf.mxu0
        %v4298 = vadd.f32 0.0, %v4297
        %4299 = vdwg.mxu0
        %v4300 = vadd.f32 %v3986, %v4221
        %v4301 = vadd.f32 %v3987, %v4223
        %v4302 = vadd.f32 %v3988, %v4226
        %v4303 = vadd.f32 %v3989, %v4228
        %v4304 = vadd.f32 %v3990, %v4231
        %v4305 = vadd.f32 %v3991, %v4233
        %v4306 = vadd.f32 %v3992, %v4236
        %v4307 = vadd.f32 %v3993, %v4238
        %v4308 = vadd.f32 %v3994, %v4241
        %v4309 = vadd.f32 %v3995, %v4243
        %v4310 = vadd.f32 %v3996, %v4246
        %v4311 = vadd.f32 %v3997, %v4248
        %v4312 = vadd.f32 %v3998, %v4251
        %v4313 = vadd.f32 %v3999, %v4253
        %v4314 = vadd.f32 %v4000, %v4256
        %v4315 = vadd.f32 %v4001, %v4258
        %v4316 = vadd.f32 %v4002, %v4261
        %v4317 = vadd.f32 %v4003, %v4263
        %v4318 = vadd.f32 %v4004, %v4266
        %v4319 = vadd.f32 %v4005, %v4268
        %v4320 = vadd.f32 %v4006, %v4271
        %v4321 = vadd.f32 %v4007, %v4273
        %v4322 = vadd.f32 %v4008, %v4276
        %v4323 = vadd.f32 %v4009, %v4278
        %v4324 = vadd.f32 %v4010, %v4281
        %v4325 = vadd.f32 %v4011, %v4283
        %v4326 = vadd.f32 %v4012, %v4286
        %v4327 = vadd.f32 %v4013, %v4288
        %v4328 = vadd.f32 %v4014, %v4291
        %v4329 = vadd.f32 %v4015, %v4293
        %v4330 = vadd.f32 %v4016, %v4296
        %v4331 = vadd.f32 %v4017, %v4298
        %v4332 = vld [vmem:[%s3187 + $0x8] sm:$0xf]
        %v4333 = vld [vmem:[%s3187 + $0xc] sm:$0xf]
        %v4334 = vld [vmem:[%s3187 + $0x10] sm:$0xf]
        %v4335 = vld [vmem:[%s3187 + $0x14] sm:$0xf]
        %v4336 = vld [vmem:[%s3187 + $0x18] sm:$0xf]
        %v4337 = vld [vmem:[%s3187 + $0x1c] sm:$0xf]
        %v4338 = vld [vmem:[%s3187 + $0x20] sm:$0xf]
        %v4339 = vld [vmem:[%s3187 + $0x24] sm:$0xf]
        %v4340 = vld [vmem:[%s3187 + $0x28] sm:$0xf]
        %v4341 = vld [vmem:[%s3187 + $0x2c] sm:$0xf]
        %v4342 = vld [vmem:[%s3187 + $0x30] sm:$0xf]
        %v4343 = vld [vmem:[%s3187 + $0x34] sm:$0xf]
        %v4344 = vld [vmem:[%s3187 + $0x38] sm:$0xf]
        %v4345 = vld [vmem:[%s3187 + $0x3c] sm:$0xf]
        %v4346 = vld [vmem:[%s3187 + $0x40] sm:$0xf]
        %v4347 = vld [vmem:[%s3187 + $0x44] sm:$0xf]
        %v4348 = vld [vmem:[%s3187 + $0x48] sm:$0xf]
        %v4349 = vld [vmem:[%s3187 + $0x4c] sm:$0xf]
        %v4350 = vld [vmem:[%s3187 + $0x50] sm:$0xf]
        %v4351 = vld [vmem:[%s3187 + $0x54] sm:$0xf]
        %v4352 = vld [vmem:[%s3187 + $0x58] sm:$0xf]
        %v4353 = vld [vmem:[%s3187 + $0x5c] sm:$0xf]
        %v4354 = vld [vmem:[%s3187 + $0x60] sm:$0xf]
        %v4355 = vld [vmem:[%s3187 + $0x64] sm:$0xf]
        %v4356 = vld [vmem:[%s3187 + $0x68] sm:$0xf]
        %v4357 = vld [vmem:[%s3187 + $0x6c] sm:$0xf]
        %v4358 = vld [vmem:[%s3187 + $0x70] sm:$0xf]
        %v4359 = vld [vmem:[%s3187 + $0x74] sm:$0xf]
        %v4360 = vld [vmem:[%s3187 + $0x78] sm:$0xf]
        %v4361 = vld [vmem:[%s3187 + $0x7c] sm:$0xf]
        %v4362 = vld [vmem:[%s3187 + $0x80] sm:$0xf]
        %v4363 = vld [vmem:[%s3187 + $0x84] sm:$0xf]
        %s4364 = scalar_lea.vmem %s477, 256 [#allocation10]
        %v4365 = vld [vmem:[%s4364] sm:$0xf]
        %v4366 = vld [vmem:[%s4364 + $0x4] sm:$0xf]
        %v4367 = vld [vmem:[%s4364 + $0x8] sm:$0xf]
        %v4368 = vld [vmem:[%s4364 + $0xc] sm:$0xf]
        %v4369 = vld [vmem:[%s4364 + $0x10] sm:$0xf]
        %v4370 = vld [vmem:[%s4364 + $0x14] sm:$0xf]
        %v4371 = vld [vmem:[%s4364 + $0x18] sm:$0xf]
        %v4372 = vld [vmem:[%s4364 + $0x1c] sm:$0xf]
        %v4373 = vld [vmem:[%s4364 + $0x20] sm:$0xf]
        %v4374 = vld [vmem:[%s4364 + $0x24] sm:$0xf]
        %v4375 = vld [vmem:[%s4364 + $0x28] sm:$0xf]
        %v4376 = vld [vmem:[%s4364 + $0x2c] sm:$0xf]
        %v4377 = vld [vmem:[%s4364 + $0x30] sm:$0xf]
        %v4378 = vld [vmem:[%s4364 + $0x34] sm:$0xf]
        %v4379 = vld [vmem:[%s4364 + $0x38] sm:$0xf]
        %v4380 = vld [vmem:[%s4364 + $0x3c] sm:$0xf]
        %v4413 = vunpack.c.l.b16 %v4332
        %v4414 = vunpack.c.l.b16 %v4333
        %v4415 = vunpack.c.l.b16 %v4334
        %v4416 = vunpack.c.l.b16 %v4335
        %v4417 = vunpack.c.l.b16 %v4336
        %v4418 = vunpack.c.l.b16 %v4337
        %v4419 = vunpack.c.l.b16 %v4338
        %v4420 = vunpack.c.l.b16 %v4339
        %v4421 = vunpack.c.l.b16 %v4340
        %v4422 = vunpack.c.l.b16 %v4341
        %v4423 = vunpack.c.l.b16 %v4342
        %v4424 = vunpack.c.l.b16 %v4343
        %v4425 = vunpack.c.l.b16 %v4344
        %v4426 = vunpack.c.l.b16 %v4345
        %v4427 = vunpack.c.l.b16 %v4346
        %v4428 = vunpack.c.l.b16 %v4347
        %v4429 = vunpack.c.l.b16 %v4348
        %v4430 = vunpack.c.l.b16 %v4349
        %v4431 = vunpack.c.l.b16 %v4350
        %v4432 = vunpack.c.l.b16 %v4351
        %v4433 = vunpack.c.l.b16 %v4352
        %v4434 = vunpack.c.l.b16 %v4353
        %v4435 = vunpack.c.l.b16 %v4354
        %v4436 = vunpack.c.l.b16 %v4355
        %v4437 = vunpack.c.l.b16 %v4356
        %v4438 = vunpack.c.l.b16 %v4357
        %v4439 = vunpack.c.l.b16 %v4358
        %v4440 = vunpack.c.l.b16 %v4359
        %v4441 = vunpack.c.l.b16 %v4360
        %v4442 = vunpack.c.l.b16 %v4361
        %v4443 = vunpack.c.l.b16 %v4362
        %v4444 = vunpack.c.l.b16 %v4363
        %v4445 = vpack.c.b16 %v4414, %v4413
        %v4446 = vpack.c.b16 %v4416, %v4415
        %v4447 = vpack.c.b16 %v4418, %v4417
        %v4448 = vpack.c.b16 %v4420, %v4419
        %v4449 = vpack.c.b16 %v4422, %v4421
        %v4450 = vpack.c.b16 %v4424, %v4423
        %v4451 = vpack.c.b16 %v4426, %v4425
        %v4452 = vpack.c.b16 %v4428, %v4427
        %v4453 = vpack.c.b16 %v4430, %v4429
        %v4454 = vpack.c.b16 %v4432, %v4431
        %v4455 = vpack.c.b16 %v4434, %v4433
        %v4456 = vpack.c.b16 %v4436, %v4435
        %v4457 = vpack.c.b16 %v4438, %v4437
        %v4458 = vpack.c.b16 %v4440, %v4439
        %v4459 = vpack.c.b16 %v4442, %v4441
        %v4460 = vpack.c.b16 %v4444, %v4443
        %v4493 = vunpack.c.l.b16 %v4365
        %v4494 = vunpack.c.l.b16 %v4366
        %v4495 = vunpack.c.l.b16 %v4367
        %v4496 = vunpack.c.l.b16 %v4368
        %v4497 = vunpack.c.l.b16 %v4369
        %v4498 = vunpack.c.l.b16 %v4370
        %v4499 = vunpack.c.l.b16 %v4371
        %v4500 = vunpack.c.l.b16 %v4372
        %v4501 = vunpack.c.l.b16 %v4373
        %v4502 = vunpack.c.l.b16 %v4374
        %v4503 = vunpack.c.l.b16 %v4375
        %v4504 = vunpack.c.l.b16 %v4376
        %v4505 = vunpack.c.l.b16 %v4377
        %v4506 = vunpack.c.l.b16 %v4378
        %v4507 = vunpack.c.l.b16 %v4379
        %v4508 = vunpack.c.l.b16 %v4380
        %v4509 = vpack.c.b16 %v4494, %v4493
        %v4510 = vpack.c.b16 %v4496, %v4495
        %v4511 = vpack.c.b16 %v4498, %v4497
        %v4512 = vpack.c.b16 %v4500, %v4499
        %v4513 = vpack.c.b16 %v4502, %v4501
        %v4514 = vpack.c.b16 %v4504, %v4503
        %v4515 = vpack.c.b16 %v4506, %v4505
        %v4516 = vpack.c.b16 %v4508, %v4507
        %4525 = vmatpush.bf16.msra.mxu0 %v4516
        %4526 = vmatpush.bf16.msra.mxu0 %v4515
        %4527 = vmatpush.bf16.msra.mxu0 %v4514
        %4528 = vmatpush.bf16.msra.mxu0 %v4513
        %4529 = vmatpush.bf16.msra.mxu0 %v4512
        %4530 = vmatpush.bf16.msra.mxu0 %v4511
        %4531 = vmatpush.bf16.msra.mxu0 %v4510
        %4532 = vmatpush.bf16.msra.mxu0 %v4509
        %4533 = vmatmul.bf16.gmra.mxu0 %v4445
        %v4534 = vpop.f32.mrf.mxu0
        %v4535 = vadd.f32 0.0, %v4534
        %v4536 = vpop.f32.mrf.mxu0
        %v4537 = vadd.f32 0.0, %v4536
        %4538 = vmatmul.bf16.gmra.mxu0 %v4446
        %v4539 = vpop.f32.mrf.mxu0
        %v4540 = vadd.f32 0.0, %v4539
        %v4541 = vpop.f32.mrf.mxu0
        %v4542 = vadd.f32 0.0, %v4541
        %4543 = vmatmul.bf16.gmra.mxu0 %v4447
        %v4544 = vpop.f32.mrf.mxu0
        %v4545 = vadd.f32 0.0, %v4544
        %v4546 = vpop.f32.mrf.mxu0
        %v4547 = vadd.f32 0.0, %v4546
        %4548 = vmatmul.bf16.gmra.mxu0 %v4448
        %v4549 = vpop.f32.mrf.mxu0
        %v4550 = vadd.f32 0.0, %v4549
        %v4551 = vpop.f32.mrf.mxu0
        %v4552 = vadd.f32 0.0, %v4551
        %4553 = vmatmul.bf16.gmra.mxu0 %v4449
        %v4554 = vpop.f32.mrf.mxu0
        %v4555 = vadd.f32 0.0, %v4554
        %v4556 = vpop.f32.mrf.mxu0
        %v4557 = vadd.f32 0.0, %v4556
        %4558 = vmatmul.bf16.gmra.mxu0 %v4450
        %v4559 = vpop.f32.mrf.mxu0
        %v4560 = vadd.f32 0.0, %v4559
        %v4561 = vpop.f32.mrf.mxu0
        %v4562 = vadd.f32 0.0, %v4561
        %4563 = vmatmul.bf16.gmra.mxu0 %v4451
        %v4564 = vpop.f32.mrf.mxu0
        %v4565 = vadd.f32 0.0, %v4564
        %v4566 = vpop.f32.mrf.mxu0
        %v4567 = vadd.f32 0.0, %v4566
        %4568 = vmatmul.bf16.gmra.mxu0 %v4452
        %v4569 = vpop.f32.mrf.mxu0
        %v4570 = vadd.f32 0.0, %v4569
        %v4571 = vpop.f32.mrf.mxu0
        %v4572 = vadd.f32 0.0, %v4571
        %4573 = vmatmul.bf16.gmra.mxu0 %v4453
        %v4574 = vpop.f32.mrf.mxu0
        %v4575 = vadd.f32 0.0, %v4574
        %v4576 = vpop.f32.mrf.mxu0
        %v4577 = vadd.f32 0.0, %v4576
        %4578 = vmatmul.bf16.gmra.mxu0 %v4454
        %v4579 = vpop.f32.mrf.mxu0
        %v4580 = vadd.f32 0.0, %v4579
        %v4581 = vpop.f32.mrf.mxu0
        %v4582 = vadd.f32 0.0, %v4581
        %4583 = vmatmul.bf16.gmra.mxu0 %v4455
        %v4584 = vpop.f32.mrf.mxu0
        %v4585 = vadd.f32 0.0, %v4584
        %v4586 = vpop.f32.mrf.mxu0
        %v4587 = vadd.f32 0.0, %v4586
        %4588 = vmatmul.bf16.gmra.mxu0 %v4456
        %v4589 = vpop.f32.mrf.mxu0
        %v4590 = vadd.f32 0.0, %v4589
        %v4591 = vpop.f32.mrf.mxu0
        %v4592 = vadd.f32 0.0, %v4591
        %4593 = vmatmul.bf16.gmra.mxu0 %v4457
        %v4594 = vpop.f32.mrf.mxu0
        %v4595 = vadd.f32 0.0, %v4594
        %v4596 = vpop.f32.mrf.mxu0
        %v4597 = vadd.f32 0.0, %v4596
        %4598 = vmatmul.bf16.gmra.mxu0 %v4458
        %v4599 = vpop.f32.mrf.mxu0
        %v4600 = vadd.f32 0.0, %v4599
        %v4601 = vpop.f32.mrf.mxu0
        %v4602 = vadd.f32 0.0, %v4601
        %4603 = vmatmul.bf16.gmra.mxu0 %v4459
        %v4604 = vpop.f32.mrf.mxu0
        %v4605 = vadd.f32 0.0, %v4604
        %v4606 = vpop.f32.mrf.mxu0
        %v4607 = vadd.f32 0.0, %v4606
        %4608 = vmatmul.bf16.gmra.mxu0 %v4460
        %v4609 = vpop.f32.mrf.mxu0
        %v4610 = vadd.f32 0.0, %v4609
        %v4611 = vpop.f32.mrf.mxu0
        %v4612 = vadd.f32 0.0, %v4611
        %4613 = vdwg.mxu0
        %v4614 = vadd.f32 %v4300, %v4535
        %v4615 = vadd.f32 %v4301, %v4537
        %v4616 = vadd.f32 %v4302, %v4540
        %v4617 = vadd.f32 %v4303, %v4542
        %v4618 = vadd.f32 %v4304, %v4545
        %v4619 = vadd.f32 %v4305, %v4547
        %v4620 = vadd.f32 %v4306, %v4550
        %v4621 = vadd.f32 %v4307, %v4552
        %v4622 = vadd.f32 %v4308, %v4555
        %v4623 = vadd.f32 %v4309, %v4557
        %v4624 = vadd.f32 %v4310, %v4560
        %v4625 = vadd.f32 %v4311, %v4562
        %v4626 = vadd.f32 %v4312, %v4565
        %v4627 = vadd.f32 %v4313, %v4567
        %v4628 = vadd.f32 %v4314, %v4570
        %v4629 = vadd.f32 %v4315, %v4572
        %v4630 = vadd.f32 %v4316, %v4575
        %v4631 = vadd.f32 %v4317, %v4577
        %v4632 = vadd.f32 %v4318, %v4580
        %v4633 = vadd.f32 %v4319, %v4582
        %v4634 = vadd.f32 %v4320, %v4585
        %v4635 = vadd.f32 %v4321, %v4587
        %v4636 = vadd.f32 %v4322, %v4590
        %v4637 = vadd.f32 %v4323, %v4592
        %v4638 = vadd.f32 %v4324, %v4595
        %v4639 = vadd.f32 %v4325, %v4597
        %v4640 = vadd.f32 %v4326, %v4600
        %v4641 = vadd.f32 %v4327, %v4602
        %v4642 = vadd.f32 %v4328, %v4605
        %v4643 = vadd.f32 %v4329, %v4607
        %v4644 = vadd.f32 %v4330, %v4610
        %v4645 = vadd.f32 %v4331, %v4612
        %v4646 = vld [vmem:[%s3703 + $0x8] sm:$0xf]
        %v4647 = vld [vmem:[%s3703 + $0xc] sm:$0xf]
        %v4648 = vld [vmem:[%s3703 + $0x10] sm:$0xf]
        %v4649 = vld [vmem:[%s3703 + $0x14] sm:$0xf]
        %v4650 = vld [vmem:[%s3703 + $0x18] sm:$0xf]
        %v4651 = vld [vmem:[%s3703 + $0x1c] sm:$0xf]
        %v4652 = vld [vmem:[%s3703 + $0x20] sm:$0xf]
        %v4653 = vld [vmem:[%s3703 + $0x24] sm:$0xf]
        %v4654 = vld [vmem:[%s3703 + $0x28] sm:$0xf]
        %v4655 = vld [vmem:[%s3703 + $0x2c] sm:$0xf]
        %v4656 = vld [vmem:[%s3703 + $0x30] sm:$0xf]
        %v4657 = vld [vmem:[%s3703 + $0x34] sm:$0xf]
        %v4658 = vld [vmem:[%s3703 + $0x38] sm:$0xf]
        %v4659 = vld [vmem:[%s3703 + $0x3c] sm:$0xf]
        %v4660 = vld [vmem:[%s3703 + $0x40] sm:$0xf]
        %v4661 = vld [vmem:[%s3703 + $0x44] sm:$0xf]
        %v4662 = vld [vmem:[%s3703 + $0x48] sm:$0xf]
        %v4663 = vld [vmem:[%s3703 + $0x4c] sm:$0xf]
        %v4664 = vld [vmem:[%s3703 + $0x50] sm:$0xf]
        %v4665 = vld [vmem:[%s3703 + $0x54] sm:$0xf]
        %v4666 = vld [vmem:[%s3703 + $0x58] sm:$0xf]
        %v4667 = vld [vmem:[%s3703 + $0x5c] sm:$0xf]
        %v4668 = vld [vmem:[%s3703 + $0x60] sm:$0xf]
        %v4669 = vld [vmem:[%s3703 + $0x64] sm:$0xf]
        %v4670 = vld [vmem:[%s3703 + $0x68] sm:$0xf]
        %v4671 = vld [vmem:[%s3703 + $0x6c] sm:$0xf]
        %v4672 = vld [vmem:[%s3703 + $0x70] sm:$0xf]
        %v4673 = vld [vmem:[%s3703 + $0x74] sm:$0xf]
        %v4674 = vld [vmem:[%s3703 + $0x78] sm:$0xf]
        %v4675 = vld [vmem:[%s3703 + $0x7c] sm:$0xf]
        %v4676 = vld [vmem:[%s3703 + $0x80] sm:$0xf]
        %v4677 = vld [vmem:[%s3703 + $0x84] sm:$0xf]
        %s4678 = scalar_lea.vmem %s477, 320 [#allocation10]
        %v4679 = vld [vmem:[%s4678] sm:$0xf]
        %v4680 = vld [vmem:[%s4678 + $0x4] sm:$0xf]
        %v4681 = vld [vmem:[%s4678 + $0x8] sm:$0xf]
        %v4682 = vld [vmem:[%s4678 + $0xc] sm:$0xf]
        %v4683 = vld [vmem:[%s4678 + $0x10] sm:$0xf]
        %v4684 = vld [vmem:[%s4678 + $0x14] sm:$0xf]
        %v4685 = vld [vmem:[%s4678 + $0x18] sm:$0xf]
        %v4686 = vld [vmem:[%s4678 + $0x1c] sm:$0xf]
        %v4687 = vld [vmem:[%s4678 + $0x20] sm:$0xf]
        %v4688 = vld [vmem:[%s4678 + $0x24] sm:$0xf]
        %v4689 = vld [vmem:[%s4678 + $0x28] sm:$0xf]
        %v4690 = vld [vmem:[%s4678 + $0x2c] sm:$0xf]
        %v4691 = vld [vmem:[%s4678 + $0x30] sm:$0xf]
        %v4692 = vld [vmem:[%s4678 + $0x34] sm:$0xf]
        %v4693 = vld [vmem:[%s4678 + $0x38] sm:$0xf]
        %v4694 = vld [vmem:[%s4678 + $0x3c] sm:$0xf]
        %v4727 = vunpack.c.l.b16 %v4646
        %v4728 = vunpack.c.l.b16 %v4647
        %v4729 = vunpack.c.l.b16 %v4648
        %v4730 = vunpack.c.l.b16 %v4649
        %v4731 = vunpack.c.l.b16 %v4650
        %v4732 = vunpack.c.l.b16 %v4651
        %v4733 = vunpack.c.l.b16 %v4652
        %v4734 = vunpack.c.l.b16 %v4653
        %v4735 = vunpack.c.l.b16 %v4654
        %v4736 = vunpack.c.l.b16 %v4655
        %v4737 = vunpack.c.l.b16 %v4656
        %v4738 = vunpack.c.l.b16 %v4657
        %v4739 = vunpack.c.l.b16 %v4658
        %v4740 = vunpack.c.l.b16 %v4659
        %v4741 = vunpack.c.l.b16 %v4660
        %v4742 = vunpack.c.l.b16 %v4661
        %v4743 = vunpack.c.l.b16 %v4662
        %v4744 = vunpack.c.l.b16 %v4663
        %v4745 = vunpack.c.l.b16 %v4664
        %v4746 = vunpack.c.l.b16 %v4665
        %v4747 = vunpack.c.l.b16 %v4666
        %v4748 = vunpack.c.l.b16 %v4667
        %v4749 = vunpack.c.l.b16 %v4668
        %v4750 = vunpack.c.l.b16 %v4669
        %v4751 = vunpack.c.l.b16 %v4670
        %v4752 = vunpack.c.l.b16 %v4671
        %v4753 = vunpack.c.l.b16 %v4672
        %v4754 = vunpack.c.l.b16 %v4673
        %v4755 = vunpack.c.l.b16 %v4674
        %v4756 = vunpack.c.l.b16 %v4675
        %v4757 = vunpack.c.l.b16 %v4676
        %v4758 = vunpack.c.l.b16 %v4677
        %v4759 = vpack.c.b16 %v4728, %v4727
        %v4760 = vpack.c.b16 %v4730, %v4729
        %v4761 = vpack.c.b16 %v4732, %v4731
        %v4762 = vpack.c.b16 %v4734, %v4733
        %v4763 = vpack.c.b16 %v4736, %v4735
        %v4764 = vpack.c.b16 %v4738, %v4737
        %v4765 = vpack.c.b16 %v4740, %v4739
        %v4766 = vpack.c.b16 %v4742, %v4741
        %v4767 = vpack.c.b16 %v4744, %v4743
        %v4768 = vpack.c.b16 %v4746, %v4745
        %v4769 = vpack.c.b16 %v4748, %v4747
        %v4770 = vpack.c.b16 %v4750, %v4749
        %v4771 = vpack.c.b16 %v4752, %v4751
        %v4772 = vpack.c.b16 %v4754, %v4753
        %v4773 = vpack.c.b16 %v4756, %v4755
        %v4774 = vpack.c.b16 %v4758, %v4757
        %v4807 = vunpack.c.l.b16 %v4679
        %v4808 = vunpack.c.l.b16 %v4680
        %v4809 = vunpack.c.l.b16 %v4681
        %v4810 = vunpack.c.l.b16 %v4682
        %v4811 = vunpack.c.l.b16 %v4683
        %v4812 = vunpack.c.l.b16 %v4684
        %v4813 = vunpack.c.l.b16 %v4685
        %v4814 = vunpack.c.l.b16 %v4686
        %v4815 = vunpack.c.l.b16 %v4687
        %v4816 = vunpack.c.l.b16 %v4688
        %v4817 = vunpack.c.l.b16 %v4689
        %v4818 = vunpack.c.l.b16 %v4690
        %v4819 = vunpack.c.l.b16 %v4691
        %v4820 = vunpack.c.l.b16 %v4692
        %v4821 = vunpack.c.l.b16 %v4693
        %v4822 = vunpack.c.l.b16 %v4694
        %v4823 = vpack.c.b16 %v4808, %v4807
        %v4824 = vpack.c.b16 %v4810, %v4809
        %v4825 = vpack.c.b16 %v4812, %v4811
        %v4826 = vpack.c.b16 %v4814, %v4813
        %v4827 = vpack.c.b16 %v4816, %v4815
        %v4828 = vpack.c.b16 %v4818, %v4817
        %v4829 = vpack.c.b16 %v4820, %v4819
        %v4830 = vpack.c.b16 %v4822, %v4821
        %4839 = vmatpush.bf16.msra.mxu0 %v4830
        %4840 = vmatpush.bf16.msra.mxu0 %v4829
        %4841 = vmatpush.bf16.msra.mxu0 %v4828
        %4842 = vmatpush.bf16.msra.mxu0 %v4827
        %4843 = vmatpush.bf16.msra.mxu0 %v4826
        %4844 = vmatpush.bf16.msra.mxu0 %v4825
        %4845 = vmatpush.bf16.msra.mxu0 %v4824
        %4846 = vmatpush.bf16.msra.mxu0 %v4823
        %4847 = vmatmul.bf16.gmra.mxu0 %v4759
        %v4848 = vpop.f32.mrf.mxu0
        %v4849 = vadd.f32 0.0, %v4848
        %v4850 = vpop.f32.mrf.mxu0
        %v4851 = vadd.f32 0.0, %v4850
        %4852 = vmatmul.bf16.gmra.mxu0 %v4760
        %v4853 = vpop.f32.mrf.mxu0
        %v4854 = vadd.f32 0.0, %v4853
        %v4855 = vpop.f32.mrf.mxu0
        %v4856 = vadd.f32 0.0, %v4855
        %4857 = vmatmul.bf16.gmra.mxu0 %v4761
        %v4858 = vpop.f32.mrf.mxu0
        %v4859 = vadd.f32 0.0, %v4858
        %v4860 = vpop.f32.mrf.mxu0
        %v4861 = vadd.f32 0.0, %v4860
        %4862 = vmatmul.bf16.gmra.mxu0 %v4762
        %v4863 = vpop.f32.mrf.mxu0
        %v4864 = vadd.f32 0.0, %v4863
        %v4865 = vpop.f32.mrf.mxu0
        %v4866 = vadd.f32 0.0, %v4865
        %4867 = vmatmul.bf16.gmra.mxu0 %v4763
        %v4868 = vpop.f32.mrf.mxu0
        %v4869 = vadd.f32 0.0, %v4868
        %v4870 = vpop.f32.mrf.mxu0
        %v4871 = vadd.f32 0.0, %v4870
        %4872 = vmatmul.bf16.gmra.mxu0 %v4764
        %v4873 = vpop.f32.mrf.mxu0
        %v4874 = vadd.f32 0.0, %v4873
        %v4875 = vpop.f32.mrf.mxu0
        %v4876 = vadd.f32 0.0, %v4875
        %4877 = vmatmul.bf16.gmra.mxu0 %v4765
        %v4878 = vpop.f32.mrf.mxu0
        %v4879 = vadd.f32 0.0, %v4878
        %v4880 = vpop.f32.mrf.mxu0
        %v4881 = vadd.f32 0.0, %v4880
        %4882 = vmatmul.bf16.gmra.mxu0 %v4766
        %v4883 = vpop.f32.mrf.mxu0
        %v4884 = vadd.f32 0.0, %v4883
        %v4885 = vpop.f32.mrf.mxu0
        %v4886 = vadd.f32 0.0, %v4885
        %4887 = vmatmul.bf16.gmra.mxu0 %v4767
        %v4888 = vpop.f32.mrf.mxu0
        %v4889 = vadd.f32 0.0, %v4888
        %v4890 = vpop.f32.mrf.mxu0
        %v4891 = vadd.f32 0.0, %v4890
        %4892 = vmatmul.bf16.gmra.mxu0 %v4768
        %v4893 = vpop.f32.mrf.mxu0
        %v4894 = vadd.f32 0.0, %v4893
        %v4895 = vpop.f32.mrf.mxu0
        %v4896 = vadd.f32 0.0, %v4895
        %4897 = vmatmul.bf16.gmra.mxu0 %v4769
        %v4898 = vpop.f32.mrf.mxu0
        %v4899 = vadd.f32 0.0, %v4898
        %v4900 = vpop.f32.mrf.mxu0
        %v4901 = vadd.f32 0.0, %v4900
        %4902 = vmatmul.bf16.gmra.mxu0 %v4770
        %v4903 = vpop.f32.mrf.mxu0
        %v4904 = vadd.f32 0.0, %v4903
        %v4905 = vpop.f32.mrf.mxu0
        %v4906 = vadd.f32 0.0, %v4905
        %4907 = vmatmul.bf16.gmra.mxu0 %v4771
        %v4908 = vpop.f32.mrf.mxu0
        %v4909 = vadd.f32 0.0, %v4908
        %v4910 = vpop.f32.mrf.mxu0
        %v4911 = vadd.f32 0.0, %v4910
        %4912 = vmatmul.bf16.gmra.mxu0 %v4772
        %v4913 = vpop.f32.mrf.mxu0
        %v4914 = vadd.f32 0.0, %v4913
        %v4915 = vpop.f32.mrf.mxu0
        %v4916 = vadd.f32 0.0, %v4915
        %4917 = vmatmul.bf16.gmra.mxu0 %v4773
        %v4918 = vpop.f32.mrf.mxu0
        %v4919 = vadd.f32 0.0, %v4918
        %v4920 = vpop.f32.mrf.mxu0
        %v4921 = vadd.f32 0.0, %v4920
        %4922 = vmatmul.bf16.gmra.mxu0 %v4774
        %v4923 = vpop.f32.mrf.mxu0
        %v4924 = vadd.f32 0.0, %v4923
        %v4925 = vpop.f32.mrf.mxu0
        %v4926 = vadd.f32 0.0, %v4925
        %4927 = vdwg.mxu0
        %v4928 = vadd.f32 %v4614, %v4849
        %v4929 = vadd.f32 %v4615, %v4851
        %v4930 = vadd.f32 %v4616, %v4854
        %v4931 = vadd.f32 %v4617, %v4856
        %v4932 = vadd.f32 %v4618, %v4859
        %v4933 = vadd.f32 %v4619, %v4861
        %v4934 = vadd.f32 %v4620, %v4864
        %v4935 = vadd.f32 %v4621, %v4866
        %v4936 = vadd.f32 %v4622, %v4869
        %v4937 = vadd.f32 %v4623, %v4871
        %v4938 = vadd.f32 %v4624, %v4874
        %v4939 = vadd.f32 %v4625, %v4876
        %v4940 = vadd.f32 %v4626, %v4879
        %v4941 = vadd.f32 %v4627, %v4881
        %v4942 = vadd.f32 %v4628, %v4884
        %v4943 = vadd.f32 %v4629, %v4886
        %v4944 = vadd.f32 %v4630, %v4889
        %v4945 = vadd.f32 %v4631, %v4891
        %v4946 = vadd.f32 %v4632, %v4894
        %v4947 = vadd.f32 %v4633, %v4896
        %v4948 = vadd.f32 %v4634, %v4899
        %v4949 = vadd.f32 %v4635, %v4901
        %v4950 = vadd.f32 %v4636, %v4904
        %v4951 = vadd.f32 %v4637, %v4906
        %v4952 = vadd.f32 %v4638, %v4909
        %v4953 = vadd.f32 %v4639, %v4911
        %v4954 = vadd.f32 %v4640, %v4914
        %v4955 = vadd.f32 %v4641, %v4916
        %v4956 = vadd.f32 %v4642, %v4919
        %v4957 = vadd.f32 %v4643, %v4921
        %v4958 = vadd.f32 %v4644, %v4924
        %v4959 = vadd.f32 %v4645, %v4926
        %v4960 = vld [vmem:[#allocation2 + $0x10] sm:$0xf]
        %v4961 = vld [vmem:[#allocation2 + $0x14] sm:$0xf]
        %v4962 = vld [vmem:[#allocation2 + $0x18] sm:$0xf]
        %v4963 = vld [vmem:[#allocation2 + $0x1c] sm:$0xf]
        %v4964 = vld [vmem:[#allocation2 + $0x20] sm:$0xf]
        %v4965 = vld [vmem:[#allocation2 + $0x24] sm:$0xf]
        %v4966 = vld [vmem:[#allocation2 + $0x28] sm:$0xf]
        %v4967 = vld [vmem:[#allocation2 + $0x2c] sm:$0xf]
        %v4968 = vld [vmem:[#allocation2 + $0x30] sm:$0xf]
        %v4969 = vld [vmem:[#allocation2 + $0x34] sm:$0xf]
        %v4970 = vld [vmem:[#allocation2 + $0x38] sm:$0xf]
        %v4971 = vld [vmem:[#allocation2 + $0x3c] sm:$0xf]
        %v4972 = vld [vmem:[#allocation2 + $0x40] sm:$0xf]
        %v4973 = vld [vmem:[#allocation2 + $0x44] sm:$0xf]
        %v4974 = vld [vmem:[#allocation2 + $0x48] sm:$0xf]
        %v4975 = vld [vmem:[#allocation2 + $0x4c] sm:$0xf]
        %v4976 = vld [vmem:[#allocation2 + $0x50] sm:$0xf]
        %v4977 = vld [vmem:[#allocation2 + $0x54] sm:$0xf]
        %v4978 = vld [vmem:[#allocation2 + $0x58] sm:$0xf]
        %v4979 = vld [vmem:[#allocation2 + $0x5c] sm:$0xf]
        %v4980 = vld [vmem:[#allocation2 + $0x60] sm:$0xf]
        %v4981 = vld [vmem:[#allocation2 + $0x64] sm:$0xf]
        %v4982 = vld [vmem:[#allocation2 + $0x68] sm:$0xf]
        %v4983 = vld [vmem:[#allocation2 + $0x6c] sm:$0xf]
        %v4984 = vld [vmem:[#allocation2 + $0x70] sm:$0xf]
        %v4985 = vld [vmem:[#allocation2 + $0x74] sm:$0xf]
        %v4986 = vld [vmem:[#allocation2 + $0x78] sm:$0xf]
        %v4987 = vld [vmem:[#allocation2 + $0x7c] sm:$0xf]
        %v4988 = vld [vmem:[#allocation2 + $0x80] sm:$0xf]
        %v4989 = vld [vmem:[#allocation2 + $0x84] sm:$0xf]
        %v4990 = vld [vmem:[#allocation2 + $0x88] sm:$0xf]
        %v4991 = vld [vmem:[#allocation2 + $0x8c] sm:$0xf]
        %s4992 = scalar_lea.vmem %s477, 384 [#allocation10]
        %v4993 = vld [vmem:[%s4992] sm:$0xf]
        %v4994 = vld [vmem:[%s4992 + $0x4] sm:$0xf]
        %v4995 = vld [vmem:[%s4992 + $0x8] sm:$0xf]
        %v4996 = vld [vmem:[%s4992 + $0xc] sm:$0xf]
        %v4997 = vld [vmem:[%s4992 + $0x10] sm:$0xf]
        %v4998 = vld [vmem:[%s4992 + $0x14] sm:$0xf]
        %v4999 = vld [vmem:[%s4992 + $0x18] sm:$0xf]
        %v5000 = vld [vmem:[%s4992 + $0x1c] sm:$0xf]
        %v5001 = vld [vmem:[%s4992 + $0x20] sm:$0xf]
        %v5002 = vld [vmem:[%s4992 + $0x24] sm:$0xf]
        %v5003 = vld [vmem:[%s4992 + $0x28] sm:$0xf]
        %v5004 = vld [vmem:[%s4992 + $0x2c] sm:$0xf]
        %v5005 = vld [vmem:[%s4992 + $0x30] sm:$0xf]
        %v5006 = vld [vmem:[%s4992 + $0x34] sm:$0xf]
        %v5007 = vld [vmem:[%s4992 + $0x38] sm:$0xf]
        %v5008 = vld [vmem:[%s4992 + $0x3c] sm:$0xf]
        %v5041 = vunpack.c.l.b16 %v4960
        %v5042 = vunpack.c.l.b16 %v4961
        %v5043 = vunpack.c.l.b16 %v4962
        %v5044 = vunpack.c.l.b16 %v4963
        %v5045 = vunpack.c.l.b16 %v4964
        %v5046 = vunpack.c.l.b16 %v4965
        %v5047 = vunpack.c.l.b16 %v4966
        %v5048 = vunpack.c.l.b16 %v4967
        %v5049 = vunpack.c.l.b16 %v4968
        %v5050 = vunpack.c.l.b16 %v4969
        %v5051 = vunpack.c.l.b16 %v4970
        %v5052 = vunpack.c.l.b16 %v4971
        %v5053 = vunpack.c.l.b16 %v4972
        %v5054 = vunpack.c.l.b16 %v4973
        %v5055 = vunpack.c.l.b16 %v4974
        %v5056 = vunpack.c.l.b16 %v4975
        %v5057 = vunpack.c.l.b16 %v4976
        %v5058 = vunpack.c.l.b16 %v4977
        %v5059 = vunpack.c.l.b16 %v4978
        %v5060 = vunpack.c.l.b16 %v4979
        %v5061 = vunpack.c.l.b16 %v4980
        %v5062 = vunpack.c.l.b16 %v4981
        %v5063 = vunpack.c.l.b16 %v4982
        %v5064 = vunpack.c.l.b16 %v4983
        %v5065 = vunpack.c.l.b16 %v4984
        %v5066 = vunpack.c.l.b16 %v4985
        %v5067 = vunpack.c.l.b16 %v4986
        %v5068 = vunpack.c.l.b16 %v4987
        %v5069 = vunpack.c.l.b16 %v4988
        %v5070 = vunpack.c.l.b16 %v4989
        %v5071 = vunpack.c.l.b16 %v4990
        %v5072 = vunpack.c.l.b16 %v4991
        %v5073 = vpack.c.b16 %v5042, %v5041
        %v5074 = vpack.c.b16 %v5044, %v5043
        %v5075 = vpack.c.b16 %v5046, %v5045
        %v5076 = vpack.c.b16 %v5048, %v5047
        %v5077 = vpack.c.b16 %v5050, %v5049
        %v5078 = vpack.c.b16 %v5052, %v5051
        %v5079 = vpack.c.b16 %v5054, %v5053
        %v5080 = vpack.c.b16 %v5056, %v5055
        %v5081 = vpack.c.b16 %v5058, %v5057
        %v5082 = vpack.c.b16 %v5060, %v5059
        %v5083 = vpack.c.b16 %v5062, %v5061
        %v5084 = vpack.c.b16 %v5064, %v5063
        %v5085 = vpack.c.b16 %v5066, %v5065
        %v5086 = vpack.c.b16 %v5068, %v5067
        %v5087 = vpack.c.b16 %v5070, %v5069
        %v5088 = vpack.c.b16 %v5072, %v5071
        %v5121 = vunpack.c.l.b16 %v4993
        %v5122 = vunpack.c.l.b16 %v4994
        %v5123 = vunpack.c.l.b16 %v4995
        %v5124 = vunpack.c.l.b16 %v4996
        %v5125 = vunpack.c.l.b16 %v4997
        %v5126 = vunpack.c.l.b16 %v4998
        %v5127 = vunpack.c.l.b16 %v4999
        %v5128 = vunpack.c.l.b16 %v5000
        %v5129 = vunpack.c.l.b16 %v5001
        %v5130 = vunpack.c.l.b16 %v5002
        %v5131 = vunpack.c.l.b16 %v5003
        %v5132 = vunpack.c.l.b16 %v5004
        %v5133 = vunpack.c.l.b16 %v5005
        %v5134 = vunpack.c.l.b16 %v5006
        %v5135 = vunpack.c.l.b16 %v5007
        %v5136 = vunpack.c.l.b16 %v5008
        %v5137 = vpack.c.b16 %v5122, %v5121
        %v5138 = vpack.c.b16 %v5124, %v5123
        %v5139 = vpack.c.b16 %v5126, %v5125
        %v5140 = vpack.c.b16 %v5128, %v5127
        %v5141 = vpack.c.b16 %v5130, %v5129
        %v5142 = vpack.c.b16 %v5132, %v5131
        %v5143 = vpack.c.b16 %v5134, %v5133
        %v5144 = vpack.c.b16 %v5136, %v5135
        %5153 = vmatpush.bf16.msra.mxu0 %v5144
        %5154 = vmatpush.bf16.msra.mxu0 %v5143
        %5155 = vmatpush.bf16.msra.mxu0 %v5142
        %5156 = vmatpush.bf16.msra.mxu0 %v5141
        %5157 = vmatpush.bf16.msra.mxu0 %v5140
        %5158 = vmatpush.bf16.msra.mxu0 %v5139
        %5159 = vmatpush.bf16.msra.mxu0 %v5138
        %5160 = vmatpush.bf16.msra.mxu0 %v5137
        %5161 = vmatmul.bf16.gmra.mxu0 %v5073
        %v5162 = vpop.f32.mrf.mxu0
        %v5163 = vadd.f32 0.0, %v5162
        %v5164 = vpop.f32.mrf.mxu0
        %v5165 = vadd.f32 0.0, %v5164
        %5166 = vmatmul.bf16.gmra.mxu0 %v5074
        %v5167 = vpop.f32.mrf.mxu0
        %v5168 = vadd.f32 0.0, %v5167
        %v5169 = vpop.f32.mrf.mxu0
        %v5170 = vadd.f32 0.0, %v5169
        %5171 = vmatmul.bf16.gmra.mxu0 %v5075
        %v5172 = vpop.f32.mrf.mxu0
        %v5173 = vadd.f32 0.0, %v5172
        %v5174 = vpop.f32.mrf.mxu0
        %v5175 = vadd.f32 0.0, %v5174
        %5176 = vmatmul.bf16.gmra.mxu0 %v5076
        %v5177 = vpop.f32.mrf.mxu0
        %v5178 = vadd.f32 0.0, %v5177
        %v5179 = vpop.f32.mrf.mxu0
        %v5180 = vadd.f32 0.0, %v5179
        %5181 = vmatmul.bf16.gmra.mxu0 %v5077
        %v5182 = vpop.f32.mrf.mxu0
        %v5183 = vadd.f32 0.0, %v5182
        %v5184 = vpop.f32.mrf.mxu0
        %v5185 = vadd.f32 0.0, %v5184
        %5186 = vmatmul.bf16.gmra.mxu0 %v5078
        %v5187 = vpop.f32.mrf.mxu0
        %v5188 = vadd.f32 0.0, %v5187
        %v5189 = vpop.f32.mrf.mxu0
        %v5190 = vadd.f32 0.0, %v5189
        %5191 = vmatmul.bf16.gmra.mxu0 %v5079
        %v5192 = vpop.f32.mrf.mxu0
        %v5193 = vadd.f32 0.0, %v5192
        %v5194 = vpop.f32.mrf.mxu0
        %v5195 = vadd.f32 0.0, %v5194
        %5196 = vmatmul.bf16.gmra.mxu0 %v5080
        %v5197 = vpop.f32.mrf.mxu0
        %v5198 = vadd.f32 0.0, %v5197
        %v5199 = vpop.f32.mrf.mxu0
        %v5200 = vadd.f32 0.0, %v5199
        %5201 = vmatmul.bf16.gmra.mxu0 %v5081
        %v5202 = vpop.f32.mrf.mxu0
        %v5203 = vadd.f32 0.0, %v5202
        %v5204 = vpop.f32.mrf.mxu0
        %v5205 = vadd.f32 0.0, %v5204
        %5206 = vmatmul.bf16.gmra.mxu0 %v5082
        %v5207 = vpop.f32.mrf.mxu0
        %v5208 = vadd.f32 0.0, %v5207
        %v5209 = vpop.f32.mrf.mxu0
        %v5210 = vadd.f32 0.0, %v5209
        %5211 = vmatmul.bf16.gmra.mxu0 %v5083
        %v5212 = vpop.f32.mrf.mxu0
        %v5213 = vadd.f32 0.0, %v5212
        %v5214 = vpop.f32.mrf.mxu0
        %v5215 = vadd.f32 0.0, %v5214
        %5216 = vmatmul.bf16.gmra.mxu0 %v5084
        %v5217 = vpop.f32.mrf.mxu0
        %v5218 = vadd.f32 0.0, %v5217
        %v5219 = vpop.f32.mrf.mxu0
        %v5220 = vadd.f32 0.0, %v5219
        %5221 = vmatmul.bf16.gmra.mxu0 %v5085
        %v5222 = vpop.f32.mrf.mxu0
        %v5223 = vadd.f32 0.0, %v5222
        %v5224 = vpop.f32.mrf.mxu0
        %v5225 = vadd.f32 0.0, %v5224
        %5226 = vmatmul.bf16.gmra.mxu0 %v5086
        %v5227 = vpop.f32.mrf.mxu0
        %v5228 = vadd.f32 0.0, %v5227
        %v5229 = vpop.f32.mrf.mxu0
        %v5230 = vadd.f32 0.0, %v5229
        %5231 = vmatmul.bf16.gmra.mxu0 %v5087
        %v5232 = vpop.f32.mrf.mxu0
        %v5233 = vadd.f32 0.0, %v5232
        %v5234 = vpop.f32.mrf.mxu0
        %v5235 = vadd.f32 0.0, %v5234
        %5236 = vmatmul.bf16.gmra.mxu0 %v5088
        %v5237 = vpop.f32.mrf.mxu0
        %v5238 = vadd.f32 0.0, %v5237
        %v5239 = vpop.f32.mrf.mxu0
        %v5240 = vadd.f32 0.0, %v5239
        %5241 = vdwg.mxu0
        %v5242 = vadd.f32 %v4928, %v5163
        %v5243 = vadd.f32 %v4929, %v5165
        %v5244 = vadd.f32 %v4930, %v5168
        %v5245 = vadd.f32 %v4931, %v5170
        %v5246 = vadd.f32 %v4932, %v5173
        %v5247 = vadd.f32 %v4933, %v5175
        %v5248 = vadd.f32 %v4934, %v5178
        %v5249 = vadd.f32 %v4935, %v5180
        %v5250 = vadd.f32 %v4936, %v5183
        %v5251 = vadd.f32 %v4937, %v5185
        %v5252 = vadd.f32 %v4938, %v5188
        %v5253 = vadd.f32 %v4939, %v5190
        %v5254 = vadd.f32 %v4940, %v5193
        %v5255 = vadd.f32 %v4941, %v5195
        %v5256 = vadd.f32 %v4942, %v5198
        %v5257 = vadd.f32 %v4943, %v5200
        %v5258 = vadd.f32 %v4944, %v5203
        %v5259 = vadd.f32 %v4945, %v5205
        %v5260 = vadd.f32 %v4946, %v5208
        %v5261 = vadd.f32 %v4947, %v5210
        %v5262 = vadd.f32 %v4948, %v5213
        %v5263 = vadd.f32 %v4949, %v5215
        %v5264 = vadd.f32 %v4950, %v5218
        %v5265 = vadd.f32 %v4951, %v5220
        %v5266 = vadd.f32 %v4952, %v5223
        %v5267 = vadd.f32 %v4953, %v5225
        %v5268 = vadd.f32 %v4954, %v5228
        %v5269 = vadd.f32 %v4955, %v5230
        %v5270 = vadd.f32 %v4956, %v5233
        %v5271 = vadd.f32 %v4957, %v5235
        %v5272 = vadd.f32 %v4958, %v5238
        %v5273 = vadd.f32 %v4959, %v5240
        %v5274 = vld [vmem:[%s3187 + $0x10] sm:$0xf]
        %v5275 = vld [vmem:[%s3187 + $0x14] sm:$0xf]
        %v5276 = vld [vmem:[%s3187 + $0x18] sm:$0xf]
        %v5277 = vld [vmem:[%s3187 + $0x1c] sm:$0xf]
        %v5278 = vld [vmem:[%s3187 + $0x20] sm:$0xf]
        %v5279 = vld [vmem:[%s3187 + $0x24] sm:$0xf]
        %v5280 = vld [vmem:[%s3187 + $0x28] sm:$0xf]
        %v5281 = vld [vmem:[%s3187 + $0x2c] sm:$0xf]
        %v5282 = vld [vmem:[%s3187 + $0x30] sm:$0xf]
        %v5283 = vld [vmem:[%s3187 + $0x34] sm:$0xf]
        %v5284 = vld [vmem:[%s3187 + $0x38] sm:$0xf]
        %v5285 = vld [vmem:[%s3187 + $0x3c] sm:$0xf]
        %v5286 = vld [vmem:[%s3187 + $0x40] sm:$0xf]
        %v5287 = vld [vmem:[%s3187 + $0x44] sm:$0xf]
        %v5288 = vld [vmem:[%s3187 + $0x48] sm:$0xf]
        %v5289 = vld [vmem:[%s3187 + $0x4c] sm:$0xf]
        %v5290 = vld [vmem:[%s3187 + $0x50] sm:$0xf]
        %v5291 = vld [vmem:[%s3187 + $0x54] sm:$0xf]
        %v5292 = vld [vmem:[%s3187 + $0x58] sm:$0xf]
        %v5293 = vld [vmem:[%s3187 + $0x5c] sm:$0xf]
        %v5294 = vld [vmem:[%s3187 + $0x60] sm:$0xf]
        %v5295 = vld [vmem:[%s3187 + $0x64] sm:$0xf]
        %v5296 = vld [vmem:[%s3187 + $0x68] sm:$0xf]
        %v5297 = vld [vmem:[%s3187 + $0x6c] sm:$0xf]
        %v5298 = vld [vmem:[%s3187 + $0x70] sm:$0xf]
        %v5299 = vld [vmem:[%s3187 + $0x74] sm:$0xf]
        %v5300 = vld [vmem:[%s3187 + $0x78] sm:$0xf]
        %v5301 = vld [vmem:[%s3187 + $0x7c] sm:$0xf]
        %v5302 = vld [vmem:[%s3187 + $0x80] sm:$0xf]
        %v5303 = vld [vmem:[%s3187 + $0x84] sm:$0xf]
        %v5304 = vld [vmem:[%s3187 + $0x88] sm:$0xf]
        %v5305 = vld [vmem:[%s3187 + $0x8c] sm:$0xf]
        %s5306 = scalar_lea.vmem %s477, 448 [#allocation10]
        %v5307 = vld [vmem:[%s5306] sm:$0xf]
        %v5308 = vld [vmem:[%s5306 + $0x4] sm:$0xf]
        %v5309 = vld [vmem:[%s5306 + $0x8] sm:$0xf]
        %v5310 = vld [vmem:[%s5306 + $0xc] sm:$0xf]
        %v5311 = vld [vmem:[%s5306 + $0x10] sm:$0xf]
        %v5312 = vld [vmem:[%s5306 + $0x14] sm:$0xf]
        %v5313 = vld [vmem:[%s5306 + $0x18] sm:$0xf]
        %v5314 = vld [vmem:[%s5306 + $0x1c] sm:$0xf]
        %v5315 = vld [vmem:[%s5306 + $0x20] sm:$0xf]
        %v5316 = vld [vmem:[%s5306 + $0x24] sm:$0xf]
        %v5317 = vld [vmem:[%s5306 + $0x28] sm:$0xf]
        %v5318 = vld [vmem:[%s5306 + $0x2c] sm:$0xf]
        %v5319 = vld [vmem:[%s5306 + $0x30] sm:$0xf]
        %v5320 = vld [vmem:[%s5306 + $0x34] sm:$0xf]
        %v5321 = vld [vmem:[%s5306 + $0x38] sm:$0xf]
        %v5322 = vld [vmem:[%s5306 + $0x3c] sm:$0xf]
        %v5355 = vunpack.c.l.b16 %v5274
        %v5356 = vunpack.c.l.b16 %v5275
        %v5357 = vunpack.c.l.b16 %v5276
        %v5358 = vunpack.c.l.b16 %v5277
        %v5359 = vunpack.c.l.b16 %v5278
        %v5360 = vunpack.c.l.b16 %v5279
        %v5361 = vunpack.c.l.b16 %v5280
        %v5362 = vunpack.c.l.b16 %v5281
        %v5363 = vunpack.c.l.b16 %v5282
        %v5364 = vunpack.c.l.b16 %v5283
        %v5365 = vunpack.c.l.b16 %v5284
        %v5366 = vunpack.c.l.b16 %v5285
        %v5367 = vunpack.c.l.b16 %v5286
        %v5368 = vunpack.c.l.b16 %v5287
        %v5369 = vunpack.c.l.b16 %v5288
        %v5370 = vunpack.c.l.b16 %v5289
        %v5371 = vunpack.c.l.b16 %v5290
        %v5372 = vunpack.c.l.b16 %v5291
        %v5373 = vunpack.c.l.b16 %v5292
        %v5374 = vunpack.c.l.b16 %v5293
        %v5375 = vunpack.c.l.b16 %v5294
        %v5376 = vunpack.c.l.b16 %v5295
        %v5377 = vunpack.c.l.b16 %v5296
        %v5378 = vunpack.c.l.b16 %v5297
        %v5379 = vunpack.c.l.b16 %v5298
        %v5380 = vunpack.c.l.b16 %v5299
        %v5381 = vunpack.c.l.b16 %v5300
        %v5382 = vunpack.c.l.b16 %v5301
        %v5383 = vunpack.c.l.b16 %v5302
        %v5384 = vunpack.c.l.b16 %v5303
        %v5385 = vunpack.c.l.b16 %v5304
        %v5386 = vunpack.c.l.b16 %v5305
        %v5387 = vpack.c.b16 %v5356, %v5355
        %v5388 = vpack.c.b16 %v5358, %v5357
        %v5389 = vpack.c.b16 %v5360, %v5359
        %v5390 = vpack.c.b16 %v5362, %v5361
        %v5391 = vpack.c.b16 %v5364, %v5363
        %v5392 = vpack.c.b16 %v5366, %v5365
        %v5393 = vpack.c.b16 %v5368, %v5367
        %v5394 = vpack.c.b16 %v5370, %v5369
        %v5395 = vpack.c.b16 %v5372, %v5371
        %v5396 = vpack.c.b16 %v5374, %v5373
        %v5397 = vpack.c.b16 %v5376, %v5375
        %v5398 = vpack.c.b16 %v5378, %v5377
        %v5399 = vpack.c.b16 %v5380, %v5379
        %v5400 = vpack.c.b16 %v5382, %v5381
        %v5401 = vpack.c.b16 %v5384, %v5383
        %v5402 = vpack.c.b16 %v5386, %v5385
        %v5435 = vunpack.c.l.b16 %v5307
        %v5436 = vunpack.c.l.b16 %v5308
        %v5437 = vunpack.c.l.b16 %v5309
        %v5438 = vunpack.c.l.b16 %v5310
        %v5439 = vunpack.c.l.b16 %v5311
        %v5440 = vunpack.c.l.b16 %v5312
        %v5441 = vunpack.c.l.b16 %v5313
        %v5442 = vunpack.c.l.b16 %v5314
        %v5443 = vunpack.c.l.b16 %v5315
        %v5444 = vunpack.c.l.b16 %v5316
        %v5445 = vunpack.c.l.b16 %v5317
        %v5446 = vunpack.c.l.b16 %v5318
        %v5447 = vunpack.c.l.b16 %v5319
        %v5448 = vunpack.c.l.b16 %v5320
        %v5449 = vunpack.c.l.b16 %v5321
        %v5450 = vunpack.c.l.b16 %v5322
        %v5451 = vpack.c.b16 %v5436, %v5435
        %v5452 = vpack.c.b16 %v5438, %v5437
        %v5453 = vpack.c.b16 %v5440, %v5439
        %v5454 = vpack.c.b16 %v5442, %v5441
        %v5455 = vpack.c.b16 %v5444, %v5443
        %v5456 = vpack.c.b16 %v5446, %v5445
        %v5457 = vpack.c.b16 %v5448, %v5447
        %v5458 = vpack.c.b16 %v5450, %v5449
        %5467 = vmatpush.bf16.msra.mxu0 %v5458
        %5468 = vmatpush.bf16.msra.mxu0 %v5457
        %5469 = vmatpush.bf16.msra.mxu0 %v5456
        %5470 = vmatpush.bf16.msra.mxu0 %v5455
        %5471 = vmatpush.bf16.msra.mxu0 %v5454
        %5472 = vmatpush.bf16.msra.mxu0 %v5453
        %5473 = vmatpush.bf16.msra.mxu0 %v5452
        %5474 = vmatpush.bf16.msra.mxu0 %v5451
        %5475 = vmatmul.bf16.gmra.mxu0 %v5387
        %v5476 = vpop.f32.mrf.mxu0
        %v5477 = vadd.f32 0.0, %v5476
        %v5478 = vpop.f32.mrf.mxu0
        %v5479 = vadd.f32 0.0, %v5478
        %5480 = vmatmul.bf16.gmra.mxu0 %v5388
        %v5481 = vpop.f32.mrf.mxu0
        %v5482 = vadd.f32 0.0, %v5481
        %v5483 = vpop.f32.mrf.mxu0
        %v5484 = vadd.f32 0.0, %v5483
        %5485 = vmatmul.bf16.gmra.mxu0 %v5389
        %v5486 = vpop.f32.mrf.mxu0
        %v5487 = vadd.f32 0.0, %v5486
        %v5488 = vpop.f32.mrf.mxu0
        %v5489 = vadd.f32 0.0, %v5488
        %5490 = vmatmul.bf16.gmra.mxu0 %v5390
        %v5491 = vpop.f32.mrf.mxu0
        %v5492 = vadd.f32 0.0, %v5491
        %v5493 = vpop.f32.mrf.mxu0
        %v5494 = vadd.f32 0.0, %v5493
        %5495 = vmatmul.bf16.gmra.mxu0 %v5391
        %v5496 = vpop.f32.mrf.mxu0
        %v5497 = vadd.f32 0.0, %v5496
        %v5498 = vpop.f32.mrf.mxu0
        %v5499 = vadd.f32 0.0, %v5498
        %5500 = vmatmul.bf16.gmra.mxu0 %v5392
        %v5501 = vpop.f32.mrf.mxu0
        %v5502 = vadd.f32 0.0, %v5501
        %v5503 = vpop.f32.mrf.mxu0
        %v5504 = vadd.f32 0.0, %v5503
        %5505 = vmatmul.bf16.gmra.mxu0 %v5393
        %v5506 = vpop.f32.mrf.mxu0
        %v5507 = vadd.f32 0.0, %v5506
        %v5508 = vpop.f32.mrf.mxu0
        %v5509 = vadd.f32 0.0, %v5508
        %5510 = vmatmul.bf16.gmra.mxu0 %v5394
        %v5511 = vpop.f32.mrf.mxu0
        %v5512 = vadd.f32 0.0, %v5511
        %v5513 = vpop.f32.mrf.mxu0
        %v5514 = vadd.f32 0.0, %v5513
        %5515 = vmatmul.bf16.gmra.mxu0 %v5395
        %v5516 = vpop.f32.mrf.mxu0
        %v5517 = vadd.f32 0.0, %v5516
        %v5518 = vpop.f32.mrf.mxu0
        %v5519 = vadd.f32 0.0, %v5518
        %5520 = vmatmul.bf16.gmra.mxu0 %v5396
        %v5521 = vpop.f32.mrf.mxu0
        %v5522 = vadd.f32 0.0, %v5521
        %v5523 = vpop.f32.mrf.mxu0
        %v5524 = vadd.f32 0.0, %v5523
        %5525 = vmatmul.bf16.gmra.mxu0 %v5397
        %v5526 = vpop.f32.mrf.mxu0
        %v5527 = vadd.f32 0.0, %v5526
        %v5528 = vpop.f32.mrf.mxu0
        %v5529 = vadd.f32 0.0, %v5528
        %5530 = vmatmul.bf16.gmra.mxu0 %v5398
        %v5531 = vpop.f32.mrf.mxu0
        %v5532 = vadd.f32 0.0, %v5531
        %v5533 = vpop.f32.mrf.mxu0
        %v5534 = vadd.f32 0.0, %v5533
        %5535 = vmatmul.bf16.gmra.mxu0 %v5399
        %v5536 = vpop.f32.mrf.mxu0
        %v5537 = vadd.f32 0.0, %v5536
        %v5538 = vpop.f32.mrf.mxu0
        %v5539 = vadd.f32 0.0, %v5538
        %5540 = vmatmul.bf16.gmra.mxu0 %v5400
        %v5541 = vpop.f32.mrf.mxu0
        %v5542 = vadd.f32 0.0, %v5541
        %v5543 = vpop.f32.mrf.mxu0
        %v5544 = vadd.f32 0.0, %v5543
        %5545 = vmatmul.bf16.gmra.mxu0 %v5401
        %v5546 = vpop.f32.mrf.mxu0
        %v5547 = vadd.f32 0.0, %v5546
        %v5548 = vpop.f32.mrf.mxu0
        %v5549 = vadd.f32 0.0, %v5548
        %5550 = vmatmul.bf16.gmra.mxu0 %v5402
        %v5551 = vpop.f32.mrf.mxu0
        %v5552 = vadd.f32 0.0, %v5551
        %v5553 = vpop.f32.mrf.mxu0
        %v5554 = vadd.f32 0.0, %v5553
        %5555 = vdwg.mxu0
        %v5556 = vadd.f32 %v5242, %v5477
        %v5557 = vadd.f32 %v5243, %v5479
        %v5558 = vadd.f32 %v5244, %v5482
        %v5559 = vadd.f32 %v5245, %v5484
        %v5560 = vadd.f32 %v5246, %v5487
        %v5561 = vadd.f32 %v5247, %v5489
        %v5562 = vadd.f32 %v5248, %v5492
        %v5563 = vadd.f32 %v5249, %v5494
        %v5564 = vadd.f32 %v5250, %v5497
        %v5565 = vadd.f32 %v5251, %v5499
        %v5566 = vadd.f32 %v5252, %v5502
        %v5567 = vadd.f32 %v5253, %v5504
        %v5568 = vadd.f32 %v5254, %v5507
        %v5569 = vadd.f32 %v5255, %v5509
        %v5570 = vadd.f32 %v5256, %v5512
        %v5571 = vadd.f32 %v5257, %v5514
        %v5572 = vadd.f32 %v5258, %v5517
        %v5573 = vadd.f32 %v5259, %v5519
        %v5574 = vadd.f32 %v5260, %v5522
        %v5575 = vadd.f32 %v5261, %v5524
        %v5576 = vadd.f32 %v5262, %v5527
        %v5577 = vadd.f32 %v5263, %v5529
        %v5578 = vadd.f32 %v5264, %v5532
        %v5579 = vadd.f32 %v5265, %v5534
        %v5580 = vadd.f32 %v5266, %v5537
        %v5581 = vadd.f32 %v5267, %v5539
        %v5582 = vadd.f32 %v5268, %v5542
        %v5583 = vadd.f32 %v5269, %v5544
        %v5584 = vadd.f32 %v5270, %v5547
        %v5585 = vadd.f32 %v5271, %v5549
        %v5586 = vadd.f32 %v5272, %v5552
        %v5587 = vadd.f32 %v5273, %v5554
        %v5588 = vld [vmem:[%s3703 + $0x10] sm:$0xf]
        %v5589 = vld [vmem:[%s3703 + $0x14] sm:$0xf]
        %v5590 = vld [vmem:[%s3703 + $0x18] sm:$0xf]
        %v5591 = vld [vmem:[%s3703 + $0x1c] sm:$0xf]
        %v5592 = vld [vmem:[%s3703 + $0x20] sm:$0xf]
        %v5593 = vld [vmem:[%s3703 + $0x24] sm:$0xf]
        %v5594 = vld [vmem:[%s3703 + $0x28] sm:$0xf]
        %v5595 = vld [vmem:[%s3703 + $0x2c] sm:$0xf]
        %v5596 = vld [vmem:[%s3703 + $0x30] sm:$0xf]
        %v5597 = vld [vmem:[%s3703 + $0x34] sm:$0xf]
        %v5598 = vld [vmem:[%s3703 + $0x38] sm:$0xf]
        %v5599 = vld [vmem:[%s3703 + $0x3c] sm:$0xf]
        %v5600 = vld [vmem:[%s3703 + $0x40] sm:$0xf]
        %v5601 = vld [vmem:[%s3703 + $0x44] sm:$0xf]
        %v5602 = vld [vmem:[%s3703 + $0x48] sm:$0xf]
        %v5603 = vld [vmem:[%s3703 + $0x4c] sm:$0xf]
        %v5604 = vld [vmem:[%s3703 + $0x50] sm:$0xf]
        %v5605 = vld [vmem:[%s3703 + $0x54] sm:$0xf]
        %v5606 = vld [vmem:[%s3703 + $0x58] sm:$0xf]
        %v5607 = vld [vmem:[%s3703 + $0x5c] sm:$0xf]
        %v5608 = vld [vmem:[%s3703 + $0x60] sm:$0xf]
        %v5609 = vld [vmem:[%s3703 + $0x64] sm:$0xf]
        %v5610 = vld [vmem:[%s3703 + $0x68] sm:$0xf]
        %v5611 = vld [vmem:[%s3703 + $0x6c] sm:$0xf]
        %v5612 = vld [vmem:[%s3703 + $0x70] sm:$0xf]
        %v5613 = vld [vmem:[%s3703 + $0x74] sm:$0xf]
        %v5614 = vld [vmem:[%s3703 + $0x78] sm:$0xf]
        %v5615 = vld [vmem:[%s3703 + $0x7c] sm:$0xf]
        %v5616 = vld [vmem:[%s3703 + $0x80] sm:$0xf]
        %v5617 = vld [vmem:[%s3703 + $0x84] sm:$0xf]
        %v5618 = vld [vmem:[%s3703 + $0x88] sm:$0xf]
        %v5619 = vld [vmem:[%s3703 + $0x8c] sm:$0xf]
        %s5620 = scalar_lea.vmem %s477, 512 [#allocation10]
        %v5621 = vld [vmem:[%s5620] sm:$0xf]
        %v5622 = vld [vmem:[%s5620 + $0x4] sm:$0xf]
        %v5623 = vld [vmem:[%s5620 + $0x8] sm:$0xf]
        %v5624 = vld [vmem:[%s5620 + $0xc] sm:$0xf]
        %v5625 = vld [vmem:[%s5620 + $0x10] sm:$0xf]
        %v5626 = vld [vmem:[%s5620 + $0x14] sm:$0xf]
        %v5627 = vld [vmem:[%s5620 + $0x18] sm:$0xf]
        %v5628 = vld [vmem:[%s5620 + $0x1c] sm:$0xf]
        %v5629 = vld [vmem:[%s5620 + $0x20] sm:$0xf]
        %v5630 = vld [vmem:[%s5620 + $0x24] sm:$0xf]
        %v5631 = vld [vmem:[%s5620 + $0x28] sm:$0xf]
        %v5632 = vld [vmem:[%s5620 + $0x2c] sm:$0xf]
        %v5633 = vld [vmem:[%s5620 + $0x30] sm:$0xf]
        %v5634 = vld [vmem:[%s5620 + $0x34] sm:$0xf]
        %v5635 = vld [vmem:[%s5620 + $0x38] sm:$0xf]
        %v5636 = vld [vmem:[%s5620 + $0x3c] sm:$0xf]
        %v5669 = vunpack.c.l.b16 %v5588
        %v5670 = vunpack.c.l.b16 %v5589
        %v5671 = vunpack.c.l.b16 %v5590
        %v5672 = vunpack.c.l.b16 %v5591
        %v5673 = vunpack.c.l.b16 %v5592
        %v5674 = vunpack.c.l.b16 %v5593
        %v5675 = vunpack.c.l.b16 %v5594
        %v5676 = vunpack.c.l.b16 %v5595
        %v5677 = vunpack.c.l.b16 %v5596
        %v5678 = vunpack.c.l.b16 %v5597
        %v5679 = vunpack.c.l.b16 %v5598
        %v5680 = vunpack.c.l.b16 %v5599
        %v5681 = vunpack.c.l.b16 %v5600
        %v5682 = vunpack.c.l.b16 %v5601
        %v5683 = vunpack.c.l.b16 %v5602
        %v5684 = vunpack.c.l.b16 %v5603
        %v5685 = vunpack.c.l.b16 %v5604
        %v5686 = vunpack.c.l.b16 %v5605
        %v5687 = vunpack.c.l.b16 %v5606
        %v5688 = vunpack.c.l.b16 %v5607
        %v5689 = vunpack.c.l.b16 %v5608
        %v5690 = vunpack.c.l.b16 %v5609
        %v5691 = vunpack.c.l.b16 %v5610
        %v5692 = vunpack.c.l.b16 %v5611
        %v5693 = vunpack.c.l.b16 %v5612
        %v5694 = vunpack.c.l.b16 %v5613
        %v5695 = vunpack.c.l.b16 %v5614
        %v5696 = vunpack.c.l.b16 %v5615
        %v5697 = vunpack.c.l.b16 %v5616
        %v5698 = vunpack.c.l.b16 %v5617
        %v5699 = vunpack.c.l.b16 %v5618
        %v5700 = vunpack.c.l.b16 %v5619
        %v5701 = vpack.c.b16 %v5670, %v5669
        %v5702 = vpack.c.b16 %v5672, %v5671
        %v5703 = vpack.c.b16 %v5674, %v5673
        %v5704 = vpack.c.b16 %v5676, %v5675
        %v5705 = vpack.c.b16 %v5678, %v5677
        %v5706 = vpack.c.b16 %v5680, %v5679
        %v5707 = vpack.c.b16 %v5682, %v5681
        %v5708 = vpack.c.b16 %v5684, %v5683
        %v5709 = vpack.c.b16 %v5686, %v5685
        %v5710 = vpack.c.b16 %v5688, %v5687
        %v5711 = vpack.c.b16 %v5690, %v5689
        %v5712 = vpack.c.b16 %v5692, %v5691
        %v5713 = vpack.c.b16 %v5694, %v5693
        %v5714 = vpack.c.b16 %v5696, %v5695
        %v5715 = vpack.c.b16 %v5698, %v5697
        %v5716 = vpack.c.b16 %v5700, %v5699
        %v5749 = vunpack.c.l.b16 %v5621
        %v5750 = vunpack.c.l.b16 %v5622
        %v5751 = vunpack.c.l.b16 %v5623
        %v5752 = vunpack.c.l.b16 %v5624
        %v5753 = vunpack.c.l.b16 %v5625
        %v5754 = vunpack.c.l.b16 %v5626
        %v5755 = vunpack.c.l.b16 %v5627
        %v5756 = vunpack.c.l.b16 %v5628
        %v5757 = vunpack.c.l.b16 %v5629
        %v5758 = vunpack.c.l.b16 %v5630
        %v5759 = vunpack.c.l.b16 %v5631
        %v5760 = vunpack.c.l.b16 %v5632
        %v5761 = vunpack.c.l.b16 %v5633
        %v5762 = vunpack.c.l.b16 %v5634
        %v5763 = vunpack.c.l.b16 %v5635
        %v5764 = vunpack.c.l.b16 %v5636
        %v5765 = vpack.c.b16 %v5750, %v5749
        %v5766 = vpack.c.b16 %v5752, %v5751
        %v5767 = vpack.c.b16 %v5754, %v5753
        %v5768 = vpack.c.b16 %v5756, %v5755
        %v5769 = vpack.c.b16 %v5758, %v5757
        %v5770 = vpack.c.b16 %v5760, %v5759
        %v5771 = vpack.c.b16 %v5762, %v5761
        %v5772 = vpack.c.b16 %v5764, %v5763
        %5781 = vmatpush.bf16.msra.mxu0 %v5772
        %5782 = vmatpush.bf16.msra.mxu0 %v5771
        %5783 = vmatpush.bf16.msra.mxu0 %v5770
        %5784 = vmatpush.bf16.msra.mxu0 %v5769
        %5785 = vmatpush.bf16.msra.mxu0 %v5768
        %5786 = vmatpush.bf16.msra.mxu0 %v5767
        %5787 = vmatpush.bf16.msra.mxu0 %v5766
        %5788 = vmatpush.bf16.msra.mxu0 %v5765
        %5789 = vmatmul.bf16.gmra.mxu0 %v5701
        %v5790 = vpop.f32.mrf.mxu0
        %v5791 = vadd.f32 0.0, %v5790
        %v5792 = vpop.f32.mrf.mxu0
        %v5793 = vadd.f32 0.0, %v5792
        %5794 = vmatmul.bf16.gmra.mxu0 %v5702
        %v5795 = vpop.f32.mrf.mxu0
        %v5796 = vadd.f32 0.0, %v5795
        %v5797 = vpop.f32.mrf.mxu0
        %v5798 = vadd.f32 0.0, %v5797
        %5799 = vmatmul.bf16.gmra.mxu0 %v5703
        %v5800 = vpop.f32.mrf.mxu0
        %v5801 = vadd.f32 0.0, %v5800
        %v5802 = vpop.f32.mrf.mxu0
        %v5803 = vadd.f32 0.0, %v5802
        %5804 = vmatmul.bf16.gmra.mxu0 %v5704
        %v5805 = vpop.f32.mrf.mxu0
        %v5806 = vadd.f32 0.0, %v5805
        %v5807 = vpop.f32.mrf.mxu0
        %v5808 = vadd.f32 0.0, %v5807
        %5809 = vmatmul.bf16.gmra.mxu0 %v5705
        %v5810 = vpop.f32.mrf.mxu0
        %v5811 = vadd.f32 0.0, %v5810
        %v5812 = vpop.f32.mrf.mxu0
        %v5813 = vadd.f32 0.0, %v5812
        %5814 = vmatmul.bf16.gmra.mxu0 %v5706
        %v5815 = vpop.f32.mrf.mxu0
        %v5816 = vadd.f32 0.0, %v5815
        %v5817 = vpop.f32.mrf.mxu0
        %v5818 = vadd.f32 0.0, %v5817
        %5819 = vmatmul.bf16.gmra.mxu0 %v5707
        %v5820 = vpop.f32.mrf.mxu0
        %v5821 = vadd.f32 0.0, %v5820
        %v5822 = vpop.f32.mrf.mxu0
        %v5823 = vadd.f32 0.0, %v5822
        %5824 = vmatmul.bf16.gmra.mxu0 %v5708
        %v5825 = vpop.f32.mrf.mxu0
        %v5826 = vadd.f32 0.0, %v5825
        %v5827 = vpop.f32.mrf.mxu0
        %v5828 = vadd.f32 0.0, %v5827
        %5829 = vmatmul.bf16.gmra.mxu0 %v5709
        %v5830 = vpop.f32.mrf.mxu0
        %v5831 = vadd.f32 0.0, %v5830
        %v5832 = vpop.f32.mrf.mxu0
        %v5833 = vadd.f32 0.0, %v5832
        %5834 = vmatmul.bf16.gmra.mxu0 %v5710
        %v5835 = vpop.f32.mrf.mxu0
        %v5836 = vadd.f32 0.0, %v5835
        %v5837 = vpop.f32.mrf.mxu0
        %v5838 = vadd.f32 0.0, %v5837
        %5839 = vmatmul.bf16.gmra.mxu0 %v5711
        %v5840 = vpop.f32.mrf.mxu0
        %v5841 = vadd.f32 0.0, %v5840
        %v5842 = vpop.f32.mrf.mxu0
        %v5843 = vadd.f32 0.0, %v5842
        %5844 = vmatmul.bf16.gmra.mxu0 %v5712
        %v5845 = vpop.f32.mrf.mxu0
        %v5846 = vadd.f32 0.0, %v5845
        %v5847 = vpop.f32.mrf.mxu0
        %v5848 = vadd.f32 0.0, %v5847
        %5849 = vmatmul.bf16.gmra.mxu0 %v5713
        %v5850 = vpop.f32.mrf.mxu0
        %v5851 = vadd.f32 0.0, %v5850
        %v5852 = vpop.f32.mrf.mxu0
        %v5853 = vadd.f32 0.0, %v5852
        %5854 = vmatmul.bf16.gmra.mxu0 %v5714
        %v5855 = vpop.f32.mrf.mxu0
        %v5856 = vadd.f32 0.0, %v5855
        %v5857 = vpop.f32.mrf.mxu0
        %v5858 = vadd.f32 0.0, %v5857
        %5859 = vmatmul.bf16.gmra.mxu0 %v5715
        %v5860 = vpop.f32.mrf.mxu0
        %v5861 = vadd.f32 0.0, %v5860
        %v5862 = vpop.f32.mrf.mxu0
        %v5863 = vadd.f32 0.0, %v5862
        %5864 = vmatmul.bf16.gmra.mxu0 %v5716
        %v5865 = vpop.f32.mrf.mxu0
        %v5866 = vadd.f32 0.0, %v5865
        %v5867 = vpop.f32.mrf.mxu0
        %v5868 = vadd.f32 0.0, %v5867
        %5869 = vdwg.mxu0
        %v5870 = vadd.f32 %v5556, %v5791
        %v5871 = vadd.f32 %v5557, %v5793
        %v5872 = vadd.f32 %v5558, %v5796
        %v5873 = vadd.f32 %v5559, %v5798
        %v5874 = vadd.f32 %v5560, %v5801
        %v5875 = vadd.f32 %v5561, %v5803
        %v5876 = vadd.f32 %v5562, %v5806
        %v5877 = vadd.f32 %v5563, %v5808
        %v5878 = vadd.f32 %v5564, %v5811
        %v5879 = vadd.f32 %v5565, %v5813
        %v5880 = vadd.f32 %v5566, %v5816
        %v5881 = vadd.f32 %v5567, %v5818
        %v5882 = vadd.f32 %v5568, %v5821
        %v5883 = vadd.f32 %v5569, %v5823
        %v5884 = vadd.f32 %v5570, %v5826
        %v5885 = vadd.f32 %v5571, %v5828
        %v5886 = vadd.f32 %v5572, %v5831
        %v5887 = vadd.f32 %v5573, %v5833
        %v5888 = vadd.f32 %v5574, %v5836
        %v5889 = vadd.f32 %v5575, %v5838
        %v5890 = vadd.f32 %v5576, %v5841
        %v5891 = vadd.f32 %v5577, %v5843
        %v5892 = vadd.f32 %v5578, %v5846
        %v5893 = vadd.f32 %v5579, %v5848
        %v5894 = vadd.f32 %v5580, %v5851
        %v5895 = vadd.f32 %v5581, %v5853
        %v5896 = vadd.f32 %v5582, %v5856
        %v5897 = vadd.f32 %v5583, %v5858
        %v5898 = vadd.f32 %v5584, %v5861
        %v5899 = vadd.f32 %v5585, %v5863
        %v5900 = vadd.f32 %v5586, %v5866
        %v5901 = vadd.f32 %v5587, %v5868
        %v5902 = vld [vmem:[%s538] sm:$0x1]
        %v5904 = vperm.slane %v5902, 0
        %v5906 = vadd.f32 %v5870, %v5904
        %v5907 = vadd.f32 %v5871, %v5904
        %v5908 = vadd.f32 %v5872, %v5904
        %v5909 = vadd.f32 %v5873, %v5904
        %v5910 = vadd.f32 %v5874, %v5904
        %v5911 = vadd.f32 %v5875, %v5904
        %v5912 = vadd.f32 %v5876, %v5904
        %v5913 = vadd.f32 %v5877, %v5904
        %v5914 = vadd.f32 %v5878, %v5904
        %v5915 = vadd.f32 %v5879, %v5904
        %v5916 = vadd.f32 %v5880, %v5904
        %v5917 = vadd.f32 %v5881, %v5904
        %v5918 = vadd.f32 %v5882, %v5904
        %v5919 = vadd.f32 %v5883, %v5904
        %v5920 = vadd.f32 %v5884, %v5904
        %v5921 = vadd.f32 %v5885, %v5904
        %v5922 = vadd.f32 %v5886, %v5904
        %v5923 = vadd.f32 %v5887, %v5904
        %v5924 = vadd.f32 %v5888, %v5904
        %v5925 = vadd.f32 %v5889, %v5904
        %v5926 = vadd.f32 %v5890, %v5904
        %v5927 = vadd.f32 %v5891, %v5904
        %v5928 = vadd.f32 %v5892, %v5904
        %v5929 = vadd.f32 %v5893, %v5904
        %v5930 = vadd.f32 %v5894, %v5904
        %v5931 = vadd.f32 %v5895, %v5904
        %v5932 = vadd.f32 %v5896, %v5904
        %v5933 = vadd.f32 %v5897, %v5904
        %v5934 = vadd.f32 %v5898, %v5904
        %v5935 = vadd.f32 %v5899, %v5904
        %v5936 = vadd.f32 %v5900, %v5904
        %v5937 = vadd.f32 %v5901, %v5904
        %v5938 = vmax.f32 %v5906, 0.0
        %v5939 = vmax.f32 %v5907, 0.0
        %v5940 = vmax.f32 %v5908, 0.0
        %v5941 = vmax.f32 %v5909, 0.0
        %v5942 = vmax.f32 %v5910, 0.0
        %v5943 = vmax.f32 %v5911, 0.0
        %v5944 = vmax.f32 %v5912, 0.0
        %v5945 = vmax.f32 %v5913, 0.0
        %v5946 = vmax.f32 %v5914, 0.0
        %v5947 = vmax.f32 %v5915, 0.0
        %v5948 = vmax.f32 %v5916, 0.0
        %v5949 = vmax.f32 %v5917, 0.0
        %v5950 = vmax.f32 %v5918, 0.0
        %v5951 = vmax.f32 %v5919, 0.0
        %v5952 = vmax.f32 %v5920, 0.0
        %v5953 = vmax.f32 %v5921, 0.0
        %v5954 = vmax.f32 %v5922, 0.0
        %v5955 = vmax.f32 %v5923, 0.0
        %v5956 = vmax.f32 %v5924, 0.0
        %v5957 = vmax.f32 %v5925, 0.0
        %v5958 = vmax.f32 %v5926, 0.0
        %v5959 = vmax.f32 %v5927, 0.0
        %v5960 = vmax.f32 %v5928, 0.0
        %v5961 = vmax.f32 %v5929, 0.0
        %v5962 = vmax.f32 %v5930, 0.0
        %v5963 = vmax.f32 %v5931, 0.0
        %v5964 = vmax.f32 %v5932, 0.0
        %v5965 = vmax.f32 %v5933, 0.0
        %v5966 = vmax.f32 %v5934, 0.0
        %v5967 = vmax.f32 %v5935, 0.0
        %v5968 = vmax.f32 %v5936, 0.0
        %v5969 = vmax.f32 %v5937, 0.0
        %v5970 = vpack.c.bf16 %v5939, %v5938
        %v5971 = vpack.c.bf16 %v5941, %v5940
        %v5972 = vpack.c.bf16 %v5943, %v5942
        %v5973 = vpack.c.bf16 %v5945, %v5944
        %v5974 = vpack.c.bf16 %v5947, %v5946
        %v5975 = vpack.c.bf16 %v5949, %v5948
        %v5976 = vpack.c.bf16 %v5951, %v5950
        %v5977 = vpack.c.bf16 %v5953, %v5952
        %v5978 = vpack.c.bf16 %v5955, %v5954
        %v5979 = vpack.c.bf16 %v5957, %v5956
        %v5980 = vpack.c.bf16 %v5959, %v5958
        %v5981 = vpack.c.bf16 %v5961, %v5960
        %v5982 = vpack.c.bf16 %v5963, %v5962
        %v5983 = vpack.c.bf16 %v5965, %v5964
        %v5984 = vpack.c.bf16 %v5967, %v5966
        %v5985 = vpack.c.bf16 %v5969, %v5968
        %v5986 = vld [vmem:[%s544] sm:$0xff]
        %v5987 = vld [vmem:[%s544 + $0x8] sm:$0xff]
        %v5988 = vld [vmem:[%s544 + $0x10] sm:$0xff]
        %v5989 = vld [vmem:[%s544 + $0x18] sm:$0xff]
        %v5990 = vld [vmem:[%s544 + $0x20] sm:$0xff]
        %v5991 = vld [vmem:[%s544 + $0x28] sm:$0xff]
        %v5992 = vld [vmem:[%s544 + $0x30] sm:$0xff]
        %v5993 = vld [vmem:[%s544 + $0x38] sm:$0xff]
        %v5994 = vld [vmem:[%s544 + $0x40] sm:$0xff]
        %v5995 = vld [vmem:[%s544 + $0x48] sm:$0xff]
        %v5996 = vld [vmem:[%s544 + $0x50] sm:$0xff]
        %v5997 = vld [vmem:[%s544 + $0x58] sm:$0xff]
        %v5998 = vld [vmem:[%s544 + $0x60] sm:$0xff]
        %v5999 = vld [vmem:[%s544 + $0x68] sm:$0xff]
        %v6000 = vld [vmem:[%s544 + $0x70] sm:$0xff]
        %v6001 = vld [vmem:[%s544 + $0x78] sm:$0xff]
        %v6018 = vunpack.c.l.b16 %v5986
        %v6019 = vunpack.c.h.b16 %v5986
        %v6020 = vunpack.c.l.b16 %v5987
        %v6021 = vunpack.c.h.b16 %v5987
        %v6022 = vunpack.c.l.b16 %v5988
        %v6023 = vunpack.c.h.b16 %v5988
        %v6024 = vunpack.c.l.b16 %v5989
        %v6025 = vunpack.c.h.b16 %v5989
        %v6026 = vunpack.c.l.b16 %v5990
        %v6027 = vunpack.c.h.b16 %v5990
        %v6028 = vunpack.c.l.b16 %v5991
        %v6029 = vunpack.c.h.b16 %v5991
        %v6030 = vunpack.c.l.b16 %v5992
        %v6031 = vunpack.c.h.b16 %v5992
        %v6032 = vunpack.c.l.b16 %v5993
        %v6033 = vunpack.c.h.b16 %v5993
        %v6034 = vunpack.c.l.b16 %v5994
        %v6035 = vunpack.c.h.b16 %v5994
        %v6036 = vunpack.c.l.b16 %v5995
        %v6037 = vunpack.c.h.b16 %v5995
        %v6038 = vunpack.c.l.b16 %v5996
        %v6039 = vunpack.c.h.b16 %v5996
        %v6040 = vunpack.c.l.b16 %v5997
        %v6041 = vunpack.c.h.b16 %v5997
        %v6042 = vunpack.c.l.b16 %v5998
        %v6043 = vunpack.c.h.b16 %v5998
        %v6044 = vunpack.c.l.b16 %v5999
        %v6045 = vunpack.c.h.b16 %v5999
        %v6046 = vunpack.c.l.b16 %v6000
        %v6047 = vunpack.c.h.b16 %v6000
        %v6048 = vunpack.c.l.b16 %v6001
        %v6049 = vunpack.c.h.b16 %v6001
        %v6050 = vpack.c.b16 %v6020, %v6018
        %v6051 = vpack.c.b16 %v6021, %v6019
        %v6052 = vpack.c.b16 %v6024, %v6022
        %v6053 = vpack.c.b16 %v6025, %v6023
        %v6054 = vpack.c.b16 %v6028, %v6026
        %v6055 = vpack.c.b16 %v6029, %v6027
        %v6056 = vpack.c.b16 %v6032, %v6030
        %v6057 = vpack.c.b16 %v6033, %v6031
        %v6058 = vpack.c.b16 %v6036, %v6034
        %v6059 = vpack.c.b16 %v6037, %v6035
        %v6060 = vpack.c.b16 %v6040, %v6038
        %v6061 = vpack.c.b16 %v6041, %v6039
        %v6062 = vpack.c.b16 %v6044, %v6042
        %v6063 = vpack.c.b16 %v6045, %v6043
        %v6064 = vpack.c.b16 %v6048, %v6046
        %v6065 = vpack.c.b16 %v6049, %v6047
        %6082 = vmatpush.bf16.msra.mxu0 %v6064
        %6083 = vmatpush.bf16.msra.mxu0 %v6062
        %6084 = vmatpush.bf16.msra.mxu0 %v6060
        %6085 = vmatpush.bf16.msra.mxu0 %v6058
        %6086 = vmatpush.bf16.msra.mxu0 %v6056
        %6087 = vmatpush.bf16.msra.mxu0 %v6054
        %6088 = vmatpush.bf16.msra.mxu0 %v6052
        %6089 = vmatpush.bf16.msra.mxu0 %v6050
        %6090 = vmatmul.bf16.gmra.mxu0 %v5970
        %v6091 = vpop.f32.mrf.mxu0
        %v6092 = vadd.f32 0.0, %v6091
        %v6093 = vpop.f32.mrf.mxu0
        %v6094 = vadd.f32 0.0, %v6093
        %6095 = vmatmul.bf16.gmra.mxu0 %v5971
        %v6096 = vpop.f32.mrf.mxu0
        %v6097 = vadd.f32 0.0, %v6096
        %v6098 = vpop.f32.mrf.mxu0
        %v6099 = vadd.f32 0.0, %v6098
        %6100 = vmatmul.bf16.gmra.mxu0 %v5972
        %v6101 = vpop.f32.mrf.mxu0
        %v6102 = vadd.f32 0.0, %v6101
        %v6103 = vpop.f32.mrf.mxu0
        %v6104 = vadd.f32 0.0, %v6103
        %6105 = vmatmul.bf16.gmra.mxu0 %v5973
        %v6106 = vpop.f32.mrf.mxu0
        %v6107 = vadd.f32 0.0, %v6106
        %v6108 = vpop.f32.mrf.mxu0
        %v6109 = vadd.f32 0.0, %v6108
        %6110 = vmatmul.bf16.gmra.mxu0 %v5974
        %v6111 = vpop.f32.mrf.mxu0
        %v6112 = vadd.f32 0.0, %v6111
        %v6113 = vpop.f32.mrf.mxu0
        %v6114 = vadd.f32 0.0, %v6113
        %6115 = vmatmul.bf16.gmra.mxu0 %v5975
        %v6116 = vpop.f32.mrf.mxu0
        %v6117 = vadd.f32 0.0, %v6116
        %v6118 = vpop.f32.mrf.mxu0
        %v6119 = vadd.f32 0.0, %v6118
        %6120 = vmatmul.bf16.gmra.mxu0 %v5976
        %v6121 = vpop.f32.mrf.mxu0
        %v6122 = vadd.f32 0.0, %v6121
        %v6123 = vpop.f32.mrf.mxu0
        %v6124 = vadd.f32 0.0, %v6123
        %6125 = vmatmul.bf16.gmra.mxu0 %v5977
        %v6126 = vpop.f32.mrf.mxu0
        %v6127 = vadd.f32 0.0, %v6126
        %v6128 = vpop.f32.mrf.mxu0
        %v6129 = vadd.f32 0.0, %v6128
        %6130 = vmatmul.bf16.gmra.mxu0 %v5978
        %v6131 = vpop.f32.mrf.mxu0
        %v6132 = vadd.f32 0.0, %v6131
        %v6133 = vpop.f32.mrf.mxu0
        %v6134 = vadd.f32 0.0, %v6133
        %6135 = vmatmul.bf16.gmra.mxu0 %v5979
        %v6136 = vpop.f32.mrf.mxu0
        %v6137 = vadd.f32 0.0, %v6136
        %v6138 = vpop.f32.mrf.mxu0
        %v6139 = vadd.f32 0.0, %v6138
        %6140 = vmatmul.bf16.gmra.mxu0 %v5980
        %v6141 = vpop.f32.mrf.mxu0
        %v6142 = vadd.f32 0.0, %v6141
        %v6143 = vpop.f32.mrf.mxu0
        %v6144 = vadd.f32 0.0, %v6143
        %6145 = vmatmul.bf16.gmra.mxu0 %v5981
        %v6146 = vpop.f32.mrf.mxu0
        %v6147 = vadd.f32 0.0, %v6146
        %v6148 = vpop.f32.mrf.mxu0
        %v6149 = vadd.f32 0.0, %v6148
        %6150 = vmatmul.bf16.gmra.mxu0 %v5982
        %v6151 = vpop.f32.mrf.mxu0
        %v6152 = vadd.f32 0.0, %v6151
        %v6153 = vpop.f32.mrf.mxu0
        %v6154 = vadd.f32 0.0, %v6153
        %6155 = vmatmul.bf16.gmra.mxu0 %v5983
        %v6156 = vpop.f32.mrf.mxu0
        %v6157 = vadd.f32 0.0, %v6156
        %v6158 = vpop.f32.mrf.mxu0
        %v6159 = vadd.f32 0.0, %v6158
        %6160 = vmatmul.bf16.gmra.mxu0 %v5984
        %v6161 = vpop.f32.mrf.mxu0
        %v6162 = vadd.f32 0.0, %v6161
        %v6163 = vpop.f32.mrf.mxu0
        %v6164 = vadd.f32 0.0, %v6163
        %6165 = vmatmul.bf16.gmra.mxu0 %v5985
        %v6166 = vpop.f32.mrf.mxu0
        %v6167 = vadd.f32 0.0, %v6166
        %v6168 = vpop.f32.mrf.mxu0
        %v6169 = vadd.f32 0.0, %v6168
        %6170 = vdwg.mxu0
        %6171 = vmatpush.bf16.msra.mxu0 %v6065
        %6172 = vmatpush.bf16.msra.mxu0 %v6063
        %6173 = vmatpush.bf16.msra.mxu0 %v6061
        %6174 = vmatpush.bf16.msra.mxu0 %v6059
        %6175 = vmatpush.bf16.msra.mxu0 %v6057
        %6176 = vmatpush.bf16.msra.mxu0 %v6055
        %6177 = vmatpush.bf16.msra.mxu0 %v6053
        %6178 = vmatpush.bf16.msra.mxu0 %v6051
        %6179 = vmatmul.bf16.gmra.mxu0 %v5970
        %v6180 = vpop.f32.mrf.mxu0
        %v6181 = vadd.f32 0.0, %v6180
        %v6182 = vpop.f32.mrf.mxu0
        %v6183 = vadd.f32 0.0, %v6182
        %6184 = vmatmul.bf16.gmra.mxu0 %v5971
        %v6185 = vpop.f32.mrf.mxu0
        %v6186 = vadd.f32 0.0, %v6185
        %v6187 = vpop.f32.mrf.mxu0
        %v6188 = vadd.f32 0.0, %v6187
        %6189 = vmatmul.bf16.gmra.mxu0 %v5972
        %v6190 = vpop.f32.mrf.mxu0
        %v6191 = vadd.f32 0.0, %v6190
        %v6192 = vpop.f32.mrf.mxu0
        %v6193 = vadd.f32 0.0, %v6192
        %6194 = vmatmul.bf16.gmra.mxu0 %v5973
        %v6195 = vpop.f32.mrf.mxu0
        %v6196 = vadd.f32 0.0, %v6195
        %v6197 = vpop.f32.mrf.mxu0
        %v6198 = vadd.f32 0.0, %v6197
        %6199 = vmatmul.bf16.gmra.mxu0 %v5974
        %v6200 = vpop.f32.mrf.mxu0
        %v6201 = vadd.f32 0.0, %v6200
        %v6202 = vpop.f32.mrf.mxu0
        %v6203 = vadd.f32 0.0, %v6202
        %6204 = vmatmul.bf16.gmra.mxu0 %v5975
        %v6205 = vpop.f32.mrf.mxu0
        %v6206 = vadd.f32 0.0, %v6205
        %v6207 = vpop.f32.mrf.mxu0
        %v6208 = vadd.f32 0.0, %v6207
        %6209 = vmatmul.bf16.gmra.mxu0 %v5976
        %v6210 = vpop.f32.mrf.mxu0
        %v6211 = vadd.f32 0.0, %v6210
        %v6212 = vpop.f32.mrf.mxu0
        %v6213 = vadd.f32 0.0, %v6212
        %6214 = vmatmul.bf16.gmra.mxu0 %v5977
        %v6215 = vpop.f32.mrf.mxu0
        %v6216 = vadd.f32 0.0, %v6215
        %v6217 = vpop.f32.mrf.mxu0
        %v6218 = vadd.f32 0.0, %v6217
        %6219 = vmatmul.bf16.gmra.mxu0 %v5978
        %v6220 = vpop.f32.mrf.mxu0
        %v6221 = vadd.f32 0.0, %v6220
        %v6222 = vpop.f32.mrf.mxu0
        %v6223 = vadd.f32 0.0, %v6222
        %6224 = vmatmul.bf16.gmra.mxu0 %v5979
        %v6225 = vpop.f32.mrf.mxu0
        %v6226 = vadd.f32 0.0, %v6225
        %v6227 = vpop.f32.mrf.mxu0
        %v6228 = vadd.f32 0.0, %v6227
        %6229 = vmatmul.bf16.gmra.mxu0 %v5980
        %v6230 = vpop.f32.mrf.mxu0
        %v6231 = vadd.f32 0.0, %v6230
        %v6232 = vpop.f32.mrf.mxu0
        %v6233 = vadd.f32 0.0, %v6232
        %6234 = vmatmul.bf16.gmra.mxu0 %v5981
        %v6235 = vpop.f32.mrf.mxu0
        %v6236 = vadd.f32 0.0, %v6235
        %v6237 = vpop.f32.mrf.mxu0
        %v6238 = vadd.f32 0.0, %v6237
        %6239 = vmatmul.bf16.gmra.mxu0 %v5982
        %v6240 = vpop.f32.mrf.mxu0
        %v6241 = vadd.f32 0.0, %v6240
        %v6242 = vpop.f32.mrf.mxu0
        %v6243 = vadd.f32 0.0, %v6242
        %6244 = vmatmul.bf16.gmra.mxu0 %v5983
        %v6245 = vpop.f32.mrf.mxu0
        %v6246 = vadd.f32 0.0, %v6245
        %v6247 = vpop.f32.mrf.mxu0
        %v6248 = vadd.f32 0.0, %v6247
        %6249 = vmatmul.bf16.gmra.mxu0 %v5984
        %v6250 = vpop.f32.mrf.mxu0
        %v6251 = vadd.f32 0.0, %v6250
        %v6252 = vpop.f32.mrf.mxu0
        %v6253 = vadd.f32 0.0, %v6252
        %6254 = vmatmul.bf16.gmra.mxu0 %v5985
        %v6255 = vpop.f32.mrf.mxu0
        %v6256 = vadd.f32 0.0, %v6255
        %v6257 = vpop.f32.mrf.mxu0
        %v6258 = vadd.f32 0.0, %v6257
        %6259 = vdwg.mxu0
        // Predicated region
        $region89: #{tpu_custom_call.1} parent=63 // pred_check
          %p6260 = pneg %p547
        $region90: #{tpu_custom_call.1} parent=63 // pred_check_branch
          %6262 = sbr.rel (%p6260) target = $region92
        $region91: #{tpu_custom_call.1} parent=63 // pred_region
          %6263 = vst [vmem:[#allocation3] sm:$0xff] %v6092
          %6264 = vst [vmem:[#allocation3 + $0x8] sm:$0xff] %v6181
          %6265 = vst [vmem:[#allocation3 + $0x10] sm:$0xff] %v6094
          %6266 = vst [vmem:[#allocation3 + $0x18] sm:$0xff] %v6183
          %6267 = vst [vmem:[#allocation3 + $0x20] sm:$0xff] %v6097
          %6268 = vst [vmem:[#allocation3 + $0x28] sm:$0xff] %v6186
          %6269 = vst [vmem:[#allocation3 + $0x30] sm:$0xff] %v6099
          %6270 = vst [vmem:[#allocation3 + $0x38] sm:$0xff] %v6188
          %6271 = vst [vmem:[#allocation3 + $0x40] sm:$0xff] %v6102
          %6272 = vst [vmem:[#allocation3 + $0x48] sm:$0xff] %v6191
          %6273 = vst [vmem:[#allocation3 + $0x50] sm:$0xff] %v6104
          %6274 = vst [vmem:[#allocation3 + $0x58] sm:$0xff] %v6193
          %6275 = vst [vmem:[#allocation3 + $0x60] sm:$0xff] %v6107
          %6276 = vst [vmem:[#allocation3 + $0x68] sm:$0xff] %v6196
          %6277 = vst [vmem:[#allocation3 + $0x70] sm:$0xff] %v6109
          %6278 = vst [vmem:[#allocation3 + $0x78] sm:$0xff] %v6198
          %6279 = vst [vmem:[#allocation3 + $0x80] sm:$0xff] %v6112
          %6280 = vst [vmem:[#allocation3 + $0x88] sm:$0xff] %v6201
          %6281 = vst [vmem:[#allocation3 + $0x90] sm:$0xff] %v6114
          %6282 = vst [vmem:[#allocation3 + $0x98] sm:$0xff] %v6203
          %6283 = vst [vmem:[#allocation3 + $0xa0] sm:$0xff] %v6117
          %6284 = vst [vmem:[#allocation3 + $0xa8] sm:$0xff] %v6206
          %6285 = vst [vmem:[#allocation3 + $0xb0] sm:$0xff] %v6119
          %6286 = vst [vmem:[#allocation3 + $0xb8] sm:$0xff] %v6208
          %6287 = vst [vmem:[#allocation3 + $0xc0] sm:$0xff] %v6122
          %6288 = vst [vmem:[#allocation3 + $0xc8] sm:$0xff] %v6211
          %6289 = vst [vmem:[#allocation3 + $0xd0] sm:$0xff] %v6124
          %6290 = vst [vmem:[#allocation3 + $0xd8] sm:$0xff] %v6213
          %6291 = vst [vmem:[#allocation3 + $0xe0] sm:$0xff] %v6127
          %6292 = vst [vmem:[#allocation3 + $0xe8] sm:$0xff] %v6216
          %6293 = vst [vmem:[#allocation3 + $0xf0] sm:$0xff] %v6129
          %6294 = vst [vmem:[#allocation3 + $0xf8] sm:$0xff] %v6218
          %6295 = vst [vmem:[#allocation3 + $0x100] sm:$0xff] %v6132
          %6296 = vst [vmem:[#allocation3 + $0x108] sm:$0xff] %v6221
          %6297 = vst [vmem:[#allocation3 + $0x110] sm:$0xff] %v6134
          %6298 = vst [vmem:[#allocation3 + $0x118] sm:$0xff] %v6223
          %6299 = vst [vmem:[#allocation3 + $0x120] sm:$0xff] %v6137
          %6300 = vst [vmem:[#allocation3 + $0x128] sm:$0xff] %v6226
          %6301 = vst [vmem:[#allocation3 + $0x130] sm:$0xff] %v6139
          %6302 = vst [vmem:[#allocation3 + $0x138] sm:$0xff] %v6228
          %6303 = vst [vmem:[#allocation3 + $0x140] sm:$0xff] %v6142
          %6304 = vst [vmem:[#allocation3 + $0x148] sm:$0xff] %v6231
          %6305 = vst [vmem:[#allocation3 + $0x150] sm:$0xff] %v6144
          %6306 = vst [vmem:[#allocation3 + $0x158] sm:$0xff] %v6233
          %6307 = vst [vmem:[#allocation3 + $0x160] sm:$0xff] %v6147
          %6308 = vst [vmem:[#allocation3 + $0x168] sm:$0xff] %v6236
          %6309 = vst [vmem:[#allocation3 + $0x170] sm:$0xff] %v6149
          %6310 = vst [vmem:[#allocation3 + $0x178] sm:$0xff] %v6238
          %6311 = vst [vmem:[#allocation3 + $0x180] sm:$0xff] %v6152
          %6312 = vst [vmem:[#allocation3 + $0x188] sm:$0xff] %v6241
          %6313 = vst [vmem:[#allocation3 + $0x190] sm:$0xff] %v6154
          %6314 = vst [vmem:[#allocation3 + $0x198] sm:$0xff] %v6243
          %6315 = vst [vmem:[#allocation3 + $0x1a0] sm:$0xff] %v6157
          %6316 = vst [vmem:[#allocation3 + $0x1a8] sm:$0xff] %v6246
          %6317 = vst [vmem:[#allocation3 + $0x1b0] sm:$0xff] %v6159
          %6318 = vst [vmem:[#allocation3 + $0x1b8] sm:$0xff] %v6248
          %6319 = vst [vmem:[#allocation3 + $0x1c0] sm:$0xff] %v6162
          %6320 = vst [vmem:[#allocation3 + $0x1c8] sm:$0xff] %v6251
          %6321 = vst [vmem:[#allocation3 + $0x1d0] sm:$0xff] %v6164
          %6322 = vst [vmem:[#allocation3 + $0x1d8] sm:$0xff] %v6253
          %6323 = vst [vmem:[#allocation3 + $0x1e0] sm:$0xff] %v6167
          %6324 = vst [vmem:[#allocation3 + $0x1e8] sm:$0xff] %v6256
          %6325 = vst [vmem:[#allocation3 + $0x1f0] sm:$0xff] %v6169
          %6326 = vst [vmem:[#allocation3 + $0x1f8] sm:$0xff] %v6258
        $region92: #{tpu_custom_call.1} parent=63 // pred_fallthru
          _
        %p6327 = scmp.gt.s32.totalorder %s37, 0
        // Predicated region
        $region93: #{tpu_custom_call.1} parent=63 // pred_check
          %p6328 = pneg %p6327
        $region94: #{tpu_custom_call.1} parent=63 // pred_check_branch
          %6330 = sbr.rel (%p6328) target = $region96
        $region95: #{tpu_custom_call.1} parent=63 // pred_region
          %v6331 = vld [vmem:[#allocation3] sm:$0xff]
          %v6332 = vld [vmem:[#allocation3 + $0x8] sm:$0xff]
          %v6333 = vld [vmem:[#allocation3 + $0x10] sm:$0xff]
          %v6334 = vld [vmem:[#allocation3 + $0x18] sm:$0xff]
          %v6335 = vld [vmem:[#allocation3 + $0x20] sm:$0xff]
          %v6336 = vld [vmem:[#allocation3 + $0x28] sm:$0xff]
          %v6337 = vld [vmem:[#allocation3 + $0x30] sm:$0xff]
          %v6338 = vld [vmem:[#allocation3 + $0x38] sm:$0xff]
          %v6339 = vld [vmem:[#allocation3 + $0x40] sm:$0xff]
          %v6340 = vld [vmem:[#allocation3 + $0x48] sm:$0xff]
          %v6341 = vld [vmem:[#allocation3 + $0x50] sm:$0xff]
          %v6342 = vld [vmem:[#allocation3 + $0x58] sm:$0xff]
          %v6343 = vld [vmem:[#allocation3 + $0x60] sm:$0xff]
          %v6344 = vld [vmem:[#allocation3 + $0x68] sm:$0xff]
          %v6345 = vld [vmem:[#allocation3 + $0x70] sm:$0xff]
          %v6346 = vld [vmem:[#allocation3 + $0x78] sm:$0xff]
          %v6347 = vld [vmem:[#allocation3 + $0x80] sm:$0xff]
          %v6348 = vld [vmem:[#allocation3 + $0x88] sm:$0xff]
          %v6349 = vld [vmem:[#allocation3 + $0x90] sm:$0xff]
          %v6350 = vld [vmem:[#allocation3 + $0x98] sm:$0xff]
          %v6351 = vld [vmem:[#allocation3 + $0xa0] sm:$0xff]
          %v6352 = vld [vmem:[#allocation3 + $0xa8] sm:$0xff]
          %v6353 = vld [vmem:[#allocation3 + $0xb0] sm:$0xff]
          %v6354 = vld [vmem:[#allocation3 + $0xb8] sm:$0xff]
          %v6355 = vld [vmem:[#allocation3 + $0xc0] sm:$0xff]
          %v6356 = vld [vmem:[#allocation3 + $0xc8] sm:$0xff]
          %v6357 = vld [vmem:[#allocation3 + $0xd0] sm:$0xff]
          %v6358 = vld [vmem:[#allocation3 + $0xd8] sm:$0xff]
          %v6359 = vld [vmem:[#allocation3 + $0xe0] sm:$0xff]
          %v6360 = vld [vmem:[#allocation3 + $0xe8] sm:$0xff]
          %v6361 = vld [vmem:[#allocation3 + $0xf0] sm:$0xff]
          %v6362 = vld [vmem:[#allocation3 + $0xf8] sm:$0xff]
          %v6363 = vld [vmem:[#allocation3 + $0x100] sm:$0xff]
          %v6364 = vld [vmem:[#allocation3 + $0x108] sm:$0xff]
          %v6365 = vld [vmem:[#allocation3 + $0x110] sm:$0xff]
          %v6366 = vld [vmem:[#allocation3 + $0x118] sm:$0xff]
          %v6367 = vld [vmem:[#allocation3 + $0x120] sm:$0xff]
          %v6368 = vld [vmem:[#allocation3 + $0x128] sm:$0xff]
          %v6369 = vld [vmem:[#allocation3 + $0x130] sm:$0xff]
          %v6370 = vld [vmem:[#allocation3 + $0x138] sm:$0xff]
          %v6371 = vld [vmem:[#allocation3 + $0x140] sm:$0xff]
          %v6372 = vld [vmem:[#allocation3 + $0x148] sm:$0xff]
          %v6373 = vld [vmem:[#allocation3 + $0x150] sm:$0xff]
          %v6374 = vld [vmem:[#allocation3 + $0x158] sm:$0xff]
          %v6375 = vld [vmem:[#allocation3 + $0x160] sm:$0xff]
          %v6376 = vld [vmem:[#allocation3 + $0x168] sm:$0xff]
          %v6377 = vld [vmem:[#allocation3 + $0x170] sm:$0xff]
          %v6378 = vld [vmem:[#allocation3 + $0x178] sm:$0xff]
          %v6379 = vld [vmem:[#allocation3 + $0x180] sm:$0xff]
          %v6380 = vld [vmem:[#allocation3 + $0x188] sm:$0xff]
          %v6381 = vld [vmem:[#allocation3 + $0x190] sm:$0xff]
          %v6382 = vld [vmem:[#allocation3 + $0x198] sm:$0xff]
          %v6383 = vld [vmem:[#allocation3 + $0x1a0] sm:$0xff]
          %v6384 = vld [vmem:[#allocation3 + $0x1a8] sm:$0xff]
          %v6385 = vld [vmem:[#allocation3 + $0x1b0] sm:$0xff]
          %v6386 = vld [vmem:[#allocation3 + $0x1b8] sm:$0xff]
          %v6387 = vld [vmem:[#allocation3 + $0x1c0] sm:$0xff]
          %v6388 = vld [vmem:[#allocation3 + $0x1c8] sm:$0xff]
          %v6389 = vld [vmem:[#allocation3 + $0x1d0] sm:$0xff]
          %v6390 = vld [vmem:[#allocation3 + $0x1d8] sm:$0xff]
          %v6391 = vld [vmem:[#allocation3 + $0x1e0] sm:$0xff]
          %v6392 = vld [vmem:[#allocation3 + $0x1e8] sm:$0xff]
          %v6393 = vld [vmem:[#allocation3 + $0x1f0] sm:$0xff]
          %v6394 = vld [vmem:[#allocation3 + $0x1f8] sm:$0xff]
          %v6395 = vadd.f32 %v6331, %v6092
          %v6396 = vadd.f32 %v6332, %v6181
          %v6397 = vadd.f32 %v6333, %v6094
          %v6398 = vadd.f32 %v6334, %v6183
          %v6399 = vadd.f32 %v6335, %v6097
          %v6400 = vadd.f32 %v6336, %v6186
          %v6401 = vadd.f32 %v6337, %v6099
          %v6402 = vadd.f32 %v6338, %v6188
          %v6403 = vadd.f32 %v6339, %v6102
          %v6404 = vadd.f32 %v6340, %v6191
          %v6405 = vadd.f32 %v6341, %v6104
          %v6406 = vadd.f32 %v6342, %v6193
          %v6407 = vadd.f32 %v6343, %v6107
          %v6408 = vadd.f32 %v6344, %v6196
          %v6409 = vadd.f32 %v6345, %v6109
          %v6410 = vadd.f32 %v6346, %v6198
          %v6411 = vadd.f32 %v6347, %v6112
          %v6412 = vadd.f32 %v6348, %v6201
          %v6413 = vadd.f32 %v6349, %v6114
          %v6414 = vadd.f32 %v6350, %v6203
          %v6415 = vadd.f32 %v6351, %v6117
          %v6416 = vadd.f32 %v6352, %v6206
          %v6417 = vadd.f32 %v6353, %v6119
          %v6418 = vadd.f32 %v6354, %v6208
          %v6419 = vadd.f32 %v6355, %v6122
          %v6420 = vadd.f32 %v6356, %v6211
          %v6421 = vadd.f32 %v6357, %v6124
          %v6422 = vadd.f32 %v6358, %v6213
          %v6423 = vadd.f32 %v6359, %v6127
          %v6424 = vadd.f32 %v6360, %v6216
          %v6425 = vadd.f32 %v6361, %v6129
          %v6426 = vadd.f32 %v6362, %v6218
          %v6427 = vadd.f32 %v6363, %v6132
          %v6428 = vadd.f32 %v6364, %v6221
          %v6429 = vadd.f32 %v6365, %v6134
          %v6430 = vadd.f32 %v6366, %v6223
          %v6431 = vadd.f32 %v6367, %v6137
          %v6432 = vadd.f32 %v6368, %v6226
          %v6433 = vadd.f32 %v6369, %v6139
          %v6434 = vadd.f32 %v6370, %v6228
          %v6435 = vadd.f32 %v6371, %v6142
          %v6436 = vadd.f32 %v6372, %v6231
          %v6437 = vadd.f32 %v6373, %v6144
          %v6438 = vadd.f32 %v6374, %v6233
          %v6439 = vadd.f32 %v6375, %v6147
          %v6440 = vadd.f32 %v6376, %v6236
          %v6441 = vadd.f32 %v6377, %v6149
          %v6442 = vadd.f32 %v6378, %v6238
          %v6443 = vadd.f32 %v6379, %v6152
          %v6444 = vadd.f32 %v6380, %v6241
          %v6445 = vadd.f32 %v6381, %v6154
          %v6446 = vadd.f32 %v6382, %v6243
          %v6447 = vadd.f32 %v6383, %v6157
          %v6448 = vadd.f32 %v6384, %v6246
          %v6449 = vadd.f32 %v6385, %v6159
          %v6450 = vadd.f32 %v6386, %v6248
          %v6451 = vadd.f32 %v6387, %v6162
          %v6452 = vadd.f32 %v6388, %v6251
          %v6453 = vadd.f32 %v6389, %v6164
          %v6454 = vadd.f32 %v6390, %v6253
          %v6455 = vadd.f32 %v6391, %v6167
          %v6456 = vadd.f32 %v6392, %v6256
          %v6457 = vadd.f32 %v6393, %v6169
          %v6458 = vadd.f32 %v6394, %v6258
          %6459 = vst [vmem:[#allocation3] sm:$0xff] %v6395
          %6460 = vst [vmem:[#allocation3 + $0x8] sm:$0xff] %v6396
          %6461 = vst [vmem:[#allocation3 + $0x10] sm:$0xff] %v6397
          %6462 = vst [vmem:[#allocation3 + $0x18] sm:$0xff] %v6398
          %6463 = vst [vmem:[#allocation3 + $0x20] sm:$0xff] %v6399
          %6464 = vst [vmem:[#allocation3 + $0x28] sm:$0xff] %v6400
          %6465 = vst [vmem:[#allocation3 + $0x30] sm:$0xff] %v6401
          %6466 = vst [vmem:[#allocation3 + $0x38] sm:$0xff] %v6402
          %6467 = vst [vmem:[#allocation3 + $0x40] sm:$0xff] %v6403
          %6468 = vst [vmem:[#allocation3 + $0x48] sm:$0xff] %v6404
          %6469 = vst [vmem:[#allocation3 + $0x50] sm:$0xff] %v6405
          %6470 = vst [vmem:[#allocation3 + $0x58] sm:$0xff] %v6406
          %6471 = vst [vmem:[#allocation3 + $0x60] sm:$0xff] %v6407
          %6472 = vst [vmem:[#allocation3 + $0x68] sm:$0xff] %v6408
          %6473 = vst [vmem:[#allocation3 + $0x70] sm:$0xff] %v6409
          %6474 = vst [vmem:[#allocation3 + $0x78] sm:$0xff] %v6410
          %6475 = vst [vmem:[#allocation3 + $0x80] sm:$0xff] %v6411
          %6476 = vst [vmem:[#allocation3 + $0x88] sm:$0xff] %v6412
          %6477 = vst [vmem:[#allocation3 + $0x90] sm:$0xff] %v6413
          %6478 = vst [vmem:[#allocation3 + $0x98] sm:$0xff] %v6414
          %6479 = vst [vmem:[#allocation3 + $0xa0] sm:$0xff] %v6415
          %6480 = vst [vmem:[#allocation3 + $0xa8] sm:$0xff] %v6416
          %6481 = vst [vmem:[#allocation3 + $0xb0] sm:$0xff] %v6417
          %6482 = vst [vmem:[#allocation3 + $0xb8] sm:$0xff] %v6418
          %6483 = vst [vmem:[#allocation3 + $0xc0] sm:$0xff] %v6419
          %6484 = vst [vmem:[#allocation3 + $0xc8] sm:$0xff] %v6420
          %6485 = vst [vmem:[#allocation3 + $0xd0] sm:$0xff] %v6421
          %6486 = vst [vmem:[#allocation3 + $0xd8] sm:$0xff] %v6422
          %6487 = vst [vmem:[#allocation3 + $0xe0] sm:$0xff] %v6423
          %6488 = vst [vmem:[#allocation3 + $0xe8] sm:$0xff] %v6424
          %6489 = vst [vmem:[#allocation3 + $0xf0] sm:$0xff] %v6425
          %6490 = vst [vmem:[#allocation3 + $0xf8] sm:$0xff] %v6426
          %6491 = vst [vmem:[#allocation3 + $0x100] sm:$0xff] %v6427
          %6492 = vst [vmem:[#allocation3 + $0x108] sm:$0xff] %v6428
          %6493 = vst [vmem:[#allocation3 + $0x110] sm:$0xff] %v6429
          %6494 = vst [vmem:[#allocation3 + $0x118] sm:$0xff] %v6430
          %6495 = vst [vmem:[#allocation3 + $0x120] sm:$0xff] %v6431
          %6496 = vst [vmem:[#allocation3 + $0x128] sm:$0xff] %v6432
          %6497 = vst [vmem:[#allocation3 + $0x130] sm:$0xff] %v6433
          %6498 = vst [vmem:[#allocation3 + $0x138] sm:$0xff] %v6434
          %6499 = vst [vmem:[#allocation3 + $0x140] sm:$0xff] %v6435
          %6500 = vst [vmem:[#allocation3 + $0x148] sm:$0xff] %v6436
          %6501 = vst [vmem:[#allocation3 + $0x150] sm:$0xff] %v6437
          %6502 = vst [vmem:[#allocation3 + $0x158] sm:$0xff] %v6438
          %6503 = vst [vmem:[#allocation3 + $0x160] sm:$0xff] %v6439
          %6504 = vst [vmem:[#allocation3 + $0x168] sm:$0xff] %v6440
          %6505 = vst [vmem:[#allocation3 + $0x170] sm:$0xff] %v6441
          %6506 = vst [vmem:[#allocation3 + $0x178] sm:$0xff] %v6442
          %6507 = vst [vmem:[#allocation3 + $0x180] sm:$0xff] %v6443
          %6508 = vst [vmem:[#allocation3 + $0x188] sm:$0xff] %v6444
          %6509 = vst [vmem:[#allocation3 + $0x190] sm:$0xff] %v6445
          %6510 = vst [vmem:[#allocation3 + $0x198] sm:$0xff] %v6446
          %6511 = vst [vmem:[#allocation3 + $0x1a0] sm:$0xff] %v6447
          %6512 = vst [vmem:[#allocation3 + $0x1a8] sm:$0xff] %v6448
          %6513 = vst [vmem:[#allocation3 + $0x1b0] sm:$0xff] %v6449
          %6514 = vst [vmem:[#allocation3 + $0x1b8] sm:$0xff] %v6450
          %6515 = vst [vmem:[#allocation3 + $0x1c0] sm:$0xff] %v6451
          %6516 = vst [vmem:[#allocation3 + $0x1c8] sm:$0xff] %v6452
          %6517 = vst [vmem:[#allocation3 + $0x1d0] sm:$0xff] %v6453
          %6518 = vst [vmem:[#allocation3 + $0x1d8] sm:$0xff] %v6454
          %6519 = vst [vmem:[#allocation3 + $0x1e0] sm:$0xff] %v6455
          %6520 = vst [vmem:[#allocation3 + $0x1e8] sm:$0xff] %v6456
          %6521 = vst [vmem:[#allocation3 + $0x1f0] sm:$0xff] %v6457
          %6522 = vst [vmem:[#allocation3 + $0x1f8] sm:$0xff] %v6458
        $region96: #{tpu_custom_call.1} parent=63 // pred_fallthru
          _
        %p6523 = scmp.eq.s32.totalorder %s37, 1
        // Predicated region
        $region97: #{tpu_custom_call.1} parent=63 // pred_check
          %p6524 = pneg %p6523
        $region98: #{tpu_custom_call.1} parent=63 // pred_check_branch
          %6526 = sbr.rel (%p6524) target = $region100
        $region99: #{tpu_custom_call.1} parent=63 // pred_region
          %v6527 = vld [vmem:[%s457] sm:$0xff]
          %v6528 = vld [vmem:[%s457 + $0x8] sm:$0xff]
          %v6529 = vld [vmem:[%s457 + $0x10] sm:$0xff]
          %v6530 = vld [vmem:[%s457 + $0x18] sm:$0xff]
          %v6531 = vld [vmem:[%s457 + $0x20] sm:$0xff]
          %v6532 = vld [vmem:[%s457 + $0x28] sm:$0xff]
          %v6533 = vld [vmem:[%s457 + $0x30] sm:$0xff]
          %v6534 = vld [vmem:[%s457 + $0x38] sm:$0xff]
          %v6535 = vld [vmem:[%s457 + $0x40] sm:$0xff]
          %v6536 = vld [vmem:[%s457 + $0x48] sm:$0xff]
          %v6537 = vld [vmem:[%s457 + $0x50] sm:$0xff]
          %v6538 = vld [vmem:[%s457 + $0x58] sm:$0xff]
          %v6539 = vld [vmem:[%s457 + $0x60] sm:$0xff]
          %v6540 = vld [vmem:[%s457 + $0x68] sm:$0xff]
          %v6541 = vld [vmem:[%s457 + $0x70] sm:$0xff]
          %v6542 = vld [vmem:[%s457 + $0x78] sm:$0xff]
          %v6543 = vld [vmem:[%s457 + $0x80] sm:$0xff]
          %v6544 = vld [vmem:[%s457 + $0x88] sm:$0xff]
          %v6545 = vld [vmem:[%s457 + $0x90] sm:$0xff]
          %v6546 = vld [vmem:[%s457 + $0x98] sm:$0xff]
          %v6547 = vld [vmem:[%s457 + $0xa0] sm:$0xff]
          %v6548 = vld [vmem:[%s457 + $0xa8] sm:$0xff]
          %v6549 = vld [vmem:[%s457 + $0xb0] sm:$0xff]
          %v6550 = vld [vmem:[%s457 + $0xb8] sm:$0xff]
          %v6551 = vld [vmem:[%s457 + $0xc0] sm:$0xff]
          %v6552 = vld [vmem:[%s457 + $0xc8] sm:$0xff]
          %v6553 = vld [vmem:[%s457 + $0xd0] sm:$0xff]
          %v6554 = vld [vmem:[%s457 + $0xd8] sm:$0xff]
          %v6555 = vld [vmem:[%s457 + $0xe0] sm:$0xff]
          %v6556 = vld [vmem:[%s457 + $0xe8] sm:$0xff]
          %v6557 = vld [vmem:[%s457 + $0xf0] sm:$0xff]
          %v6558 = vld [vmem:[%s457 + $0xf8] sm:$0xff]
          %v6559 = vunpack.c.l.bf16 %v6527
          %v6560 = vunpack.c.h.bf16 %v6527
          %v6561 = vunpack.c.l.bf16 %v6528
          %v6562 = vunpack.c.h.bf16 %v6528
          %v6563 = vunpack.c.l.bf16 %v6529
          %v6564 = vunpack.c.h.bf16 %v6529
          %v6565 = vunpack.c.l.bf16 %v6530
          %v6566 = vunpack.c.h.bf16 %v6530
          %v6567 = vunpack.c.l.bf16 %v6531
          %v6568 = vunpack.c.h.bf16 %v6531
          %v6569 = vunpack.c.l.bf16 %v6532
          %v6570 = vunpack.c.h.bf16 %v6532
          %v6571 = vunpack.c.l.bf16 %v6533
          %v6572 = vunpack.c.h.bf16 %v6533
          %v6573 = vunpack.c.l.bf16 %v6534
          %v6574 = vunpack.c.h.bf16 %v6534
          %v6575 = vunpack.c.l.bf16 %v6535
          %v6576 = vunpack.c.h.bf16 %v6535
          %v6577 = vunpack.c.l.bf16 %v6536
          %v6578 = vunpack.c.h.bf16 %v6536
          %v6579 = vunpack.c.l.bf16 %v6537
          %v6580 = vunpack.c.h.bf16 %v6537
          %v6581 = vunpack.c.l.bf16 %v6538
          %v6582 = vunpack.c.h.bf16 %v6538
          %v6583 = vunpack.c.l.bf16 %v6539
          %v6584 = vunpack.c.h.bf16 %v6539
          %v6585 = vunpack.c.l.bf16 %v6540
          %v6586 = vunpack.c.h.bf16 %v6540
          %v6587 = vunpack.c.l.bf16 %v6541
          %v6588 = vunpack.c.h.bf16 %v6541
          %v6589 = vunpack.c.l.bf16 %v6542
          %v6590 = vunpack.c.h.bf16 %v6542
          %v6591 = vunpack.c.l.bf16 %v6543
          %v6592 = vunpack.c.h.bf16 %v6543
          %v6593 = vunpack.c.l.bf16 %v6544
          %v6594 = vunpack.c.h.bf16 %v6544
          %v6595 = vunpack.c.l.bf16 %v6545
          %v6596 = vunpack.c.h.bf16 %v6545
          %v6597 = vunpack.c.l.bf16 %v6546
          %v6598 = vunpack.c.h.bf16 %v6546
          %v6599 = vunpack.c.l.bf16 %v6547
          %v6600 = vunpack.c.h.bf16 %v6547
          %v6601 = vunpack.c.l.bf16 %v6548
          %v6602 = vunpack.c.h.bf16 %v6548
          %v6603 = vunpack.c.l.bf16 %v6549
          %v6604 = vunpack.c.h.bf16 %v6549
          %v6605 = vunpack.c.l.bf16 %v6550
          %v6606 = vunpack.c.h.bf16 %v6550
          %v6607 = vunpack.c.l.bf16 %v6551
          %v6608 = vunpack.c.h.bf16 %v6551
          %v6609 = vunpack.c.l.bf16 %v6552
          %v6610 = vunpack.c.h.bf16 %v6552
          %v6611 = vunpack.c.l.bf16 %v6553
          %v6612 = vunpack.c.h.bf16 %v6553
          %v6613 = vunpack.c.l.bf16 %v6554
          %v6614 = vunpack.c.h.bf16 %v6554
          %v6615 = vunpack.c.l.bf16 %v6555
          %v6616 = vunpack.c.h.bf16 %v6555
          %v6617 = vunpack.c.l.bf16 %v6556
          %v6618 = vunpack.c.h.bf16 %v6556
          %v6619 = vunpack.c.l.bf16 %v6557
          %v6620 = vunpack.c.h.bf16 %v6557
          %v6621 = vunpack.c.l.bf16 %v6558
          %v6622 = vunpack.c.h.bf16 %v6558
          %v6623 = vld [vmem:[#allocation3] sm:$0xff]
          %v6624 = vld [vmem:[#allocation3 + $0x8] sm:$0xff]
          %v6625 = vld [vmem:[#allocation3 + $0x10] sm:$0xff]
          %v6626 = vld [vmem:[#allocation3 + $0x18] sm:$0xff]
          %v6627 = vld [vmem:[#allocation3 + $0x20] sm:$0xff]
          %v6628 = vld [vmem:[#allocation3 + $0x28] sm:$0xff]
          %v6629 = vld [vmem:[#allocation3 + $0x30] sm:$0xff]
          %v6630 = vld [vmem:[#allocation3 + $0x38] sm:$0xff]
          %v6631 = vld [vmem:[#allocation3 + $0x40] sm:$0xff]
          %v6632 = vld [vmem:[#allocation3 + $0x48] sm:$0xff]
          %v6633 = vld [vmem:[#allocation3 + $0x50] sm:$0xff]
          %v6634 = vld [vmem:[#allocation3 + $0x58] sm:$0xff]
          %v6635 = vld [vmem:[#allocation3 + $0x60] sm:$0xff]
          %v6636 = vld [vmem:[#allocation3 + $0x68] sm:$0xff]
          %v6637 = vld [vmem:[#allocation3 + $0x70] sm:$0xff]
          %v6638 = vld [vmem:[#allocation3 + $0x78] sm:$0xff]
          %v6639 = vld [vmem:[#allocation3 + $0x80] sm:$0xff]
          %v6640 = vld [vmem:[#allocation3 + $0x88] sm:$0xff]
          %v6641 = vld [vmem:[#allocation3 + $0x90] sm:$0xff]
          %v6642 = vld [vmem:[#allocation3 + $0x98] sm:$0xff]
          %v6643 = vld [vmem:[#allocation3 + $0xa0] sm:$0xff]
          %v6644 = vld [vmem:[#allocation3 + $0xa8] sm:$0xff]
          %v6645 = vld [vmem:[#allocation3 + $0xb0] sm:$0xff]
          %v6646 = vld [vmem:[#allocation3 + $0xb8] sm:$0xff]
          %v6647 = vld [vmem:[#allocation3 + $0xc0] sm:$0xff]
          %v6648 = vld [vmem:[#allocation3 + $0xc8] sm:$0xff]
          %v6649 = vld [vmem:[#allocation3 + $0xd0] sm:$0xff]
          %v6650 = vld [vmem:[#allocation3 + $0xd8] sm:$0xff]
          %v6651 = vld [vmem:[#allocation3 + $0xe0] sm:$0xff]
          %v6652 = vld [vmem:[#allocation3 + $0xe8] sm:$0xff]
          %v6653 = vld [vmem:[#allocation3 + $0xf0] sm:$0xff]
          %v6654 = vld [vmem:[#allocation3 + $0xf8] sm:$0xff]
          %v6655 = vld [vmem:[#allocation3 + $0x100] sm:$0xff]
          %v6656 = vld [vmem:[#allocation3 + $0x108] sm:$0xff]
          %v6657 = vld [vmem:[#allocation3 + $0x110] sm:$0xff]
          %v6658 = vld [vmem:[#allocation3 + $0x118] sm:$0xff]
          %v6659 = vld [vmem:[#allocation3 + $0x120] sm:$0xff]
          %v6660 = vld [vmem:[#allocation3 + $0x128] sm:$0xff]
          %v6661 = vld [vmem:[#allocation3 + $0x130] sm:$0xff]
          %v6662 = vld [vmem:[#allocation3 + $0x138] sm:$0xff]
          %v6663 = vld [vmem:[#allocation3 + $0x140] sm:$0xff]
          %v6664 = vld [vmem:[#allocation3 + $0x148] sm:$0xff]
          %v6665 = vld [vmem:[#allocation3 + $0x150] sm:$0xff]
          %v6666 = vld [vmem:[#allocation3 + $0x158] sm:$0xff]
          %v6667 = vld [vmem:[#allocation3 + $0x160] sm:$0xff]
          %v6668 = vld [vmem:[#allocation3 + $0x168] sm:$0xff]
          %v6669 = vld [vmem:[#allocation3 + $0x170] sm:$0xff]
          %v6670 = vld [vmem:[#allocation3 + $0x178] sm:$0xff]
          %v6671 = vld [vmem:[#allocation3 + $0x180] sm:$0xff]
          %v6672 = vld [vmem:[#allocation3 + $0x188] sm:$0xff]
          %v6673 = vld [vmem:[#allocation3 + $0x190] sm:$0xff]
          %v6674 = vld [vmem:[#allocation3 + $0x198] sm:$0xff]
          %v6675 = vld [vmem:[#allocation3 + $0x1a0] sm:$0xff]
          %v6676 = vld [vmem:[#allocation3 + $0x1a8] sm:$0xff]
          %v6677 = vld [vmem:[#allocation3 + $0x1b0] sm:$0xff]
          %v6678 = vld [vmem:[#allocation3 + $0x1b8] sm:$0xff]
          %v6679 = vld [vmem:[#allocation3 + $0x1c0] sm:$0xff]
          %v6680 = vld [vmem:[#allocation3 + $0x1c8] sm:$0xff]
          %v6681 = vld [vmem:[#allocation3 + $0x1d0] sm:$0xff]
          %v6682 = vld [vmem:[#allocation3 + $0x1d8] sm:$0xff]
          %v6683 = vld [vmem:[#allocation3 + $0x1e0] sm:$0xff]
          %v6684 = vld [vmem:[#allocation3 + $0x1e8] sm:$0xff]
          %v6685 = vld [vmem:[#allocation3 + $0x1f0] sm:$0xff]
          %v6686 = vld [vmem:[#allocation3 + $0x1f8] sm:$0xff]
          %v6687 = vld [vmem:[%s8] sm:$0x3]
          %v6689 = vperm.slane %v6687, 0
          %v6690 = vperm.slane %v6687, 1
          %v6693 = vadd.f32 %v6623, %v6689
          %v6694 = vadd.f32 %v6624, %v6690
          %v6695 = vadd.f32 %v6625, %v6689
          %v6696 = vadd.f32 %v6626, %v6690
          %v6697 = vadd.f32 %v6627, %v6689
          %v6698 = vadd.f32 %v6628, %v6690
          %v6699 = vadd.f32 %v6629, %v6689
          %v6700 = vadd.f32 %v6630, %v6690
          %v6701 = vadd.f32 %v6631, %v6689
          %v6702 = vadd.f32 %v6632, %v6690
          %v6703 = vadd.f32 %v6633, %v6689
          %v6704 = vadd.f32 %v6634, %v6690
          %v6705 = vadd.f32 %v6635, %v6689
          %v6706 = vadd.f32 %v6636, %v6690
          %v6707 = vadd.f32 %v6637, %v6689
          %v6708 = vadd.f32 %v6638, %v6690
          %v6709 = vadd.f32 %v6639, %v6689
          %v6710 = vadd.f32 %v6640, %v6690
          %v6711 = vadd.f32 %v6641, %v6689
          %v6712 = vadd.f32 %v6642, %v6690
          %v6713 = vadd.f32 %v6643, %v6689
          %v6714 = vadd.f32 %v6644, %v6690
          %v6715 = vadd.f32 %v6645, %v6689
          %v6716 = vadd.f32 %v6646, %v6690
          %v6717 = vadd.f32 %v6647, %v6689
          %v6718 = vadd.f32 %v6648, %v6690
          %v6719 = vadd.f32 %v6649, %v6689
          %v6720 = vadd.f32 %v6650, %v6690
          %v6721 = vadd.f32 %v6651, %v6689
          %v6722 = vadd.f32 %v6652, %v6690
          %v6723 = vadd.f32 %v6653, %v6689
          %v6724 = vadd.f32 %v6654, %v6690
          %v6725 = vadd.f32 %v6655, %v6689
          %v6726 = vadd.f32 %v6656, %v6690
          %v6727 = vadd.f32 %v6657, %v6689
          %v6728 = vadd.f32 %v6658, %v6690
          %v6729 = vadd.f32 %v6659, %v6689
          %v6730 = vadd.f32 %v6660, %v6690
          %v6731 = vadd.f32 %v6661, %v6689
          %v6732 = vadd.f32 %v6662, %v6690
          %v6733 = vadd.f32 %v6663, %v6689
          %v6734 = vadd.f32 %v6664, %v6690
          %v6735 = vadd.f32 %v6665, %v6689
          %v6736 = vadd.f32 %v6666, %v6690
          %v6737 = vadd.f32 %v6667, %v6689
          %v6738 = vadd.f32 %v6668, %v6690
          %v6739 = vadd.f32 %v6669, %v6689
          %v6740 = vadd.f32 %v6670, %v6690
          %v6741 = vadd.f32 %v6671, %v6689
          %v6742 = vadd.f32 %v6672, %v6690
          %v6743 = vadd.f32 %v6673, %v6689
          %v6744 = vadd.f32 %v6674, %v6690
          %v6745 = vadd.f32 %v6675, %v6689
          %v6746 = vadd.f32 %v6676, %v6690
          %v6747 = vadd.f32 %v6677, %v6689
          %v6748 = vadd.f32 %v6678, %v6690
          %v6749 = vadd.f32 %v6679, %v6689
          %v6750 = vadd.f32 %v6680, %v6690
          %v6751 = vadd.f32 %v6681, %v6689
          %v6752 = vadd.f32 %v6682, %v6690
          %v6753 = vadd.f32 %v6683, %v6689
          %v6754 = vadd.f32 %v6684, %v6690
          %v6755 = vadd.f32 %v6685, %v6689
          %v6756 = vadd.f32 %v6686, %v6690
          %v6757 = vadd.f32 %v6693, %v6559
          %v6758 = vadd.f32 %v6694, %v6560
          %v6759 = vadd.f32 %v6695, %v6561
          %v6760 = vadd.f32 %v6696, %v6562
          %v6761 = vadd.f32 %v6697, %v6563
          %v6762 = vadd.f32 %v6698, %v6564
          %v6763 = vadd.f32 %v6699, %v6565
          %v6764 = vadd.f32 %v6700, %v6566
          %v6765 = vadd.f32 %v6701, %v6567
          %v6766 = vadd.f32 %v6702, %v6568
          %v6767 = vadd.f32 %v6703, %v6569
          %v6768 = vadd.f32 %v6704, %v6570
          %v6769 = vadd.f32 %v6705, %v6571
          %v6770 = vadd.f32 %v6706, %v6572
          %v6771 = vadd.f32 %v6707, %v6573
          %v6772 = vadd.f32 %v6708, %v6574
          %v6773 = vadd.f32 %v6709, %v6575
          %v6774 = vadd.f32 %v6710, %v6576
          %v6775 = vadd.f32 %v6711, %v6577
          %v6776 = vadd.f32 %v6712, %v6578
          %v6777 = vadd.f32 %v6713, %v6579
          %v6778 = vadd.f32 %v6714, %v6580
          %v6779 = vadd.f32 %v6715, %v6581
          %v6780 = vadd.f32 %v6716, %v6582
          %v6781 = vadd.f32 %v6717, %v6583
          %v6782 = vadd.f32 %v6718, %v6584
          %v6783 = vadd.f32 %v6719, %v6585
          %v6784 = vadd.f32 %v6720, %v6586
          %v6785 = vadd.f32 %v6721, %v6587
          %v6786 = vadd.f32 %v6722, %v6588
          %v6787 = vadd.f32 %v6723, %v6589
          %v6788 = vadd.f32 %v6724, %v6590
          %v6789 = vadd.f32 %v6725, %v6591
          %v6790 = vadd.f32 %v6726, %v6592
          %v6791 = vadd.f32 %v6727, %v6593
          %v6792 = vadd.f32 %v6728, %v6594
          %v6793 = vadd.f32 %v6729, %v6595
          %v6794 = vadd.f32 %v6730, %v6596
          %v6795 = vadd.f32 %v6731, %v6597
          %v6796 = vadd.f32 %v6732, %v6598
          %v6797 = vadd.f32 %v6733, %v6599
          %v6798 = vadd.f32 %v6734, %v6600
          %v6799 = vadd.f32 %v6735, %v6601
          %v6800 = vadd.f32 %v6736, %v6602
          %v6801 = vadd.f32 %v6737, %v6603
          %v6802 = vadd.f32 %v6738, %v6604
          %v6803 = vadd.f32 %v6739, %v6605
          %v6804 = vadd.f32 %v6740, %v6606
          %v6805 = vadd.f32 %v6741, %v6607
          %v6806 = vadd.f32 %v6742, %v6608
          %v6807 = vadd.f32 %v6743, %v6609
          %v6808 = vadd.f32 %v6744, %v6610
          %v6809 = vadd.f32 %v6745, %v6611
          %v6810 = vadd.f32 %v6746, %v6612
          %v6811 = vadd.f32 %v6747, %v6613
          %v6812 = vadd.f32 %v6748, %v6614
          %v6813 = vadd.f32 %v6749, %v6615
          %v6814 = vadd.f32 %v6750, %v6616
          %v6815 = vadd.f32 %v6751, %v6617
          %v6816 = vadd.f32 %v6752, %v6618
          %v6817 = vadd.f32 %v6753, %v6619
          %v6818 = vadd.f32 %v6754, %v6620
          %v6819 = vadd.f32 %v6755, %v6621
          %v6820 = vadd.f32 %v6756, %v6622
          %v6821 = vmax.f32 %v6757, 0.0
          %v6822 = vmax.f32 %v6758, 0.0
          %v6823 = vmax.f32 %v6759, 0.0
          %v6824 = vmax.f32 %v6760, 0.0
          %v6825 = vmax.f32 %v6761, 0.0
          %v6826 = vmax.f32 %v6762, 0.0
          %v6827 = vmax.f32 %v6763, 0.0
          %v6828 = vmax.f32 %v6764, 0.0
          %v6829 = vmax.f32 %v6765, 0.0
          %v6830 = vmax.f32 %v6766, 0.0
          %v6831 = vmax.f32 %v6767, 0.0
          %v6832 = vmax.f32 %v6768, 0.0
          %v6833 = vmax.f32 %v6769, 0.0
          %v6834 = vmax.f32 %v6770, 0.0
          %v6835 = vmax.f32 %v6771, 0.0
          %v6836 = vmax.f32 %v6772, 0.0
          %v6837 = vmax.f32 %v6773, 0.0
          %v6838 = vmax.f32 %v6774, 0.0
          %v6839 = vmax.f32 %v6775, 0.0
          %v6840 = vmax.f32 %v6776, 0.0
          %v6841 = vmax.f32 %v6777, 0.0
          %v6842 = vmax.f32 %v6778, 0.0
          %v6843 = vmax.f32 %v6779, 0.0
          %v6844 = vmax.f32 %v6780, 0.0
          %v6845 = vmax.f32 %v6781, 0.0
          %v6846 = vmax.f32 %v6782, 0.0
          %v6847 = vmax.f32 %v6783, 0.0
          %v6848 = vmax.f32 %v6784, 0.0
          %v6849 = vmax.f32 %v6785, 0.0
          %v6850 = vmax.f32 %v6786, 0.0
          %v6851 = vmax.f32 %v6787, 0.0
          %v6852 = vmax.f32 %v6788, 0.0
          %v6853 = vmax.f32 %v6789, 0.0
          %v6854 = vmax.f32 %v6790, 0.0
          %v6855 = vmax.f32 %v6791, 0.0
          %v6856 = vmax.f32 %v6792, 0.0
          %v6857 = vmax.f32 %v6793, 0.0
          %v6858 = vmax.f32 %v6794, 0.0
          %v6859 = vmax.f32 %v6795, 0.0
          %v6860 = vmax.f32 %v6796, 0.0
          %v6861 = vmax.f32 %v6797, 0.0
          %v6862 = vmax.f32 %v6798, 0.0
          %v6863 = vmax.f32 %v6799, 0.0
          %v6864 = vmax.f32 %v6800, 0.0
          %v6865 = vmax.f32 %v6801, 0.0
          %v6866 = vmax.f32 %v6802, 0.0
          %v6867 = vmax.f32 %v6803, 0.0
          %v6868 = vmax.f32 %v6804, 0.0
          %v6869 = vmax.f32 %v6805, 0.0
          %v6870 = vmax.f32 %v6806, 0.0
          %v6871 = vmax.f32 %v6807, 0.0
          %v6872 = vmax.f32 %v6808, 0.0
          %v6873 = vmax.f32 %v6809, 0.0
          %v6874 = vmax.f32 %v6810, 0.0
          %v6875 = vmax.f32 %v6811, 0.0
          %v6876 = vmax.f32 %v6812, 0.0
          %v6877 = vmax.f32 %v6813, 0.0
          %v6878 = vmax.f32 %v6814, 0.0
          %v6879 = vmax.f32 %v6815, 0.0
          %v6880 = vmax.f32 %v6816, 0.0
          %v6881 = vmax.f32 %v6817, 0.0
          %v6882 = vmax.f32 %v6818, 0.0
          %v6883 = vmax.f32 %v6819, 0.0
          %v6884 = vmax.f32 %v6820, 0.0
          %v6885 = vpack.c.bf16 %v6823, %v6821
          %v6886 = vpack.c.bf16 %v6824, %v6822
          %v6887 = vpack.c.bf16 %v6827, %v6825
          %v6888 = vpack.c.bf16 %v6828, %v6826
          %v6889 = vpack.c.bf16 %v6831, %v6829
          %v6890 = vpack.c.bf16 %v6832, %v6830
          %v6891 = vpack.c.bf16 %v6835, %v6833
          %v6892 = vpack.c.bf16 %v6836, %v6834
          %v6893 = vpack.c.bf16 %v6839, %v6837
          %v6894 = vpack.c.bf16 %v6840, %v6838
          %v6895 = vpack.c.bf16 %v6843, %v6841
          %v6896 = vpack.c.bf16 %v6844, %v6842
          %v6897 = vpack.c.bf16 %v6847, %v6845
          %v6898 = vpack.c.bf16 %v6848, %v6846
          %v6899 = vpack.c.bf16 %v6851, %v6849
          %v6900 = vpack.c.bf16 %v6852, %v6850
          %v6901 = vpack.c.bf16 %v6855, %v6853
          %v6902 = vpack.c.bf16 %v6856, %v6854
          %v6903 = vpack.c.bf16 %v6859, %v6857
          %v6904 = vpack.c.bf16 %v6860, %v6858
          %v6905 = vpack.c.bf16 %v6863, %v6861
          %v6906 = vpack.c.bf16 %v6864, %v6862
          %v6907 = vpack.c.bf16 %v6867, %v6865
          %v6908 = vpack.c.bf16 %v6868, %v6866
          %v6909 = vpack.c.bf16 %v6871, %v6869
          %v6910 = vpack.c.bf16 %v6872, %v6870
          %v6911 = vpack.c.bf16 %v6875, %v6873
          %v6912 = vpack.c.bf16 %v6876, %v6874
          %v6913 = vpack.c.bf16 %v6879, %v6877
          %v6914 = vpack.c.bf16 %v6880, %v6878
          %v6915 = vpack.c.bf16 %v6883, %v6881
          %v6916 = vpack.c.bf16 %v6884, %v6882
          %v6917 = vld [vmem:[#allocation12] sm:$0xf]
          %v6918 = vld [vmem:[#allocation12 + $0x4] sm:$0xf]
          %v6919 = vld [vmem:[#allocation12 + $0x8] sm:$0xf]
          %v6920 = vld [vmem:[#allocation12 + $0xc] sm:$0xf]
          %v6921 = vld [vmem:[#allocation12 + $0x10] sm:$0xf]
          %v6922 = vld [vmem:[#allocation12 + $0x14] sm:$0xf]
          %v6923 = vld [vmem:[#allocation12 + $0x18] sm:$0xf]
          %v6924 = vld [vmem:[#allocation12 + $0x1c] sm:$0xf]
          %v6925 = vld [vmem:[#allocation12 + $0x20] sm:$0xf]
          %v6926 = vld [vmem:[#allocation12 + $0x24] sm:$0xf]
          %v6927 = vld [vmem:[#allocation12 + $0x28] sm:$0xf]
          %v6928 = vld [vmem:[#allocation12 + $0x2c] sm:$0xf]
          %v6929 = vld [vmem:[#allocation12 + $0x30] sm:$0xf]
          %v6930 = vld [vmem:[#allocation12 + $0x34] sm:$0xf]
          %v6931 = vld [vmem:[#allocation12 + $0x38] sm:$0xf]
          %v6932 = vld [vmem:[#allocation12 + $0x3c] sm:$0xf]
          %v6933 = vld [vmem:[#allocation12 + $0x40] sm:$0xf]
          %v6934 = vld [vmem:[#allocation12 + $0x44] sm:$0xf]
          %v6935 = vld [vmem:[#allocation12 + $0x48] sm:$0xf]
          %v6936 = vld [vmem:[#allocation12 + $0x4c] sm:$0xf]
          %v6937 = vld [vmem:[#allocation12 + $0x50] sm:$0xf]
          %v6938 = vld [vmem:[#allocation12 + $0x54] sm:$0xf]
          %v6939 = vld [vmem:[#allocation12 + $0x58] sm:$0xf]
          %v6940 = vld [vmem:[#allocation12 + $0x5c] sm:$0xf]
          %v6941 = vld [vmem:[#allocation12 + $0x60] sm:$0xf]
          %v6942 = vld [vmem:[#allocation12 + $0x64] sm:$0xf]
          %v6943 = vld [vmem:[#allocation12 + $0x68] sm:$0xf]
          %v6944 = vld [vmem:[#allocation12 + $0x6c] sm:$0xf]
          %v6945 = vld [vmem:[#allocation12 + $0x70] sm:$0xf]
          %v6946 = vld [vmem:[#allocation12 + $0x74] sm:$0xf]
          %v6947 = vld [vmem:[#allocation12 + $0x78] sm:$0xf]
          %v6948 = vld [vmem:[#allocation12 + $0x7c] sm:$0xf]
          %v6949 = vld [vmem:[%s10] sm:$0x1]
          %v6951 = vperm.slane %v6949, 0
          %v6985 = vunpack.c.l.b16 %v6917
          %v6986 = vunpack.c.l.b16 %v6918
          %v6987 = vunpack.c.l.b16 %v6919
          %v6988 = vunpack.c.l.b16 %v6920
          %v6989 = vunpack.c.l.b16 %v6921
          %v6990 = vunpack.c.l.b16 %v6922
          %v6991 = vunpack.c.l.b16 %v6923
          %v6992 = vunpack.c.l.b16 %v6924
          %v6993 = vunpack.c.l.b16 %v6925
          %v6994 = vunpack.c.l.b16 %v6926
          %v6995 = vunpack.c.l.b16 %v6927
          %v6996 = vunpack.c.l.b16 %v6928
          %v6997 = vunpack.c.l.b16 %v6929
          %v6998 = vunpack.c.l.b16 %v6930
          %v6999 = vunpack.c.l.b16 %v6931
          %v7000 = vunpack.c.l.b16 %v6932
          %v7001 = vunpack.c.l.b16 %v6933
          %v7002 = vunpack.c.l.b16 %v6934
          %v7003 = vunpack.c.l.b16 %v6935
          %v7004 = vunpack.c.l.b16 %v6936
          %v7005 = vunpack.c.l.b16 %v6937
          %v7006 = vunpack.c.l.b16 %v6938
          %v7007 = vunpack.c.l.b16 %v6939
          %v7008 = vunpack.c.l.b16 %v6940
          %v7009 = vunpack.c.l.b16 %v6941
          %v7010 = vunpack.c.l.b16 %v6942
          %v7011 = vunpack.c.l.b16 %v6943
          %v7012 = vunpack.c.l.b16 %v6944
          %v7013 = vunpack.c.l.b16 %v6945
          %v7014 = vunpack.c.l.b16 %v6946
          %v7015 = vunpack.c.l.b16 %v6947
          %v7016 = vunpack.c.l.b16 %v6948
          %v7017 = vpack.c.b16 %v6986, %v6985
          %v7018 = vpack.c.b16 %v6988, %v6987
          %v7019 = vpack.c.b16 %v6990, %v6989
          %v7020 = vpack.c.b16 %v6992, %v6991
          %v7021 = vpack.c.b16 %v6994, %v6993
          %v7022 = vpack.c.b16 %v6996, %v6995
          %v7023 = vpack.c.b16 %v6998, %v6997
          %v7024 = vpack.c.b16 %v7000, %v6999
          %v7025 = vpack.c.b16 %v7002, %v7001
          %v7026 = vpack.c.b16 %v7004, %v7003
          %v7027 = vpack.c.b16 %v7006, %v7005
          %v7028 = vpack.c.b16 %v7008, %v7007
          %v7029 = vpack.c.b16 %v7010, %v7009
          %v7030 = vpack.c.b16 %v7012, %v7011
          %v7031 = vpack.c.b16 %v7014, %v7013
          %v7032 = vpack.c.b16 %v7016, %v7015
          %7049 = vmatpush.bf16.msra.mxu0 %v7024
          %7050 = vmatpush.bf16.msra.mxu0 %v7023
          %7051 = vmatpush.bf16.msra.mxu0 %v7022
          %7052 = vmatpush.bf16.msra.mxu0 %v7021
          %7053 = vmatpush.bf16.msra.mxu0 %v7020
          %7054 = vmatpush.bf16.msra.mxu0 %v7019
          %7055 = vmatpush.bf16.msra.mxu0 %v7018
          %7056 = vmatpush.bf16.msra.mxu0 %v7017
          %7057 = vmatmul.bf16.gmra.mxu0 %v6885
          %v7058 = vpop.f32.mrf.mxu0
          %v7059 = vadd.f32 %v6951, %v7058
          %v7060 = vpop.f32.mrf.mxu0
          %v7061 = vadd.f32 %v6951, %v7060
          %7062 = vmatmul.bf16.gmra.mxu0 %v6887
          %v7063 = vpop.f32.mrf.mxu0
          %v7064 = vadd.f32 %v6951, %v7063
          %v7065 = vpop.f32.mrf.mxu0
          %v7066 = vadd.f32 %v6951, %v7065
          %7067 = vmatmul.bf16.gmra.mxu0 %v6889
          %v7068 = vpop.f32.mrf.mxu0
          %v7069 = vadd.f32 %v6951, %v7068
          %v7070 = vpop.f32.mrf.mxu0
          %v7071 = vadd.f32 %v6951, %v7070
          %7072 = vmatmul.bf16.gmra.mxu0 %v6891
          %v7073 = vpop.f32.mrf.mxu0
          %v7074 = vadd.f32 %v6951, %v7073
          %v7075 = vpop.f32.mrf.mxu0
          %v7076 = vadd.f32 %v6951, %v7075
          %7077 = vmatmul.bf16.gmra.mxu0 %v6893
          %v7078 = vpop.f32.mrf.mxu0
          %v7079 = vadd.f32 %v6951, %v7078
          %v7080 = vpop.f32.mrf.mxu0
          %v7081 = vadd.f32 %v6951, %v7080
          %7082 = vmatmul.bf16.gmra.mxu0 %v6895
          %v7083 = vpop.f32.mrf.mxu0
          %v7084 = vadd.f32 %v6951, %v7083
          %v7085 = vpop.f32.mrf.mxu0
          %v7086 = vadd.f32 %v6951, %v7085
          %7087 = vmatmul.bf16.gmra.mxu0 %v6897
          %v7088 = vpop.f32.mrf.mxu0
          %v7089 = vadd.f32 %v6951, %v7088
          %v7090 = vpop.f32.mrf.mxu0
          %v7091 = vadd.f32 %v6951, %v7090
          %7092 = vmatmul.bf16.gmra.mxu0 %v6899
          %v7093 = vpop.f32.mrf.mxu0
          %v7094 = vadd.f32 %v6951, %v7093
          %v7095 = vpop.f32.mrf.mxu0
          %v7096 = vadd.f32 %v6951, %v7095
          %7097 = vmatmul.bf16.gmra.mxu0 %v6901
          %v7098 = vpop.f32.mrf.mxu0
          %v7099 = vadd.f32 %v6951, %v7098
          %v7100 = vpop.f32.mrf.mxu0
          %v7101 = vadd.f32 %v6951, %v7100
          %7102 = vmatmul.bf16.gmra.mxu0 %v6903
          %v7103 = vpop.f32.mrf.mxu0
          %v7104 = vadd.f32 %v6951, %v7103
          %v7105 = vpop.f32.mrf.mxu0
          %v7106 = vadd.f32 %v6951, %v7105
          %7107 = vmatmul.bf16.gmra.mxu0 %v6905
          %v7108 = vpop.f32.mrf.mxu0
          %v7109 = vadd.f32 %v6951, %v7108
          %v7110 = vpop.f32.mrf.mxu0
          %v7111 = vadd.f32 %v6951, %v7110
          %7112 = vmatmul.bf16.gmra.mxu0 %v6907
          %v7113 = vpop.f32.mrf.mxu0
          %v7114 = vadd.f32 %v6951, %v7113
          %v7115 = vpop.f32.mrf.mxu0
          %v7116 = vadd.f32 %v6951, %v7115
          %7117 = vmatmul.bf16.gmra.mxu0 %v6909
          %v7118 = vpop.f32.mrf.mxu0
          %v7119 = vadd.f32 %v6951, %v7118
          %v7120 = vpop.f32.mrf.mxu0
          %v7121 = vadd.f32 %v6951, %v7120
          %7122 = vmatmul.bf16.gmra.mxu0 %v6911
          %v7123 = vpop.f32.mrf.mxu0
          %v7124 = vadd.f32 %v6951, %v7123
          %v7125 = vpop.f32.mrf.mxu0
          %v7126 = vadd.f32 %v6951, %v7125
          %7127 = vmatmul.bf16.gmra.mxu0 %v6913
          %v7128 = vpop.f32.mrf.mxu0
          %v7129 = vadd.f32 %v6951, %v7128
          %v7130 = vpop.f32.mrf.mxu0
          %v7131 = vadd.f32 %v6951, %v7130
          %7132 = vmatmul.bf16.gmra.mxu0 %v6915
          %v7133 = vpop.f32.mrf.mxu0
          %v7134 = vadd.f32 %v6951, %v7133
          %v7135 = vpop.f32.mrf.mxu0
          %v7136 = vadd.f32 %v6951, %v7135
          %7137 = vdwg.mxu0
          %7138 = vmatpush.bf16.msra.mxu0 %v7032
          %7139 = vmatpush.bf16.msra.mxu0 %v7031
          %7140 = vmatpush.bf16.msra.mxu0 %v7030
          %7141 = vmatpush.bf16.msra.mxu0 %v7029
          %7142 = vmatpush.bf16.msra.mxu0 %v7028
          %7143 = vmatpush.bf16.msra.mxu0 %v7027
          %7144 = vmatpush.bf16.msra.mxu0 %v7026
          %7145 = vmatpush.bf16.msra.mxu0 %v7025
          %7146 = vmatmul.bf16.gmra.mxu0 %v6886
          %v7147 = vpop.f32.mrf.mxu0
          %v7148 = vadd.f32 %v7059, %v7147
          %v7149 = vpop.f32.mrf.mxu0
          %v7150 = vadd.f32 %v7061, %v7149
          %7151 = vmatmul.bf16.gmra.mxu0 %v6888
          %v7152 = vpop.f32.mrf.mxu0
          %v7153 = vadd.f32 %v7064, %v7152
          %v7154 = vpop.f32.mrf.mxu0
          %v7155 = vadd.f32 %v7066, %v7154
          %7156 = vmatmul.bf16.gmra.mxu0 %v6890
          %v7157 = vpop.f32.mrf.mxu0
          %v7158 = vadd.f32 %v7069, %v7157
          %v7159 = vpop.f32.mrf.mxu0
          %v7160 = vadd.f32 %v7071, %v7159
          %7161 = vmatmul.bf16.gmra.mxu0 %v6892
          %v7162 = vpop.f32.mrf.mxu0
          %v7163 = vadd.f32 %v7074, %v7162
          %v7164 = vpop.f32.mrf.mxu0
          %v7165 = vadd.f32 %v7076, %v7164
          %7166 = vmatmul.bf16.gmra.mxu0 %v6894
          %v7167 = vpop.f32.mrf.mxu0
          %v7168 = vadd.f32 %v7079, %v7167
          %v7169 = vpop.f32.mrf.mxu0
          %v7170 = vadd.f32 %v7081, %v7169
          %7171 = vmatmul.bf16.gmra.mxu0 %v6896
          %v7172 = vpop.f32.mrf.mxu0
          %v7173 = vadd.f32 %v7084, %v7172
          %v7174 = vpop.f32.mrf.mxu0
          %v7175 = vadd.f32 %v7086, %v7174
          %7176 = vmatmul.bf16.gmra.mxu0 %v6898
          %v7177 = vpop.f32.mrf.mxu0
          %v7178 = vadd.f32 %v7089, %v7177
          %v7179 = vpop.f32.mrf.mxu0
          %v7180 = vadd.f32 %v7091, %v7179
          %7181 = vmatmul.bf16.gmra.mxu0 %v6900
          %v7182 = vpop.f32.mrf.mxu0
          %v7183 = vadd.f32 %v7094, %v7182
          %v7184 = vpop.f32.mrf.mxu0
          %v7185 = vadd.f32 %v7096, %v7184
          %7186 = vmatmul.bf16.gmra.mxu0 %v6902
          %v7187 = vpop.f32.mrf.mxu0
          %v7188 = vadd.f32 %v7099, %v7187
          %v7189 = vpop.f32.mrf.mxu0
          %v7190 = vadd.f32 %v7101, %v7189
          %7191 = vmatmul.bf16.gmra.mxu0 %v6904
          %v7192 = vpop.f32.mrf.mxu0
          %v7193 = vadd.f32 %v7104, %v7192
          %v7194 = vpop.f32.mrf.mxu0
          %v7195 = vadd.f32 %v7106, %v7194
          %7196 = vmatmul.bf16.gmra.mxu0 %v6906
          %v7197 = vpop.f32.mrf.mxu0
          %v7198 = vadd.f32 %v7109, %v7197
          %v7199 = vpop.f32.mrf.mxu0
          %v7200 = vadd.f32 %v7111, %v7199
          %7201 = vmatmul.bf16.gmra.mxu0 %v6908
          %v7202 = vpop.f32.mrf.mxu0
          %v7203 = vadd.f32 %v7114, %v7202
          %v7204 = vpop.f32.mrf.mxu0
          %v7205 = vadd.f32 %v7116, %v7204
          %7206 = vmatmul.bf16.gmra.mxu0 %v6910
          %v7207 = vpop.f32.mrf.mxu0
          %v7208 = vadd.f32 %v7119, %v7207
          %v7209 = vpop.f32.mrf.mxu0
          %v7210 = vadd.f32 %v7121, %v7209
          %7211 = vmatmul.bf16.gmra.mxu0 %v6912
          %v7212 = vpop.f32.mrf.mxu0
          %v7213 = vadd.f32 %v7124, %v7212
          %v7214 = vpop.f32.mrf.mxu0
          %v7215 = vadd.f32 %v7126, %v7214
          %7216 = vmatmul.bf16.gmra.mxu0 %v6914
          %v7217 = vpop.f32.mrf.mxu0
          %v7218 = vadd.f32 %v7129, %v7217
          %v7219 = vpop.f32.mrf.mxu0
          %v7220 = vadd.f32 %v7131, %v7219
          %7221 = vmatmul.bf16.gmra.mxu0 %v6916
          %v7222 = vpop.f32.mrf.mxu0
          %v7223 = vadd.f32 %v7134, %v7222
          %v7224 = vpop.f32.mrf.mxu0
          %v7225 = vadd.f32 %v7136, %v7224
          %7226 = vdwg.mxu0
          %v7227 = vmax.f32 %v7148, 0.0
          %v7228 = vmax.f32 %v7150, 0.0
          %v7229 = vmax.f32 %v7153, 0.0
          %v7230 = vmax.f32 %v7155, 0.0
          %v7231 = vmax.f32 %v7158, 0.0
          %v7232 = vmax.f32 %v7160, 0.0
          %v7233 = vmax.f32 %v7163, 0.0
          %v7234 = vmax.f32 %v7165, 0.0
          %v7235 = vmax.f32 %v7168, 0.0
          %v7236 = vmax.f32 %v7170, 0.0
          %v7237 = vmax.f32 %v7173, 0.0
          %v7238 = vmax.f32 %v7175, 0.0
          %v7239 = vmax.f32 %v7178, 0.0
          %v7240 = vmax.f32 %v7180, 0.0
          %v7241 = vmax.f32 %v7183, 0.0
          %v7242 = vmax.f32 %v7185, 0.0
          %v7243 = vmax.f32 %v7188, 0.0
          %v7244 = vmax.f32 %v7190, 0.0
          %v7245 = vmax.f32 %v7193, 0.0
          %v7246 = vmax.f32 %v7195, 0.0
          %v7247 = vmax.f32 %v7198, 0.0
          %v7248 = vmax.f32 %v7200, 0.0
          %v7249 = vmax.f32 %v7203, 0.0
          %v7250 = vmax.f32 %v7205, 0.0
          %v7251 = vmax.f32 %v7208, 0.0
          %v7252 = vmax.f32 %v7210, 0.0
          %v7253 = vmax.f32 %v7213, 0.0
          %v7254 = vmax.f32 %v7215, 0.0
          %v7255 = vmax.f32 %v7218, 0.0
          %v7256 = vmax.f32 %v7220, 0.0
          %v7257 = vmax.f32 %v7223, 0.0
          %v7258 = vmax.f32 %v7225, 0.0
          %7259 = vst [vmem:[%s535] sm:$0xff] %v7227
          %7260 = vst [vmem:[%s535 + $0x8] sm:$0xff] %v7228
          %7261 = vst [vmem:[%s535 + $0x10] sm:$0xff] %v7229
          %7262 = vst [vmem:[%s535 + $0x18] sm:$0xff] %v7230
          %7263 = vst [vmem:[%s535 + $0x20] sm:$0xff] %v7231
          %7264 = vst [vmem:[%s535 + $0x28] sm:$0xff] %v7232
          %7265 = vst [vmem:[%s535 + $0x30] sm:$0xff] %v7233
          %7266 = vst [vmem:[%s535 + $0x38] sm:$0xff] %v7234
          %7267 = vst [vmem:[%s535 + $0x40] sm:$0xff] %v7235
          %7268 = vst [vmem:[%s535 + $0x48] sm:$0xff] %v7236
          %7269 = vst [vmem:[%s535 + $0x50] sm:$0xff] %v7237
          %7270 = vst [vmem:[%s535 + $0x58] sm:$0xff] %v7238
          %7271 = vst [vmem:[%s535 + $0x60] sm:$0xff] %v7239
          %7272 = vst [vmem:[%s535 + $0x68] sm:$0xff] %v7240
          %7273 = vst [vmem:[%s535 + $0x70] sm:$0xff] %v7241
          %7274 = vst [vmem:[%s535 + $0x78] sm:$0xff] %v7242
          %7275 = vst [vmem:[%s535 + $0x80] sm:$0xff] %v7243
          %7276 = vst [vmem:[%s535 + $0x88] sm:$0xff] %v7244
          %7277 = vst [vmem:[%s535 + $0x90] sm:$0xff] %v7245
          %7278 = vst [vmem:[%s535 + $0x98] sm:$0xff] %v7246
          %7279 = vst [vmem:[%s535 + $0xa0] sm:$0xff] %v7247
          %7280 = vst [vmem:[%s535 + $0xa8] sm:$0xff] %v7248
          %7281 = vst [vmem:[%s535 + $0xb0] sm:$0xff] %v7249
          %7282 = vst [vmem:[%s535 + $0xb8] sm:$0xff] %v7250
          %7283 = vst [vmem:[%s535 + $0xc0] sm:$0xff] %v7251
          %7284 = vst [vmem:[%s535 + $0xc8] sm:$0xff] %v7252
          %7285 = vst [vmem:[%s535 + $0xd0] sm:$0xff] %v7253
          %7286 = vst [vmem:[%s535 + $0xd8] sm:$0xff] %v7254
          %7287 = vst [vmem:[%s535 + $0xe0] sm:$0xff] %v7255
          %7288 = vst [vmem:[%s535 + $0xe8] sm:$0xff] %v7256
          %7289 = vst [vmem:[%s535 + $0xf0] sm:$0xff] %v7257
          %7290 = vst [vmem:[%s535 + $0xf8] sm:$0xff] %v7258
        $region100: #{tpu_custom_call.1} parent=63 // pred_fallthru
          _
        %s7291 = sand.u32 %s303, 1
        %s7292 = scalar_lea.sflag [#allocation6], %s7291
        %s7293 = sand.u32 %s303, 1
        %s7294 = smul.addr %s7293, 256
        %s7295 = scalar_lea.vmem [#allocation13], %s7294
        // Predicated region
        $region101: #{tpu_custom_call.1} parent=63 // pred_check
          %p7296 = pneg %p313
        $region102: #{tpu_custom_call.1} parent=63 // pred_check_branch
          %7298 = sbr.rel (%p7296) target = $region104
        $region103: #{tpu_custom_call.1} parent=63 // pred_region
          %7300 = vsyncadd %s7292, 0
          %s7301 = smul.addr %s36, 32
          %s7302 = smul.addr %s7301, 8
          %s7303 = scalar_lea.hbm %s11, %s7302
          %s7304 = sshll.u32 %s7295, 4
          %s7305 = int_to_ptr.vmem [resolvable:$true] %s7304
          %s7306 = sshll.u32 %s7303, 4
          %s7307 = int_to_ptr.hbm [resolvable:$true] %s7306
          %7312 = dma.vmem_to_hbm [thread:$0]  %s7305, 4096, %s7307, %s7292, 128, 128, 8
        $region104: #{tpu_custom_call.1} parent=63 // pred_fallthru
          _
      $region64: #{tpu_custom_call.1} parent=5 // pred_fallthru
        _
      %p7313 = scmp.le.s32.totalorder 2, %s27
      // Predicated region
      $region105: #{tpu_custom_call.1} parent=5 // pred_check
        %p7314 = pneg %p7313
      $region106: #{tpu_custom_call.1} parent=5 // pred_check_branch
        %7316 = sbr.rel (%p7314) target = $region108
      $region107: #{tpu_custom_call.1} parent=5 // pred_region
        %s7317 = ssub.s32 %s27, 2
        // Predicated region
        $region109: #{tpu_custom_call.1} parent=107 // pred_check
          %p7318 = pneg %p319
        $region110: #{tpu_custom_call.1} parent=107 // pred_check_branch
          %7320 = sbr.rel (%p7318) target = $region112
        $region111: #{tpu_custom_call.1} parent=107 // pred_region
          %s7321 = sand.u32 %s304, 1
          %s7322 = scalar_lea.sflag [#allocation6], %s7321
          %s7323 = sand.u32 %s304, 1
          %s7324 = smul.addr %s7323, 256
          %s7325 = scalar_lea.vmem [#allocation13], %s7324
          %7327 = dma.done %s7322, 4096
        $region112: #{tpu_custom_call.1} parent=107 // pred_fallthru
          _
      $region108: #{tpu_custom_call.1} parent=5 // pred_fallthru
        _
    $region6: #{tpu_custom_call.1} parent=1 // loop_footer
      %s31 = sadd.s32 1, %s27
    $region7: #{tpu_custom_call.1} parent=1 // loop_footer_branch
      %26 = sbr.rel target = $region3
    $region8: #{tpu_custom_call.1} parent=1 // loop_exit
      _
    %7328 = vsyncpa [#allocation5], 1
    %s7329 = scalar_lea.sflag [#allocation5], 1
    %7330 = vsyncpa %s7329, 1
    %7331 = vsyncpa [#allocation8], 1
    %7332 = vsyncpa [#allocation11], 1
    %s7333 = scalar_lea.sflag [#allocation11], 1
    %7334 = vsyncpa %s7333, 1
    %7335 = vsyncpa [#allocation6], 1
    %s7336 = scalar_lea.sflag [#allocation6], 1
    %7337 = vsyncpa %s7336, 1

</llo_original>
